<compile_context>
chip_gen: v6e
topology: v6e:2x2x1
jax: 0.10.0
libtpu: 0.0.40
codegen_flags: <defaults>
</compile_context>

<pallas_src>
import math

import jax
import jax.numpy as jnp
from jax.experimental import pallas as pl
from jax.experimental.pallas import tpu as pltpu


# ----------------------------- Pallas kernel ------------------------------- #

def _lstm_fused_kernel(x_ref, wih1_ref, b1_ref, w2f_ref, b2_ref,
                       wout_ref, bout_ref, init_ref, o_ref):
    """Fused 2-cell LSTM over the full sequence + linear head.

    x_ref:    (B, T)      input sequence, lane-dense (in_dim == 1 squeezed)
    wih1_ref: (1, 4H)     lstm1.weight_ih^T (gate order i,f,g,o)
    b1_ref:   (1, 4H)     lstm1.bias_ih + lstm1.bias_hh
    w2f_ref:  (2H, 8H)    [[W_ih2^T, W_hh1^T], [W_hh2^T, 0]]
    b2_ref:   (1, 4H)     lstm2.bias_ih + lstm2.bias_hh
    wout_ref: (H, O)      output.weight^T
    bout_ref: (1, O)      output.bias
    init_ref: (4B, H)     rows [h1_0; c1_0; h2_0; c2_0]
    o_ref:    (B, O)
    """
    B, T = x_ref.shape
    H = w2f_ref.shape[0] // 2

    # Carried states: one (8, 64) tile, sliced by rows.
    h1 = init_ref[0 * B:1 * B, :]
    c1 = init_ref[1 * B:2 * B, :]
    h2 = init_ref[2 * B:3 * B, :]
    c2 = init_ref[3 * B:4 * B, :]

    # Loop-invariant loads / broadcasts, hoisted once above the unroll.
    w2f = w2f_ref[...]                                        # (2H, 8H)
    wih1 = jnp.broadcast_to(wih1_ref[...], (B, 4 * H))        # (B, 4H)
    b1 = jnp.broadcast_to(b1_ref[...], (B, 4 * H))
    b2 = jnp.broadcast_to(b2_ref[...], (B, 4 * H))

    # Prime the layer-1 hidden->hidden term for step 0 (off the hot loop).
    # W_hh1^T is the top-right quadrant of the fused weight.
    hh1 = jnp.dot(h1, w2f_ref[0:H, 4 * H:8 * H],
                  preferred_element_type=jnp.float32)          # (B, 4H)

    def gates(pre, c):
        # Two full-width EUP passes, then 64-lane slices for the combines.
        s = jax.nn.sigmoid(pre)                                # (B, 4H)
        th = jnp.tanh(pre)                                     # (B, 4H)
        i = s[:, 0:H]
        f = s[:, H:2 * H]
        g = th[:, 2 * H:3 * H]
        o = s[:, 3 * H:4 * H]
        c_new = f * c + i * g
        h_new = o * jnp.tanh(c_new)
        return h_new, c_new

    # T is static & small: unroll so the serial recurrence is fully visible
    # to the scheduler (carries stay in vregs, no loop-carried ref traffic).
    for t in range(T):
        # Layer 1: in_dim == 1, so the input projection is a broadcast-mul.
        x_t = x_ref[:, t:t + 1]                                # (B, 1) static slice
        pre1 = x_t * wih1 + hh1 + b1                           # (B, 4H)
        h1, c1 = gates(pre1, c1)

        # One fused matmul: [h1(t) | h2(t-1)] @ [[Wih2, Whh1], [Whh2, 0]].
        lhs = jnp.concatenate([h1, h2], axis=-1)               # (B, 2H) = (B, 128)
        fused = jnp.dot(lhs, w2f,
                        preferred_element_type=jnp.float32)    # (B, 8H)
        pre2 = fused[:, 0:4 * H] + b2
        hh1 = fused[:, 4 * H:8 * H]                            # h1(t) @ Whh1 for t+1
        h2, c2 = gates(pre2, c2)

    # Linear head epilogue (reads h2 straight from vregs).
    o_ref[...] = (jnp.dot(h2, wout_ref[...],
                          preferred_element_type=jnp.float32) + bout_ref[...])


# ------------------------------ JAX wrapper -------------------------------- #

def lstm_forward(x, params, init_states):
    """x: (B, T, 1) float32 -> (B, 2 * predicted_step)"""
    B, T, _ = x.shape
    H = params["w_hh1_t"].shape[0]
    O = params["out_w_t"].shape[1]
    x2 = jnp.squeeze(x, -1)                                    # (B, T) lane-dense

    # Advisory cost estimate: one (B,2H)x(2H,8H) dot per step + priming + head.
    flops = 2 * B * (T * (2 * H) * (8 * H) + H * (4 * H) + H * O)
    transcendentals = T * B * 18 * H
    bytes_accessed = 4 * (B * T + 3 * 4 * H + (2 * H) * (8 * H)
                          + H * O + O + 4 * B * H + B * O)

    vmem = pl.BlockSpec(memory_space=pltpu.MemorySpace.VMEM)
    return pl.pallas_call(
        _lstm_fused_kernel,
        out_shape=jax.ShapeDtypeStruct((B, O), jnp.float32),
        in_specs=[vmem] * 8,
        out_specs=vmem,
        cost_estimate=pl.CostEstimate(flops=flops,
                                      transcendentals=transcendentals,
                                      bytes_accessed=bytes_accessed),
    )(x2,
      params["w_ih1_t"], params["b1"], params["w2_fused"], params["b2"],
      params["out_w_t"], params["out_b"], init_states)


# --------------------------- parameter construction ------------------------- #

def init_params(key, *, num_neurons, predicted_step):
    """Mimics torch.nn.LSTMCell / nn.Linear default init + the fixed output bias."""
    H = num_neurons
    stdv = 1.0 / math.sqrt(H)

    def uni(k, shape):
        return jax.random.uniform(k, shape, jnp.float32, -stdv, stdv)

    key, k1, k2, k3, k4 = jax.random.split(key, 5)
    w_ih1 = uni(k1, (4 * H, 1))
    w_hh1 = uni(k2, (4 * H, H))
    b_ih1 = uni(k3, (4 * H,))
    b_hh1 = uni(k4, (4 * H,))

    key, k1, k2, k3, k4 = jax.random.split(key, 5)
    w_ih2 = uni(k1, (4 * H, H))
    w_hh2 = uni(k2, (4 * H, H))
    b_ih2 = uni(k3, (4 * H,))
    b_hh2 = uni(k4, (4 * H,))

    out_dim = 2 * predicted_step
    key, kw = jax.random.split(key)
    w_out = jax.random.uniform(kw, (out_dim, H), jnp.float32, -stdv, stdv)
    b_out = jnp.tile(jnp.array([0.2, -0.2], jnp.float32), predicted_step)

    # Fused layer-2 / layer-1-hh block weight: (2H, 8H)
    #   [[W_ih2^T, W_hh1^T],
    #    [W_hh2^T,    0   ]]
    w2_fused = jnp.concatenate([
        jnp.concatenate([w_ih2.T, w_hh1.T], axis=1),
        jnp.concatenate([w_hh2.T, jnp.zeros((H, 4 * H), jnp.float32)], axis=1),
    ], axis=0)

    return dict(
        # kernel inputs
        w_ih1_t=w_ih1.T, b1=(b_ih1 + b_hh1).reshape(1, -1),
        w2_fused=w2_fused, b2=(b_ih2 + b_hh2).reshape(1, -1),
        out_w_t=w_out.T, out_b=b_out.reshape(1, -1),
        # unfused weights kept for the pure-JAX reference check
        w_hh1_t=w_hh1.T, w_ih2_t=w_ih2.T, w_hh2_t=w_hh2.T,
    )


def init_states(key, *, batch, num_neurons):
    """torch.nn.init.xavier_normal_ on (B, H): std = sqrt(2 / (B + H)).

    Packed as (4B, H): rows [h1_0; c1_0; h2_0; c2_0] -> one (8, 64) tile.
    """
    H = num_neurons
    std = math.sqrt(2.0 / (batch + H))
    return std * jax.random.normal(key, (4 * batch, H), jnp.float32)


# -------------------------- pure-JAX reference check ------------------------ #

def ref_forward(x, params, states):
    H = params["w_hh1_t"].shape[0]
    B = x.shape[0]
    h1, c1 = states[0:B], states[B:2 * B]
    h2, c2 = states[2 * B:3 * B], states[3 * B:4 * B]

    def gates(pre, c):
        i = jax.nn.sigmoid(pre[:, 0:H])
        f = jax.nn.sigmoid(pre[:, H:2 * H])
        g = jnp.tanh(pre[:, 2 * H:3 * H])
        o = jax.nn.sigmoid(pre[:, 3 * H:4 * H])
        c_new = f * c + i * g
        return o * jnp.tanh(c_new), c_new

    T = x.shape[1]
    for t in range(T):
        x_t = x[:, t, :]                                       # (B, 1)
        pre1 = x_t @ params["w_ih1_t"] + h1 @ params["w_hh1_t"] + params["b1"]
        h1, c1 = gates(pre1, c1)
        pre2 = h1 @ params["w_ih2_t"] + h2 @ params["w_hh2_t"] + params["b2"]
        h2, c2 = gates(pre2, c2)
    return h2 @ params["out_w_t"] + params["out_b"]


# ----------------------------------- main ----------------------------------- #

if __name__ == "__main__":
    # Module defaults: LSTMCell(1, 64) -> LSTMCell(64, 64) -> Linear(64, 2)
    num_neurons = 64
    input_window_size = 24
    predicted_step = 1
    batch = 2

    key = jax.random.PRNGKey(0)
    key, kx, ks = jax.random.split(key, 3)
    x = jax.random.normal(kx, (batch, input_window_size, 1), jnp.float32)

    params = init_params(key, num_neurons=num_neurons, predicted_step=predicted_step)
    states = init_states(ks, batch=batch, num_neurons=num_neurons)

    fwd = jax.jit(lambda xx: lstm_forward(xx, params, states))
    out = fwd(x)
    jax.block_until_ready(out)

    ref = ref_forward(x, params, states)
    assert out.shape == (batch, 2 * predicted_step), out.shape
    assert jnp.allclose(out, ref, atol=5e-4, rtol=5e-4), (out, ref)

    print("KERNEL_OK")
</pallas_src>

<mosaic_0001>
module attributes {stable_mosaic.version = 11 : i64} {
  func.func @_lstm_fused_kernel(%arg0: memref<2x24xf32, #tpu.memory_space<vmem>>, %arg1: memref<1x256xf32, #tpu.memory_space<vmem>>, %arg2: memref<1x256xf32, #tpu.memory_space<vmem>>, %arg3: memref<128x512xf32, #tpu.memory_space<vmem>>, %arg4: memref<1x256xf32, #tpu.memory_space<vmem>>, %arg5: memref<64x2xf32, #tpu.memory_space<vmem>>, %arg6: memref<1x2xf32, #tpu.memory_space<vmem>>, %arg7: memref<8x64xf32, #tpu.memory_space<vmem>>, %arg8: memref<2x2xf32, #tpu.memory_space<vmem>>) attributes {dimension_semantics = [], scalar_prefetch = 0 : i64, scratch_operands = 0 : i64, tpu.core_type = #tpu.core_type<tc>} {
    %c0 = arith.constant 0 : index
    %c0_0 = arith.constant 0 : index
    %0 = vector.load %arg7[%c0, %c0_0] : memref<8x64xf32, #tpu.memory_space<vmem>>, vector<2x64xf32>
    %c2 = arith.constant 2 : index
    %c0_1 = arith.constant 0 : index
    %1 = vector.load %arg7[%c2, %c0_1] : memref<8x64xf32, #tpu.memory_space<vmem>>, vector<2x64xf32>
    %c4 = arith.constant 4 : index
    %c0_2 = arith.constant 0 : index
    %2 = vector.load %arg7[%c4, %c0_2] : memref<8x64xf32, #tpu.memory_space<vmem>>, vector<2x64xf32>
    %c6 = arith.constant 6 : index
    %c0_3 = arith.constant 0 : index
    %3 = vector.load %arg7[%c6, %c0_3] : memref<8x64xf32, #tpu.memory_space<vmem>>, vector<2x64xf32>
    %c0_4 = arith.constant 0 : index
    %c0_5 = arith.constant 0 : index
    %4 = vector.load %arg3[%c0_4, %c0_5] : memref<128x512xf32, #tpu.memory_space<vmem>>, vector<128x512xf32>
    %c0_6 = arith.constant 0 : index
    %c0_7 = arith.constant 0 : index
    %5 = vector.load %arg1[%c0_6, %c0_7] : memref<1x256xf32, #tpu.memory_space<vmem>>, vector<1x256xf32>
    %6 = vector.shape_cast %5 : vector<1x256xf32> to vector<1x256xf32>
    %7 = vector.broadcast %6 : vector<1x256xf32> to vector<2x256xf32>
    %c0_8 = arith.constant 0 : index
    %c0_9 = arith.constant 0 : index
    %8 = vector.load %arg2[%c0_8, %c0_9] : memref<1x256xf32, #tpu.memory_space<vmem>>, vector<1x256xf32>
    %9 = vector.shape_cast %8 : vector<1x256xf32> to vector<1x256xf32>
    %10 = vector.broadcast %9 : vector<1x256xf32> to vector<2x256xf32>
    %c0_10 = arith.constant 0 : index
    %c0_11 = arith.constant 0 : index
    %11 = vector.load %arg4[%c0_10, %c0_11] : memref<1x256xf32, #tpu.memory_space<vmem>>, vector<1x256xf32>
    %12 = vector.shape_cast %11 : vector<1x256xf32> to vector<1x256xf32>
    %13 = vector.broadcast %12 : vector<1x256xf32> to vector<2x256xf32>
    %c0_12 = arith.constant 0 : index
    %c256 = arith.constant 256 : index
    %14 = vector.load %arg3[%c0_12, %c256] : memref<128x512xf32, #tpu.memory_space<vmem>>, vector<64x256xf32>
    %cst = arith.constant dense<0.000000e+00> : vector<2x256xf32>
    %15 = tpu.matmul %0, %14, %cst {dimension_numbers = #tpu.dot_dimension_numbers<[1], [0], [0], [1], [0, 0, 1, 1], [], []>} : vector<2x64xf32>, vector<64x256xf32>, vector<2x256xf32> -> vector<2x256xf32>
    %c0_13 = arith.constant 0 : index
    %c0_14 = arith.constant 0 : index
    %16 = vector.load %arg0[%c0_13, %c0_14] : memref<2x24xf32, #tpu.memory_space<vmem>>, vector<2x1xf32>
    %17 = vector.broadcast %16 : vector<2x1xf32> to vector<2x256xf32>
    %18 = arith.mulf %17, %7 : vector<2x256xf32>
    %19 = arith.addf %18, %15 : vector<2x256xf32>
    %20 = arith.addf %19, %10 : vector<2x256xf32>
    %21 = arith.negf %20 : vector<2x256xf32>
    %22 = math.exp %21 : vector<2x256xf32>
    %cst_15 = arith.constant 1.000000e+00 : f32
    %23 = vector.broadcast %cst_15 : f32 to vector<2x256xf32>
    %24 = arith.addf %23, %22 : vector<2x256xf32>
    %25 = arith.divf %23, %24 : vector<2x256xf32>
    %26 = math.tanh %20 : vector<2x256xf32>
    %27 = vector.extract_strided_slice %25 {offsets = [0, 0], sizes = [2, 64], strides = [1, 1]} : vector<2x256xf32> to vector<2x64xf32>
    %28 = vector.extract_strided_slice %25 {offsets = [0, 64], sizes = [2, 64], strides = [1, 1]} : vector<2x256xf32> to vector<2x64xf32>
    %29 = vector.extract_strided_slice %26 {offsets = [0, 128], sizes = [2, 64], strides = [1, 1]} : vector<2x256xf32> to vector<2x64xf32>
    %30 = vector.extract_strided_slice %25 {offsets = [0, 192], sizes = [2, 64], strides = [1, 1]} : vector<2x256xf32> to vector<2x64xf32>
    %31 = arith.mulf %28, %1 : vector<2x64xf32>
    %32 = arith.mulf %27, %29 : vector<2x64xf32>
    %33 = arith.addf %31, %32 : vector<2x64xf32>
    %34 = math.tanh %33 : vector<2x64xf32>
    %35 = arith.mulf %30, %34 : vector<2x64xf32>
    %36 = tpu.concatenate %35, %2 in 1 : vector<2x64xf32>, vector<2x64xf32> -> vector<2x128xf32>
    %cst_16 = arith.constant dense<0.000000e+00> : vector<2x512xf32>
    %37 = tpu.matmul %36, %4, %cst_16 {dimension_numbers = #tpu.dot_dimension_numbers<[1], [0], [0], [1], [0, 0, 1, 1], [], []>} : vector<2x128xf32>, vector<128x512xf32>, vector<2x512xf32> -> vector<2x512xf32>
    %38 = vector.extract_strided_slice %37 {offsets = [0, 0], sizes = [2, 256], strides = [1, 1]} : vector<2x512xf32> to vector<2x256xf32>
    %39 = arith.addf %38, %13 : vector<2x256xf32>
    %40 = vector.extract_strided_slice %37 {offsets = [0, 256], sizes = [2, 256], strides = [1, 1]} : vector<2x512xf32> to vector<2x256xf32>
    %41 = arith.negf %39 : vector<2x256xf32>
    %42 = math.exp %41 : vector<2x256xf32>
    %cst_17 = arith.constant 1.000000e+00 : f32
    %43 = vector.broadcast %cst_17 : f32 to vector<2x256xf32>
    %44 = arith.addf %43, %42 : vector<2x256xf32>
    %45 = arith.divf %43, %44 : vector<2x256xf32>
    %46 = math.tanh %39 : vector<2x256xf32>
    %47 = vector.extract_strided_slice %45 {offsets = [0, 0], sizes = [2, 64], strides = [1, 1]} : vector<2x256xf32> to vector<2x64xf32>
    %48 = vector.extract_strided_slice %45 {offsets = [0, 64], sizes = [2, 64], strides = [1, 1]} : vector<2x256xf32> to vector<2x64xf32>
    %49 = vector.extract_strided_slice %46 {offsets = [0, 128], sizes = [2, 64], strides = [1, 1]} : vector<2x256xf32> to vector<2x64xf32>
    %50 = vector.extract_strided_slice %45 {offsets = [0, 192], sizes = [2, 64], strides = [1, 1]} : vector<2x256xf32> to vector<2x64xf32>
    %51 = arith.mulf %48, %3 : vector<2x64xf32>
    %52 = arith.mulf %47, %49 : vector<2x64xf32>
    %53 = arith.addf %51, %52 : vector<2x64xf32>
    %54 = math.tanh %53 : vector<2x64xf32>
    %55 = arith.mulf %50, %54 : vector<2x64xf32>
    %c0_18 = arith.constant 0 : index
    %c1 = arith.constant 1 : index
    %56 = vector.load %arg0[%c0_18, %c1] : memref<2x24xf32, #tpu.memory_space<vmem>>, vector<2x1xf32>
    %57 = vector.broadcast %56 : vector<2x1xf32> to vector<2x256xf32>
    %58 = arith.mulf %57, %7 : vector<2x256xf32>
    %59 = arith.addf %58, %40 : vector<2x256xf32>
    %60 = arith.addf %59, %10 : vector<2x256xf32>
    %61 = arith.negf %60 : vector<2x256xf32>
    %62 = math.exp %61 : vector<2x256xf32>
    %cst_19 = arith.constant 1.000000e+00 : f32
    %63 = vector.broadcast %cst_19 : f32 to vector<2x256xf32>
    %64 = arith.addf %63, %62 : vector<2x256xf32>
    %65 = arith.divf %63, %64 : vector<2x256xf32>
    %66 = math.tanh %60 : vector<2x256xf32>
    %67 = vector.extract_strided_slice %65 {offsets = [0, 0], sizes = [2, 64], strides = [1, 1]} : vector<2x256xf32> to vector<2x64xf32>
    %68 = vector.extract_strided_slice %65 {offsets = [0, 64], sizes = [2, 64], strides = [1, 1]} : vector<2x256xf32> to vector<2x64xf32>
    %69 = vector.extract_strided_slice %66 {offsets = [0, 128], sizes = [2, 64], strides = [1, 1]} : vector<2x256xf32> to vector<2x64xf32>
    %70 = vector.extract_strided_slice %65 {offsets = [0, 192], sizes = [2, 64], strides = [1, 1]} : vector<2x256xf32> to vector<2x64xf32>
    %71 = arith.mulf %68, %33 : vector<2x64xf32>
    %72 = arith.mulf %67, %69 : vector<2x64xf32>
    %73 = arith.addf %71, %72 : vector<2x64xf32>
    %74 = math.tanh %73 : vector<2x64xf32>
    %75 = arith.mulf %70, %74 : vector<2x64xf32>
    %76 = tpu.concatenate %75, %55 in 1 : vector<2x64xf32>, vector<2x64xf32> -> vector<2x128xf32>
    %cst_20 = arith.constant dense<0.000000e+00> : vector<2x512xf32>
    %77 = tpu.matmul %76, %4, %cst_20 {dimension_numbers = #tpu.dot_dimension_numbers<[1], [0], [0], [1], [0, 0, 1, 1], [], []>} : vector<2x128xf32>, vector<128x512xf32>, vector<2x512xf32> -> vector<2x512xf32>
    %78 = vector.extract_strided_slice %77 {offsets = [0, 0], sizes = [2, 256], strides = [1, 1]} : vector<2x512xf32> to vector<2x256xf32>
    %79 = arith.addf %78, %13 : vector<2x256xf32>
    %80 = vector.extract_strided_slice %77 {offsets = [0, 256], sizes = [2, 256], strides = [1, 1]} : vector<2x512xf32> to vector<2x256xf32>
    %81 = arith.negf %79 : vector<2x256xf32>
    %82 = math.exp %81 : vector<2x256xf32>
    %cst_21 = arith.constant 1.000000e+00 : f32
    %83 = vector.broadcast %cst_21 : f32 to vector<2x256xf32>
    %84 = arith.addf %83, %82 : vector<2x256xf32>
    %85 = arith.divf %83, %84 : vector<2x256xf32>
    %86 = math.tanh %79 : vector<2x256xf32>
    %87 = vector.extract_strided_slice %85 {offsets = [0, 0], sizes = [2, 64], strides = [1, 1]} : vector<2x256xf32> to vector<2x64xf32>
    %88 = vector.extract_strided_slice %85 {offsets = [0, 64], sizes = [2, 64], strides = [1, 1]} : vector<2x256xf32> to vector<2x64xf32>
    %89 = vector.extract_strided_slice %86 {offsets = [0, 128], sizes = [2, 64], strides = [1, 1]} : vector<2x256xf32> to vector<2x64xf32>
    %90 = vector.extract_strided_slice %85 {offsets = [0, 192], sizes = [2, 64], strides = [1, 1]} : vector<2x256xf32> to vector<2x64xf32>
    %91 = arith.mulf %88, %53 : vector<2x64xf32>
    %92 = arith.mulf %87, %89 : vector<2x64xf32>
    %93 = arith.addf %91, %92 : vector<2x64xf32>
    %94 = math.tanh %93 : vector<2x64xf32>
    %95 = arith.mulf %90, %94 : vector<2x64xf32>
    %c0_22 = arith.constant 0 : index
    %c2_23 = arith.constant 2 : index
    %96 = vector.load %arg0[%c0_22, %c2_23] : memref<2x24xf32, #tpu.memory_space<vmem>>, vector<2x1xf32>
    %97 = vector.broadcast %96 : vector<2x1xf32> to vector<2x256xf32>
    %98 = arith.mulf %97, %7 : vector<2x256xf32>
    %99 = arith.addf %98, %80 : vector<2x256xf32>
    %100 = arith.addf %99, %10 : vector<2x256xf32>
    %101 = arith.negf %100 : vector<2x256xf32>
    %102 = math.exp %101 : vector<2x256xf32>
    %cst_24 = arith.constant 1.000000e+00 : f32
    %103 = vector.broadcast %cst_24 : f32 to vector<2x256xf32>
    %104 = arith.addf %103, %102 : vector<2x256xf32>
    %105 = arith.divf %103, %104 : vector<2x256xf32>
    %106 = math.tanh %100 : vector<2x256xf32>
    %107 = vector.extract_strided_slice %105 {offsets = [0, 0], sizes = [2, 64], strides = [1, 1]} : vector<2x256xf32> to vector<2x64xf32>
    %108 = vector.extract_strided_slice %105 {offsets = [0, 64], sizes = [2, 64], strides = [1, 1]} : vector<2x256xf32> to vector<2x64xf32>
    %109 = vector.extract_strided_slice %106 {offsets = [0, 128], sizes = [2, 64], strides = [1, 1]} : vector<2x256xf32> to vector<2x64xf32>
    %110 = vector.extract_strided_slice %105 {offsets = [0, 192], sizes = [2, 64], strides = [1, 1]} : vector<2x256xf32> to vector<2x64xf32>
    %111 = arith.mulf %108, %73 : vector<2x64xf32>
    %112 = arith.mulf %107, %109 : vector<2x64xf32>
    %113 = arith.addf %111, %112 : vector<2x64xf32>
    %114 = math.tanh %113 : vector<2x64xf32>
    %115 = arith.mulf %110, %114 : vector<2x64xf32>
    %116 = tpu.concatenate %115, %95 in 1 : vector<2x64xf32>, vector<2x64xf32> -> vector<2x128xf32>
    %cst_25 = arith.constant dense<0.000000e+00> : vector<2x512xf32>
    %117 = tpu.matmul %116, %4, %cst_25 {dimension_numbers = #tpu.dot_dimension_numbers<[1], [0], [0], [1], [0, 0, 1, 1], [], []>} : vector<2x128xf32>, vector<128x512xf32>, vector<2x512xf32> -> vector<2x512xf32>
    %118 = vector.extract_strided_slice %117 {offsets = [0, 0], sizes = [2, 256], strides = [1, 1]} : vector<2x512xf32> to vector<2x256xf32>
    %119 = arith.addf %118, %13 : vector<2x256xf32>
    %120 = vector.extract_strided_slice %117 {offsets = [0, 256], sizes = [2, 256], strides = [1, 1]} : vector<2x512xf32> to vector<2x256xf32>
    %121 = arith.negf %119 : vector<2x256xf32>
    %122 = math.exp %121 : vector<2x256xf32>
    %cst_26 = arith.constant 1.000000e+00 : f32
    %123 = vector.broadcast %cst_26 : f32 to vector<2x256xf32>
    %124 = arith.addf %123, %122 : vector<2x256xf32>
    %125 = arith.divf %123, %124 : vector<2x256xf32>
    %126 = math.tanh %119 : vector<2x256xf32>
    %127 = vector.extract_strided_slice %125 {offsets = [0, 0], sizes = [2, 64], strides = [1, 1]} : vector<2x256xf32> to vector<2x64xf32>
    %128 = vector.extract_strided_slice %125 {offsets = [0, 64], sizes = [2, 64], strides = [1, 1]} : vector<2x256xf32> to vector<2x64xf32>
    %129 = vector.extract_strided_slice %126 {offsets = [0, 128], sizes = [2, 64], strides = [1, 1]} : vector<2x256xf32> to vector<2x64xf32>
    %130 = vector.extract_strided_slice %125 {offsets = [0, 192], sizes = [2, 64], strides = [1, 1]} : vector<2x256xf32> to vector<2x64xf32>
    %131 = arith.mulf %128, %93 : vector<2x64xf32>
    %132 = arith.mulf %127, %129 : vector<2x64xf32>
    %133 = arith.addf %131, %132 : vector<2x64xf32>
    %134 = math.tanh %133 : vector<2x64xf32>
    %135 = arith.mulf %130, %134 : vector<2x64xf32>
    %c0_27 = arith.constant 0 : index
    %c3 = arith.constant 3 : index
    %136 = vector.load %arg0[%c0_27, %c3] : memref<2x24xf32, #tpu.memory_space<vmem>>, vector<2x1xf32>
    %137 = vector.broadcast %136 : vector<2x1xf32> to vector<2x256xf32>
    %138 = arith.mulf %137, %7 : vector<2x256xf32>
    %139 = arith.addf %138, %120 : vector<2x256xf32>
    %140 = arith.addf %139, %10 : vector<2x256xf32>
    %141 = arith.negf %140 : vector<2x256xf32>
    %142 = math.exp %141 : vector<2x256xf32>
    %cst_28 = arith.constant 1.000000e+00 : f32
    %143 = vector.broadcast %cst_28 : f32 to vector<2x256xf32>
    %144 = arith.addf %143, %142 : vector<2x256xf32>
    %145 = arith.divf %143, %144 : vector<2x256xf32>
    %146 = math.tanh %140 : vector<2x256xf32>
    %147 = vector.extract_strided_slice %145 {offsets = [0, 0], sizes = [2, 64], strides = [1, 1]} : vector<2x256xf32> to vector<2x64xf32>
    %148 = vector.extract_strided_slice %145 {offsets = [0, 64], sizes = [2, 64], strides = [1, 1]} : vector<2x256xf32> to vector<2x64xf32>
    %149 = vector.extract_strided_slice %146 {offsets = [0, 128], sizes = [2, 64], strides = [1, 1]} : vector<2x256xf32> to vector<2x64xf32>
    %150 = vector.extract_strided_slice %145 {offsets = [0, 192], sizes = [2, 64], strides = [1, 1]} : vector<2x256xf32> to vector<2x64xf32>
    %151 = arith.mulf %148, %113 : vector<2x64xf32>
    %152 = arith.mulf %147, %149 : vector<2x64xf32>
    %153 = arith.addf %151, %152 : vector<2x64xf32>
    %154 = math.tanh %153 : vector<2x64xf32>
    %155 = arith.mulf %150, %154 : vector<2x64xf32>
    %156 = tpu.concatenate %155, %135 in 1 : vector<2x64xf32>, vector<2x64xf32> -> vector<2x128xf32>
    %cst_29 = arith.constant dense<0.000000e+00> : vector<2x512xf32>
    %157 = tpu.matmul %156, %4, %cst_29 {dimension_numbers = #tpu.dot_dimension_numbers<[1], [0], [0], [1], [0, 0, 1, 1], [], []>} : vector<2x128xf32>, vector<128x512xf32>, vector<2x512xf32> -> vector<2x512xf32>
    %158 = vector.extract_strided_slice %157 {offsets = [0, 0], sizes = [2, 256], strides = [1, 1]} : vector<2x512xf32> to vector<2x256xf32>
    %159 = arith.addf %158, %13 : vector<2x256xf32>
    %160 = vector.extract_strided_slice %157 {offsets = [0, 256], sizes = [2, 256], strides = [1, 1]} : vector<2x512xf32> to vector<2x256xf32>
    %161 = arith.negf %159 : vector<2x256xf32>
    %162 = math.exp %161 : vector<2x256xf32>
    %cst_30 = arith.constant 1.000000e+00 : f32
    %163 = vector.broadcast %cst_30 : f32 to vector<2x256xf32>
    %164 = arith.addf %163, %162 : vector<2x256xf32>
    %165 = arith.divf %163, %164 : vector<2x256xf32>
    %166 = math.tanh %159 : vector<2x256xf32>
    %167 = vector.extract_strided_slice %165 {offsets = [0, 0], sizes = [2, 64], strides = [1, 1]} : vector<2x256xf32> to vector<2x64xf32>
    %168 = vector.extract_strided_slice %165 {offsets = [0, 64], sizes = [2, 64], strides = [1, 1]} : vector<2x256xf32> to vector<2x64xf32>
    %169 = vector.extract_strided_slice %166 {offsets = [0, 128], sizes = [2, 64], strides = [1, 1]} : vector<2x256xf32> to vector<2x64xf32>
    %170 = vector.extract_strided_slice %165 {offsets = [0, 192], sizes = [2, 64], strides = [1, 1]} : vector<2x256xf32> to vector<2x64xf32>
    %171 = arith.mulf %168, %133 : vector<2x64xf32>
    %172 = arith.mulf %167, %169 : vector<2x64xf32>
    %173 = arith.addf %171, %172 : vector<2x64xf32>
    %174 = math.tanh %173 : vector<2x64xf32>
    %175 = arith.mulf %170, %174 : vector<2x64xf32>
    %c0_31 = arith.constant 0 : index
    %c4_32 = arith.constant 4 : index
    %176 = vector.load %arg0[%c0_31, %c4_32] : memref<2x24xf32, #tpu.memory_space<vmem>>, vector<2x1xf32>
    %177 = vector.broadcast %176 : vector<2x1xf32> to vector<2x256xf32>
    %178 = arith.mulf %177, %7 : vector<2x256xf32>
    %179 = arith.addf %178, %160 : vector<2x256xf32>
    %180 = arith.addf %179, %10 : vector<2x256xf32>
    %181 = arith.negf %180 : vector<2x256xf32>
    %182 = math.exp %181 : vector<2x256xf32>
    %cst_33 = arith.constant 1.000000e+00 : f32
    %183 = vector.broadcast %cst_33 : f32 to vector<2x256xf32>
    %184 = arith.addf %183, %182 : vector<2x256xf32>
    %185 = arith.divf %183, %184 : vector<2x256xf32>
    %186 = math.tanh %180 : vector<2x256xf32>
    %187 = vector.extract_strided_slice %185 {offsets = [0, 0], sizes = [2, 64], strides = [1, 1]} : vector<2x256xf32> to vector<2x64xf32>
    %188 = vector.extract_strided_slice %185 {offsets = [0, 64], sizes = [2, 64], strides = [1, 1]} : vector<2x256xf32> to vector<2x64xf32>
    %189 = vector.extract_strided_slice %186 {offsets = [0, 128], sizes = [2, 64], strides = [1, 1]} : vector<2x256xf32> to vector<2x64xf32>
    %190 = vector.extract_strided_slice %185 {offsets = [0, 192], sizes = [2, 64], strides = [1, 1]} : vector<2x256xf32> to vector<2x64xf32>
    %191 = arith.mulf %188, %153 : vector<2x64xf32>
    %192 = arith.mulf %187, %189 : vector<2x64xf32>
    %193 = arith.addf %191, %192 : vector<2x64xf32>
    %194 = math.tanh %193 : vector<2x64xf32>
    %195 = arith.mulf %190, %194 : vector<2x64xf32>
    %196 = tpu.concatenate %195, %175 in 1 : vector<2x64xf32>, vector<2x64xf32> -> vector<2x128xf32>
    %cst_34 = arith.constant dense<0.000000e+00> : vector<2x512xf32>
    %197 = tpu.matmul %196, %4, %cst_34 {dimension_numbers = #tpu.dot_dimension_numbers<[1], [0], [0], [1], [0, 0, 1, 1], [], []>} : vector<2x128xf32>, vector<128x512xf32>, vector<2x512xf32> -> vector<2x512xf32>
    %198 = vector.extract_strided_slice %197 {offsets = [0, 0], sizes = [2, 256], strides = [1, 1]} : vector<2x512xf32> to vector<2x256xf32>
    %199 = arith.addf %198, %13 : vector<2x256xf32>
    %200 = vector.extract_strided_slice %197 {offsets = [0, 256], sizes = [2, 256], strides = [1, 1]} : vector<2x512xf32> to vector<2x256xf32>
    %201 = arith.negf %199 : vector<2x256xf32>
    %202 = math.exp %201 : vector<2x256xf32>
    %cst_35 = arith.constant 1.000000e+00 : f32
    %203 = vector.broadcast %cst_35 : f32 to vector<2x256xf32>
    %204 = arith.addf %203, %202 : vector<2x256xf32>
    %205 = arith.divf %203, %204 : vector<2x256xf32>
    %206 = math.tanh %199 : vector<2x256xf32>
    %207 = vector.extract_strided_slice %205 {offsets = [0, 0], sizes = [2, 64], strides = [1, 1]} : vector<2x256xf32> to vector<2x64xf32>
    %208 = vector.extract_strided_slice %205 {offsets = [0, 64], sizes = [2, 64], strides = [1, 1]} : vector<2x256xf32> to vector<2x64xf32>
    %209 = vector.extract_strided_slice %206 {offsets = [0, 128], sizes = [2, 64], strides = [1, 1]} : vector<2x256xf32> to vector<2x64xf32>
    %210 = vector.extract_strided_slice %205 {offsets = [0, 192], sizes = [2, 64], strides = [1, 1]} : vector<2x256xf32> to vector<2x64xf32>
    %211 = arith.mulf %208, %173 : vector<2x64xf32>
    %212 = arith.mulf %207, %209 : vector<2x64xf32>
    %213 = arith.addf %211, %212 : vector<2x64xf32>
    %214 = math.tanh %213 : vector<2x64xf32>
    %215 = arith.mulf %210, %214 : vector<2x64xf32>
    %c0_36 = arith.constant 0 : index
    %c5 = arith.constant 5 : index
    %216 = vector.load %arg0[%c0_36, %c5] : memref<2x24xf32, #tpu.memory_space<vmem>>, vector<2x1xf32>
    %217 = vector.broadcast %216 : vector<2x1xf32> to vector<2x256xf32>
    %218 = arith.mulf %217, %7 : vector<2x256xf32>
    %219 = arith.addf %218, %200 : vector<2x256xf32>
    %220 = arith.addf %219, %10 : vector<2x256xf32>
    %221 = arith.negf %220 : vector<2x256xf32>
    %222 = math.exp %221 : vector<2x256xf32>
    %cst_37 = arith.constant 1.000000e+00 : f32
    %223 = vector.broadcast %cst_37 : f32 to vector<2x256xf32>
    %224 = arith.addf %223, %222 : vector<2x256xf32>
    %225 = arith.divf %223, %224 : vector<2x256xf32>
    %226 = math.tanh %220 : vector<2x256xf32>
    %227 = vector.extract_strided_slice %225 {offsets = [0, 0], sizes = [2, 64], strides = [1, 1]} : vector<2x256xf32> to vector<2x64xf32>
    %228 = vector.extract_strided_slice %225 {offsets = [0, 64], sizes = [2, 64], strides = [1, 1]} : vector<2x256xf32> to vector<2x64xf32>
    %229 = vector.extract_strided_slice %226 {offsets = [0, 128], sizes = [2, 64], strides = [1, 1]} : vector<2x256xf32> to vector<2x64xf32>
    %230 = vector.extract_strided_slice %225 {offsets = [0, 192], sizes = [2, 64], strides = [1, 1]} : vector<2x256xf32> to vector<2x64xf32>
    %231 = arith.mulf %228, %193 : vector<2x64xf32>
    %232 = arith.mulf %227, %229 : vector<2x64xf32>
    %233 = arith.addf %231, %232 : vector<2x64xf32>
    %234 = math.tanh %233 : vector<2x64xf32>
    %235 = arith.mulf %230, %234 : vector<2x64xf32>
    %236 = tpu.concatenate %235, %215 in 1 : vector<2x64xf32>, vector<2x64xf32> -> vector<2x128xf32>
    %cst_38 = arith.constant dense<0.000000e+00> : vector<2x512xf32>
    %237 = tpu.matmul %236, %4, %cst_38 {dimension_numbers = #tpu.dot_dimension_numbers<[1], [0], [0], [1], [0, 0, 1, 1], [], []>} : vector<2x128xf32>, vector<128x512xf32>, vector<2x512xf32> -> vector<2x512xf32>
    %238 = vector.extract_strided_slice %237 {offsets = [0, 0], sizes = [2, 256], strides = [1, 1]} : vector<2x512xf32> to vector<2x256xf32>
    %239 = arith.addf %238, %13 : vector<2x256xf32>
    %240 = vector.extract_strided_slice %237 {offsets = [0, 256], sizes = [2, 256], strides = [1, 1]} : vector<2x512xf32> to vector<2x256xf32>
    %241 = arith.negf %239 : vector<2x256xf32>
    %242 = math.exp %241 : vector<2x256xf32>
    %cst_39 = arith.constant 1.000000e+00 : f32
    %243 = vector.broadcast %cst_39 : f32 to vector<2x256xf32>
    %244 = arith.addf %243, %242 : vector<2x256xf32>
    %245 = arith.divf %243, %244 : vector<2x256xf32>
    %246 = math.tanh %239 : vector<2x256xf32>
    %247 = vector.extract_strided_slice %245 {offsets = [0, 0], sizes = [2, 64], strides = [1, 1]} : vector<2x256xf32> to vector<2x64xf32>
    %248 = vector.extract_strided_slice %245 {offsets = [0, 64], sizes = [2, 64], strides = [1, 1]} : vector<2x256xf32> to vector<2x64xf32>
    %249 = vector.extract_strided_slice %246 {offsets = [0, 128], sizes = [2, 64], strides = [1, 1]} : vector<2x256xf32> to vector<2x64xf32>
    %250 = vector.extract_strided_slice %245 {offsets = [0, 192], sizes = [2, 64], strides = [1, 1]} : vector<2x256xf32> to vector<2x64xf32>
    %251 = arith.mulf %248, %213 : vector<2x64xf32>
    %252 = arith.mulf %247, %249 : vector<2x64xf32>
    %253 = arith.addf %251, %252 : vector<2x64xf32>
    %254 = math.tanh %253 : vector<2x64xf32>
    %255 = arith.mulf %250, %254 : vector<2x64xf32>
    %c0_40 = arith.constant 0 : index
    %c6_41 = arith.constant 6 : index
    %256 = vector.load %arg0[%c0_40, %c6_41] : memref<2x24xf32, #tpu.memory_space<vmem>>, vector<2x1xf32>
    %257 = vector.broadcast %256 : vector<2x1xf32> to vector<2x256xf32>
    %258 = arith.mulf %257, %7 : vector<2x256xf32>
    %259 = arith.addf %258, %240 : vector<2x256xf32>
    %260 = arith.addf %259, %10 : vector<2x256xf32>
    %261 = arith.negf %260 : vector<2x256xf32>
    %262 = math.exp %261 : vector<2x256xf32>
    %cst_42 = arith.constant 1.000000e+00 : f32
    %263 = vector.broadcast %cst_42 : f32 to vector<2x256xf32>
    %264 = arith.addf %263, %262 : vector<2x256xf32>
    %265 = arith.divf %263, %264 : vector<2x256xf32>
    %266 = math.tanh %260 : vector<2x256xf32>
    %267 = vector.extract_strided_slice %265 {offsets = [0, 0], sizes = [2, 64], strides = [1, 1]} : vector<2x256xf32> to vector<2x64xf32>
    %268 = vector.extract_strided_slice %265 {offsets = [0, 64], sizes = [2, 64], strides = [1, 1]} : vector<2x256xf32> to vector<2x64xf32>
    %269 = vector.extract_strided_slice %266 {offsets = [0, 128], sizes = [2, 64], strides = [1, 1]} : vector<2x256xf32> to vector<2x64xf32>
    %270 = vector.extract_strided_slice %265 {offsets = [0, 192], sizes = [2, 64], strides = [1, 1]} : vector<2x256xf32> to vector<2x64xf32>
    %271 = arith.mulf %268, %233 : vector<2x64xf32>
    %272 = arith.mulf %267, %269 : vector<2x64xf32>
    %273 = arith.addf %271, %272 : vector<2x64xf32>
    %274 = math.tanh %273 : vector<2x64xf32>
    %275 = arith.mulf %270, %274 : vector<2x64xf32>
    %276 = tpu.concatenate %275, %255 in 1 : vector<2x64xf32>, vector<2x64xf32> -> vector<2x128xf32>
    %cst_43 = arith.constant dense<0.000000e+00> : vector<2x512xf32>
    %277 = tpu.matmul %276, %4, %cst_43 {dimension_numbers = #tpu.dot_dimension_numbers<[1], [0], [0], [1], [0, 0, 1, 1], [], []>} : vector<2x128xf32>, vector<128x512xf32>, vector<2x512xf32> -> vector<2x512xf32>
    %278 = vector.extract_strided_slice %277 {offsets = [0, 0], sizes = [2, 256], strides = [1, 1]} : vector<2x512xf32> to vector<2x256xf32>
    %279 = arith.addf %278, %13 : vector<2x256xf32>
    %280 = vector.extract_strided_slice %277 {offsets = [0, 256], sizes = [2, 256], strides = [1, 1]} : vector<2x512xf32> to vector<2x256xf32>
    %281 = arith.negf %279 : vector<2x256xf32>
    %282 = math.exp %281 : vector<2x256xf32>
    %cst_44 = arith.constant 1.000000e+00 : f32
    %283 = vector.broadcast %cst_44 : f32 to vector<2x256xf32>
    %284 = arith.addf %283, %282 : vector<2x256xf32>
    %285 = arith.divf %283, %284 : vector<2x256xf32>
    %286 = math.tanh %279 : vector<2x256xf32>
    %287 = vector.extract_strided_slice %285 {offsets = [0, 0], sizes = [2, 64], strides = [1, 1]} : vector<2x256xf32> to vector<2x64xf32>
    %288 = vector.extract_strided_slice %285 {offsets = [0, 64], sizes = [2, 64], strides = [1, 1]} : vector<2x256xf32> to vector<2x64xf32>
    %289 = vector.extract_strided_slice %286 {offsets = [0, 128], sizes = [2, 64], strides = [1, 1]} : vector<2x256xf32> to vector<2x64xf32>
    %290 = vector.extract_strided_slice %285 {offsets = [0, 192], sizes = [2, 64], strides = [1, 1]} : vector<2x256xf32> to vector<2x64xf32>
    %291 = arith.mulf %288, %253 : vector<2x64xf32>
    %292 = arith.mulf %287, %289 : vector<2x64xf32>
    %293 = arith.addf %291, %292 : vector<2x64xf32>
    %294 = math.tanh %293 : vector<2x64xf32>
    %295 = arith.mulf %290, %294 : vector<2x64xf32>
    %c0_45 = arith.constant 0 : index
    %c7 = arith.constant 7 : index
    %296 = vector.load %arg0[%c0_45, %c7] : memref<2x24xf32, #tpu.memory_space<vmem>>, vector<2x1xf32>
    %297 = vector.broadcast %296 : vector<2x1xf32> to vector<2x256xf32>
    %298 = arith.mulf %297, %7 : vector<2x256xf32>
    %299 = arith.addf %298, %280 : vector<2x256xf32>
    %300 = arith.addf %299, %10 : vector<2x256xf32>
    %301 = arith.negf %300 : vector<2x256xf32>
    %302 = math.exp %301 : vector<2x256xf32>
    %cst_46 = arith.constant 1.000000e+00 : f32
    %303 = vector.broadcast %cst_46 : f32 to vector<2x256xf32>
    %304 = arith.addf %303, %302 : vector<2x256xf32>
    %305 = arith.divf %303, %304 : vector<2x256xf32>
    %306 = math.tanh %300 : vector<2x256xf32>
    %307 = vector.extract_strided_slice %305 {offsets = [0, 0], sizes = [2, 64], strides = [1, 1]} : vector<2x256xf32> to vector<2x64xf32>
    %308 = vector.extract_strided_slice %305 {offsets = [0, 64], sizes = [2, 64], strides = [1, 1]} : vector<2x256xf32> to vector<2x64xf32>
    %309 = vector.extract_strided_slice %306 {offsets = [0, 128], sizes = [2, 64], strides = [1, 1]} : vector<2x256xf32> to vector<2x64xf32>
    %310 = vector.extract_strided_slice %305 {offsets = [0, 192], sizes = [2, 64], strides = [1, 1]} : vector<2x256xf32> to vector<2x64xf32>
    %311 = arith.mulf %308, %273 : vector<2x64xf32>
    %312 = arith.mulf %307, %309 : vector<2x64xf32>
    %313 = arith.addf %311, %312 : vector<2x64xf32>
    %314 = math.tanh %313 : vector<2x64xf32>
    %315 = arith.mulf %310, %314 : vector<2x64xf32>
    %316 = tpu.concatenate %315, %295 in 1 : vector<2x64xf32>, vector<2x64xf32> -> vector<2x128xf32>
    %cst_47 = arith.constant dense<0.000000e+00> : vector<2x512xf32>
    %317 = tpu.matmul %316, %4, %cst_47 {dimension_numbers = #tpu.dot_dimension_numbers<[1], [0], [0], [1], [0, 0, 1, 1], [], []>} : vector<2x128xf32>, vector<128x512xf32>, vector<2x512xf32> -> vector<2x512xf32>
    %318 = vector.extract_strided_slice %317 {offsets = [0, 0], sizes = [2, 256], strides = [1, 1]} : vector<2x512xf32> to vector<2x256xf32>
    %319 = arith.addf %318, %13 : vector<2x256xf32>
    %320 = vector.extract_strided_slice %317 {offsets = [0, 256], sizes = [2, 256], strides = [1, 1]} : vector<2x512xf32> to vector<2x256xf32>
    %321 = arith.negf %319 : vector<2x256xf32>
    %322 = math.exp %321 : vector<2x256xf32>
    %cst_48 = arith.constant 1.000000e+00 : f32
    %323 = vector.broadcast %cst_48 : f32 to vector<2x256xf32>
    %324 = arith.addf %323, %322 : vector<2x256xf32>
    %325 = arith.divf %323, %324 : vector<2x256xf32>
    %326 = math.tanh %319 : vector<2x256xf32>
    %327 = vector.extract_strided_slice %325 {offsets = [0, 0], sizes = [2, 64], strides = [1, 1]} : vector<2x256xf32> to vector<2x64xf32>
    %328 = vector.extract_strided_slice %325 {offsets = [0, 64], sizes = [2, 64], strides = [1, 1]} : vector<2x256xf32> to vector<2x64xf32>
    %329 = vector.extract_strided_slice %326 {offsets = [0, 128], sizes = [2, 64], strides = [1, 1]} : vector<2x256xf32> to vector<2x64xf32>
    %330 = vector.extract_strided_slice %325 {offsets = [0, 192], sizes = [2, 64], strides = [1, 1]} : vector<2x256xf32> to vector<2x64xf32>
    %331 = arith.mulf %328, %293 : vector<2x64xf32>
    %332 = arith.mulf %327, %329 : vector<2x64xf32>
    %333 = arith.addf %331, %332 : vector<2x64xf32>
    %334 = math.tanh %333 : vector<2x64xf32>
    %335 = arith.mulf %330, %334 : vector<2x64xf32>
    %c0_49 = arith.constant 0 : index
    %c8 = arith.constant 8 : index
    %336 = vector.load %arg0[%c0_49, %c8] : memref<2x24xf32, #tpu.memory_space<vmem>>, vector<2x1xf32>
    %337 = vector.broadcast %336 : vector<2x1xf32> to vector<2x256xf32>
    %338 = arith.mulf %337, %7 : vector<2x256xf32>
    %339 = arith.addf %338, %320 : vector<2x256xf32>
    %340 = arith.addf %339, %10 : vector<2x256xf32>
    %341 = arith.negf %340 : vector<2x256xf32>
    %342 = math.exp %341 : vector<2x256xf32>
    %cst_50 = arith.constant 1.000000e+00 : f32
    %343 = vector.broadcast %cst_50 : f32 to vector<2x256xf32>
    %344 = arith.addf %343, %342 : vector<2x256xf32>
    %345 = arith.divf %343, %344 : vector<2x256xf32>
    %346 = math.tanh %340 : vector<2x256xf32>
    %347 = vector.extract_strided_slice %345 {offsets = [0, 0], sizes = [2, 64], strides = [1, 1]} : vector<2x256xf32> to vector<2x64xf32>
    %348 = vector.extract_strided_slice %345 {offsets = [0, 64], sizes = [2, 64], strides = [1, 1]} : vector<2x256xf32> to vector<2x64xf32>
    %349 = vector.extract_strided_slice %346 {offsets = [0, 128], sizes = [2, 64], strides = [1, 1]} : vector<2x256xf32> to vector<2x64xf32>
    %350 = vector.extract_strided_slice %345 {offsets = [0, 192], sizes = [2, 64], strides = [1, 1]} : vector<2x256xf32> to vector<2x64xf32>
    %351 = arith.mulf %348, %313 : vector<2x64xf32>
    %352 = arith.mulf %347, %349 : vector<2x64xf32>
    %353 = arith.addf %351, %352 : vector<2x64xf32>
    %354 = math.tanh %353 : vector<2x64xf32>
    %355 = arith.mulf %350, %354 : vector<2x64xf32>
    %356 = tpu.concatenate %355, %335 in 1 : vector<2x64xf32>, vector<2x64xf32> -> vector<2x128xf32>
    %cst_51 = arith.constant dense<0.000000e+00> : vector<2x512xf32>
    %357 = tpu.matmul %356, %4, %cst_51 {dimension_numbers = #tpu.dot_dimension_numbers<[1], [0], [0], [1], [0, 0, 1, 1], [], []>} : vector<2x128xf32>, vector<128x512xf32>, vector<2x512xf32> -> vector<2x512xf32>
    %358 = vector.extract_strided_slice %357 {offsets = [0, 0], sizes = [2, 256], strides = [1, 1]} : vector<2x512xf32> to vector<2x256xf32>
    %359 = arith.addf %358, %13 : vector<2x256xf32>
    %360 = vector.extract_strided_slice %357 {offsets = [0, 256], sizes = [2, 256], strides = [1, 1]} : vector<2x512xf32> to vector<2x256xf32>
    %361 = arith.negf %359 : vector<2x256xf32>
    %362 = math.exp %361 : vector<2x256xf32>
    %cst_52 = arith.constant 1.000000e+00 : f32
    %363 = vector.broadcast %cst_52 : f32 to vector<2x256xf32>
    %364 = arith.addf %363, %362 : vector<2x256xf32>
    %365 = arith.divf %363, %364 : vector<2x256xf32>
    %366 = math.tanh %359 : vector<2x256xf32>
    %367 = vector.extract_strided_slice %365 {offsets = [0, 0], sizes = [2, 64], strides = [1, 1]} : vector<2x256xf32> to vector<2x64xf32>
    %368 = vector.extract_strided_slice %365 {offsets = [0, 64], sizes = [2, 64], strides = [1, 1]} : vector<2x256xf32> to vector<2x64xf32>
    %369 = vector.extract_strided_slice %366 {offsets = [0, 128], sizes = [2, 64], strides = [1, 1]} : vector<2x256xf32> to vector<2x64xf32>
    %370 = vector.extract_strided_slice %365 {offsets = [0, 192], sizes = [2, 64], strides = [1, 1]} : vector<2x256xf32> to vector<2x64xf32>
    %371 = arith.mulf %368, %333 : vector<2x64xf32>
    %372 = arith.mulf %367, %369 : vector<2x64xf32>
    %373 = arith.addf %371, %372 : vector<2x64xf32>
    %374 = math.tanh %373 : vector<2x64xf32>
    %375 = arith.mulf %370, %374 : vector<2x64xf32>
    %c0_53 = arith.constant 0 : index
    %c9 = arith.constant 9 : index
    %376 = vector.load %arg0[%c0_53, %c9] : memref<2x24xf32, #tpu.memory_space<vmem>>, vector<2x1xf32>
    %377 = vector.broadcast %376 : vector<2x1xf32> to vector<2x256xf32>
    %378 = arith.mulf %377, %7 : vector<2x256xf32>
    %379 = arith.addf %378, %360 : vector<2x256xf32>
    %380 = arith.addf %379, %10 : vector<2x256xf32>
    %381 = arith.negf %380 : vector<2x256xf32>
    %382 = math.exp %381 : vector<2x256xf32>
    %cst_54 = arith.constant 1.000000e+00 : f32
    %383 = vector.broadcast %cst_54 : f32 to vector<2x256xf32>
    %384 = arith.addf %383, %382 : vector<2x256xf32>
    %385 = arith.divf %383, %384 : vector<2x256xf32>
    %386 = math.tanh %380 : vector<2x256xf32>
    %387 = vector.extract_strided_slice %385 {offsets = [0, 0], sizes = [2, 64], strides = [1, 1]} : vector<2x256xf32> to vector<2x64xf32>
    %388 = vector.extract_strided_slice %385 {offsets = [0, 64], sizes = [2, 64], strides = [1, 1]} : vector<2x256xf32> to vector<2x64xf32>
    %389 = vector.extract_strided_slice %386 {offsets = [0, 128], sizes = [2, 64], strides = [1, 1]} : vector<2x256xf32> to vector<2x64xf32>
    %390 = vector.extract_strided_slice %385 {offsets = [0, 192], sizes = [2, 64], strides = [1, 1]} : vector<2x256xf32> to vector<2x64xf32>
    %391 = arith.mulf %388, %353 : vector<2x64xf32>
    %392 = arith.mulf %387, %389 : vector<2x64xf32>
    %393 = arith.addf %391, %392 : vector<2x64xf32>
    %394 = math.tanh %393 : vector<2x64xf32>
    %395 = arith.mulf %390, %394 : vector<2x64xf32>
    %396 = tpu.concatenate %395, %375 in 1 : vector<2x64xf32>, vector<2x64xf32> -> vector<2x128xf32>
    %cst_55 = arith.constant dense<0.000000e+00> : vector<2x512xf32>
    %397 = tpu.matmul %396, %4, %cst_55 {dimension_numbers = #tpu.dot_dimension_numbers<[1], [0], [0], [1], [0, 0, 1, 1], [], []>} : vector<2x128xf32>, vector<128x512xf32>, vector<2x512xf32> -> vector<2x512xf32>
    %398 = vector.extract_strided_slice %397 {offsets = [0, 0], sizes = [2, 256], strides = [1, 1]} : vector<2x512xf32> to vector<2x256xf32>
    %399 = arith.addf %398, %13 : vector<2x256xf32>
    %400 = vector.extract_strided_slice %397 {offsets = [0, 256], sizes = [2, 256], strides = [1, 1]} : vector<2x512xf32> to vector<2x256xf32>
    %401 = arith.negf %399 : vector<2x256xf32>
    %402 = math.exp %401 : vector<2x256xf32>
    %cst_56 = arith.constant 1.000000e+00 : f32
    %403 = vector.broadcast %cst_56 : f32 to vector<2x256xf32>
    %404 = arith.addf %403, %402 : vector<2x256xf32>
    %405 = arith.divf %403, %404 : vector<2x256xf32>
    %406 = math.tanh %399 : vector<2x256xf32>
    %407 = vector.extract_strided_slice %405 {offsets = [0, 0], sizes = [2, 64], strides = [1, 1]} : vector<2x256xf32> to vector<2x64xf32>
    %408 = vector.extract_strided_slice %405 {offsets = [0, 64], sizes = [2, 64], strides = [1, 1]} : vector<2x256xf32> to vector<2x64xf32>
    %409 = vector.extract_strided_slice %406 {offsets = [0, 128], sizes = [2, 64], strides = [1, 1]} : vector<2x256xf32> to vector<2x64xf32>
    %410 = vector.extract_strided_slice %405 {offsets = [0, 192], sizes = [2, 64], strides = [1, 1]} : vector<2x256xf32> to vector<2x64xf32>
    %411 = arith.mulf %408, %373 : vector<2x64xf32>
    %412 = arith.mulf %407, %409 : vector<2x64xf32>
    %413 = arith.addf %411, %412 : vector<2x64xf32>
    %414 = math.tanh %413 : vector<2x64xf32>
    %415 = arith.mulf %410, %414 : vector<2x64xf32>
    %c0_57 = arith.constant 0 : index
    %c10 = arith.constant 10 : index
    %416 = vector.load %arg0[%c0_57, %c10] : memref<2x24xf32, #tpu.memory_space<vmem>>, vector<2x1xf32>
    %417 = vector.broadcast %416 : vector<2x1xf32> to vector<2x256xf32>
    %418 = arith.mulf %417, %7 : vector<2x256xf32>
    %419 = arith.addf %418, %400 : vector<2x256xf32>
    %420 = arith.addf %419, %10 : vector<2x256xf32>
    %421 = arith.negf %420 : vector<2x256xf32>
    %422 = math.exp %421 : vector<2x256xf32>
    %cst_58 = arith.constant 1.000000e+00 : f32
    %423 = vector.broadcast %cst_58 : f32 to vector<2x256xf32>
    %424 = arith.addf %423, %422 : vector<2x256xf32>
    %425 = arith.divf %423, %424 : vector<2x256xf32>
    %426 = math.tanh %420 : vector<2x256xf32>
    %427 = vector.extract_strided_slice %425 {offsets = [0, 0], sizes = [2, 64], strides = [1, 1]} : vector<2x256xf32> to vector<2x64xf32>
    %428 = vector.extract_strided_slice %425 {offsets = [0, 64], sizes = [2, 64], strides = [1, 1]} : vector<2x256xf32> to vector<2x64xf32>
    %429 = vector.extract_strided_slice %426 {offsets = [0, 128], sizes = [2, 64], strides = [1, 1]} : vector<2x256xf32> to vector<2x64xf32>
    %430 = vector.extract_strided_slice %425 {offsets = [0, 192], sizes = [2, 64], strides = [1, 1]} : vector<2x256xf32> to vector<2x64xf32>
    %431 = arith.mulf %428, %393 : vector<2x64xf32>
    %432 = arith.mulf %427, %429 : vector<2x64xf32>
    %433 = arith.addf %431, %432 : vector<2x64xf32>
    %434 = math.tanh %433 : vector<2x64xf32>
    %435 = arith.mulf %430, %434 : vector<2x64xf32>
    %436 = tpu.concatenate %435, %415 in 1 : vector<2x64xf32>, vector<2x64xf32> -> vector<2x128xf32>
    %cst_59 = arith.constant dense<0.000000e+00> : vector<2x512xf32>
    %437 = tpu.matmul %436, %4, %cst_59 {dimension_numbers = #tpu.dot_dimension_numbers<[1], [0], [0], [1], [0, 0, 1, 1], [], []>} : vector<2x128xf32>, vector<128x512xf32>, vector<2x512xf32> -> vector<2x512xf32>
    %438 = vector.extract_strided_slice %437 {offsets = [0, 0], sizes = [2, 256], strides = [1, 1]} : vector<2x512xf32> to vector<2x256xf32>
    %439 = arith.addf %438, %13 : vector<2x256xf32>
    %440 = vector.extract_strided_slice %437 {offsets = [0, 256], sizes = [2, 256], strides = [1, 1]} : vector<2x512xf32> to vector<2x256xf32>
    %441 = arith.negf %439 : vector<2x256xf32>
    %442 = math.exp %441 : vector<2x256xf32>
    %cst_60 = arith.constant 1.000000e+00 : f32
    %443 = vector.broadcast %cst_60 : f32 to vector<2x256xf32>
    %444 = arith.addf %443, %442 : vector<2x256xf32>
    %445 = arith.divf %443, %444 : vector<2x256xf32>
    %446 = math.tanh %439 : vector<2x256xf32>
    %447 = vector.extract_strided_slice %445 {offsets = [0, 0], sizes = [2, 64], strides = [1, 1]} : vector<2x256xf32> to vector<2x64xf32>
    %448 = vector.extract_strided_slice %445 {offsets = [0, 64], sizes = [2, 64], strides = [1, 1]} : vector<2x256xf32> to vector<2x64xf32>
    %449 = vector.extract_strided_slice %446 {offsets = [0, 128], sizes = [2, 64], strides = [1, 1]} : vector<2x256xf32> to vector<2x64xf32>
    %450 = vector.extract_strided_slice %445 {offsets = [0, 192], sizes = [2, 64], strides = [1, 1]} : vector<2x256xf32> to vector<2x64xf32>
    %451 = arith.mulf %448, %413 : vector<2x64xf32>
    %452 = arith.mulf %447, %449 : vector<2x64xf32>
    %453 = arith.addf %451, %452 : vector<2x64xf32>
    %454 = math.tanh %453 : vector<2x64xf32>
    %455 = arith.mulf %450, %454 : vector<2x64xf32>
    %c0_61 = arith.constant 0 : index
    %c11 = arith.constant 11 : index
    %456 = vector.load %arg0[%c0_61, %c11] : memref<2x24xf32, #tpu.memory_space<vmem>>, vector<2x1xf32>
    %457 = vector.broadcast %456 : vector<2x1xf32> to vector<2x256xf32>
    %458 = arith.mulf %457, %7 : vector<2x256xf32>
    %459 = arith.addf %458, %440 : vector<2x256xf32>
    %460 = arith.addf %459, %10 : vector<2x256xf32>
    %461 = arith.negf %460 : vector<2x256xf32>
    %462 = math.exp %461 : vector<2x256xf32>
    %cst_62 = arith.constant 1.000000e+00 : f32
    %463 = vector.broadcast %cst_62 : f32 to vector<2x256xf32>
    %464 = arith.addf %463, %462 : vector<2x256xf32>
    %465 = arith.divf %463, %464 : vector<2x256xf32>
    %466 = math.tanh %460 : vector<2x256xf32>
    %467 = vector.extract_strided_slice %465 {offsets = [0, 0], sizes = [2, 64], strides = [1, 1]} : vector<2x256xf32> to vector<2x64xf32>
    %468 = vector.extract_strided_slice %465 {offsets = [0, 64], sizes = [2, 64], strides = [1, 1]} : vector<2x256xf32> to vector<2x64xf32>
    %469 = vector.extract_strided_slice %466 {offsets = [0, 128], sizes = [2, 64], strides = [1, 1]} : vector<2x256xf32> to vector<2x64xf32>
    %470 = vector.extract_strided_slice %465 {offsets = [0, 192], sizes = [2, 64], strides = [1, 1]} : vector<2x256xf32> to vector<2x64xf32>
    %471 = arith.mulf %468, %433 : vector<2x64xf32>
    %472 = arith.mulf %467, %469 : vector<2x64xf32>
    %473 = arith.addf %471, %472 : vector<2x64xf32>
    %474 = math.tanh %473 : vector<2x64xf32>
    %475 = arith.mulf %470, %474 : vector<2x64xf32>
    %476 = tpu.concatenate %475, %455 in 1 : vector<2x64xf32>, vector<2x64xf32> -> vector<2x128xf32>
    %cst_63 = arith.constant dense<0.000000e+00> : vector<2x512xf32>
    %477 = tpu.matmul %476, %4, %cst_63 {dimension_numbers = #tpu.dot_dimension_numbers<[1], [0], [0], [1], [0, 0, 1, 1], [], []>} : vector<2x128xf32>, vector<128x512xf32>, vector<2x512xf32> -> vector<2x512xf32>
    %478 = vector.extract_strided_slice %477 {offsets = [0, 0], sizes = [2, 256], strides = [1, 1]} : vector<2x512xf32> to vector<2x256xf32>
    %479 = arith.addf %478, %13 : vector<2x256xf32>
    %480 = vector.extract_strided_slice %477 {offsets = [0, 256], sizes = [2, 256], strides = [1, 1]} : vector<2x512xf32> to vector<2x256xf32>
    %481 = arith.negf %479 : vector<2x256xf32>
    %482 = math.exp %481 : vector<2x256xf32>
    %cst_64 = arith.constant 1.000000e+00 : f32
    %483 = vector.broadcast %cst_64 : f32 to vector<2x256xf32>
    %484 = arith.addf %483, %482 : vector<2x256xf32>
    %485 = arith.divf %483, %484 : vector<2x256xf32>
    %486 = math.tanh %479 : vector<2x256xf32>
    %487 = vector.extract_strided_slice %485 {offsets = [0, 0], sizes = [2, 64], strides = [1, 1]} : vector<2x256xf32> to vector<2x64xf32>
    %488 = vector.extract_strided_slice %485 {offsets = [0, 64], sizes = [2, 64], strides = [1, 1]} : vector<2x256xf32> to vector<2x64xf32>
    %489 = vector.extract_strided_slice %486 {offsets = [0, 128], sizes = [2, 64], strides = [1, 1]} : vector<2x256xf32> to vector<2x64xf32>
    %490 = vector.extract_strided_slice %485 {offsets = [0, 192], sizes = [2, 64], strides = [1, 1]} : vector<2x256xf32> to vector<2x64xf32>
    %491 = arith.mulf %488, %453 : vector<2x64xf32>
    %492 = arith.mulf %487, %489 : vector<2x64xf32>
    %493 = arith.addf %491, %492 : vector<2x64xf32>
    %494 = math.tanh %493 : vector<2x64xf32>
    %495 = arith.mulf %490, %494 : vector<2x64xf32>
    %c0_65 = arith.constant 0 : index
    %c12 = arith.constant 12 : index
    %496 = vector.load %arg0[%c0_65, %c12] : memref<2x24xf32, #tpu.memory_space<vmem>>, vector<2x1xf32>
    %497 = vector.broadcast %496 : vector<2x1xf32> to vector<2x256xf32>
    %498 = arith.mulf %497, %7 : vector<2x256xf32>
    %499 = arith.addf %498, %480 : vector<2x256xf32>
    %500 = arith.addf %499, %10 : vector<2x256xf32>
    %501 = arith.negf %500 : vector<2x256xf32>
    %502 = math.exp %501 : vector<2x256xf32>
    %cst_66 = arith.constant 1.000000e+00 : f32
    %503 = vector.broadcast %cst_66 : f32 to vector<2x256xf32>
    %504 = arith.addf %503, %502 : vector<2x256xf32>
    %505 = arith.divf %503, %504 : vector<2x256xf32>
    %506 = math.tanh %500 : vector<2x256xf32>
    %507 = vector.extract_strided_slice %505 {offsets = [0, 0], sizes = [2, 64], strides = [1, 1]} : vector<2x256xf32> to vector<2x64xf32>
    %508 = vector.extract_strided_slice %505 {offsets = [0, 64], sizes = [2, 64], strides = [1, 1]} : vector<2x256xf32> to vector<2x64xf32>
    %509 = vector.extract_strided_slice %506 {offsets = [0, 128], sizes = [2, 64], strides = [1, 1]} : vector<2x256xf32> to vector<2x64xf32>
    %510 = vector.extract_strided_slice %505 {offsets = [0, 192], sizes = [2, 64], strides = [1, 1]} : vector<2x256xf32> to vector<2x64xf32>
    %511 = arith.mulf %508, %473 : vector<2x64xf32>
    %512 = arith.mulf %507, %509 : vector<2x64xf32>
    %513 = arith.addf %511, %512 : vector<2x64xf32>
    %514 = math.tanh %513 : vector<2x64xf32>
    %515 = arith.mulf %510, %514 : vector<2x64xf32>
    %516 = tpu.concatenate %515, %495 in 1 : vector<2x64xf32>, vector<2x64xf32> -> vector<2x128xf32>
    %cst_67 = arith.constant dense<0.000000e+00> : vector<2x512xf32>
    %517 = tpu.matmul %516, %4, %cst_67 {dimension_numbers = #tpu.dot_dimension_numbers<[1], [0], [0], [1], [0, 0, 1, 1], [], []>} : vector<2x128xf32>, vector<128x512xf32>, vector<2x512xf32> -> vector<2x512xf32>
    %518 = vector.extract_strided_slice %517 {offsets = [0, 0], sizes = [2, 256], strides = [1, 1]} : vector<2x512xf32> to vector<2x256xf32>
    %519 = arith.addf %518, %13 : vector<2x256xf32>
    %520 = vector.extract_strided_slice %517 {offsets = [0, 256], sizes = [2, 256], strides = [1, 1]} : vector<2x512xf32> to vector<2x256xf32>
    %521 = arith.negf %519 : vector<2x256xf32>
    %522 = math.exp %521 : vector<2x256xf32>
    %cst_68 = arith.constant 1.000000e+00 : f32
    %523 = vector.broadcast %cst_68 : f32 to vector<2x256xf32>
    %524 = arith.addf %523, %522 : vector<2x256xf32>
    %525 = arith.divf %523, %524 : vector<2x256xf32>
    %526 = math.tanh %519 : vector<2x256xf32>
    %527 = vector.extract_strided_slice %525 {offsets = [0, 0], sizes = [2, 64], strides = [1, 1]} : vector<2x256xf32> to vector<2x64xf32>
    %528 = vector.extract_strided_slice %525 {offsets = [0, 64], sizes = [2, 64], strides = [1, 1]} : vector<2x256xf32> to vector<2x64xf32>
    %529 = vector.extract_strided_slice %526 {offsets = [0, 128], sizes = [2, 64], strides = [1, 1]} : vector<2x256xf32> to vector<2x64xf32>
    %530 = vector.extract_strided_slice %525 {offsets = [0, 192], sizes = [2, 64], strides = [1, 1]} : vector<2x256xf32> to vector<2x64xf32>
    %531 = arith.mulf %528, %493 : vector<2x64xf32>
    %532 = arith.mulf %527, %529 : vector<2x64xf32>
    %533 = arith.addf %531, %532 : vector<2x64xf32>
    %534 = math.tanh %533 : vector<2x64xf32>
    %535 = arith.mulf %530, %534 : vector<2x64xf32>
    %c0_69 = arith.constant 0 : index
    %c13 = arith.constant 13 : index
    %536 = vector.load %arg0[%c0_69, %c13] : memref<2x24xf32, #tpu.memory_space<vmem>>, vector<2x1xf32>
    %537 = vector.broadcast %536 : vector<2x1xf32> to vector<2x256xf32>
    %538 = arith.mulf %537, %7 : vector<2x256xf32>
    %539 = arith.addf %538, %520 : vector<2x256xf32>
    %540 = arith.addf %539, %10 : vector<2x256xf32>
    %541 = arith.negf %540 : vector<2x256xf32>
    %542 = math.exp %541 : vector<2x256xf32>
    %cst_70 = arith.constant 1.000000e+00 : f32
    %543 = vector.broadcast %cst_70 : f32 to vector<2x256xf32>
    %544 = arith.addf %543, %542 : vector<2x256xf32>
    %545 = arith.divf %543, %544 : vector<2x256xf32>
    %546 = math.tanh %540 : vector<2x256xf32>
    %547 = vector.extract_strided_slice %545 {offsets = [0, 0], sizes = [2, 64], strides = [1, 1]} : vector<2x256xf32> to vector<2x64xf32>
    %548 = vector.extract_strided_slice %545 {offsets = [0, 64], sizes = [2, 64], strides = [1, 1]} : vector<2x256xf32> to vector<2x64xf32>
    %549 = vector.extract_strided_slice %546 {offsets = [0, 128], sizes = [2, 64], strides = [1, 1]} : vector<2x256xf32> to vector<2x64xf32>
    %550 = vector.extract_strided_slice %545 {offsets = [0, 192], sizes = [2, 64], strides = [1, 1]} : vector<2x256xf32> to vector<2x64xf32>
    %551 = arith.mulf %548, %513 : vector<2x64xf32>
    %552 = arith.mulf %547, %549 : vector<2x64xf32>
    %553 = arith.addf %551, %552 : vector<2x64xf32>
    %554 = math.tanh %553 : vector<2x64xf32>
    %555 = arith.mulf %550, %554 : vector<2x64xf32>
    %556 = tpu.concatenate %555, %535 in 1 : vector<2x64xf32>, vector<2x64xf32> -> vector<2x128xf32>
    %cst_71 = arith.constant dense<0.000000e+00> : vector<2x512xf32>
    %557 = tpu.matmul %556, %4, %cst_71 {dimension_numbers = #tpu.dot_dimension_numbers<[1], [0], [0], [1], [0, 0, 1, 1], [], []>} : vector<2x128xf32>, vector<128x512xf32>, vector<2x512xf32> -> vector<2x512xf32>
    %558 = vector.extract_strided_slice %557 {offsets = [0, 0], sizes = [2, 256], strides = [1, 1]} : vector<2x512xf32> to vector<2x256xf32>
    %559 = arith.addf %558, %13 : vector<2x256xf32>
    %560 = vector.extract_strided_slice %557 {offsets = [0, 256], sizes = [2, 256], strides = [1, 1]} : vector<2x512xf32> to vector<2x256xf32>
    %561 = arith.negf %559 : vector<2x256xf32>
    %562 = math.exp %561 : vector<2x256xf32>
    %cst_72 = arith.constant 1.000000e+00 : f32
    %563 = vector.broadcast %cst_72 : f32 to vector<2x256xf32>
    %564 = arith.addf %563, %562 : vector<2x256xf32>
    %565 = arith.divf %563, %564 : vector<2x256xf32>
    %566 = math.tanh %559 : vector<2x256xf32>
    %567 = vector.extract_strided_slice %565 {offsets = [0, 0], sizes = [2, 64], strides = [1, 1]} : vector<2x256xf32> to vector<2x64xf32>
    %568 = vector.extract_strided_slice %565 {offsets = [0, 64], sizes = [2, 64], strides = [1, 1]} : vector<2x256xf32> to vector<2x64xf32>
    %569 = vector.extract_strided_slice %566 {offsets = [0, 128], sizes = [2, 64], strides = [1, 1]} : vector<2x256xf32> to vector<2x64xf32>
    %570 = vector.extract_strided_slice %565 {offsets = [0, 192], sizes = [2, 64], strides = [1, 1]} : vector<2x256xf32> to vector<2x64xf32>
    %571 = arith.mulf %568, %533 : vector<2x64xf32>
    %572 = arith.mulf %567, %569 : vector<2x64xf32>
    %573 = arith.addf %571, %572 : vector<2x64xf32>
    %574 = math.tanh %573 : vector<2x64xf32>
    %575 = arith.mulf %570, %574 : vector<2x64xf32>
    %c0_73 = arith.constant 0 : index
    %c14 = arith.constant 14 : index
    %576 = vector.load %arg0[%c0_73, %c14] : memref<2x24xf32, #tpu.memory_space<vmem>>, vector<2x1xf32>
    %577 = vector.broadcast %576 : vector<2x1xf32> to vector<2x256xf32>
    %578 = arith.mulf %577, %7 : vector<2x256xf32>
    %579 = arith.addf %578, %560 : vector<2x256xf32>
    %580 = arith.addf %579, %10 : vector<2x256xf32>
    %581 = arith.negf %580 : vector<2x256xf32>
    %582 = math.exp %581 : vector<2x256xf32>
    %cst_74 = arith.constant 1.000000e+00 : f32
    %583 = vector.broadcast %cst_74 : f32 to vector<2x256xf32>
    %584 = arith.addf %583, %582 : vector<2x256xf32>
    %585 = arith.divf %583, %584 : vector<2x256xf32>
    %586 = math.tanh %580 : vector<2x256xf32>
    %587 = vector.extract_strided_slice %585 {offsets = [0, 0], sizes = [2, 64], strides = [1, 1]} : vector<2x256xf32> to vector<2x64xf32>
    %588 = vector.extract_strided_slice %585 {offsets = [0, 64], sizes = [2, 64], strides = [1, 1]} : vector<2x256xf32> to vector<2x64xf32>
    %589 = vector.extract_strided_slice %586 {offsets = [0, 128], sizes = [2, 64], strides = [1, 1]} : vector<2x256xf32> to vector<2x64xf32>
    %590 = vector.extract_strided_slice %585 {offsets = [0, 192], sizes = [2, 64], strides = [1, 1]} : vector<2x256xf32> to vector<2x64xf32>
    %591 = arith.mulf %588, %553 : vector<2x64xf32>
    %592 = arith.mulf %587, %589 : vector<2x64xf32>
    %593 = arith.addf %591, %592 : vector<2x64xf32>
    %594 = math.tanh %593 : vector<2x64xf32>
    %595 = arith.mulf %590, %594 : vector<2x64xf32>
    %596 = tpu.concatenate %595, %575 in 1 : vector<2x64xf32>, vector<2x64xf32> -> vector<2x128xf32>
    %cst_75 = arith.constant dense<0.000000e+00> : vector<2x512xf32>
    %597 = tpu.matmul %596, %4, %cst_75 {dimension_numbers = #tpu.dot_dimension_numbers<[1], [0], [0], [1], [0, 0, 1, 1], [], []>} : vector<2x128xf32>, vector<128x512xf32>, vector<2x512xf32> -> vector<2x512xf32>
    %598 = vector.extract_strided_slice %597 {offsets = [0, 0], sizes = [2, 256], strides = [1, 1]} : vector<2x512xf32> to vector<2x256xf32>
    %599 = arith.addf %598, %13 : vector<2x256xf32>
    %600 = vector.extract_strided_slice %597 {offsets = [0, 256], sizes = [2, 256], strides = [1, 1]} : vector<2x512xf32> to vector<2x256xf32>
    %601 = arith.negf %599 : vector<2x256xf32>
    %602 = math.exp %601 : vector<2x256xf32>
    %cst_76 = arith.constant 1.000000e+00 : f32
    %603 = vector.broadcast %cst_76 : f32 to vector<2x256xf32>
    %604 = arith.addf %603, %602 : vector<2x256xf32>
    %605 = arith.divf %603, %604 : vector<2x256xf32>
    %606 = math.tanh %599 : vector<2x256xf32>
    %607 = vector.extract_strided_slice %605 {offsets = [0, 0], sizes = [2, 64], strides = [1, 1]} : vector<2x256xf32> to vector<2x64xf32>
    %608 = vector.extract_strided_slice %605 {offsets = [0, 64], sizes = [2, 64], strides = [1, 1]} : vector<2x256xf32> to vector<2x64xf32>
    %609 = vector.extract_strided_slice %606 {offsets = [0, 128], sizes = [2, 64], strides = [1, 1]} : vector<2x256xf32> to vector<2x64xf32>
    %610 = vector.extract_strided_slice %605 {offsets = [0, 192], sizes = [2, 64], strides = [1, 1]} : vector<2x256xf32> to vector<2x64xf32>
    %611 = arith.mulf %608, %573 : vector<2x64xf32>
    %612 = arith.mulf %607, %609 : vector<2x64xf32>
    %613 = arith.addf %611, %612 : vector<2x64xf32>
    %614 = math.tanh %613 : vector<2x64xf32>
    %615 = arith.mulf %610, %614 : vector<2x64xf32>
    %c0_77 = arith.constant 0 : index
    %c15 = arith.constant 15 : index
    %616 = vector.load %arg0[%c0_77, %c15] : memref<2x24xf32, #tpu.memory_space<vmem>>, vector<2x1xf32>
    %617 = vector.broadcast %616 : vector<2x1xf32> to vector<2x256xf32>
    %618 = arith.mulf %617, %7 : vector<2x256xf32>
    %619 = arith.addf %618, %600 : vector<2x256xf32>
    %620 = arith.addf %619, %10 : vector<2x256xf32>
    %621 = arith.negf %620 : vector<2x256xf32>
    %622 = math.exp %621 : vector<2x256xf32>
    %cst_78 = arith.constant 1.000000e+00 : f32
    %623 = vector.broadcast %cst_78 : f32 to vector<2x256xf32>
    %624 = arith.addf %623, %622 : vector<2x256xf32>
    %625 = arith.divf %623, %624 : vector<2x256xf32>
    %626 = math.tanh %620 : vector<2x256xf32>
    %627 = vector.extract_strided_slice %625 {offsets = [0, 0], sizes = [2, 64], strides = [1, 1]} : vector<2x256xf32> to vector<2x64xf32>
    %628 = vector.extract_strided_slice %625 {offsets = [0, 64], sizes = [2, 64], strides = [1, 1]} : vector<2x256xf32> to vector<2x64xf32>
    %629 = vector.extract_strided_slice %626 {offsets = [0, 128], sizes = [2, 64], strides = [1, 1]} : vector<2x256xf32> to vector<2x64xf32>
    %630 = vector.extract_strided_slice %625 {offsets = [0, 192], sizes = [2, 64], strides = [1, 1]} : vector<2x256xf32> to vector<2x64xf32>
    %631 = arith.mulf %628, %593 : vector<2x64xf32>
    %632 = arith.mulf %627, %629 : vector<2x64xf32>
    %633 = arith.addf %631, %632 : vector<2x64xf32>
    %634 = math.tanh %633 : vector<2x64xf32>
    %635 = arith.mulf %630, %634 : vector<2x64xf32>
    %636 = tpu.concatenate %635, %615 in 1 : vector<2x64xf32>, vector<2x64xf32> -> vector<2x128xf32>
    %cst_79 = arith.constant dense<0.000000e+00> : vector<2x512xf32>
    %637 = tpu.matmul %636, %4, %cst_79 {dimension_numbers = #tpu.dot_dimension_numbers<[1], [0], [0], [1], [0, 0, 1, 1], [], []>} : vector<2x128xf32>, vector<128x512xf32>, vector<2x512xf32> -> vector<2x512xf32>
    %638 = vector.extract_strided_slice %637 {offsets = [0, 0], sizes = [2, 256], strides = [1, 1]} : vector<2x512xf32> to vector<2x256xf32>
    %639 = arith.addf %638, %13 : vector<2x256xf32>
    %640 = vector.extract_strided_slice %637 {offsets = [0, 256], sizes = [2, 256], strides = [1, 1]} : vector<2x512xf32> to vector<2x256xf32>
    %641 = arith.negf %639 : vector<2x256xf32>
    %642 = math.exp %641 : vector<2x256xf32>
    %cst_80 = arith.constant 1.000000e+00 : f32
    %643 = vector.broadcast %cst_80 : f32 to vector<2x256xf32>
    %644 = arith.addf %643, %642 : vector<2x256xf32>
    %645 = arith.divf %643, %644 : vector<2x256xf32>
    %646 = math.tanh %639 : vector<2x256xf32>
    %647 = vector.extract_strided_slice %645 {offsets = [0, 0], sizes = [2, 64], strides = [1, 1]} : vector<2x256xf32> to vector<2x64xf32>
    %648 = vector.extract_strided_slice %645 {offsets = [0, 64], sizes = [2, 64], strides = [1, 1]} : vector<2x256xf32> to vector<2x64xf32>
    %649 = vector.extract_strided_slice %646 {offsets = [0, 128], sizes = [2, 64], strides = [1, 1]} : vector<2x256xf32> to vector<2x64xf32>
    %650 = vector.extract_strided_slice %645 {offsets = [0, 192], sizes = [2, 64], strides = [1, 1]} : vector<2x256xf32> to vector<2x64xf32>
    %651 = arith.mulf %648, %613 : vector<2x64xf32>
    %652 = arith.mulf %647, %649 : vector<2x64xf32>
    %653 = arith.addf %651, %652 : vector<2x64xf32>
    %654 = math.tanh %653 : vector<2x64xf32>
    %655 = arith.mulf %650, %654 : vector<2x64xf32>
    %c0_81 = arith.constant 0 : index
    %c16 = arith.constant 16 : index
    %656 = vector.load %arg0[%c0_81, %c16] : memref<2x24xf32, #tpu.memory_space<vmem>>, vector<2x1xf32>
    %657 = vector.broadcast %656 : vector<2x1xf32> to vector<2x256xf32>
    %658 = arith.mulf %657, %7 : vector<2x256xf32>
    %659 = arith.addf %658, %640 : vector<2x256xf32>
    %660 = arith.addf %659, %10 : vector<2x256xf32>
    %661 = arith.negf %660 : vector<2x256xf32>
    %662 = math.exp %661 : vector<2x256xf32>
    %cst_82 = arith.constant 1.000000e+00 : f32
    %663 = vector.broadcast %cst_82 : f32 to vector<2x256xf32>
    %664 = arith.addf %663, %662 : vector<2x256xf32>
    %665 = arith.divf %663, %664 : vector<2x256xf32>
    %666 = math.tanh %660 : vector<2x256xf32>
    %667 = vector.extract_strided_slice %665 {offsets = [0, 0], sizes = [2, 64], strides = [1, 1]} : vector<2x256xf32> to vector<2x64xf32>
    %668 = vector.extract_strided_slice %665 {offsets = [0, 64], sizes = [2, 64], strides = [1, 1]} : vector<2x256xf32> to vector<2x64xf32>
    %669 = vector.extract_strided_slice %666 {offsets = [0, 128], sizes = [2, 64], strides = [1, 1]} : vector<2x256xf32> to vector<2x64xf32>
    %670 = vector.extract_strided_slice %665 {offsets = [0, 192], sizes = [2, 64], strides = [1, 1]} : vector<2x256xf32> to vector<2x64xf32>
    %671 = arith.mulf %668, %633 : vector<2x64xf32>
    %672 = arith.mulf %667, %669 : vector<2x64xf32>
    %673 = arith.addf %671, %672 : vector<2x64xf32>
    %674 = math.tanh %673 : vector<2x64xf32>
    %675 = arith.mulf %670, %674 : vector<2x64xf32>
    %676 = tpu.concatenate %675, %655 in 1 : vector<2x64xf32>, vector<2x64xf32> -> vector<2x128xf32>
    %cst_83 = arith.constant dense<0.000000e+00> : vector<2x512xf32>
    %677 = tpu.matmul %676, %4, %cst_83 {dimension_numbers = #tpu.dot_dimension_numbers<[1], [0], [0], [1], [0, 0, 1, 1], [], []>} : vector<2x128xf32>, vector<128x512xf32>, vector<2x512xf32> -> vector<2x512xf32>
    %678 = vector.extract_strided_slice %677 {offsets = [0, 0], sizes = [2, 256], strides = [1, 1]} : vector<2x512xf32> to vector<2x256xf32>
    %679 = arith.addf %678, %13 : vector<2x256xf32>
    %680 = vector.extract_strided_slice %677 {offsets = [0, 256], sizes = [2, 256], strides = [1, 1]} : vector<2x512xf32> to vector<2x256xf32>
    %681 = arith.negf %679 : vector<2x256xf32>
    %682 = math.exp %681 : vector<2x256xf32>
    %cst_84 = arith.constant 1.000000e+00 : f32
    %683 = vector.broadcast %cst_84 : f32 to vector<2x256xf32>
    %684 = arith.addf %683, %682 : vector<2x256xf32>
    %685 = arith.divf %683, %684 : vector<2x256xf32>
    %686 = math.tanh %679 : vector<2x256xf32>
    %687 = vector.extract_strided_slice %685 {offsets = [0, 0], sizes = [2, 64], strides = [1, 1]} : vector<2x256xf32> to vector<2x64xf32>
    %688 = vector.extract_strided_slice %685 {offsets = [0, 64], sizes = [2, 64], strides = [1, 1]} : vector<2x256xf32> to vector<2x64xf32>
    %689 = vector.extract_strided_slice %686 {offsets = [0, 128], sizes = [2, 64], strides = [1, 1]} : vector<2x256xf32> to vector<2x64xf32>
    %690 = vector.extract_strided_slice %685 {offsets = [0, 192], sizes = [2, 64], strides = [1, 1]} : vector<2x256xf32> to vector<2x64xf32>
    %691 = arith.mulf %688, %653 : vector<2x64xf32>
    %692 = arith.mulf %687, %689 : vector<2x64xf32>
    %693 = arith.addf %691, %692 : vector<2x64xf32>
    %694 = math.tanh %693 : vector<2x64xf32>
    %695 = arith.mulf %690, %694 : vector<2x64xf32>
    %c0_85 = arith.constant 0 : index
    %c17 = arith.constant 17 : index
    %696 = vector.load %arg0[%c0_85, %c17] : memref<2x24xf32, #tpu.memory_space<vmem>>, vector<2x1xf32>
    %697 = vector.broadcast %696 : vector<2x1xf32> to vector<2x256xf32>
    %698 = arith.mulf %697, %7 : vector<2x256xf32>
    %699 = arith.addf %698, %680 : vector<2x256xf32>
    %700 = arith.addf %699, %10 : vector<2x256xf32>
    %701 = arith.negf %700 : vector<2x256xf32>
    %702 = math.exp %701 : vector<2x256xf32>
    %cst_86 = arith.constant 1.000000e+00 : f32
    %703 = vector.broadcast %cst_86 : f32 to vector<2x256xf32>
    %704 = arith.addf %703, %702 : vector<2x256xf32>
    %705 = arith.divf %703, %704 : vector<2x256xf32>
    %706 = math.tanh %700 : vector<2x256xf32>
    %707 = vector.extract_strided_slice %705 {offsets = [0, 0], sizes = [2, 64], strides = [1, 1]} : vector<2x256xf32> to vector<2x64xf32>
    %708 = vector.extract_strided_slice %705 {offsets = [0, 64], sizes = [2, 64], strides = [1, 1]} : vector<2x256xf32> to vector<2x64xf32>
    %709 = vector.extract_strided_slice %706 {offsets = [0, 128], sizes = [2, 64], strides = [1, 1]} : vector<2x256xf32> to vector<2x64xf32>
    %710 = vector.extract_strided_slice %705 {offsets = [0, 192], sizes = [2, 64], strides = [1, 1]} : vector<2x256xf32> to vector<2x64xf32>
    %711 = arith.mulf %708, %673 : vector<2x64xf32>
    %712 = arith.mulf %707, %709 : vector<2x64xf32>
    %713 = arith.addf %711, %712 : vector<2x64xf32>
    %714 = math.tanh %713 : vector<2x64xf32>
    %715 = arith.mulf %710, %714 : vector<2x64xf32>
    %716 = tpu.concatenate %715, %695 in 1 : vector<2x64xf32>, vector<2x64xf32> -> vector<2x128xf32>
    %cst_87 = arith.constant dense<0.000000e+00> : vector<2x512xf32>
    %717 = tpu.matmul %716, %4, %cst_87 {dimension_numbers = #tpu.dot_dimension_numbers<[1], [0], [0], [1], [0, 0, 1, 1], [], []>} : vector<2x128xf32>, vector<128x512xf32>, vector<2x512xf32> -> vector<2x512xf32>
    %718 = vector.extract_strided_slice %717 {offsets = [0, 0], sizes = [2, 256], strides = [1, 1]} : vector<2x512xf32> to vector<2x256xf32>
    %719 = arith.addf %718, %13 : vector<2x256xf32>
    %720 = vector.extract_strided_slice %717 {offsets = [0, 256], sizes = [2, 256], strides = [1, 1]} : vector<2x512xf32> to vector<2x256xf32>
    %721 = arith.negf %719 : vector<2x256xf32>
    %722 = math.exp %721 : vector<2x256xf32>
    %cst_88 = arith.constant 1.000000e+00 : f32
    %723 = vector.broadcast %cst_88 : f32 to vector<2x256xf32>
    %724 = arith.addf %723, %722 : vector<2x256xf32>
    %725 = arith.divf %723, %724 : vector<2x256xf32>
    %726 = math.tanh %719 : vector<2x256xf32>
    %727 = vector.extract_strided_slice %725 {offsets = [0, 0], sizes = [2, 64], strides = [1, 1]} : vector<2x256xf32> to vector<2x64xf32>
    %728 = vector.extract_strided_slice %725 {offsets = [0, 64], sizes = [2, 64], strides = [1, 1]} : vector<2x256xf32> to vector<2x64xf32>
    %729 = vector.extract_strided_slice %726 {offsets = [0, 128], sizes = [2, 64], strides = [1, 1]} : vector<2x256xf32> to vector<2x64xf32>
    %730 = vector.extract_strided_slice %725 {offsets = [0, 192], sizes = [2, 64], strides = [1, 1]} : vector<2x256xf32> to vector<2x64xf32>
    %731 = arith.mulf %728, %693 : vector<2x64xf32>
    %732 = arith.mulf %727, %729 : vector<2x64xf32>
    %733 = arith.addf %731, %732 : vector<2x64xf32>
    %734 = math.tanh %733 : vector<2x64xf32>
    %735 = arith.mulf %730, %734 : vector<2x64xf32>
    %c0_89 = arith.constant 0 : index
    %c18 = arith.constant 18 : index
    %736 = vector.load %arg0[%c0_89, %c18] : memref<2x24xf32, #tpu.memory_space<vmem>>, vector<2x1xf32>
    %737 = vector.broadcast %736 : vector<2x1xf32> to vector<2x256xf32>
    %738 = arith.mulf %737, %7 : vector<2x256xf32>
    %739 = arith.addf %738, %720 : vector<2x256xf32>
    %740 = arith.addf %739, %10 : vector<2x256xf32>
    %741 = arith.negf %740 : vector<2x256xf32>
    %742 = math.exp %741 : vector<2x256xf32>
    %cst_90 = arith.constant 1.000000e+00 : f32
    %743 = vector.broadcast %cst_90 : f32 to vector<2x256xf32>
    %744 = arith.addf %743, %742 : vector<2x256xf32>
    %745 = arith.divf %743, %744 : vector<2x256xf32>
    %746 = math.tanh %740 : vector<2x256xf32>
    %747 = vector.extract_strided_slice %745 {offsets = [0, 0], sizes = [2, 64], strides = [1, 1]} : vector<2x256xf32> to vector<2x64xf32>
    %748 = vector.extract_strided_slice %745 {offsets = [0, 64], sizes = [2, 64], strides = [1, 1]} : vector<2x256xf32> to vector<2x64xf32>
    %749 = vector.extract_strided_slice %746 {offsets = [0, 128], sizes = [2, 64], strides = [1, 1]} : vector<2x256xf32> to vector<2x64xf32>
    %750 = vector.extract_strided_slice %745 {offsets = [0, 192], sizes = [2, 64], strides = [1, 1]} : vector<2x256xf32> to vector<2x64xf32>
    %751 = arith.mulf %748, %713 : vector<2x64xf32>
    %752 = arith.mulf %747, %749 : vector<2x64xf32>
    %753 = arith.addf %751, %752 : vector<2x64xf32>
    %754 = math.tanh %753 : vector<2x64xf32>
    %755 = arith.mulf %750, %754 : vector<2x64xf32>
    %756 = tpu.concatenate %755, %735 in 1 : vector<2x64xf32>, vector<2x64xf32> -> vector<2x128xf32>
    %cst_91 = arith.constant dense<0.000000e+00> : vector<2x512xf32>
    %757 = tpu.matmul %756, %4, %cst_91 {dimension_numbers = #tpu.dot_dimension_numbers<[1], [0], [0], [1], [0, 0, 1, 1], [], []>} : vector<2x128xf32>, vector<128x512xf32>, vector<2x512xf32> -> vector<2x512xf32>
    %758 = vector.extract_strided_slice %757 {offsets = [0, 0], sizes = [2, 256], strides = [1, 1]} : vector<2x512xf32> to vector<2x256xf32>
    %759 = arith.addf %758, %13 : vector<2x256xf32>
    %760 = vector.extract_strided_slice %757 {offsets = [0, 256], sizes = [2, 256], strides = [1, 1]} : vector<2x512xf32> to vector<2x256xf32>
    %761 = arith.negf %759 : vector<2x256xf32>
    %762 = math.exp %761 : vector<2x256xf32>
    %cst_92 = arith.constant 1.000000e+00 : f32
    %763 = vector.broadcast %cst_92 : f32 to vector<2x256xf32>
    %764 = arith.addf %763, %762 : vector<2x256xf32>
    %765 = arith.divf %763, %764 : vector<2x256xf32>
    %766 = math.tanh %759 : vector<2x256xf32>
    %767 = vector.extract_strided_slice %765 {offsets = [0, 0], sizes = [2, 64], strides = [1, 1]} : vector<2x256xf32> to vector<2x64xf32>
    %768 = vector.extract_strided_slice %765 {offsets = [0, 64], sizes = [2, 64], strides = [1, 1]} : vector<2x256xf32> to vector<2x64xf32>
    %769 = vector.extract_strided_slice %766 {offsets = [0, 128], sizes = [2, 64], strides = [1, 1]} : vector<2x256xf32> to vector<2x64xf32>
    %770 = vector.extract_strided_slice %765 {offsets = [0, 192], sizes = [2, 64], strides = [1, 1]} : vector<2x256xf32> to vector<2x64xf32>
    %771 = arith.mulf %768, %733 : vector<2x64xf32>
    %772 = arith.mulf %767, %769 : vector<2x64xf32>
    %773 = arith.addf %771, %772 : vector<2x64xf32>
    %774 = math.tanh %773 : vector<2x64xf32>
    %775 = arith.mulf %770, %774 : vector<2x64xf32>
    %c0_93 = arith.constant 0 : index
    %c19 = arith.constant 19 : index
    %776 = vector.load %arg0[%c0_93, %c19] : memref<2x24xf32, #tpu.memory_space<vmem>>, vector<2x1xf32>
    %777 = vector.broadcast %776 : vector<2x1xf32> to vector<2x256xf32>
    %778 = arith.mulf %777, %7 : vector<2x256xf32>
    %779 = arith.addf %778, %760 : vector<2x256xf32>
    %780 = arith.addf %779, %10 : vector<2x256xf32>
    %781 = arith.negf %780 : vector<2x256xf32>
    %782 = math.exp %781 : vector<2x256xf32>
    %cst_94 = arith.constant 1.000000e+00 : f32
    %783 = vector.broadcast %cst_94 : f32 to vector<2x256xf32>
    %784 = arith.addf %783, %782 : vector<2x256xf32>
    %785 = arith.divf %783, %784 : vector<2x256xf32>
    %786 = math.tanh %780 : vector<2x256xf32>
    %787 = vector.extract_strided_slice %785 {offsets = [0, 0], sizes = [2, 64], strides = [1, 1]} : vector<2x256xf32> to vector<2x64xf32>
    %788 = vector.extract_strided_slice %785 {offsets = [0, 64], sizes = [2, 64], strides = [1, 1]} : vector<2x256xf32> to vector<2x64xf32>
    %789 = vector.extract_strided_slice %786 {offsets = [0, 128], sizes = [2, 64], strides = [1, 1]} : vector<2x256xf32> to vector<2x64xf32>
    %790 = vector.extract_strided_slice %785 {offsets = [0, 192], sizes = [2, 64], strides = [1, 1]} : vector<2x256xf32> to vector<2x64xf32>
    %791 = arith.mulf %788, %753 : vector<2x64xf32>
    %792 = arith.mulf %787, %789 : vector<2x64xf32>
    %793 = arith.addf %791, %792 : vector<2x64xf32>
    %794 = math.tanh %793 : vector<2x64xf32>
    %795 = arith.mulf %790, %794 : vector<2x64xf32>
    %796 = tpu.concatenate %795, %775 in 1 : vector<2x64xf32>, vector<2x64xf32> -> vector<2x128xf32>
    %cst_95 = arith.constant dense<0.000000e+00> : vector<2x512xf32>
    %797 = tpu.matmul %796, %4, %cst_95 {dimension_numbers = #tpu.dot_dimension_numbers<[1], [0], [0], [1], [0, 0, 1, 1], [], []>} : vector<2x128xf32>, vector<128x512xf32>, vector<2x512xf32> -> vector<2x512xf32>
    %798 = vector.extract_strided_slice %797 {offsets = [0, 0], sizes = [2, 256], strides = [1, 1]} : vector<2x512xf32> to vector<2x256xf32>
    %799 = arith.addf %798, %13 : vector<2x256xf32>
    %800 = vector.extract_strided_slice %797 {offsets = [0, 256], sizes = [2, 256], strides = [1, 1]} : vector<2x512xf32> to vector<2x256xf32>
    %801 = arith.negf %799 : vector<2x256xf32>
    %802 = math.exp %801 : vector<2x256xf32>
    %cst_96 = arith.constant 1.000000e+00 : f32
    %803 = vector.broadcast %cst_96 : f32 to vector<2x256xf32>
    %804 = arith.addf %803, %802 : vector<2x256xf32>
    %805 = arith.divf %803, %804 : vector<2x256xf32>
    %806 = math.tanh %799 : vector<2x256xf32>
    %807 = vector.extract_strided_slice %805 {offsets = [0, 0], sizes = [2, 64], strides = [1, 1]} : vector<2x256xf32> to vector<2x64xf32>
    %808 = vector.extract_strided_slice %805 {offsets = [0, 64], sizes = [2, 64], strides = [1, 1]} : vector<2x256xf32> to vector<2x64xf32>
    %809 = vector.extract_strided_slice %806 {offsets = [0, 128], sizes = [2, 64], strides = [1, 1]} : vector<2x256xf32> to vector<2x64xf32>
    %810 = vector.extract_strided_slice %805 {offsets = [0, 192], sizes = [2, 64], strides = [1, 1]} : vector<2x256xf32> to vector<2x64xf32>
    %811 = arith.mulf %808, %773 : vector<2x64xf32>
    %812 = arith.mulf %807, %809 : vector<2x64xf32>
    %813 = arith.addf %811, %812 : vector<2x64xf32>
    %814 = math.tanh %813 : vector<2x64xf32>
    %815 = arith.mulf %810, %814 : vector<2x64xf32>
    %c0_97 = arith.constant 0 : index
    %c20 = arith.constant 20 : index
    %816 = vector.load %arg0[%c0_97, %c20] : memref<2x24xf32, #tpu.memory_space<vmem>>, vector<2x1xf32>
    %817 = vector.broadcast %816 : vector<2x1xf32> to vector<2x256xf32>
    %818 = arith.mulf %817, %7 : vector<2x256xf32>
    %819 = arith.addf %818, %800 : vector<2x256xf32>
    %820 = arith.addf %819, %10 : vector<2x256xf32>
    %821 = arith.negf %820 : vector<2x256xf32>
    %822 = math.exp %821 : vector<2x256xf32>
    %cst_98 = arith.constant 1.000000e+00 : f32
    %823 = vector.broadcast %cst_98 : f32 to vector<2x256xf32>
    %824 = arith.addf %823, %822 : vector<2x256xf32>
    %825 = arith.divf %823, %824 : vector<2x256xf32>
    %826 = math.tanh %820 : vector<2x256xf32>
    %827 = vector.extract_strided_slice %825 {offsets = [0, 0], sizes = [2, 64], strides = [1, 1]} : vector<2x256xf32> to vector<2x64xf32>
    %828 = vector.extract_strided_slice %825 {offsets = [0, 64], sizes = [2, 64], strides = [1, 1]} : vector<2x256xf32> to vector<2x64xf32>
    %829 = vector.extract_strided_slice %826 {offsets = [0, 128], sizes = [2, 64], strides = [1, 1]} : vector<2x256xf32> to vector<2x64xf32>
    %830 = vector.extract_strided_slice %825 {offsets = [0, 192], sizes = [2, 64], strides = [1, 1]} : vector<2x256xf32> to vector<2x64xf32>
    %831 = arith.mulf %828, %793 : vector<2x64xf32>
    %832 = arith.mulf %827, %829 : vector<2x64xf32>
    %833 = arith.addf %831, %832 : vector<2x64xf32>
    %834 = math.tanh %833 : vector<2x64xf32>
    %835 = arith.mulf %830, %834 : vector<2x64xf32>
    %836 = tpu.concatenate %835, %815 in 1 : vector<2x64xf32>, vector<2x64xf32> -> vector<2x128xf32>
    %cst_99 = arith.constant dense<0.000000e+00> : vector<2x512xf32>
    %837 = tpu.matmul %836, %4, %cst_99 {dimension_numbers = #tpu.dot_dimension_numbers<[1], [0], [0], [1], [0, 0, 1, 1], [], []>} : vector<2x128xf32>, vector<128x512xf32>, vector<2x512xf32> -> vector<2x512xf32>
    %838 = vector.extract_strided_slice %837 {offsets = [0, 0], sizes = [2, 256], strides = [1, 1]} : vector<2x512xf32> to vector<2x256xf32>
    %839 = arith.addf %838, %13 : vector<2x256xf32>
    %840 = vector.extract_strided_slice %837 {offsets = [0, 256], sizes = [2, 256], strides = [1, 1]} : vector<2x512xf32> to vector<2x256xf32>
    %841 = arith.negf %839 : vector<2x256xf32>
    %842 = math.exp %841 : vector<2x256xf32>
    %cst_100 = arith.constant 1.000000e+00 : f32
    %843 = vector.broadcast %cst_100 : f32 to vector<2x256xf32>
    %844 = arith.addf %843, %842 : vector<2x256xf32>
    %845 = arith.divf %843, %844 : vector<2x256xf32>
    %846 = math.tanh %839 : vector<2x256xf32>
    %847 = vector.extract_strided_slice %845 {offsets = [0, 0], sizes = [2, 64], strides = [1, 1]} : vector<2x256xf32> to vector<2x64xf32>
    %848 = vector.extract_strided_slice %845 {offsets = [0, 64], sizes = [2, 64], strides = [1, 1]} : vector<2x256xf32> to vector<2x64xf32>
    %849 = vector.extract_strided_slice %846 {offsets = [0, 128], sizes = [2, 64], strides = [1, 1]} : vector<2x256xf32> to vector<2x64xf32>
    %850 = vector.extract_strided_slice %845 {offsets = [0, 192], sizes = [2, 64], strides = [1, 1]} : vector<2x256xf32> to vector<2x64xf32>
    %851 = arith.mulf %848, %813 : vector<2x64xf32>
    %852 = arith.mulf %847, %849 : vector<2x64xf32>
    %853 = arith.addf %851, %852 : vector<2x64xf32>
    %854 = math.tanh %853 : vector<2x64xf32>
    %855 = arith.mulf %850, %854 : vector<2x64xf32>
    %c0_101 = arith.constant 0 : index
    %c21 = arith.constant 21 : index
    %856 = vector.load %arg0[%c0_101, %c21] : memref<2x24xf32, #tpu.memory_space<vmem>>, vector<2x1xf32>
    %857 = vector.broadcast %856 : vector<2x1xf32> to vector<2x256xf32>
    %858 = arith.mulf %857, %7 : vector<2x256xf32>
    %859 = arith.addf %858, %840 : vector<2x256xf32>
    %860 = arith.addf %859, %10 : vector<2x256xf32>
    %861 = arith.negf %860 : vector<2x256xf32>
    %862 = math.exp %861 : vector<2x256xf32>
    %cst_102 = arith.constant 1.000000e+00 : f32
    %863 = vector.broadcast %cst_102 : f32 to vector<2x256xf32>
    %864 = arith.addf %863, %862 : vector<2x256xf32>
    %865 = arith.divf %863, %864 : vector<2x256xf32>
    %866 = math.tanh %860 : vector<2x256xf32>
    %867 = vector.extract_strided_slice %865 {offsets = [0, 0], sizes = [2, 64], strides = [1, 1]} : vector<2x256xf32> to vector<2x64xf32>
    %868 = vector.extract_strided_slice %865 {offsets = [0, 64], sizes = [2, 64], strides = [1, 1]} : vector<2x256xf32> to vector<2x64xf32>
    %869 = vector.extract_strided_slice %866 {offsets = [0, 128], sizes = [2, 64], strides = [1, 1]} : vector<2x256xf32> to vector<2x64xf32>
    %870 = vector.extract_strided_slice %865 {offsets = [0, 192], sizes = [2, 64], strides = [1, 1]} : vector<2x256xf32> to vector<2x64xf32>
    %871 = arith.mulf %868, %833 : vector<2x64xf32>
    %872 = arith.mulf %867, %869 : vector<2x64xf32>
    %873 = arith.addf %871, %872 : vector<2x64xf32>
    %874 = math.tanh %873 : vector<2x64xf32>
    %875 = arith.mulf %870, %874 : vector<2x64xf32>
    %876 = tpu.concatenate %875, %855 in 1 : vector<2x64xf32>, vector<2x64xf32> -> vector<2x128xf32>
    %cst_103 = arith.constant dense<0.000000e+00> : vector<2x512xf32>
    %877 = tpu.matmul %876, %4, %cst_103 {dimension_numbers = #tpu.dot_dimension_numbers<[1], [0], [0], [1], [0, 0, 1, 1], [], []>} : vector<2x128xf32>, vector<128x512xf32>, vector<2x512xf32> -> vector<2x512xf32>
    %878 = vector.extract_strided_slice %877 {offsets = [0, 0], sizes = [2, 256], strides = [1, 1]} : vector<2x512xf32> to vector<2x256xf32>
    %879 = arith.addf %878, %13 : vector<2x256xf32>
    %880 = vector.extract_strided_slice %877 {offsets = [0, 256], sizes = [2, 256], strides = [1, 1]} : vector<2x512xf32> to vector<2x256xf32>
    %881 = arith.negf %879 : vector<2x256xf32>
    %882 = math.exp %881 : vector<2x256xf32>
    %cst_104 = arith.constant 1.000000e+00 : f32
    %883 = vector.broadcast %cst_104 : f32 to vector<2x256xf32>
    %884 = arith.addf %883, %882 : vector<2x256xf32>
    %885 = arith.divf %883, %884 : vector<2x256xf32>
    %886 = math.tanh %879 : vector<2x256xf32>
    %887 = vector.extract_strided_slice %885 {offsets = [0, 0], sizes = [2, 64], strides = [1, 1]} : vector<2x256xf32> to vector<2x64xf32>
    %888 = vector.extract_strided_slice %885 {offsets = [0, 64], sizes = [2, 64], strides = [1, 1]} : vector<2x256xf32> to vector<2x64xf32>
    %889 = vector.extract_strided_slice %886 {offsets = [0, 128], sizes = [2, 64], strides = [1, 1]} : vector<2x256xf32> to vector<2x64xf32>
    %890 = vector.extract_strided_slice %885 {offsets = [0, 192], sizes = [2, 64], strides = [1, 1]} : vector<2x256xf32> to vector<2x64xf32>
    %891 = arith.mulf %888, %853 : vector<2x64xf32>
    %892 = arith.mulf %887, %889 : vector<2x64xf32>
    %893 = arith.addf %891, %892 : vector<2x64xf32>
    %894 = math.tanh %893 : vector<2x64xf32>
    %895 = arith.mulf %890, %894 : vector<2x64xf32>
    %c0_105 = arith.constant 0 : index
    %c22 = arith.constant 22 : index
    %896 = vector.load %arg0[%c0_105, %c22] : memref<2x24xf32, #tpu.memory_space<vmem>>, vector<2x1xf32>
    %897 = vector.broadcast %896 : vector<2x1xf32> to vector<2x256xf32>
    %898 = arith.mulf %897, %7 : vector<2x256xf32>
    %899 = arith.addf %898, %880 : vector<2x256xf32>
    %900 = arith.addf %899, %10 : vector<2x256xf32>
    %901 = arith.negf %900 : vector<2x256xf32>
    %902 = math.exp %901 : vector<2x256xf32>
    %cst_106 = arith.constant 1.000000e+00 : f32
    %903 = vector.broadcast %cst_106 : f32 to vector<2x256xf32>
    %904 = arith.addf %903, %902 : vector<2x256xf32>
    %905 = arith.divf %903, %904 : vector<2x256xf32>
    %906 = math.tanh %900 : vector<2x256xf32>
    %907 = vector.extract_strided_slice %905 {offsets = [0, 0], sizes = [2, 64], strides = [1, 1]} : vector<2x256xf32> to vector<2x64xf32>
    %908 = vector.extract_strided_slice %905 {offsets = [0, 64], sizes = [2, 64], strides = [1, 1]} : vector<2x256xf32> to vector<2x64xf32>
    %909 = vector.extract_strided_slice %906 {offsets = [0, 128], sizes = [2, 64], strides = [1, 1]} : vector<2x256xf32> to vector<2x64xf32>
    %910 = vector.extract_strided_slice %905 {offsets = [0, 192], sizes = [2, 64], strides = [1, 1]} : vector<2x256xf32> to vector<2x64xf32>
    %911 = arith.mulf %908, %873 : vector<2x64xf32>
    %912 = arith.mulf %907, %909 : vector<2x64xf32>
    %913 = arith.addf %911, %912 : vector<2x64xf32>
    %914 = math.tanh %913 : vector<2x64xf32>
    %915 = arith.mulf %910, %914 : vector<2x64xf32>
    %916 = tpu.concatenate %915, %895 in 1 : vector<2x64xf32>, vector<2x64xf32> -> vector<2x128xf32>
    %cst_107 = arith.constant dense<0.000000e+00> : vector<2x512xf32>
    %917 = tpu.matmul %916, %4, %cst_107 {dimension_numbers = #tpu.dot_dimension_numbers<[1], [0], [0], [1], [0, 0, 1, 1], [], []>} : vector<2x128xf32>, vector<128x512xf32>, vector<2x512xf32> -> vector<2x512xf32>
    %918 = vector.extract_strided_slice %917 {offsets = [0, 0], sizes = [2, 256], strides = [1, 1]} : vector<2x512xf32> to vector<2x256xf32>
    %919 = arith.addf %918, %13 : vector<2x256xf32>
    %920 = vector.extract_strided_slice %917 {offsets = [0, 256], sizes = [2, 256], strides = [1, 1]} : vector<2x512xf32> to vector<2x256xf32>
    %921 = arith.negf %919 : vector<2x256xf32>
    %922 = math.exp %921 : vector<2x256xf32>
    %cst_108 = arith.constant 1.000000e+00 : f32
    %923 = vector.broadcast %cst_108 : f32 to vector<2x256xf32>
    %924 = arith.addf %923, %922 : vector<2x256xf32>
    %925 = arith.divf %923, %924 : vector<2x256xf32>
    %926 = math.tanh %919 : vector<2x256xf32>
    %927 = vector.extract_strided_slice %925 {offsets = [0, 0], sizes = [2, 64], strides = [1, 1]} : vector<2x256xf32> to vector<2x64xf32>
    %928 = vector.extract_strided_slice %925 {offsets = [0, 64], sizes = [2, 64], strides = [1, 1]} : vector<2x256xf32> to vector<2x64xf32>
    %929 = vector.extract_strided_slice %926 {offsets = [0, 128], sizes = [2, 64], strides = [1, 1]} : vector<2x256xf32> to vector<2x64xf32>
    %930 = vector.extract_strided_slice %925 {offsets = [0, 192], sizes = [2, 64], strides = [1, 1]} : vector<2x256xf32> to vector<2x64xf32>
    %931 = arith.mulf %928, %893 : vector<2x64xf32>
    %932 = arith.mulf %927, %929 : vector<2x64xf32>
    %933 = arith.addf %931, %932 : vector<2x64xf32>
    %934 = math.tanh %933 : vector<2x64xf32>
    %935 = arith.mulf %930, %934 : vector<2x64xf32>
    %c0_109 = arith.constant 0 : index
    %c23 = arith.constant 23 : index
    %936 = vector.load %arg0[%c0_109, %c23] : memref<2x24xf32, #tpu.memory_space<vmem>>, vector<2x1xf32>
    %937 = vector.broadcast %936 : vector<2x1xf32> to vector<2x256xf32>
    %938 = arith.mulf %937, %7 : vector<2x256xf32>
    %939 = arith.addf %938, %920 : vector<2x256xf32>
    %940 = arith.addf %939, %10 : vector<2x256xf32>
    %941 = arith.negf %940 : vector<2x256xf32>
    %942 = math.exp %941 : vector<2x256xf32>
    %cst_110 = arith.constant 1.000000e+00 : f32
    %943 = vector.broadcast %cst_110 : f32 to vector<2x256xf32>
    %944 = arith.addf %943, %942 : vector<2x256xf32>
    %945 = arith.divf %943, %944 : vector<2x256xf32>
    %946 = math.tanh %940 : vector<2x256xf32>
    %947 = vector.extract_strided_slice %945 {offsets = [0, 0], sizes = [2, 64], strides = [1, 1]} : vector<2x256xf32> to vector<2x64xf32>
    %948 = vector.extract_strided_slice %945 {offsets = [0, 64], sizes = [2, 64], strides = [1, 1]} : vector<2x256xf32> to vector<2x64xf32>
    %949 = vector.extract_strided_slice %946 {offsets = [0, 128], sizes = [2, 64], strides = [1, 1]} : vector<2x256xf32> to vector<2x64xf32>
    %950 = vector.extract_strided_slice %945 {offsets = [0, 192], sizes = [2, 64], strides = [1, 1]} : vector<2x256xf32> to vector<2x64xf32>
    %951 = arith.mulf %948, %913 : vector<2x64xf32>
    %952 = arith.mulf %947, %949 : vector<2x64xf32>
    %953 = arith.addf %951, %952 : vector<2x64xf32>
    %954 = math.tanh %953 : vector<2x64xf32>
    %955 = arith.mulf %950, %954 : vector<2x64xf32>
    %956 = tpu.concatenate %955, %935 in 1 : vector<2x64xf32>, vector<2x64xf32> -> vector<2x128xf32>
    %cst_111 = arith.constant dense<0.000000e+00> : vector<2x512xf32>
    %957 = tpu.matmul %956, %4, %cst_111 {dimension_numbers = #tpu.dot_dimension_numbers<[1], [0], [0], [1], [0, 0, 1, 1], [], []>} : vector<2x128xf32>, vector<128x512xf32>, vector<2x512xf32> -> vector<2x512xf32>
    %958 = vector.extract_strided_slice %957 {offsets = [0, 0], sizes = [2, 256], strides = [1, 1]} : vector<2x512xf32> to vector<2x256xf32>
    %959 = arith.addf %958, %13 : vector<2x256xf32>
    %960 = arith.negf %959 : vector<2x256xf32>
    %961 = math.exp %960 : vector<2x256xf32>
    %cst_112 = arith.constant 1.000000e+00 : f32
    %962 = vector.broadcast %cst_112 : f32 to vector<2x256xf32>
    %963 = arith.addf %962, %961 : vector<2x256xf32>
    %964 = arith.divf %962, %963 : vector<2x256xf32>
    %965 = math.tanh %959 : vector<2x256xf32>
    %966 = vector.extract_strided_slice %964 {offsets = [0, 0], sizes = [2, 64], strides = [1, 1]} : vector<2x256xf32> to vector<2x64xf32>
    %967 = vector.extract_strided_slice %964 {offsets = [0, 64], sizes = [2, 64], strides = [1, 1]} : vector<2x256xf32> to vector<2x64xf32>
    %968 = vector.extract_strided_slice %965 {offsets = [0, 128], sizes = [2, 64], strides = [1, 1]} : vector<2x256xf32> to vector<2x64xf32>
    %969 = vector.extract_strided_slice %964 {offsets = [0, 192], sizes = [2, 64], strides = [1, 1]} : vector<2x256xf32> to vector<2x64xf32>
    %970 = arith.mulf %967, %933 : vector<2x64xf32>
    %971 = arith.mulf %966, %968 : vector<2x64xf32>
    %972 = arith.addf %970, %971 : vector<2x64xf32>
    %973 = math.tanh %972 : vector<2x64xf32>
    %974 = arith.mulf %969, %973 : vector<2x64xf32>
    %c0_113 = arith.constant 0 : index
    %c0_114 = arith.constant 0 : index
    %975 = vector.load %arg5[%c0_113, %c0_114] : memref<64x2xf32, #tpu.memory_space<vmem>>, vector<64x2xf32>
    %cst_115 = arith.constant dense<0.000000e+00> : vector<2x2xf32>
    %976 = tpu.matmul %974, %975, %cst_115 {dimension_numbers = #tpu.dot_dimension_numbers<[1], [0], [0], [1], [0, 0, 1, 1], [], []>} : vector<2x64xf32>, vector<64x2xf32>, vector<2x2xf32> -> vector<2x2xf32>
    %c0_116 = arith.constant 0 : index
    %c0_117 = arith.constant 0 : index
    %977 = vector.load %arg6[%c0_116, %c0_117] : memref<1x2xf32, #tpu.memory_space<vmem>>, vector<1x2xf32>
    %978 = vector.broadcast %977 : vector<1x2xf32> to vector<2x2xf32>
    %979 = arith.addf %976, %978 : vector<2x2xf32>
    %c0_118 = arith.constant 0 : index
    %c0_119 = arith.constant 0 : index
    %980 = vector.load %arg8[%c0_118, %c0_119] : memref<2x2xf32, #tpu.memory_space<vmem>>, vector<2x2xf32>
    tpu.vector_store %arg8[%c0_118, %c0_119], %979 {strides = array<i32>} : memref<2x2xf32, #tpu.memory_space<vmem>>, vector<2x2xf32>,
    return
  }
}

</mosaic_0001>

<llo_original>
// kernel: _lambda_.1
$region0: #{_lambda_.1}
  #allocation0 [shape = 'u32[]', space=smem, size = 0x4, offset = 0x4, fixed_abs, tag = 'smem constant byte address 0x4 - core index']
  #allocation1 [shape = 'u32[144,128]{1,0:T(1,128)}', space=vmem, size = 0x12000, scoped, tag = 'internal scratch']
  %s0 = inlined_call_operand.hbm [shape: f32[2,24], index: 0, kind: input, shape index: {}]
  %s1 = inlined_call_operand.hbm [shape: f32[1,256], index: 1, kind: input, shape index: {}]
  %s2 = inlined_call_operand.vmem [shape: f32[1,256], index: 2, kind: input, shape index: {}]
  %s3 = inlined_call_operand.hbm [shape: f32[128,512], index: 3, kind: input, shape index: {}]
  %s4 = inlined_call_operand.vmem [shape: f32[1,256], index: 4, kind: input, shape index: {}]
  %s5 = inlined_call_operand.hbm [shape: f32[64,2], index: 5, kind: input, shape index: {}]
  %s6 = inlined_call_operand.vmem [shape: f32[1,2], index: 6, kind: input, shape index: {}]
  %s7 = inlined_call_operand.vmem [shape: f32[8,64], index: 7, kind: input, shape index: {}]
  %s8 = inlined_call_operand.hbm [shape: f32[2,2], index: 8, kind: output, shape index: {}]
  %s9 = sld [smem:[#allocation0]]
  $region58: #{_lambda_.1} parent=0
    _
  %s11 = ssub.s32 1, %s9
  %s12 = scalar_select 0, %s11, %s9
  $region1: #{_lambda_.1} parent=0
    #allocation2 [shape = 'u8[1024]{0}', space=vmem, size = 0x400, scoped, tag = 'input window, operand 0, single buffered']
    #allocation3 [shape = 's32[1]{0}', space=sflag, size = 0x4, scoped, tag = 'scoped memory for _lambda_.1']
    #allocation4 [shape = 's32[1]{0}', space=sflag, size = 0x4, scoped, tag = 'scoped memory for _lambda_.1']
    #allocation5 [shape = 'u8[1024]{0}', space=vmem, size = 0x400, scoped, tag = 'input window, operand 1, single buffered']
    #allocation6 [shape = 's32[1]{0}', space=sflag, size = 0x4, scoped, tag = 'scoped memory for _lambda_.1']
    #allocation7 [shape = 'u8[262144]{0}', space=vmem, size = 0x40000, scoped, tag = 'input window, operand 3, single buffered']
    #allocation8 [shape = 'u8[32768]{0}', space=vmem, size = 0x8000, scoped, tag = 'input window, operand 5, single buffered']
    #allocation9 [shape = 's32[1]{0}', space=sflag, size = 0x4, scoped, tag = 'scoped memory for _lambda_.1']
    #allocation10 [shape = 'u8[1024]{0}', space=vmem, size = 0x400, scoped, tag = 'output window, operand 0, single buffered']
    %13 = vsyncpa [#allocation3], 0
    %14 = vsyncpa [#allocation6], 0
    %15 = vsyncpa [#allocation9], 0
    %16 = vsyncpa [#allocation4], 0
    // Predicated region
    $region2: #{_lambda_.1} parent=1 // pred_check
      _
    $region3: #{_lambda_.1} parent=1 // pred_check_branch
      %18 = sbr.rel (0) target = $region5
    $region4: #{_lambda_.1} parent=1 // pred_region
      %s20 = ssub.s32 32, 32
      %21 = vsyncadd [#allocation3], %s20
      %s23 = sshll.u32 [#allocation2], 4
      %s24 = int_to_ptr.vmem [resolvable:$true] %s23
      %26 = dma.hbm_to_vmem [thread:$0]  %s0, 32, %s24, [#allocation3]
    $region5: #{_lambda_.1} parent=1 // pred_fallthru
      _
    // Predicated region
    $region6: #{_lambda_.1} parent=1 // pred_check
      _
    $region7: #{_lambda_.1} parent=1 // pred_check_branch
      %28 = sbr.rel (0) target = $region9
    $region8: #{_lambda_.1} parent=1 // pred_region
      %s30 = ssub.s32 32, 32
      %31 = vsyncadd [#allocation6], %s30
      %s33 = sshll.u32 [#allocation5], 4
      %s34 = int_to_ptr.vmem [resolvable:$true] %s33
      %36 = dma.hbm_to_vmem [thread:$0]  %s1, 32, %s34, [#allocation6]
    $region9: #{_lambda_.1} parent=1 // pred_fallthru
      _
    // Predicated region
    $region10: #{_lambda_.1} parent=1 // pred_check
      _
    $region11: #{_lambda_.1} parent=1 // pred_check_branch
      %38 = sbr.rel (0) target = $region13
    $region12: #{_lambda_.1} parent=1 // pred_region
      _
    $region13: #{_lambda_.1} parent=1 // pred_fallthru
      _
    // Predicated region
    $region14: #{_lambda_.1} parent=1 // pred_check
      _
    $region15: #{_lambda_.1} parent=1 // pred_check_branch
      %40 = sbr.rel (0) target = $region17
    $region16: #{_lambda_.1} parent=1 // pred_region
      %s42 = ssub.s32 8192, 8192
      %43 = vsyncadd [#allocation6], %s42
      %s44 = sshll.u32 [#allocation7], 4
      %s45 = int_to_ptr.vmem [resolvable:$true] %s44
      %50 = dma.hbm_to_vmem [thread:$0]  %s3, 8192, %s45, [#allocation6], 512, 512, 32
    $region17: #{_lambda_.1} parent=1 // pred_fallthru
      _
    // Predicated region
    $region18: #{_lambda_.1} parent=1 // pred_check
      _
    $region19: #{_lambda_.1} parent=1 // pred_check_branch
      %52 = sbr.rel (0) target = $region21
    $region20: #{_lambda_.1} parent=1 // pred_region
      _
    $region21: #{_lambda_.1} parent=1 // pred_fallthru
      _
    // Predicated region
    $region22: #{_lambda_.1} parent=1 // pred_check
      _
    $region23: #{_lambda_.1} parent=1 // pred_check_branch
      %54 = sbr.rel (0) target = $region25
    $region24: #{_lambda_.1} parent=1 // pred_region
      %s56 = ssub.s32 1024, 1024
      %57 = vsyncadd [#allocation9], %s56
      %s58 = sshll.u32 [#allocation8], 4
      %s59 = int_to_ptr.vmem [resolvable:$true] %s58
      %64 = dma.hbm_to_vmem [thread:$0]  %s5, 1024, %s59, [#allocation9], 128, 128, 8
    $region25: #{_lambda_.1} parent=1 // pred_fallthru
      _
    // Predicated region
    $region26: #{_lambda_.1} parent=1 // pred_check
      _
    $region27: #{_lambda_.1} parent=1 // pred_check_branch
      %66 = sbr.rel (0) target = $region29
    $region28: #{_lambda_.1} parent=1 // pred_region
      _
    $region29: #{_lambda_.1} parent=1 // pred_fallthru
      _
    // Predicated region
    $region30: #{_lambda_.1} parent=1 // pred_check
      _
    $region31: #{_lambda_.1} parent=1 // pred_check_branch
      %68 = sbr.rel (0) target = $region33
    $region32: #{_lambda_.1} parent=1 // pred_region
      _
    $region33: #{_lambda_.1} parent=1 // pred_fallthru
      _
    // Predicated region
    $region34: #{_lambda_.1} parent=1 // pred_check
      _
    $region35: #{_lambda_.1} parent=1 // pred_check_branch
      %70 = sbr.rel (0) target = $region37
    $region36: #{_lambda_.1} parent=1 // pred_region
      %71 = dma.done [#allocation3], 32
    $region37: #{_lambda_.1} parent=1 // pred_fallthru
      _
    // Predicated region
    $region38: #{_lambda_.1} parent=1 // pred_check
      _
    $region39: #{_lambda_.1} parent=1 // pred_check_branch
      %73 = sbr.rel (0) target = $region41
    $region40: #{_lambda_.1} parent=1 // pred_region
      %74 = dma.done [#allocation6], 32
    $region41: #{_lambda_.1} parent=1 // pred_fallthru
      _
    // Predicated region
    $region42: #{_lambda_.1} parent=1 // pred_check
      _
    $region43: #{_lambda_.1} parent=1 // pred_check_branch
      %76 = sbr.rel (0) target = $region45
    $region44: #{_lambda_.1} parent=1 // pred_region
      %77 = dma.done [#allocation6], 8192
    $region45: #{_lambda_.1} parent=1 // pred_fallthru
      _
    // Predicated region
    $region46: #{_lambda_.1} parent=1 // pred_check
      _
    $region47: #{_lambda_.1} parent=1 // pred_check_branch
      %79 = sbr.rel (0) target = $region49
    $region48: #{_lambda_.1} parent=1 // pred_region
      %80 = dma.done [#allocation9], 1024
    $region49: #{_lambda_.1} parent=1 // pred_fallthru
      _
    %v81 = vld [vmem:[%s7] sm:$0x3]
    %v82 = vld [vmem:[%s7 + $0x2] sm:$0x3]
    %v83 = vld [vmem:[%s7 + $0x4] sm:$0x3]
    %v84 = vld [vmem:[%s7 + $0x6] sm:$0x3]
    %v85 = vld [vmem:[#allocation7] sm:$0xff]
    %v86 = vld [vmem:[#allocation7 + $0x8] sm:$0xff]
    %v87 = vld [vmem:[#allocation7 + $0x10] sm:$0xff]
    %v88 = vld [vmem:[#allocation7 + $0x18] sm:$0xff]
    %v89 = vld [vmem:[#allocation7 + $0x20] sm:$0xff]
    %v90 = vld [vmem:[#allocation7 + $0x28] sm:$0xff]
    %v91 = vld [vmem:[#allocation7 + $0x30] sm:$0xff]
    %v92 = vld [vmem:[#allocation7 + $0x38] sm:$0xff]
    %v93 = vld [vmem:[#allocation7 + $0x40] sm:$0xff]
    %v94 = vld [vmem:[#allocation7 + $0x48] sm:$0xff]
    %v95 = vld [vmem:[#allocation7 + $0x50] sm:$0xff]
    %v96 = vld [vmem:[#allocation7 + $0x58] sm:$0xff]
    %v97 = vld [vmem:[#allocation7 + $0x60] sm:$0xff]
    %v98 = vld [vmem:[#allocation7 + $0x68] sm:$0xff]
    %v99 = vld [vmem:[#allocation7 + $0x70] sm:$0xff]
    %v100 = vld [vmem:[#allocation7 + $0x78] sm:$0xff]
    %v101 = vld [vmem:[#allocation7 + $0x80] sm:$0xff]
    %v102 = vld [vmem:[#allocation7 + $0x88] sm:$0xff]
    %v103 = vld [vmem:[#allocation7 + $0x90] sm:$0xff]
    %v104 = vld [vmem:[#allocation7 + $0x98] sm:$0xff]
    %v105 = vld [vmem:[#allocation7 + $0xa0] sm:$0xff]
    %v106 = vld [vmem:[#allocation7 + $0xa8] sm:$0xff]
    %v107 = vld [vmem:[#allocation7 + $0xb0] sm:$0xff]
    %v108 = vld [vmem:[#allocation7 + $0xb8] sm:$0xff]
    %v109 = vld [vmem:[#allocation7 + $0xc0] sm:$0xff]
    %v110 = vld [vmem:[#allocation7 + $0xc8] sm:$0xff]
    %v111 = vld [vmem:[#allocation7 + $0xd0] sm:$0xff]
    %v112 = vld [vmem:[#allocation7 + $0xd8] sm:$0xff]
    %v113 = vld [vmem:[#allocation7 + $0xe0] sm:$0xff]
    %v114 = vld [vmem:[#allocation7 + $0xe8] sm:$0xff]
    %v115 = vld [vmem:[#allocation7 + $0xf0] sm:$0xff]
    %v116 = vld [vmem:[#allocation7 + $0xf8] sm:$0xff]
    %v117 = vld [vmem:[#allocation7 + $0x100] sm:$0xff]
    %v118 = vld [vmem:[#allocation7 + $0x108] sm:$0xff]
    %v119 = vld [vmem:[#allocation7 + $0x110] sm:$0xff]
    %v120 = vld [vmem:[#allocation7 + $0x118] sm:$0xff]
    %v121 = vld [vmem:[#allocation7 + $0x120] sm:$0xff]
    %v122 = vld [vmem:[#allocation7 + $0x128] sm:$0xff]
    %v123 = vld [vmem:[#allocation7 + $0x130] sm:$0xff]
    %v124 = vld [vmem:[#allocation7 + $0x138] sm:$0xff]
    %v125 = vld [vmem:[#allocation7 + $0x140] sm:$0xff]
    %v126 = vld [vmem:[#allocation7 + $0x148] sm:$0xff]
    %v127 = vld [vmem:[#allocation7 + $0x150] sm:$0xff]
    %v128 = vld [vmem:[#allocation7 + $0x158] sm:$0xff]
    %v129 = vld [vmem:[#allocation7 + $0x160] sm:$0xff]
    %v130 = vld [vmem:[#allocation7 + $0x168] sm:$0xff]
    %v131 = vld [vmem:[#allocation7 + $0x170] sm:$0xff]
    %v132 = vld [vmem:[#allocation7 + $0x178] sm:$0xff]
    %v133 = vld [vmem:[#allocation7 + $0x180] sm:$0xff]
    %v134 = vld [vmem:[#allocation7 + $0x188] sm:$0xff]
    %v135 = vld [vmem:[#allocation7 + $0x190] sm:$0xff]
    %v136 = vld [vmem:[#allocation7 + $0x198] sm:$0xff]
    %v137 = vld [vmem:[#allocation7 + $0x1a0] sm:$0xff]
    %v138 = vld [vmem:[#allocation7 + $0x1a8] sm:$0xff]
    %v139 = vld [vmem:[#allocation7 + $0x1b0] sm:$0xff]
    %v140 = vld [vmem:[#allocation7 + $0x1b8] sm:$0xff]
    %v141 = vld [vmem:[#allocation7 + $0x1c0] sm:$0xff]
    %v142 = vld [vmem:[#allocation7 + $0x1c8] sm:$0xff]
    %v143 = vld [vmem:[#allocation7 + $0x1d0] sm:$0xff]
    %v144 = vld [vmem:[#allocation7 + $0x1d8] sm:$0xff]
    %v145 = vld [vmem:[#allocation7 + $0x1e0] sm:$0xff]
    %v146 = vld [vmem:[#allocation7 + $0x1e8] sm:$0xff]
    %v147 = vld [vmem:[#allocation7 + $0x1f0] sm:$0xff]
    %v148 = vld [vmem:[#allocation7 + $0x1f8] sm:$0xff]
    %v149 = vld [vmem:[#allocation5] sm:$0x3]
    %v151 = vlaneseq
    %v152 = vshrl.u32 %v151, 7
    %v153 = vsub.s32 0, %v152
    %v154 = vrot.slane %v149, %v153
    %v155 = vlaneseq
    %v156 = vshrl.u32 %v155, 7
    %v157 = vsub.s32 1, %v156
    %v158 = vrot.slane %v149, %v157
    %v161 = vld [vmem:[%s2] sm:$0x3]
    %v163 = vlaneseq
    %v164 = vshrl.u32 %v163, 7
    %v165 = vsub.s32 0, %v164
    %v166 = vrot.slane %v161, %v165
    %v167 = vlaneseq
    %v168 = vshrl.u32 %v167, 7
    %v169 = vsub.s32 1, %v168
    %v170 = vrot.slane %v161, %v169
    %v173 = vld [vmem:[%s4] sm:$0x3]
    %v175 = vlaneseq
    %v176 = vshrl.u32 %v175, 7
    %v177 = vsub.s32 0, %v176
    %v178 = vrot.slane %v173, %v177
    %v179 = vlaneseq
    %v180 = vshrl.u32 %v179, 7
    %v181 = vsub.s32 1, %v180
    %v182 = vrot.slane %v173, %v181
    %v185 = vld [vmem:[#allocation7 + $0x10] sm:$0xff]
    %v186 = vld [vmem:[#allocation7 + $0x18] sm:$0xff]
    %v187 = vld [vmem:[#allocation7 + $0x30] sm:$0xff]
    %v188 = vld [vmem:[#allocation7 + $0x38] sm:$0xff]
    %v189 = vld [vmem:[#allocation7 + $0x50] sm:$0xff]
    %v190 = vld [vmem:[#allocation7 + $0x58] sm:$0xff]
    %v191 = vld [vmem:[#allocation7 + $0x70] sm:$0xff]
    %v192 = vld [vmem:[#allocation7 + $0x78] sm:$0xff]
    %v193 = vld [vmem:[#allocation7 + $0x90] sm:$0xff]
    %v194 = vld [vmem:[#allocation7 + $0x98] sm:$0xff]
    %v195 = vld [vmem:[#allocation7 + $0xb0] sm:$0xff]
    %v196 = vld [vmem:[#allocation7 + $0xb8] sm:$0xff]
    %v197 = vld [vmem:[#allocation7 + $0xd0] sm:$0xff]
    %v198 = vld [vmem:[#allocation7 + $0xd8] sm:$0xff]
    %v199 = vld [vmem:[#allocation7 + $0xf0] sm:$0xff]
    %v200 = vld [vmem:[#allocation7 + $0xf8] sm:$0xff]
    %vm201 = vcmask 523264
    %v203 = vsel %vm201, %v81, 0
    %205 = vmatprep.subr.mxu0 0.0
    %206 = vmatpush1.msra.mxu0 0.0
    %207 = vmatprep.subr.mxu0 0.0
    %208 = vmatpush1.msra.mxu0 0.0
    %209 = vmatprep.subr.mxu0 0.0
    %210 = vmatpush1.msra.mxu0 0.0
    %211 = vmatprep.subr.mxu0 0.0
    %212 = vmatpush1.msra.mxu0 0.0
    %213 = vmatprep.subr.mxu0 0.0
    %214 = vmatpush1.msra.mxu0 0.0
    %215 = vmatprep.subr.mxu0 0.0
    %216 = vmatpush1.msra.mxu0 0.0
    %217 = vmatprep.subr.mxu0 0.0
    %218 = vmatpush1.msra.mxu0 0.0
    %219 = vmatprep.subr.mxu0 0.0
    %220 = vmatpush1.msra.mxu0 0.0
    %221 = vmatprep.subr.mxu0 %v200
    %222 = vmatpush1.msra.mxu0 %v199
    %223 = vmatprep.subr.mxu0 %v198
    %224 = vmatpush1.msra.mxu0 %v197
    %225 = vmatprep.subr.mxu0 %v196
    %226 = vmatpush1.msra.mxu0 %v195
    %227 = vmatprep.subr.mxu0 %v194
    %228 = vmatpush1.msra.mxu0 %v193
    %229 = vmatprep.subr.mxu0 %v192
    %230 = vmatpush1.msra.mxu0 %v191
    %231 = vmatprep.subr.mxu0 %v190
    %232 = vmatpush1.msra.mxu0 %v189
    %233 = vmatprep.subr.mxu0 %v188
    %234 = vmatpush1.msra.mxu0 %v187
    %235 = vmatprep.subr.mxu0 %v186
    %236 = vmatpush1.msra.mxu0 %v185
    %237 = vmatprep.subr.mxu0 0.0
    %238 = vmatpush2.msra.mxu0 0.0
    %239 = vmatprep.subr.mxu0 0.0
    %240 = vmatpush2.msra.mxu0 0.0
    %241 = vmatprep.subr.mxu0 0.0
    %242 = vmatpush2.msra.mxu0 0.0
    %243 = vmatprep.subr.mxu0 0.0
    %244 = vmatpush2.msra.mxu0 0.0
    %245 = vmatprep.subr.mxu0 0.0
    %246 = vmatpush2.msra.mxu0 0.0
    %247 = vmatprep.subr.mxu0 0.0
    %248 = vmatpush2.msra.mxu0 0.0
    %249 = vmatprep.subr.mxu0 0.0
    %250 = vmatpush2.msra.mxu0 0.0
    %251 = vmatprep.subr.mxu0 0.0
    %252 = vmatpush2.msra.mxu0 0.0
    %253 = vmatprep.subr.mxu0 0.0
    %254 = vmatpush2.msra.mxu0 0.0
    %255 = vmatprep.subr.mxu0 0.0
    %256 = vmatpush2.msra.mxu0 0.0
    %257 = vmatprep.subr.mxu0 0.0
    %258 = vmatpush2.msra.mxu0 0.0
    %259 = vmatprep.subr.mxu0 0.0
    %260 = vmatpush2.msra.mxu0 0.0
    %261 = vmatprep.subr.mxu0 0.0
    %262 = vmatpush2.msra.mxu0 0.0
    %263 = vmatprep.subr.mxu0 0.0
    %264 = vmatpush2.msra.mxu0 0.0
    %265 = vmatprep.subr.mxu0 0.0
    %266 = vmatpush2.msra.mxu0 0.0
    %267 = vmatprep.subr.mxu0 0.0
    %268 = vmatpush2.msra.mxu0 0.0
    %269 = vmatprep.mubr.f32.mxu0 0.0
    %270 = vmatmul.mubr.f32.gmra.mxu0 %v203
    %v271 = vpop.f32.mrf.mxu0
    %v272 = vadd.f32 0.0, %v271
    %v273 = vpop.f32.mrf.mxu0
    %v274 = vadd.f32 0.0, %v273
    %275 = vdwg.mxu0
    %v276 = vld [vmem:[#allocation2] sm:$0x3]
    %278 = vset.pattern.permute.xlu0 0
    %279 = vperm.xlu0 %278, %v276
    %v280 = vpop.permute.xlu0 %279
    %v282 = vmul.f32 %v280, %v154
    %v283 = vmul.f32 %v280, %v158
    %v284 = vadd.f32 %v282, %v272
    %v285 = vadd.f32 %v283, %v274
    %v286 = vadd.f32 %v284, %v166
    %v287 = vadd.f32 %v285, %v170
    %v288 = vxor.u32 %v286, 2147483648
    %v289 = vxor.u32 %v287, 2147483648
    %v290 = vmul.f32 %v288, 1.442695
    %v291 = vpow.pop %v290
    %v292 = vmul.f32 %v289, 1.442695
    %v293 = vpow.pop %v292
    %v294 = vadd.f32 %v291, 1.0
    %v295 = vadd.f32 %v293, 1.0
    %v296 = vrcp.pop %v294
    %v297 = vmul.f32 1.0, %v296
    %v298 = vrcp.pop %v295
    %v299 = vmul.f32 1.0, %v298
    %v300 = vtanh.pop %v287
    %302 = vrot.lane.b32.xlu0 %v82, 64
    %v303 = vpop.permute.xlu0 %302
    %v305 = vmul.f32 %v297, %v303
    %v306 = vmul.f32 %v297, %v300
    %308 = vrot.lane.b32.xlu0 %v306, 64
    %v309 = vpop.permute.xlu0 %308
    %v311 = vadd.f32 %v305, %v309
    %v312 = vtanh.pop %v311
    %v313 = vmul.f32 %v299, %v312
    %315 = vrot.lane.b32.xlu0 %v313, 64
    %v316 = vpop.permute.xlu0 %315
    %319 = vrot.lane.b32.xlu0 %v83, 64
    %v320 = vpop.permute.xlu0 %319
    %v322 = vsel %vm201, %v316, %v320
    %323 = vmatprep.subr.mxu0 %v146
    %324 = vmatpush1.msra.mxu0 %v145
    %325 = vmatprep.subr.mxu0 %v142
    %326 = vmatpush1.msra.mxu0 %v141
    %327 = vmatprep.subr.mxu0 %v138
    %328 = vmatpush1.msra.mxu0 %v137
    %329 = vmatprep.subr.mxu0 %v134
    %330 = vmatpush1.msra.mxu0 %v133
    %331 = vmatprep.subr.mxu0 %v130
    %332 = vmatpush1.msra.mxu0 %v129
    %333 = vmatprep.subr.mxu0 %v126
    %334 = vmatpush1.msra.mxu0 %v125
    %335 = vmatprep.subr.mxu0 %v122
    %336 = vmatpush1.msra.mxu0 %v121
    %337 = vmatprep.subr.mxu0 %v118
    %338 = vmatpush1.msra.mxu0 %v117
    %339 = vmatprep.subr.mxu0 %v114
    %340 = vmatpush1.msra.mxu0 %v113
    %341 = vmatprep.subr.mxu0 %v110
    %342 = vmatpush1.msra.mxu0 %v109
    %343 = vmatprep.subr.mxu0 %v106
    %344 = vmatpush1.msra.mxu0 %v105
    %345 = vmatprep.subr.mxu0 %v102
    %346 = vmatpush1.msra.mxu0 %v101
    %347 = vmatprep.subr.mxu0 %v98
    %348 = vmatpush1.msra.mxu0 %v97
    %349 = vmatprep.subr.mxu0 %v94
    %350 = vmatpush1.msra.mxu0 %v93
    %351 = vmatprep.subr.mxu0 %v90
    %352 = vmatpush1.msra.mxu0 %v89
    %353 = vmatprep.subr.mxu0 %v86
    %354 = vmatpush1.msra.mxu0 %v85
    %355 = vmatprep.subr.mxu0 0.0
    %356 = vmatpush2.msra.mxu0 0.0
    %357 = vmatprep.subr.mxu0 0.0
    %358 = vmatpush2.msra.mxu0 0.0
    %359 = vmatprep.subr.mxu0 0.0
    %360 = vmatpush2.msra.mxu0 0.0
    %361 = vmatprep.subr.mxu0 0.0
    %362 = vmatpush2.msra.mxu0 0.0
    %363 = vmatprep.subr.mxu0 0.0
    %364 = vmatpush2.msra.mxu0 0.0
    %365 = vmatprep.subr.mxu0 0.0
    %366 = vmatpush2.msra.mxu0 0.0
    %367 = vmatprep.subr.mxu0 0.0
    %368 = vmatpush2.msra.mxu0 0.0
    %369 = vmatprep.subr.mxu0 0.0
    %370 = vmatpush2.msra.mxu0 0.0
    %371 = vmatprep.subr.mxu0 0.0
    %372 = vmatpush2.msra.mxu0 0.0
    %373 = vmatprep.subr.mxu0 0.0
    %374 = vmatpush2.msra.mxu0 0.0
    %375 = vmatprep.subr.mxu0 0.0
    %376 = vmatpush2.msra.mxu0 0.0
    %377 = vmatprep.subr.mxu0 0.0
    %378 = vmatpush2.msra.mxu0 0.0
    %379 = vmatprep.subr.mxu0 0.0
    %380 = vmatpush2.msra.mxu0 0.0
    %381 = vmatprep.subr.mxu0 0.0
    %382 = vmatpush2.msra.mxu0 0.0
    %383 = vmatprep.subr.mxu0 0.0
    %384 = vmatpush2.msra.mxu0 0.0
    %385 = vmatprep.subr.mxu0 0.0
    %386 = vmatpush2.msra.mxu0 0.0
    %387 = vmatprep.mubr.f32.mxu0 0.0
    %388 = vmatmul.mubr.f32.gmra.mxu0 %v322
    %v389 = vpop.f32.mrf.mxu0
    %v390 = vadd.f32 0.0, %v389
    %v391 = vpop.f32.mrf.mxu0
    %v392 = vadd.f32 0.0, %v391
    %393 = vdwg.mxu0
    %394 = vmatprep.subr.mxu0 %v148
    %395 = vmatpush1.msra.mxu0 %v147
    %396 = vmatprep.subr.mxu0 %v144
    %397 = vmatpush1.msra.mxu0 %v143
    %398 = vmatprep.subr.mxu0 %v140
    %399 = vmatpush1.msra.mxu0 %v139
    %400 = vmatprep.subr.mxu0 %v136
    %401 = vmatpush1.msra.mxu0 %v135
    %402 = vmatprep.subr.mxu0 %v132
    %403 = vmatpush1.msra.mxu0 %v131
    %404 = vmatprep.subr.mxu0 %v128
    %405 = vmatpush1.msra.mxu0 %v127
    %406 = vmatprep.subr.mxu0 %v124
    %407 = vmatpush1.msra.mxu0 %v123
    %408 = vmatprep.subr.mxu0 %v120
    %409 = vmatpush1.msra.mxu0 %v119
    %410 = vmatprep.subr.mxu0 %v116
    %411 = vmatpush1.msra.mxu0 %v115
    %412 = vmatprep.subr.mxu0 %v112
    %413 = vmatpush1.msra.mxu0 %v111
    %414 = vmatprep.subr.mxu0 %v108
    %415 = vmatpush1.msra.mxu0 %v107
    %416 = vmatprep.subr.mxu0 %v104
    %417 = vmatpush1.msra.mxu0 %v103
    %418 = vmatprep.subr.mxu0 %v100
    %419 = vmatpush1.msra.mxu0 %v99
    %420 = vmatprep.subr.mxu0 %v96
    %421 = vmatpush1.msra.mxu0 %v95
    %422 = vmatprep.subr.mxu0 %v92
    %423 = vmatpush1.msra.mxu0 %v91
    %424 = vmatprep.subr.mxu0 %v88
    %425 = vmatpush1.msra.mxu0 %v87
    %426 = vmatprep.subr.mxu0 0.0
    %427 = vmatpush2.msra.mxu0 0.0
    %428 = vmatprep.subr.mxu0 0.0
    %429 = vmatpush2.msra.mxu0 0.0
    %430 = vmatprep.subr.mxu0 0.0
    %431 = vmatpush2.msra.mxu0 0.0
    %432 = vmatprep.subr.mxu0 0.0
    %433 = vmatpush2.msra.mxu0 0.0
    %434 = vmatprep.subr.mxu0 0.0
    %435 = vmatpush2.msra.mxu0 0.0
    %436 = vmatprep.subr.mxu0 0.0
    %437 = vmatpush2.msra.mxu0 0.0
    %438 = vmatprep.subr.mxu0 0.0
    %439 = vmatpush2.msra.mxu0 0.0
    %440 = vmatprep.subr.mxu0 0.0
    %441 = vmatpush2.msra.mxu0 0.0
    %442 = vmatprep.subr.mxu0 0.0
    %443 = vmatpush2.msra.mxu0 0.0
    %444 = vmatprep.subr.mxu0 0.0
    %445 = vmatpush2.msra.mxu0 0.0
    %446 = vmatprep.subr.mxu0 0.0
    %447 = vmatpush2.msra.mxu0 0.0
    %448 = vmatprep.subr.mxu0 0.0
    %449 = vmatpush2.msra.mxu0 0.0
    %450 = vmatprep.subr.mxu0 0.0
    %451 = vmatpush2.msra.mxu0 0.0
    %452 = vmatprep.subr.mxu0 0.0
    %453 = vmatpush2.msra.mxu0 0.0
    %454 = vmatprep.subr.mxu0 0.0
    %455 = vmatpush2.msra.mxu0 0.0
    %456 = vmatprep.subr.mxu0 0.0
    %457 = vmatpush2.msra.mxu0 0.0
    %458 = vmatprep.mubr.f32.mxu0 0.0
    %459 = vmatmul.mubr.f32.gmra.mxu0 %v322
    %v460 = vpop.f32.mrf.mxu0
    %v461 = vadd.f32 0.0, %v460
    %v462 = vpop.f32.mrf.mxu0
    %v463 = vadd.f32 0.0, %v462
    %464 = vdwg.mxu0
    %v465 = vadd.f32 %v390, %v178
    %v466 = vadd.f32 %v392, %v182
    %v467 = vxor.u32 %v465, 2147483648
    %v468 = vxor.u32 %v466, 2147483648
    %v469 = vmul.f32 %v467, 1.442695
    %v470 = vpow.pop %v469
    %v471 = vmul.f32 %v468, 1.442695
    %v472 = vpow.pop %v471
    %v473 = vadd.f32 %v470, 1.0
    %v474 = vadd.f32 %v472, 1.0
    %v475 = vrcp.pop %v473
    %v476 = vmul.f32 1.0, %v475
    %v477 = vrcp.pop %v474
    %v478 = vmul.f32 1.0, %v477
    %v479 = vtanh.pop %v466
    %481 = vrot.lane.b32.xlu0 %v84, 64
    %v482 = vpop.permute.xlu0 %481
    %v484 = vmul.f32 %v476, %v482
    %v485 = vmul.f32 %v476, %v479
    %487 = vrot.lane.b32.xlu0 %v485, 64
    %v488 = vpop.permute.xlu0 %487
    %v490 = vadd.f32 %v484, %v488
    %v491 = vtanh.pop %v490
    %v492 = vmul.f32 %v478, %v491
    %493 = vset.pattern.permute.xlu0 1
    %494 = vperm.xlu0 %493, %v276
    %v495 = vpop.permute.xlu0 %494
    %v497 = vmul.f32 %v495, %v154
    %v498 = vmul.f32 %v495, %v158
    %v499 = vadd.f32 %v497, %v461
    %v500 = vadd.f32 %v498, %v463
    %v501 = vadd.f32 %v499, %v166
    %v502 = vadd.f32 %v500, %v170
    %v503 = vxor.u32 %v501, 2147483648
    %v504 = vxor.u32 %v502, 2147483648
    %v505 = vmul.f32 %v503, 1.442695
    %v506 = vpow.pop %v505
    %v507 = vmul.f32 %v504, 1.442695
    %v508 = vpow.pop %v507
    %v509 = vadd.f32 %v506, 1.0
    %v510 = vadd.f32 %v508, 1.0
    %v511 = vrcp.pop %v509
    %v512 = vmul.f32 1.0, %v511
    %v513 = vrcp.pop %v510
    %v514 = vmul.f32 1.0, %v513
    %v515 = vtanh.pop %v502
    %v516 = vmul.f32 %v512, %v311
    %v517 = vmul.f32 %v512, %v515
    %519 = vrot.lane.b32.xlu0 %v517, 64
    %v520 = vpop.permute.xlu0 %519
    %v522 = vadd.f32 %v516, %v520
    %v523 = vtanh.pop %v522
    %v524 = vmul.f32 %v514, %v523
    %526 = vrot.lane.b32.xlu0 %v524, 64
    %v527 = vpop.permute.xlu0 %526
    %v529 = vsel %vm201, %v527, %v492
    %530 = vmatprep.subr.mxu0 %v146
    %531 = vmatpush1.msra.mxu0 %v145
    %532 = vmatprep.subr.mxu0 %v142
    %533 = vmatpush1.msra.mxu0 %v141
    %534 = vmatprep.subr.mxu0 %v138
    %535 = vmatpush1.msra.mxu0 %v137
    %536 = vmatprep.subr.mxu0 %v134
    %537 = vmatpush1.msra.mxu0 %v133
    %538 = vmatprep.subr.mxu0 %v130
    %539 = vmatpush1.msra.mxu0 %v129
    %540 = vmatprep.subr.mxu0 %v126
    %541 = vmatpush1.msra.mxu0 %v125
    %542 = vmatprep.subr.mxu0 %v122
    %543 = vmatpush1.msra.mxu0 %v121
    %544 = vmatprep.subr.mxu0 %v118
    %545 = vmatpush1.msra.mxu0 %v117
    %546 = vmatprep.subr.mxu0 %v114
    %547 = vmatpush1.msra.mxu0 %v113
    %548 = vmatprep.subr.mxu0 %v110
    %549 = vmatpush1.msra.mxu0 %v109
    %550 = vmatprep.subr.mxu0 %v106
    %551 = vmatpush1.msra.mxu0 %v105
    %552 = vmatprep.subr.mxu0 %v102
    %553 = vmatpush1.msra.mxu0 %v101
    %554 = vmatprep.subr.mxu0 %v98
    %555 = vmatpush1.msra.mxu0 %v97
    %556 = vmatprep.subr.mxu0 %v94
    %557 = vmatpush1.msra.mxu0 %v93
    %558 = vmatprep.subr.mxu0 %v90
    %559 = vmatpush1.msra.mxu0 %v89
    %560 = vmatprep.subr.mxu0 %v86
    %561 = vmatpush1.msra.mxu0 %v85
    %562 = vmatprep.subr.mxu0 0.0
    %563 = vmatpush2.msra.mxu0 0.0
    %564 = vmatprep.subr.mxu0 0.0
    %565 = vmatpush2.msra.mxu0 0.0
    %566 = vmatprep.subr.mxu0 0.0
    %567 = vmatpush2.msra.mxu0 0.0
    %568 = vmatprep.subr.mxu0 0.0
    %569 = vmatpush2.msra.mxu0 0.0
    %570 = vmatprep.subr.mxu0 0.0
    %571 = vmatpush2.msra.mxu0 0.0
    %572 = vmatprep.subr.mxu0 0.0
    %573 = vmatpush2.msra.mxu0 0.0
    %574 = vmatprep.subr.mxu0 0.0
    %575 = vmatpush2.msra.mxu0 0.0
    %576 = vmatprep.subr.mxu0 0.0
    %577 = vmatpush2.msra.mxu0 0.0
    %578 = vmatprep.subr.mxu0 0.0
    %579 = vmatpush2.msra.mxu0 0.0
    %580 = vmatprep.subr.mxu0 0.0
    %581 = vmatpush2.msra.mxu0 0.0
    %582 = vmatprep.subr.mxu0 0.0
    %583 = vmatpush2.msra.mxu0 0.0
    %584 = vmatprep.subr.mxu0 0.0
    %585 = vmatpush2.msra.mxu0 0.0
    %586 = vmatprep.subr.mxu0 0.0
    %587 = vmatpush2.msra.mxu0 0.0
    %588 = vmatprep.subr.mxu0 0.0
    %589 = vmatpush2.msra.mxu0 0.0
    %590 = vmatprep.subr.mxu0 0.0
    %591 = vmatpush2.msra.mxu0 0.0
    %592 = vmatprep.subr.mxu0 0.0
    %593 = vmatpush2.msra.mxu0 0.0
    %594 = vmatprep.mubr.f32.mxu0 0.0
    %595 = vmatmul.mubr.f32.gmra.mxu0 %v529
    %v596 = vpop.f32.mrf.mxu0
    %v597 = vadd.f32 0.0, %v596
    %v598 = vpop.f32.mrf.mxu0
    %v599 = vadd.f32 0.0, %v598
    %600 = vdwg.mxu0
    %601 = vmatprep.subr.mxu0 %v148
    %602 = vmatpush1.msra.mxu0 %v147
    %603 = vmatprep.subr.mxu0 %v144
    %604 = vmatpush1.msra.mxu0 %v143
    %605 = vmatprep.subr.mxu0 %v140
    %606 = vmatpush1.msra.mxu0 %v139
    %607 = vmatprep.subr.mxu0 %v136
    %608 = vmatpush1.msra.mxu0 %v135
    %609 = vmatprep.subr.mxu0 %v132
    %610 = vmatpush1.msra.mxu0 %v131
    %611 = vmatprep.subr.mxu0 %v128
    %612 = vmatpush1.msra.mxu0 %v127
    %613 = vmatprep.subr.mxu0 %v124
    %614 = vmatpush1.msra.mxu0 %v123
    %615 = vmatprep.subr.mxu0 %v120
    %616 = vmatpush1.msra.mxu0 %v119
    %617 = vmatprep.subr.mxu0 %v116
    %618 = vmatpush1.msra.mxu0 %v115
    %619 = vmatprep.subr.mxu0 %v112
    %620 = vmatpush1.msra.mxu0 %v111
    %621 = vmatprep.subr.mxu0 %v108
    %622 = vmatpush1.msra.mxu0 %v107
    %623 = vmatprep.subr.mxu0 %v104
    %624 = vmatpush1.msra.mxu0 %v103
    %625 = vmatprep.subr.mxu0 %v100
    %626 = vmatpush1.msra.mxu0 %v99
    %627 = vmatprep.subr.mxu0 %v96
    %628 = vmatpush1.msra.mxu0 %v95
    %629 = vmatprep.subr.mxu0 %v92
    %630 = vmatpush1.msra.mxu0 %v91
    %631 = vmatprep.subr.mxu0 %v88
    %632 = vmatpush1.msra.mxu0 %v87
    %633 = vmatprep.subr.mxu0 0.0
    %634 = vmatpush2.msra.mxu0 0.0
    %635 = vmatprep.subr.mxu0 0.0
    %636 = vmatpush2.msra.mxu0 0.0
    %637 = vmatprep.subr.mxu0 0.0
    %638 = vmatpush2.msra.mxu0 0.0
    %639 = vmatprep.subr.mxu0 0.0
    %640 = vmatpush2.msra.mxu0 0.0
    %641 = vmatprep.subr.mxu0 0.0
    %642 = vmatpush2.msra.mxu0 0.0
    %643 = vmatprep.subr.mxu0 0.0
    %644 = vmatpush2.msra.mxu0 0.0
    %645 = vmatprep.subr.mxu0 0.0
    %646 = vmatpush2.msra.mxu0 0.0
    %647 = vmatprep.subr.mxu0 0.0
    %648 = vmatpush2.msra.mxu0 0.0
    %649 = vmatprep.subr.mxu0 0.0
    %650 = vmatpush2.msra.mxu0 0.0
    %651 = vmatprep.subr.mxu0 0.0
    %652 = vmatpush2.msra.mxu0 0.0
    %653 = vmatprep.subr.mxu0 0.0
    %654 = vmatpush2.msra.mxu0 0.0
    %655 = vmatprep.subr.mxu0 0.0
    %656 = vmatpush2.msra.mxu0 0.0
    %657 = vmatprep.subr.mxu0 0.0
    %658 = vmatpush2.msra.mxu0 0.0
    %659 = vmatprep.subr.mxu0 0.0
    %660 = vmatpush2.msra.mxu0 0.0
    %661 = vmatprep.subr.mxu0 0.0
    %662 = vmatpush2.msra.mxu0 0.0
    %663 = vmatprep.subr.mxu0 0.0
    %664 = vmatpush2.msra.mxu0 0.0
    %665 = vmatprep.mubr.f32.mxu0 0.0
    %666 = vmatmul.mubr.f32.gmra.mxu0 %v529
    %v667 = vpop.f32.mrf.mxu0
    %v668 = vadd.f32 0.0, %v667
    %v669 = vpop.f32.mrf.mxu0
    %v670 = vadd.f32 0.0, %v669
    %671 = vdwg.mxu0
    %v672 = vadd.f32 %v597, %v178
    %v673 = vadd.f32 %v599, %v182
    %v674 = vxor.u32 %v672, 2147483648
    %v675 = vxor.u32 %v673, 2147483648
    %v676 = vmul.f32 %v674, 1.442695
    %v677 = vpow.pop %v676
    %v678 = vmul.f32 %v675, 1.442695
    %v679 = vpow.pop %v678
    %v680 = vadd.f32 %v677, 1.0
    %v681 = vadd.f32 %v679, 1.0
    %v682 = vrcp.pop %v680
    %v683 = vmul.f32 1.0, %v682
    %v684 = vrcp.pop %v681
    %v685 = vmul.f32 1.0, %v684
    %v686 = vtanh.pop %v673
    %v687 = vmul.f32 %v683, %v490
    %v688 = vmul.f32 %v683, %v686
    %690 = vrot.lane.b32.xlu0 %v688, 64
    %v691 = vpop.permute.xlu0 %690
    %v693 = vadd.f32 %v687, %v691
    %v694 = vtanh.pop %v693
    %v695 = vmul.f32 %v685, %v694
    %696 = vset.pattern.permute.xlu0 2
    %697 = vperm.xlu0 %696, %v276
    %v698 = vpop.permute.xlu0 %697
    %v700 = vmul.f32 %v698, %v154
    %v701 = vmul.f32 %v698, %v158
    %v702 = vadd.f32 %v700, %v668
    %v703 = vadd.f32 %v701, %v670
    %v704 = vadd.f32 %v702, %v166
    %v705 = vadd.f32 %v703, %v170
    %v706 = vxor.u32 %v704, 2147483648
    %v707 = vxor.u32 %v705, 2147483648
    %v708 = vmul.f32 %v706, 1.442695
    %v709 = vpow.pop %v708
    %v710 = vmul.f32 %v707, 1.442695
    %v711 = vpow.pop %v710
    %v712 = vadd.f32 %v709, 1.0
    %v713 = vadd.f32 %v711, 1.0
    %v714 = vrcp.pop %v712
    %v715 = vmul.f32 1.0, %v714
    %v716 = vrcp.pop %v713
    %v717 = vmul.f32 1.0, %v716
    %v718 = vtanh.pop %v705
    %v719 = vmul.f32 %v715, %v522
    %v720 = vmul.f32 %v715, %v718
    %722 = vrot.lane.b32.xlu0 %v720, 64
    %v723 = vpop.permute.xlu0 %722
    %v725 = vadd.f32 %v719, %v723
    %v726 = vtanh.pop %v725
    %v727 = vmul.f32 %v717, %v726
    %729 = vrot.lane.b32.xlu0 %v727, 64
    %v730 = vpop.permute.xlu0 %729
    %v732 = vsel %vm201, %v730, %v695
    %733 = vmatprep.subr.mxu0 %v146
    %734 = vmatpush1.msra.mxu0 %v145
    %735 = vmatprep.subr.mxu0 %v142
    %736 = vmatpush1.msra.mxu0 %v141
    %737 = vmatprep.subr.mxu0 %v138
    %738 = vmatpush1.msra.mxu0 %v137
    %739 = vmatprep.subr.mxu0 %v134
    %740 = vmatpush1.msra.mxu0 %v133
    %741 = vmatprep.subr.mxu0 %v130
    %742 = vmatpush1.msra.mxu0 %v129
    %743 = vmatprep.subr.mxu0 %v126
    %744 = vmatpush1.msra.mxu0 %v125
    %745 = vmatprep.subr.mxu0 %v122
    %746 = vmatpush1.msra.mxu0 %v121
    %747 = vmatprep.subr.mxu0 %v118
    %748 = vmatpush1.msra.mxu0 %v117
    %749 = vmatprep.subr.mxu0 %v114
    %750 = vmatpush1.msra.mxu0 %v113
    %751 = vmatprep.subr.mxu0 %v110
    %752 = vmatpush1.msra.mxu0 %v109
    %753 = vmatprep.subr.mxu0 %v106
    %754 = vmatpush1.msra.mxu0 %v105
    %755 = vmatprep.subr.mxu0 %v102
    %756 = vmatpush1.msra.mxu0 %v101
    %757 = vmatprep.subr.mxu0 %v98
    %758 = vmatpush1.msra.mxu0 %v97
    %759 = vmatprep.subr.mxu0 %v94
    %760 = vmatpush1.msra.mxu0 %v93
    %761 = vmatprep.subr.mxu0 %v90
    %762 = vmatpush1.msra.mxu0 %v89
    %763 = vmatprep.subr.mxu0 %v86
    %764 = vmatpush1.msra.mxu0 %v85
    %765 = vmatprep.subr.mxu0 0.0
    %766 = vmatpush2.msra.mxu0 0.0
    %767 = vmatprep.subr.mxu0 0.0
    %768 = vmatpush2.msra.mxu0 0.0
    %769 = vmatprep.subr.mxu0 0.0
    %770 = vmatpush2.msra.mxu0 0.0
    %771 = vmatprep.subr.mxu0 0.0
    %772 = vmatpush2.msra.mxu0 0.0
    %773 = vmatprep.subr.mxu0 0.0
    %774 = vmatpush2.msra.mxu0 0.0
    %775 = vmatprep.subr.mxu0 0.0
    %776 = vmatpush2.msra.mxu0 0.0
    %777 = vmatprep.subr.mxu0 0.0
    %778 = vmatpush2.msra.mxu0 0.0
    %779 = vmatprep.subr.mxu0 0.0
    %780 = vmatpush2.msra.mxu0 0.0
    %781 = vmatprep.subr.mxu0 0.0
    %782 = vmatpush2.msra.mxu0 0.0
    %783 = vmatprep.subr.mxu0 0.0
    %784 = vmatpush2.msra.mxu0 0.0
    %785 = vmatprep.subr.mxu0 0.0
    %786 = vmatpush2.msra.mxu0 0.0
    %787 = vmatprep.subr.mxu0 0.0
    %788 = vmatpush2.msra.mxu0 0.0
    %789 = vmatprep.subr.mxu0 0.0
    %790 = vmatpush2.msra.mxu0 0.0
    %791 = vmatprep.subr.mxu0 0.0
    %792 = vmatpush2.msra.mxu0 0.0
    %793 = vmatprep.subr.mxu0 0.0
    %794 = vmatpush2.msra.mxu0 0.0
    %795 = vmatprep.subr.mxu0 0.0
    %796 = vmatpush2.msra.mxu0 0.0
    %797 = vmatprep.mubr.f32.mxu0 0.0
    %798 = vmatmul.mubr.f32.gmra.mxu0 %v732
    %v799 = vpop.f32.mrf.mxu0
    %v800 = vadd.f32 0.0, %v799
    %v801 = vpop.f32.mrf.mxu0
    %v802 = vadd.f32 0.0, %v801
    %803 = vdwg.mxu0
    %804 = vmatprep.subr.mxu0 %v148
    %805 = vmatpush1.msra.mxu0 %v147
    %806 = vmatprep.subr.mxu0 %v144
    %807 = vmatpush1.msra.mxu0 %v143
    %808 = vmatprep.subr.mxu0 %v140
    %809 = vmatpush1.msra.mxu0 %v139
    %810 = vmatprep.subr.mxu0 %v136
    %811 = vmatpush1.msra.mxu0 %v135
    %812 = vmatprep.subr.mxu0 %v132
    %813 = vmatpush1.msra.mxu0 %v131
    %814 = vmatprep.subr.mxu0 %v128
    %815 = vmatpush1.msra.mxu0 %v127
    %816 = vmatprep.subr.mxu0 %v124
    %817 = vmatpush1.msra.mxu0 %v123
    %818 = vmatprep.subr.mxu0 %v120
    %819 = vmatpush1.msra.mxu0 %v119
    %820 = vmatprep.subr.mxu0 %v116
    %821 = vmatpush1.msra.mxu0 %v115
    %822 = vmatprep.subr.mxu0 %v112
    %823 = vmatpush1.msra.mxu0 %v111
    %824 = vmatprep.subr.mxu0 %v108
    %825 = vmatpush1.msra.mxu0 %v107
    %826 = vmatprep.subr.mxu0 %v104
    %827 = vmatpush1.msra.mxu0 %v103
    %828 = vmatprep.subr.mxu0 %v100
    %829 = vmatpush1.msra.mxu0 %v99
    %830 = vmatprep.subr.mxu0 %v96
    %831 = vmatpush1.msra.mxu0 %v95
    %832 = vmatprep.subr.mxu0 %v92
    %833 = vmatpush1.msra.mxu0 %v91
    %834 = vmatprep.subr.mxu0 %v88
    %835 = vmatpush1.msra.mxu0 %v87
    %836 = vmatprep.subr.mxu0 0.0
    %837 = vmatpush2.msra.mxu0 0.0
    %838 = vmatprep.subr.mxu0 0.0
    %839 = vmatpush2.msra.mxu0 0.0
    %840 = vmatprep.subr.mxu0 0.0
    %841 = vmatpush2.msra.mxu0 0.0
    %842 = vmatprep.subr.mxu0 0.0
    %843 = vmatpush2.msra.mxu0 0.0
    %844 = vmatprep.subr.mxu0 0.0
    %845 = vmatpush2.msra.mxu0 0.0
    %846 = vmatprep.subr.mxu0 0.0
    %847 = vmatpush2.msra.mxu0 0.0
    %848 = vmatprep.subr.mxu0 0.0
    %849 = vmatpush2.msra.mxu0 0.0
    %850 = vmatprep.subr.mxu0 0.0
    %851 = vmatpush2.msra.mxu0 0.0
    %852 = vmatprep.subr.mxu0 0.0
    %853 = vmatpush2.msra.mxu0 0.0
    %854 = vmatprep.subr.mxu0 0.0
    %855 = vmatpush2.msra.mxu0 0.0
    %856 = vmatprep.subr.mxu0 0.0
    %857 = vmatpush2.msra.mxu0 0.0
    %858 = vmatprep.subr.mxu0 0.0
    %859 = vmatpush2.msra.mxu0 0.0
    %860 = vmatprep.subr.mxu0 0.0
    %861 = vmatpush2.msra.mxu0 0.0
    %862 = vmatprep.subr.mxu0 0.0
    %863 = vmatpush2.msra.mxu0 0.0
    %864 = vmatprep.subr.mxu0 0.0
    %865 = vmatpush2.msra.mxu0 0.0
    %866 = vmatprep.subr.mxu0 0.0
    %867 = vmatpush2.msra.mxu0 0.0
    %868 = vmatprep.mubr.f32.mxu0 0.0
    %869 = vmatmul.mubr.f32.gmra.mxu0 %v732
    %v870 = vpop.f32.mrf.mxu0
    %v871 = vadd.f32 0.0, %v870
    %v872 = vpop.f32.mrf.mxu0
    %v873 = vadd.f32 0.0, %v872
    %874 = vdwg.mxu0
    %v875 = vadd.f32 %v800, %v178
    %v876 = vadd.f32 %v802, %v182
    %v877 = vxor.u32 %v875, 2147483648
    %v878 = vxor.u32 %v876, 2147483648
    %v879 = vmul.f32 %v877, 1.442695
    %v880 = vpow.pop %v879
    %v881 = vmul.f32 %v878, 1.442695
    %v882 = vpow.pop %v881
    %v883 = vadd.f32 %v880, 1.0
    %v884 = vadd.f32 %v882, 1.0
    %v885 = vrcp.pop %v883
    %v886 = vmul.f32 1.0, %v885
    %v887 = vrcp.pop %v884
    %v888 = vmul.f32 1.0, %v887
    %v889 = vtanh.pop %v876
    %v890 = vmul.f32 %v886, %v693
    %v891 = vmul.f32 %v886, %v889
    %893 = vrot.lane.b32.xlu0 %v891, 64
    %v894 = vpop.permute.xlu0 %893
    %v896 = vadd.f32 %v890, %v894
    %v897 = vtanh.pop %v896
    %v898 = vmul.f32 %v888, %v897
    %899 = vset.pattern.permute.xlu0 3
    %900 = vperm.xlu0 %899, %v276
    %v901 = vpop.permute.xlu0 %900
    %v903 = vmul.f32 %v901, %v154
    %v904 = vmul.f32 %v901, %v158
    %v905 = vadd.f32 %v903, %v871
    %v906 = vadd.f32 %v904, %v873
    %v907 = vadd.f32 %v905, %v166
    %v908 = vadd.f32 %v906, %v170
    %v909 = vxor.u32 %v907, 2147483648
    %v910 = vxor.u32 %v908, 2147483648
    %v911 = vmul.f32 %v909, 1.442695
    %v912 = vpow.pop %v911
    %v913 = vmul.f32 %v910, 1.442695
    %v914 = vpow.pop %v913
    %v915 = vadd.f32 %v912, 1.0
    %v916 = vadd.f32 %v914, 1.0
    %v917 = vrcp.pop %v915
    %v918 = vmul.f32 1.0, %v917
    %v919 = vrcp.pop %v916
    %v920 = vmul.f32 1.0, %v919
    %v921 = vtanh.pop %v908
    %v922 = vmul.f32 %v918, %v725
    %v923 = vmul.f32 %v918, %v921
    %925 = vrot.lane.b32.xlu0 %v923, 64
    %v926 = vpop.permute.xlu0 %925
    %v928 = vadd.f32 %v922, %v926
    %v929 = vtanh.pop %v928
    %v930 = vmul.f32 %v920, %v929
    %932 = vrot.lane.b32.xlu0 %v930, 64
    %v933 = vpop.permute.xlu0 %932
    %v935 = vsel %vm201, %v933, %v898
    %936 = vmatprep.subr.mxu0 %v146
    %937 = vmatpush1.msra.mxu0 %v145
    %938 = vmatprep.subr.mxu0 %v142
    %939 = vmatpush1.msra.mxu0 %v141
    %940 = vmatprep.subr.mxu0 %v138
    %941 = vmatpush1.msra.mxu0 %v137
    %942 = vmatprep.subr.mxu0 %v134
    %943 = vmatpush1.msra.mxu0 %v133
    %944 = vmatprep.subr.mxu0 %v130
    %945 = vmatpush1.msra.mxu0 %v129
    %946 = vmatprep.subr.mxu0 %v126
    %947 = vmatpush1.msra.mxu0 %v125
    %948 = vmatprep.subr.mxu0 %v122
    %949 = vmatpush1.msra.mxu0 %v121
    %950 = vmatprep.subr.mxu0 %v118
    %951 = vmatpush1.msra.mxu0 %v117
    %952 = vmatprep.subr.mxu0 %v114
    %953 = vmatpush1.msra.mxu0 %v113
    %954 = vmatprep.subr.mxu0 %v110
    %955 = vmatpush1.msra.mxu0 %v109
    %956 = vmatprep.subr.mxu0 %v106
    %957 = vmatpush1.msra.mxu0 %v105
    %958 = vmatprep.subr.mxu0 %v102
    %959 = vmatpush1.msra.mxu0 %v101
    %960 = vmatprep.subr.mxu0 %v98
    %961 = vmatpush1.msra.mxu0 %v97
    %962 = vmatprep.subr.mxu0 %v94
    %963 = vmatpush1.msra.mxu0 %v93
    %964 = vmatprep.subr.mxu0 %v90
    %965 = vmatpush1.msra.mxu0 %v89
    %966 = vmatprep.subr.mxu0 %v86
    %967 = vmatpush1.msra.mxu0 %v85
    %968 = vmatprep.subr.mxu0 0.0
    %969 = vmatpush2.msra.mxu0 0.0
    %970 = vmatprep.subr.mxu0 0.0
    %971 = vmatpush2.msra.mxu0 0.0
    %972 = vmatprep.subr.mxu0 0.0
    %973 = vmatpush2.msra.mxu0 0.0
    %974 = vmatprep.subr.mxu0 0.0
    %975 = vmatpush2.msra.mxu0 0.0
    %976 = vmatprep.subr.mxu0 0.0
    %977 = vmatpush2.msra.mxu0 0.0
    %978 = vmatprep.subr.mxu0 0.0
    %979 = vmatpush2.msra.mxu0 0.0
    %980 = vmatprep.subr.mxu0 0.0
    %981 = vmatpush2.msra.mxu0 0.0
    %982 = vmatprep.subr.mxu0 0.0
    %983 = vmatpush2.msra.mxu0 0.0
    %984 = vmatprep.subr.mxu0 0.0
    %985 = vmatpush2.msra.mxu0 0.0
    %986 = vmatprep.subr.mxu0 0.0
    %987 = vmatpush2.msra.mxu0 0.0
    %988 = vmatprep.subr.mxu0 0.0
    %989 = vmatpush2.msra.mxu0 0.0
    %990 = vmatprep.subr.mxu0 0.0
    %991 = vmatpush2.msra.mxu0 0.0
    %992 = vmatprep.subr.mxu0 0.0
    %993 = vmatpush2.msra.mxu0 0.0
    %994 = vmatprep.subr.mxu0 0.0
    %995 = vmatpush2.msra.mxu0 0.0
    %996 = vmatprep.subr.mxu0 0.0
    %997 = vmatpush2.msra.mxu0 0.0
    %998 = vmatprep.subr.mxu0 0.0
    %999 = vmatpush2.msra.mxu0 0.0
    %1000 = vmatprep.mubr.f32.mxu0 0.0
    %1001 = vmatmul.mubr.f32.gmra.mxu0 %v935
    %v1002 = vpop.f32.mrf.mxu0
    %v1003 = vadd.f32 0.0, %v1002
    %v1004 = vpop.f32.mrf.mxu0
    %v1005 = vadd.f32 0.0, %v1004
    %1006 = vdwg.mxu0
    %1007 = vmatprep.subr.mxu0 %v148
    %1008 = vmatpush1.msra.mxu0 %v147
    %1009 = vmatprep.subr.mxu0 %v144
    %1010 = vmatpush1.msra.mxu0 %v143
    %1011 = vmatprep.subr.mxu0 %v140
    %1012 = vmatpush1.msra.mxu0 %v139
    %1013 = vmatprep.subr.mxu0 %v136
    %1014 = vmatpush1.msra.mxu0 %v135
    %1015 = vmatprep.subr.mxu0 %v132
    %1016 = vmatpush1.msra.mxu0 %v131
    %1017 = vmatprep.subr.mxu0 %v128
    %1018 = vmatpush1.msra.mxu0 %v127
    %1019 = vmatprep.subr.mxu0 %v124
    %1020 = vmatpush1.msra.mxu0 %v123
    %1021 = vmatprep.subr.mxu0 %v120
    %1022 = vmatpush1.msra.mxu0 %v119
    %1023 = vmatprep.subr.mxu0 %v116
    %1024 = vmatpush1.msra.mxu0 %v115
    %1025 = vmatprep.subr.mxu0 %v112
    %1026 = vmatpush1.msra.mxu0 %v111
    %1027 = vmatprep.subr.mxu0 %v108
    %1028 = vmatpush1.msra.mxu0 %v107
    %1029 = vmatprep.subr.mxu0 %v104
    %1030 = vmatpush1.msra.mxu0 %v103
    %1031 = vmatprep.subr.mxu0 %v100
    %1032 = vmatpush1.msra.mxu0 %v99
    %1033 = vmatprep.subr.mxu0 %v96
    %1034 = vmatpush1.msra.mxu0 %v95
    %1035 = vmatprep.subr.mxu0 %v92
    %1036 = vmatpush1.msra.mxu0 %v91
    %1037 = vmatprep.subr.mxu0 %v88
    %1038 = vmatpush1.msra.mxu0 %v87
    %1039 = vmatprep.subr.mxu0 0.0
    %1040 = vmatpush2.msra.mxu0 0.0
    %1041 = vmatprep.subr.mxu0 0.0
    %1042 = vmatpush2.msra.mxu0 0.0
    %1043 = vmatprep.subr.mxu0 0.0
    %1044 = vmatpush2.msra.mxu0 0.0
    %1045 = vmatprep.subr.mxu0 0.0
    %1046 = vmatpush2.msra.mxu0 0.0
    %1047 = vmatprep.subr.mxu0 0.0
    %1048 = vmatpush2.msra.mxu0 0.0
    %1049 = vmatprep.subr.mxu0 0.0
    %1050 = vmatpush2.msra.mxu0 0.0
    %1051 = vmatprep.subr.mxu0 0.0
    %1052 = vmatpush2.msra.mxu0 0.0
    %1053 = vmatprep.subr.mxu0 0.0
    %1054 = vmatpush2.msra.mxu0 0.0
    %1055 = vmatprep.subr.mxu0 0.0
    %1056 = vmatpush2.msra.mxu0 0.0
    %1057 = vmatprep.subr.mxu0 0.0
    %1058 = vmatpush2.msra.mxu0 0.0
    %1059 = vmatprep.subr.mxu0 0.0
    %1060 = vmatpush2.msra.mxu0 0.0
    %1061 = vmatprep.subr.mxu0 0.0
    %1062 = vmatpush2.msra.mxu0 0.0
    %1063 = vmatprep.subr.mxu0 0.0
    %1064 = vmatpush2.msra.mxu0 0.0
    %1065 = vmatprep.subr.mxu0 0.0
    %1066 = vmatpush2.msra.mxu0 0.0
    %1067 = vmatprep.subr.mxu0 0.0
    %1068 = vmatpush2.msra.mxu0 0.0
    %1069 = vmatprep.subr.mxu0 0.0
    %1070 = vmatpush2.msra.mxu0 0.0
    %1071 = vmatprep.mubr.f32.mxu0 0.0
    %1072 = vmatmul.mubr.f32.gmra.mxu0 %v935
    %v1073 = vpop.f32.mrf.mxu0
    %v1074 = vadd.f32 0.0, %v1073
    %v1075 = vpop.f32.mrf.mxu0
    %v1076 = vadd.f32 0.0, %v1075
    %1077 = vdwg.mxu0
    %v1078 = vadd.f32 %v1003, %v178
    %v1079 = vadd.f32 %v1005, %v182
    %v1080 = vxor.u32 %v1078, 2147483648
    %v1081 = vxor.u32 %v1079, 2147483648
    %v1082 = vmul.f32 %v1080, 1.442695
    %v1083 = vpow.pop %v1082
    %v1084 = vmul.f32 %v1081, 1.442695
    %v1085 = vpow.pop %v1084
    %v1086 = vadd.f32 %v1083, 1.0
    %v1087 = vadd.f32 %v1085, 1.0
    %v1088 = vrcp.pop %v1086
    %v1089 = vmul.f32 1.0, %v1088
    %v1090 = vrcp.pop %v1087
    %v1091 = vmul.f32 1.0, %v1090
    %v1092 = vtanh.pop %v1079
    %v1093 = vmul.f32 %v1089, %v896
    %v1094 = vmul.f32 %v1089, %v1092
    %1096 = vrot.lane.b32.xlu0 %v1094, 64
    %v1097 = vpop.permute.xlu0 %1096
    %v1099 = vadd.f32 %v1093, %v1097
    %v1100 = vtanh.pop %v1099
    %v1101 = vmul.f32 %v1091, %v1100
    %1102 = vset.pattern.permute.xlu0 4
    %1103 = vperm.xlu0 %1102, %v276
    %v1104 = vpop.permute.xlu0 %1103
    %v1106 = vmul.f32 %v1104, %v154
    %v1107 = vmul.f32 %v1104, %v158
    %v1108 = vadd.f32 %v1106, %v1074
    %v1109 = vadd.f32 %v1107, %v1076
    %v1110 = vadd.f32 %v1108, %v166
    %v1111 = vadd.f32 %v1109, %v170
    %v1112 = vxor.u32 %v1110, 2147483648
    %v1113 = vxor.u32 %v1111, 2147483648
    %v1114 = vmul.f32 %v1112, 1.442695
    %v1115 = vpow.pop %v1114
    %v1116 = vmul.f32 %v1113, 1.442695
    %v1117 = vpow.pop %v1116
    %v1118 = vadd.f32 %v1115, 1.0
    %v1119 = vadd.f32 %v1117, 1.0
    %v1120 = vrcp.pop %v1118
    %v1121 = vmul.f32 1.0, %v1120
    %v1122 = vrcp.pop %v1119
    %v1123 = vmul.f32 1.0, %v1122
    %v1124 = vtanh.pop %v1111
    %v1125 = vmul.f32 %v1121, %v928
    %v1126 = vmul.f32 %v1121, %v1124
    %1128 = vrot.lane.b32.xlu0 %v1126, 64
    %v1129 = vpop.permute.xlu0 %1128
    %v1131 = vadd.f32 %v1125, %v1129
    %v1132 = vtanh.pop %v1131
    %v1133 = vmul.f32 %v1123, %v1132
    %1135 = vrot.lane.b32.xlu0 %v1133, 64
    %v1136 = vpop.permute.xlu0 %1135
    %v1138 = vsel %vm201, %v1136, %v1101
    %1139 = vmatprep.subr.mxu0 %v146
    %1140 = vmatpush1.msra.mxu0 %v145
    %1141 = vmatprep.subr.mxu0 %v142
    %1142 = vmatpush1.msra.mxu0 %v141
    %1143 = vmatprep.subr.mxu0 %v138
    %1144 = vmatpush1.msra.mxu0 %v137
    %1145 = vmatprep.subr.mxu0 %v134
    %1146 = vmatpush1.msra.mxu0 %v133
    %1147 = vmatprep.subr.mxu0 %v130
    %1148 = vmatpush1.msra.mxu0 %v129
    %1149 = vmatprep.subr.mxu0 %v126
    %1150 = vmatpush1.msra.mxu0 %v125
    %1151 = vmatprep.subr.mxu0 %v122
    %1152 = vmatpush1.msra.mxu0 %v121
    %1153 = vmatprep.subr.mxu0 %v118
    %1154 = vmatpush1.msra.mxu0 %v117
    %1155 = vmatprep.subr.mxu0 %v114
    %1156 = vmatpush1.msra.mxu0 %v113
    %1157 = vmatprep.subr.mxu0 %v110
    %1158 = vmatpush1.msra.mxu0 %v109
    %1159 = vmatprep.subr.mxu0 %v106
    %1160 = vmatpush1.msra.mxu0 %v105
    %1161 = vmatprep.subr.mxu0 %v102
    %1162 = vmatpush1.msra.mxu0 %v101
    %1163 = vmatprep.subr.mxu0 %v98
    %1164 = vmatpush1.msra.mxu0 %v97
    %1165 = vmatprep.subr.mxu0 %v94
    %1166 = vmatpush1.msra.mxu0 %v93
    %1167 = vmatprep.subr.mxu0 %v90
    %1168 = vmatpush1.msra.mxu0 %v89
    %1169 = vmatprep.subr.mxu0 %v86
    %1170 = vmatpush1.msra.mxu0 %v85
    %1171 = vmatprep.subr.mxu0 0.0
    %1172 = vmatpush2.msra.mxu0 0.0
    %1173 = vmatprep.subr.mxu0 0.0
    %1174 = vmatpush2.msra.mxu0 0.0
    %1175 = vmatprep.subr.mxu0 0.0
    %1176 = vmatpush2.msra.mxu0 0.0
    %1177 = vmatprep.subr.mxu0 0.0
    %1178 = vmatpush2.msra.mxu0 0.0
    %1179 = vmatprep.subr.mxu0 0.0
    %1180 = vmatpush2.msra.mxu0 0.0
    %1181 = vmatprep.subr.mxu0 0.0
    %1182 = vmatpush2.msra.mxu0 0.0
    %1183 = vmatprep.subr.mxu0 0.0
    %1184 = vmatpush2.msra.mxu0 0.0
    %1185 = vmatprep.subr.mxu0 0.0
    %1186 = vmatpush2.msra.mxu0 0.0
    %1187 = vmatprep.subr.mxu0 0.0
    %1188 = vmatpush2.msra.mxu0 0.0
    %1189 = vmatprep.subr.mxu0 0.0
    %1190 = vmatpush2.msra.mxu0 0.0
    %1191 = vmatprep.subr.mxu0 0.0
    %1192 = vmatpush2.msra.mxu0 0.0
    %1193 = vmatprep.subr.mxu0 0.0
    %1194 = vmatpush2.msra.mxu0 0.0
    %1195 = vmatprep.subr.mxu0 0.0
    %1196 = vmatpush2.msra.mxu0 0.0
    %1197 = vmatprep.subr.mxu0 0.0
    %1198 = vmatpush2.msra.mxu0 0.0
    %1199 = vmatprep.subr.mxu0 0.0
    %1200 = vmatpush2.msra.mxu0 0.0
    %1201 = vmatprep.subr.mxu0 0.0
    %1202 = vmatpush2.msra.mxu0 0.0
    %1203 = vmatprep.mubr.f32.mxu0 0.0
    %1204 = vmatmul.mubr.f32.gmra.mxu0 %v1138
    %v1205 = vpop.f32.mrf.mxu0
    %v1206 = vadd.f32 0.0, %v1205
    %v1207 = vpop.f32.mrf.mxu0
    %v1208 = vadd.f32 0.0, %v1207
    %1209 = vdwg.mxu0
    %1210 = vmatprep.subr.mxu0 %v148
    %1211 = vmatpush1.msra.mxu0 %v147
    %1212 = vmatprep.subr.mxu0 %v144
    %1213 = vmatpush1.msra.mxu0 %v143
    %1214 = vmatprep.subr.mxu0 %v140
    %1215 = vmatpush1.msra.mxu0 %v139
    %1216 = vmatprep.subr.mxu0 %v136
    %1217 = vmatpush1.msra.mxu0 %v135
    %1218 = vmatprep.subr.mxu0 %v132
    %1219 = vmatpush1.msra.mxu0 %v131
    %1220 = vmatprep.subr.mxu0 %v128
    %1221 = vmatpush1.msra.mxu0 %v127
    %1222 = vmatprep.subr.mxu0 %v124
    %1223 = vmatpush1.msra.mxu0 %v123
    %1224 = vmatprep.subr.mxu0 %v120
    %1225 = vmatpush1.msra.mxu0 %v119
    %1226 = vmatprep.subr.mxu0 %v116
    %1227 = vmatpush1.msra.mxu0 %v115
    %1228 = vmatprep.subr.mxu0 %v112
    %1229 = vmatpush1.msra.mxu0 %v111
    %1230 = vmatprep.subr.mxu0 %v108
    %1231 = vmatpush1.msra.mxu0 %v107
    %1232 = vmatprep.subr.mxu0 %v104
    %1233 = vmatpush1.msra.mxu0 %v103
    %1234 = vmatprep.subr.mxu0 %v100
    %1235 = vmatpush1.msra.mxu0 %v99
    %1236 = vmatprep.subr.mxu0 %v96
    %1237 = vmatpush1.msra.mxu0 %v95
    %1238 = vmatprep.subr.mxu0 %v92
    %1239 = vmatpush1.msra.mxu0 %v91
    %1240 = vmatprep.subr.mxu0 %v88
    %1241 = vmatpush1.msra.mxu0 %v87
    %1242 = vmatprep.subr.mxu0 0.0
    %1243 = vmatpush2.msra.mxu0 0.0
    %1244 = vmatprep.subr.mxu0 0.0
    %1245 = vmatpush2.msra.mxu0 0.0
    %1246 = vmatprep.subr.mxu0 0.0
    %1247 = vmatpush2.msra.mxu0 0.0
    %1248 = vmatprep.subr.mxu0 0.0
    %1249 = vmatpush2.msra.mxu0 0.0
    %1250 = vmatprep.subr.mxu0 0.0
    %1251 = vmatpush2.msra.mxu0 0.0
    %1252 = vmatprep.subr.mxu0 0.0
    %1253 = vmatpush2.msra.mxu0 0.0
    %1254 = vmatprep.subr.mxu0 0.0
    %1255 = vmatpush2.msra.mxu0 0.0
    %1256 = vmatprep.subr.mxu0 0.0
    %1257 = vmatpush2.msra.mxu0 0.0
    %1258 = vmatprep.subr.mxu0 0.0
    %1259 = vmatpush2.msra.mxu0 0.0
    %1260 = vmatprep.subr.mxu0 0.0
    %1261 = vmatpush2.msra.mxu0 0.0
    %1262 = vmatprep.subr.mxu0 0.0
    %1263 = vmatpush2.msra.mxu0 0.0
    %1264 = vmatprep.subr.mxu0 0.0
    %1265 = vmatpush2.msra.mxu0 0.0
    %1266 = vmatprep.subr.mxu0 0.0
    %1267 = vmatpush2.msra.mxu0 0.0
    %1268 = vmatprep.subr.mxu0 0.0
    %1269 = vmatpush2.msra.mxu0 0.0
    %1270 = vmatprep.subr.mxu0 0.0
    %1271 = vmatpush2.msra.mxu0 0.0
    %1272 = vmatprep.subr.mxu0 0.0
    %1273 = vmatpush2.msra.mxu0 0.0
    %1274 = vmatprep.mubr.f32.mxu0 0.0
    %1275 = vmatmul.mubr.f32.gmra.mxu0 %v1138
    %v1276 = vpop.f32.mrf.mxu0
    %v1277 = vadd.f32 0.0, %v1276
    %v1278 = vpop.f32.mrf.mxu0
    %v1279 = vadd.f32 0.0, %v1278
    %1280 = vdwg.mxu0
    %v1281 = vadd.f32 %v1206, %v178
    %v1282 = vadd.f32 %v1208, %v182
    %v1283 = vxor.u32 %v1281, 2147483648
    %v1284 = vxor.u32 %v1282, 2147483648
    %v1285 = vmul.f32 %v1283, 1.442695
    %v1286 = vpow.pop %v1285
    %v1287 = vmul.f32 %v1284, 1.442695
    %v1288 = vpow.pop %v1287
    %v1289 = vadd.f32 %v1286, 1.0
    %v1290 = vadd.f32 %v1288, 1.0
    %v1291 = vrcp.pop %v1289
    %v1292 = vmul.f32 1.0, %v1291
    %v1293 = vrcp.pop %v1290
    %v1294 = vmul.f32 1.0, %v1293
    %v1295 = vtanh.pop %v1282
    %v1296 = vmul.f32 %v1292, %v1099
    %v1297 = vmul.f32 %v1292, %v1295
    %1299 = vrot.lane.b32.xlu0 %v1297, 64
    %v1300 = vpop.permute.xlu0 %1299
    %v1302 = vadd.f32 %v1296, %v1300
    %v1303 = vtanh.pop %v1302
    %v1304 = vmul.f32 %v1294, %v1303
    %1305 = vset.pattern.permute.xlu0 5
    %1306 = vperm.xlu0 %1305, %v276
    %v1307 = vpop.permute.xlu0 %1306
    %v1309 = vmul.f32 %v1307, %v154
    %v1310 = vmul.f32 %v1307, %v158
    %v1311 = vadd.f32 %v1309, %v1277
    %v1312 = vadd.f32 %v1310, %v1279
    %v1313 = vadd.f32 %v1311, %v166
    %v1314 = vadd.f32 %v1312, %v170
    %v1315 = vxor.u32 %v1313, 2147483648
    %v1316 = vxor.u32 %v1314, 2147483648
    %v1317 = vmul.f32 %v1315, 1.442695
    %v1318 = vpow.pop %v1317
    %v1319 = vmul.f32 %v1316, 1.442695
    %v1320 = vpow.pop %v1319
    %v1321 = vadd.f32 %v1318, 1.0
    %v1322 = vadd.f32 %v1320, 1.0
    %v1323 = vrcp.pop %v1321
    %v1324 = vmul.f32 1.0, %v1323
    %v1325 = vrcp.pop %v1322
    %v1326 = vmul.f32 1.0, %v1325
    %v1327 = vtanh.pop %v1314
    %v1328 = vmul.f32 %v1324, %v1131
    %v1329 = vmul.f32 %v1324, %v1327
    %1331 = vrot.lane.b32.xlu0 %v1329, 64
    %v1332 = vpop.permute.xlu0 %1331
    %v1334 = vadd.f32 %v1328, %v1332
    %v1335 = vtanh.pop %v1334
    %v1336 = vmul.f32 %v1326, %v1335
    %1338 = vrot.lane.b32.xlu0 %v1336, 64
    %v1339 = vpop.permute.xlu0 %1338
    %v1341 = vsel %vm201, %v1339, %v1304
    %1342 = vmatprep.subr.mxu0 %v146
    %1343 = vmatpush1.msra.mxu0 %v145
    %1344 = vmatprep.subr.mxu0 %v142
    %1345 = vmatpush1.msra.mxu0 %v141
    %1346 = vmatprep.subr.mxu0 %v138
    %1347 = vmatpush1.msra.mxu0 %v137
    %1348 = vmatprep.subr.mxu0 %v134
    %1349 = vmatpush1.msra.mxu0 %v133
    %1350 = vmatprep.subr.mxu0 %v130
    %1351 = vmatpush1.msra.mxu0 %v129
    %1352 = vmatprep.subr.mxu0 %v126
    %1353 = vmatpush1.msra.mxu0 %v125
    %1354 = vmatprep.subr.mxu0 %v122
    %1355 = vmatpush1.msra.mxu0 %v121
    %1356 = vmatprep.subr.mxu0 %v118
    %1357 = vmatpush1.msra.mxu0 %v117
    %1358 = vmatprep.subr.mxu0 %v114
    %1359 = vmatpush1.msra.mxu0 %v113
    %1360 = vmatprep.subr.mxu0 %v110
    %1361 = vmatpush1.msra.mxu0 %v109
    %1362 = vmatprep.subr.mxu0 %v106
    %1363 = vmatpush1.msra.mxu0 %v105
    %1364 = vmatprep.subr.mxu0 %v102
    %1365 = vmatpush1.msra.mxu0 %v101
    %1366 = vmatprep.subr.mxu0 %v98
    %1367 = vmatpush1.msra.mxu0 %v97
    %1368 = vmatprep.subr.mxu0 %v94
    %1369 = vmatpush1.msra.mxu0 %v93
    %1370 = vmatprep.subr.mxu0 %v90
    %1371 = vmatpush1.msra.mxu0 %v89
    %1372 = vmatprep.subr.mxu0 %v86
    %1373 = vmatpush1.msra.mxu0 %v85
    %1374 = vmatprep.subr.mxu0 0.0
    %1375 = vmatpush2.msra.mxu0 0.0
    %1376 = vmatprep.subr.mxu0 0.0
    %1377 = vmatpush2.msra.mxu0 0.0
    %1378 = vmatprep.subr.mxu0 0.0
    %1379 = vmatpush2.msra.mxu0 0.0
    %1380 = vmatprep.subr.mxu0 0.0
    %1381 = vmatpush2.msra.mxu0 0.0
    %1382 = vmatprep.subr.mxu0 0.0
    %1383 = vmatpush2.msra.mxu0 0.0
    %1384 = vmatprep.subr.mxu0 0.0
    %1385 = vmatpush2.msra.mxu0 0.0
    %1386 = vmatprep.subr.mxu0 0.0
    %1387 = vmatpush2.msra.mxu0 0.0
    %1388 = vmatprep.subr.mxu0 0.0
    %1389 = vmatpush2.msra.mxu0 0.0
    %1390 = vmatprep.subr.mxu0 0.0
    %1391 = vmatpush2.msra.mxu0 0.0
    %1392 = vmatprep.subr.mxu0 0.0
    %1393 = vmatpush2.msra.mxu0 0.0
    %1394 = vmatprep.subr.mxu0 0.0
    %1395 = vmatpush2.msra.mxu0 0.0
    %1396 = vmatprep.subr.mxu0 0.0
    %1397 = vmatpush2.msra.mxu0 0.0
    %1398 = vmatprep.subr.mxu0 0.0
    %1399 = vmatpush2.msra.mxu0 0.0
    %1400 = vmatprep.subr.mxu0 0.0
    %1401 = vmatpush2.msra.mxu0 0.0
    %1402 = vmatprep.subr.mxu0 0.0
    %1403 = vmatpush2.msra.mxu0 0.0
    %1404 = vmatprep.subr.mxu0 0.0
    %1405 = vmatpush2.msra.mxu0 0.0
    %1406 = vmatprep.mubr.f32.mxu0 0.0
    %1407 = vmatmul.mubr.f32.gmra.mxu0 %v1341
    %v1408 = vpop.f32.mrf.mxu0
    %v1409 = vadd.f32 0.0, %v1408
    %v1410 = vpop.f32.mrf.mxu0
    %v1411 = vadd.f32 0.0, %v1410
    %1412 = vdwg.mxu0
    %1413 = vmatprep.subr.mxu0 %v148
    %1414 = vmatpush1.msra.mxu0 %v147
    %1415 = vmatprep.subr.mxu0 %v144
    %1416 = vmatpush1.msra.mxu0 %v143
    %1417 = vmatprep.subr.mxu0 %v140
    %1418 = vmatpush1.msra.mxu0 %v139
    %1419 = vmatprep.subr.mxu0 %v136
    %1420 = vmatpush1.msra.mxu0 %v135
    %1421 = vmatprep.subr.mxu0 %v132
    %1422 = vmatpush1.msra.mxu0 %v131
    %1423 = vmatprep.subr.mxu0 %v128
    %1424 = vmatpush1.msra.mxu0 %v127
    %1425 = vmatprep.subr.mxu0 %v124
    %1426 = vmatpush1.msra.mxu0 %v123
    %1427 = vmatprep.subr.mxu0 %v120
    %1428 = vmatpush1.msra.mxu0 %v119
    %1429 = vmatprep.subr.mxu0 %v116
    %1430 = vmatpush1.msra.mxu0 %v115
    %1431 = vmatprep.subr.mxu0 %v112
    %1432 = vmatpush1.msra.mxu0 %v111
    %1433 = vmatprep.subr.mxu0 %v108
    %1434 = vmatpush1.msra.mxu0 %v107
    %1435 = vmatprep.subr.mxu0 %v104
    %1436 = vmatpush1.msra.mxu0 %v103
    %1437 = vmatprep.subr.mxu0 %v100
    %1438 = vmatpush1.msra.mxu0 %v99
    %1439 = vmatprep.subr.mxu0 %v96
    %1440 = vmatpush1.msra.mxu0 %v95
    %1441 = vmatprep.subr.mxu0 %v92
    %1442 = vmatpush1.msra.mxu0 %v91
    %1443 = vmatprep.subr.mxu0 %v88
    %1444 = vmatpush1.msra.mxu0 %v87
    %1445 = vmatprep.subr.mxu0 0.0
    %1446 = vmatpush2.msra.mxu0 0.0
    %1447 = vmatprep.subr.mxu0 0.0
    %1448 = vmatpush2.msra.mxu0 0.0
    %1449 = vmatprep.subr.mxu0 0.0
    %1450 = vmatpush2.msra.mxu0 0.0
    %1451 = vmatprep.subr.mxu0 0.0
    %1452 = vmatpush2.msra.mxu0 0.0
    %1453 = vmatprep.subr.mxu0 0.0
    %1454 = vmatpush2.msra.mxu0 0.0
    %1455 = vmatprep.subr.mxu0 0.0
    %1456 = vmatpush2.msra.mxu0 0.0
    %1457 = vmatprep.subr.mxu0 0.0
    %1458 = vmatpush2.msra.mxu0 0.0
    %1459 = vmatprep.subr.mxu0 0.0
    %1460 = vmatpush2.msra.mxu0 0.0
    %1461 = vmatprep.subr.mxu0 0.0
    %1462 = vmatpush2.msra.mxu0 0.0
    %1463 = vmatprep.subr.mxu0 0.0
    %1464 = vmatpush2.msra.mxu0 0.0
    %1465 = vmatprep.subr.mxu0 0.0
    %1466 = vmatpush2.msra.mxu0 0.0
    %1467 = vmatprep.subr.mxu0 0.0
    %1468 = vmatpush2.msra.mxu0 0.0
    %1469 = vmatprep.subr.mxu0 0.0
    %1470 = vmatpush2.msra.mxu0 0.0
    %1471 = vmatprep.subr.mxu0 0.0
    %1472 = vmatpush2.msra.mxu0 0.0
    %1473 = vmatprep.subr.mxu0 0.0
    %1474 = vmatpush2.msra.mxu0 0.0
    %1475 = vmatprep.subr.mxu0 0.0
    %1476 = vmatpush2.msra.mxu0 0.0
    %1477 = vmatprep.mubr.f32.mxu0 0.0
    %1478 = vmatmul.mubr.f32.gmra.mxu0 %v1341
    %v1479 = vpop.f32.mrf.mxu0
    %v1480 = vadd.f32 0.0, %v1479
    %v1481 = vpop.f32.mrf.mxu0
    %v1482 = vadd.f32 0.0, %v1481
    %1483 = vdwg.mxu0
    %v1484 = vadd.f32 %v1409, %v178
    %v1485 = vadd.f32 %v1411, %v182
    %v1486 = vxor.u32 %v1484, 2147483648
    %v1487 = vxor.u32 %v1485, 2147483648
    %v1488 = vmul.f32 %v1486, 1.442695
    %v1489 = vpow.pop %v1488
    %v1490 = vmul.f32 %v1487, 1.442695
    %v1491 = vpow.pop %v1490
    %v1492 = vadd.f32 %v1489, 1.0
    %v1493 = vadd.f32 %v1491, 1.0
    %v1494 = vrcp.pop %v1492
    %v1495 = vmul.f32 1.0, %v1494
    %v1496 = vrcp.pop %v1493
    %v1497 = vmul.f32 1.0, %v1496
    %v1498 = vtanh.pop %v1485
    %v1499 = vmul.f32 %v1495, %v1302
    %v1500 = vmul.f32 %v1495, %v1498
    %1502 = vrot.lane.b32.xlu0 %v1500, 64
    %v1503 = vpop.permute.xlu0 %1502
    %v1505 = vadd.f32 %v1499, %v1503
    %v1506 = vtanh.pop %v1505
    %v1507 = vmul.f32 %v1497, %v1506
    %1508 = vset.pattern.permute.xlu0 6
    %1509 = vperm.xlu0 %1508, %v276
    %v1510 = vpop.permute.xlu0 %1509
    %v1512 = vmul.f32 %v1510, %v154
    %v1513 = vmul.f32 %v1510, %v158
    %v1514 = vadd.f32 %v1512, %v1480
    %v1515 = vadd.f32 %v1513, %v1482
    %v1516 = vadd.f32 %v1514, %v166
    %v1517 = vadd.f32 %v1515, %v170
    %v1518 = vxor.u32 %v1516, 2147483648
    %v1519 = vxor.u32 %v1517, 2147483648
    %v1520 = vmul.f32 %v1518, 1.442695
    %v1521 = vpow.pop %v1520
    %v1522 = vmul.f32 %v1519, 1.442695
    %v1523 = vpow.pop %v1522
    %v1524 = vadd.f32 %v1521, 1.0
    %v1525 = vadd.f32 %v1523, 1.0
    %v1526 = vrcp.pop %v1524
    %v1527 = vmul.f32 1.0, %v1526
    %v1528 = vrcp.pop %v1525
    %v1529 = vmul.f32 1.0, %v1528
    %v1530 = vtanh.pop %v1517
    %v1531 = vmul.f32 %v1527, %v1334
    %v1532 = vmul.f32 %v1527, %v1530
    %1534 = vrot.lane.b32.xlu0 %v1532, 64
    %v1535 = vpop.permute.xlu0 %1534
    %v1537 = vadd.f32 %v1531, %v1535
    %v1538 = vtanh.pop %v1537
    %v1539 = vmul.f32 %v1529, %v1538
    %1541 = vrot.lane.b32.xlu0 %v1539, 64
    %v1542 = vpop.permute.xlu0 %1541
    %v1544 = vsel %vm201, %v1542, %v1507
    %1545 = vmatprep.subr.mxu0 %v146
    %1546 = vmatpush1.msra.mxu0 %v145
    %1547 = vmatprep.subr.mxu0 %v142
    %1548 = vmatpush1.msra.mxu0 %v141
    %1549 = vmatprep.subr.mxu0 %v138
    %1550 = vmatpush1.msra.mxu0 %v137
    %1551 = vmatprep.subr.mxu0 %v134
    %1552 = vmatpush1.msra.mxu0 %v133
    %1553 = vmatprep.subr.mxu0 %v130
    %1554 = vmatpush1.msra.mxu0 %v129
    %1555 = vmatprep.subr.mxu0 %v126
    %1556 = vmatpush1.msra.mxu0 %v125
    %1557 = vmatprep.subr.mxu0 %v122
    %1558 = vmatpush1.msra.mxu0 %v121
    %1559 = vmatprep.subr.mxu0 %v118
    %1560 = vmatpush1.msra.mxu0 %v117
    %1561 = vmatprep.subr.mxu0 %v114
    %1562 = vmatpush1.msra.mxu0 %v113
    %1563 = vmatprep.subr.mxu0 %v110
    %1564 = vmatpush1.msra.mxu0 %v109
    %1565 = vmatprep.subr.mxu0 %v106
    %1566 = vmatpush1.msra.mxu0 %v105
    %1567 = vmatprep.subr.mxu0 %v102
    %1568 = vmatpush1.msra.mxu0 %v101
    %1569 = vmatprep.subr.mxu0 %v98
    %1570 = vmatpush1.msra.mxu0 %v97
    %1571 = vmatprep.subr.mxu0 %v94
    %1572 = vmatpush1.msra.mxu0 %v93
    %1573 = vmatprep.subr.mxu0 %v90
    %1574 = vmatpush1.msra.mxu0 %v89
    %1575 = vmatprep.subr.mxu0 %v86
    %1576 = vmatpush1.msra.mxu0 %v85
    %1577 = vmatprep.subr.mxu0 0.0
    %1578 = vmatpush2.msra.mxu0 0.0
    %1579 = vmatprep.subr.mxu0 0.0
    %1580 = vmatpush2.msra.mxu0 0.0
    %1581 = vmatprep.subr.mxu0 0.0
    %1582 = vmatpush2.msra.mxu0 0.0
    %1583 = vmatprep.subr.mxu0 0.0
    %1584 = vmatpush2.msra.mxu0 0.0
    %1585 = vmatprep.subr.mxu0 0.0
    %1586 = vmatpush2.msra.mxu0 0.0
    %1587 = vmatprep.subr.mxu0 0.0
    %1588 = vmatpush2.msra.mxu0 0.0
    %1589 = vmatprep.subr.mxu0 0.0
    %1590 = vmatpush2.msra.mxu0 0.0
    %1591 = vmatprep.subr.mxu0 0.0
    %1592 = vmatpush2.msra.mxu0 0.0
    %1593 = vmatprep.subr.mxu0 0.0
    %1594 = vmatpush2.msra.mxu0 0.0
    %1595 = vmatprep.subr.mxu0 0.0
    %1596 = vmatpush2.msra.mxu0 0.0
    %1597 = vmatprep.subr.mxu0 0.0
    %1598 = vmatpush2.msra.mxu0 0.0
    %1599 = vmatprep.subr.mxu0 0.0
    %1600 = vmatpush2.msra.mxu0 0.0
    %1601 = vmatprep.subr.mxu0 0.0
    %1602 = vmatpush2.msra.mxu0 0.0
    %1603 = vmatprep.subr.mxu0 0.0
    %1604 = vmatpush2.msra.mxu0 0.0
    %1605 = vmatprep.subr.mxu0 0.0
    %1606 = vmatpush2.msra.mxu0 0.0
    %1607 = vmatprep.subr.mxu0 0.0
    %1608 = vmatpush2.msra.mxu0 0.0
    %1609 = vmatprep.mubr.f32.mxu0 0.0
    %1610 = vmatmul.mubr.f32.gmra.mxu0 %v1544
    %v1611 = vpop.f32.mrf.mxu0
    %v1612 = vadd.f32 0.0, %v1611
    %v1613 = vpop.f32.mrf.mxu0
    %v1614 = vadd.f32 0.0, %v1613
    %1615 = vdwg.mxu0
    %1616 = vmatprep.subr.mxu0 %v148
    %1617 = vmatpush1.msra.mxu0 %v147
    %1618 = vmatprep.subr.mxu0 %v144
    %1619 = vmatpush1.msra.mxu0 %v143
    %1620 = vmatprep.subr.mxu0 %v140
    %1621 = vmatpush1.msra.mxu0 %v139
    %1622 = vmatprep.subr.mxu0 %v136
    %1623 = vmatpush1.msra.mxu0 %v135
    %1624 = vmatprep.subr.mxu0 %v132
    %1625 = vmatpush1.msra.mxu0 %v131
    %1626 = vmatprep.subr.mxu0 %v128
    %1627 = vmatpush1.msra.mxu0 %v127
    %1628 = vmatprep.subr.mxu0 %v124
    %1629 = vmatpush1.msra.mxu0 %v123
    %1630 = vmatprep.subr.mxu0 %v120
    %1631 = vmatpush1.msra.mxu0 %v119
    %1632 = vmatprep.subr.mxu0 %v116
    %1633 = vmatpush1.msra.mxu0 %v115
    %1634 = vmatprep.subr.mxu0 %v112
    %1635 = vmatpush1.msra.mxu0 %v111
    %1636 = vmatprep.subr.mxu0 %v108
    %1637 = vmatpush1.msra.mxu0 %v107
    %1638 = vmatprep.subr.mxu0 %v104
    %1639 = vmatpush1.msra.mxu0 %v103
    %1640 = vmatprep.subr.mxu0 %v100
    %1641 = vmatpush1.msra.mxu0 %v99
    %1642 = vmatprep.subr.mxu0 %v96
    %1643 = vmatpush1.msra.mxu0 %v95
    %1644 = vmatprep.subr.mxu0 %v92
    %1645 = vmatpush1.msra.mxu0 %v91
    %1646 = vmatprep.subr.mxu0 %v88
    %1647 = vmatpush1.msra.mxu0 %v87
    %1648 = vmatprep.subr.mxu0 0.0
    %1649 = vmatpush2.msra.mxu0 0.0
    %1650 = vmatprep.subr.mxu0 0.0
    %1651 = vmatpush2.msra.mxu0 0.0
    %1652 = vmatprep.subr.mxu0 0.0
    %1653 = vmatpush2.msra.mxu0 0.0
    %1654 = vmatprep.subr.mxu0 0.0
    %1655 = vmatpush2.msra.mxu0 0.0
    %1656 = vmatprep.subr.mxu0 0.0
    %1657 = vmatpush2.msra.mxu0 0.0
    %1658 = vmatprep.subr.mxu0 0.0
    %1659 = vmatpush2.msra.mxu0 0.0
    %1660 = vmatprep.subr.mxu0 0.0
    %1661 = vmatpush2.msra.mxu0 0.0
    %1662 = vmatprep.subr.mxu0 0.0
    %1663 = vmatpush2.msra.mxu0 0.0
    %1664 = vmatprep.subr.mxu0 0.0
    %1665 = vmatpush2.msra.mxu0 0.0
    %1666 = vmatprep.subr.mxu0 0.0
    %1667 = vmatpush2.msra.mxu0 0.0
    %1668 = vmatprep.subr.mxu0 0.0
    %1669 = vmatpush2.msra.mxu0 0.0
    %1670 = vmatprep.subr.mxu0 0.0
    %1671 = vmatpush2.msra.mxu0 0.0
    %1672 = vmatprep.subr.mxu0 0.0
    %1673 = vmatpush2.msra.mxu0 0.0
    %1674 = vmatprep.subr.mxu0 0.0
    %1675 = vmatpush2.msra.mxu0 0.0
    %1676 = vmatprep.subr.mxu0 0.0
    %1677 = vmatpush2.msra.mxu0 0.0
    %1678 = vmatprep.subr.mxu0 0.0
    %1679 = vmatpush2.msra.mxu0 0.0
    %1680 = vmatprep.mubr.f32.mxu0 0.0
    %1681 = vmatmul.mubr.f32.gmra.mxu0 %v1544
    %v1682 = vpop.f32.mrf.mxu0
    %v1683 = vadd.f32 0.0, %v1682
    %v1684 = vpop.f32.mrf.mxu0
    %v1685 = vadd.f32 0.0, %v1684
    %1686 = vdwg.mxu0
    %v1687 = vadd.f32 %v1612, %v178
    %v1688 = vadd.f32 %v1614, %v182
    %v1689 = vxor.u32 %v1687, 2147483648
    %v1690 = vxor.u32 %v1688, 2147483648
    %v1691 = vmul.f32 %v1689, 1.442695
    %v1692 = vpow.pop %v1691
    %v1693 = vmul.f32 %v1690, 1.442695
    %v1694 = vpow.pop %v1693
    %v1695 = vadd.f32 %v1692, 1.0
    %v1696 = vadd.f32 %v1694, 1.0
    %v1697 = vrcp.pop %v1695
    %v1698 = vmul.f32 1.0, %v1697
    %v1699 = vrcp.pop %v1696
    %v1700 = vmul.f32 1.0, %v1699
    %v1701 = vtanh.pop %v1688
    %v1702 = vmul.f32 %v1698, %v1505
    %v1703 = vmul.f32 %v1698, %v1701
    %1705 = vrot.lane.b32.xlu0 %v1703, 64
    %v1706 = vpop.permute.xlu0 %1705
    %v1708 = vadd.f32 %v1702, %v1706
    %v1709 = vtanh.pop %v1708
    %v1710 = vmul.f32 %v1700, %v1709
    %1711 = vset.pattern.permute.xlu0 7
    %1712 = vperm.xlu0 %1711, %v276
    %v1713 = vpop.permute.xlu0 %1712
    %v1715 = vmul.f32 %v1713, %v154
    %v1716 = vmul.f32 %v1713, %v158
    %v1717 = vadd.f32 %v1715, %v1683
    %v1718 = vadd.f32 %v1716, %v1685
    %v1719 = vadd.f32 %v1717, %v166
    %v1720 = vadd.f32 %v1718, %v170
    %v1721 = vxor.u32 %v1719, 2147483648
    %v1722 = vxor.u32 %v1720, 2147483648
    %v1723 = vmul.f32 %v1721, 1.442695
    %v1724 = vpow.pop %v1723
    %v1725 = vmul.f32 %v1722, 1.442695
    %v1726 = vpow.pop %v1725
    %v1727 = vadd.f32 %v1724, 1.0
    %v1728 = vadd.f32 %v1726, 1.0
    %v1729 = vrcp.pop %v1727
    %v1730 = vmul.f32 1.0, %v1729
    %v1731 = vrcp.pop %v1728
    %v1732 = vmul.f32 1.0, %v1731
    %v1733 = vtanh.pop %v1720
    %v1734 = vmul.f32 %v1730, %v1537
    %v1735 = vmul.f32 %v1730, %v1733
    %1737 = vrot.lane.b32.xlu0 %v1735, 64
    %v1738 = vpop.permute.xlu0 %1737
    %v1740 = vadd.f32 %v1734, %v1738
    %v1741 = vtanh.pop %v1740
    %v1742 = vmul.f32 %v1732, %v1741
    %1744 = vrot.lane.b32.xlu0 %v1742, 64
    %v1745 = vpop.permute.xlu0 %1744
    %v1747 = vsel %vm201, %v1745, %v1710
    %1748 = vmatprep.subr.mxu0 %v146
    %1749 = vmatpush1.msra.mxu0 %v145
    %1750 = vmatprep.subr.mxu0 %v142
    %1751 = vmatpush1.msra.mxu0 %v141
    %1752 = vmatprep.subr.mxu0 %v138
    %1753 = vmatpush1.msra.mxu0 %v137
    %1754 = vmatprep.subr.mxu0 %v134
    %1755 = vmatpush1.msra.mxu0 %v133
    %1756 = vmatprep.subr.mxu0 %v130
    %1757 = vmatpush1.msra.mxu0 %v129
    %1758 = vmatprep.subr.mxu0 %v126
    %1759 = vmatpush1.msra.mxu0 %v125
    %1760 = vmatprep.subr.mxu0 %v122
    %1761 = vmatpush1.msra.mxu0 %v121
    %1762 = vmatprep.subr.mxu0 %v118
    %1763 = vmatpush1.msra.mxu0 %v117
    %1764 = vmatprep.subr.mxu0 %v114
    %1765 = vmatpush1.msra.mxu0 %v113
    %1766 = vmatprep.subr.mxu0 %v110
    %1767 = vmatpush1.msra.mxu0 %v109
    %1768 = vmatprep.subr.mxu0 %v106
    %1769 = vmatpush1.msra.mxu0 %v105
    %1770 = vmatprep.subr.mxu0 %v102
    %1771 = vmatpush1.msra.mxu0 %v101
    %1772 = vmatprep.subr.mxu0 %v98
    %1773 = vmatpush1.msra.mxu0 %v97
    %1774 = vmatprep.subr.mxu0 %v94
    %1775 = vmatpush1.msra.mxu0 %v93
    %1776 = vmatprep.subr.mxu0 %v90
    %1777 = vmatpush1.msra.mxu0 %v89
    %1778 = vmatprep.subr.mxu0 %v86
    %1779 = vmatpush1.msra.mxu0 %v85
    %1780 = vmatprep.subr.mxu0 0.0
    %1781 = vmatpush2.msra.mxu0 0.0
    %1782 = vmatprep.subr.mxu0 0.0
    %1783 = vmatpush2.msra.mxu0 0.0
    %1784 = vmatprep.subr.mxu0 0.0
    %1785 = vmatpush2.msra.mxu0 0.0
    %1786 = vmatprep.subr.mxu0 0.0
    %1787 = vmatpush2.msra.mxu0 0.0
    %1788 = vmatprep.subr.mxu0 0.0
    %1789 = vmatpush2.msra.mxu0 0.0
    %1790 = vmatprep.subr.mxu0 0.0
    %1791 = vmatpush2.msra.mxu0 0.0
    %1792 = vmatprep.subr.mxu0 0.0
    %1793 = vmatpush2.msra.mxu0 0.0
    %1794 = vmatprep.subr.mxu0 0.0
    %1795 = vmatpush2.msra.mxu0 0.0
    %1796 = vmatprep.subr.mxu0 0.0
    %1797 = vmatpush2.msra.mxu0 0.0
    %1798 = vmatprep.subr.mxu0 0.0
    %1799 = vmatpush2.msra.mxu0 0.0
    %1800 = vmatprep.subr.mxu0 0.0
    %1801 = vmatpush2.msra.mxu0 0.0
    %1802 = vmatprep.subr.mxu0 0.0
    %1803 = vmatpush2.msra.mxu0 0.0
    %1804 = vmatprep.subr.mxu0 0.0
    %1805 = vmatpush2.msra.mxu0 0.0
    %1806 = vmatprep.subr.mxu0 0.0
    %1807 = vmatpush2.msra.mxu0 0.0
    %1808 = vmatprep.subr.mxu0 0.0
    %1809 = vmatpush2.msra.mxu0 0.0
    %1810 = vmatprep.subr.mxu0 0.0
    %1811 = vmatpush2.msra.mxu0 0.0
    %1812 = vmatprep.mubr.f32.mxu0 0.0
    %1813 = vmatmul.mubr.f32.gmra.mxu0 %v1747
    %v1814 = vpop.f32.mrf.mxu0
    %v1815 = vadd.f32 0.0, %v1814
    %v1816 = vpop.f32.mrf.mxu0
    %v1817 = vadd.f32 0.0, %v1816
    %1818 = vdwg.mxu0
    %1819 = vmatprep.subr.mxu0 %v148
    %1820 = vmatpush1.msra.mxu0 %v147
    %1821 = vmatprep.subr.mxu0 %v144
    %1822 = vmatpush1.msra.mxu0 %v143
    %1823 = vmatprep.subr.mxu0 %v140
    %1824 = vmatpush1.msra.mxu0 %v139
    %1825 = vmatprep.subr.mxu0 %v136
    %1826 = vmatpush1.msra.mxu0 %v135
    %1827 = vmatprep.subr.mxu0 %v132
    %1828 = vmatpush1.msra.mxu0 %v131
    %1829 = vmatprep.subr.mxu0 %v128
    %1830 = vmatpush1.msra.mxu0 %v127
    %1831 = vmatprep.subr.mxu0 %v124
    %1832 = vmatpush1.msra.mxu0 %v123
    %1833 = vmatprep.subr.mxu0 %v120
    %1834 = vmatpush1.msra.mxu0 %v119
    %1835 = vmatprep.subr.mxu0 %v116
    %1836 = vmatpush1.msra.mxu0 %v115
    %1837 = vmatprep.subr.mxu0 %v112
    %1838 = vmatpush1.msra.mxu0 %v111
    %1839 = vmatprep.subr.mxu0 %v108
    %1840 = vmatpush1.msra.mxu0 %v107
    %1841 = vmatprep.subr.mxu0 %v104
    %1842 = vmatpush1.msra.mxu0 %v103
    %1843 = vmatprep.subr.mxu0 %v100
    %1844 = vmatpush1.msra.mxu0 %v99
    %1845 = vmatprep.subr.mxu0 %v96
    %1846 = vmatpush1.msra.mxu0 %v95
    %1847 = vmatprep.subr.mxu0 %v92
    %1848 = vmatpush1.msra.mxu0 %v91
    %1849 = vmatprep.subr.mxu0 %v88
    %1850 = vmatpush1.msra.mxu0 %v87
    %1851 = vmatprep.subr.mxu0 0.0
    %1852 = vmatpush2.msra.mxu0 0.0
    %1853 = vmatprep.subr.mxu0 0.0
    %1854 = vmatpush2.msra.mxu0 0.0
    %1855 = vmatprep.subr.mxu0 0.0
    %1856 = vmatpush2.msra.mxu0 0.0
    %1857 = vmatprep.subr.mxu0 0.0
    %1858 = vmatpush2.msra.mxu0 0.0
    %1859 = vmatprep.subr.mxu0 0.0
    %1860 = vmatpush2.msra.mxu0 0.0
    %1861 = vmatprep.subr.mxu0 0.0
    %1862 = vmatpush2.msra.mxu0 0.0
    %1863 = vmatprep.subr.mxu0 0.0
    %1864 = vmatpush2.msra.mxu0 0.0
    %1865 = vmatprep.subr.mxu0 0.0
    %1866 = vmatpush2.msra.mxu0 0.0
    %1867 = vmatprep.subr.mxu0 0.0
    %1868 = vmatpush2.msra.mxu0 0.0
    %1869 = vmatprep.subr.mxu0 0.0
    %1870 = vmatpush2.msra.mxu0 0.0
    %1871 = vmatprep.subr.mxu0 0.0
    %1872 = vmatpush2.msra.mxu0 0.0
    %1873 = vmatprep.subr.mxu0 0.0
    %1874 = vmatpush2.msra.mxu0 0.0
    %1875 = vmatprep.subr.mxu0 0.0
    %1876 = vmatpush2.msra.mxu0 0.0
    %1877 = vmatprep.subr.mxu0 0.0
    %1878 = vmatpush2.msra.mxu0 0.0
    %1879 = vmatprep.subr.mxu0 0.0
    %1880 = vmatpush2.msra.mxu0 0.0
    %1881 = vmatprep.subr.mxu0 0.0
    %1882 = vmatpush2.msra.mxu0 0.0
    %1883 = vmatprep.mubr.f32.mxu0 0.0
    %1884 = vmatmul.mubr.f32.gmra.mxu0 %v1747
    %v1885 = vpop.f32.mrf.mxu0
    %v1886 = vadd.f32 0.0, %v1885
    %v1887 = vpop.f32.mrf.mxu0
    %v1888 = vadd.f32 0.0, %v1887
    %1889 = vdwg.mxu0
    %v1890 = vadd.f32 %v1815, %v178
    %v1891 = vadd.f32 %v1817, %v182
    %v1892 = vxor.u32 %v1890, 2147483648
    %v1893 = vxor.u32 %v1891, 2147483648
    %v1894 = vmul.f32 %v1892, 1.442695
    %v1895 = vpow.pop %v1894
    %v1896 = vmul.f32 %v1893, 1.442695
    %v1897 = vpow.pop %v1896
    %v1898 = vadd.f32 %v1895, 1.0
    %v1899 = vadd.f32 %v1897, 1.0
    %v1900 = vrcp.pop %v1898
    %v1901 = vmul.f32 1.0, %v1900
    %v1902 = vrcp.pop %v1899
    %v1903 = vmul.f32 1.0, %v1902
    %v1904 = vtanh.pop %v1891
    %v1905 = vmul.f32 %v1901, %v1708
    %v1906 = vmul.f32 %v1901, %v1904
    %1908 = vrot.lane.b32.xlu0 %v1906, 64
    %v1909 = vpop.permute.xlu0 %1908
    %v1911 = vadd.f32 %v1905, %v1909
    %v1912 = vtanh.pop %v1911
    %v1913 = vmul.f32 %v1903, %v1912
    %1914 = vset.pattern.permute.xlu0 8
    %1915 = vperm.xlu0 %1914, %v276
    %v1916 = vpop.permute.xlu0 %1915
    %v1918 = vmul.f32 %v1916, %v154
    %v1919 = vmul.f32 %v1916, %v158
    %v1920 = vadd.f32 %v1918, %v1886
    %v1921 = vadd.f32 %v1919, %v1888
    %v1922 = vadd.f32 %v1920, %v166
    %v1923 = vadd.f32 %v1921, %v170
    %v1924 = vxor.u32 %v1922, 2147483648
    %v1925 = vxor.u32 %v1923, 2147483648
    %v1926 = vmul.f32 %v1924, 1.442695
    %v1927 = vpow.pop %v1926
    %v1928 = vmul.f32 %v1925, 1.442695
    %v1929 = vpow.pop %v1928
    %v1930 = vadd.f32 %v1927, 1.0
    %v1931 = vadd.f32 %v1929, 1.0
    %v1932 = vrcp.pop %v1930
    %v1933 = vmul.f32 1.0, %v1932
    %v1934 = vrcp.pop %v1931
    %v1935 = vmul.f32 1.0, %v1934
    %v1936 = vtanh.pop %v1923
    %v1937 = vmul.f32 %v1933, %v1740
    %v1938 = vmul.f32 %v1933, %v1936
    %1940 = vrot.lane.b32.xlu0 %v1938, 64
    %v1941 = vpop.permute.xlu0 %1940
    %v1943 = vadd.f32 %v1937, %v1941
    %v1944 = vtanh.pop %v1943
    %v1945 = vmul.f32 %v1935, %v1944
    %1947 = vrot.lane.b32.xlu0 %v1945, 64
    %v1948 = vpop.permute.xlu0 %1947
    %v1950 = vsel %vm201, %v1948, %v1913
    %1951 = vmatprep.subr.mxu0 %v146
    %1952 = vmatpush1.msra.mxu0 %v145
    %1953 = vmatprep.subr.mxu0 %v142
    %1954 = vmatpush1.msra.mxu0 %v141
    %1955 = vmatprep.subr.mxu0 %v138
    %1956 = vmatpush1.msra.mxu0 %v137
    %1957 = vmatprep.subr.mxu0 %v134
    %1958 = vmatpush1.msra.mxu0 %v133
    %1959 = vmatprep.subr.mxu0 %v130
    %1960 = vmatpush1.msra.mxu0 %v129
    %1961 = vmatprep.subr.mxu0 %v126
    %1962 = vmatpush1.msra.mxu0 %v125
    %1963 = vmatprep.subr.mxu0 %v122
    %1964 = vmatpush1.msra.mxu0 %v121
    %1965 = vmatprep.subr.mxu0 %v118
    %1966 = vmatpush1.msra.mxu0 %v117
    %1967 = vmatprep.subr.mxu0 %v114
    %1968 = vmatpush1.msra.mxu0 %v113
    %1969 = vmatprep.subr.mxu0 %v110
    %1970 = vmatpush1.msra.mxu0 %v109
    %1971 = vmatprep.subr.mxu0 %v106
    %1972 = vmatpush1.msra.mxu0 %v105
    %1973 = vmatprep.subr.mxu0 %v102
    %1974 = vmatpush1.msra.mxu0 %v101
    %1975 = vmatprep.subr.mxu0 %v98
    %1976 = vmatpush1.msra.mxu0 %v97
    %1977 = vmatprep.subr.mxu0 %v94
    %1978 = vmatpush1.msra.mxu0 %v93
    %1979 = vmatprep.subr.mxu0 %v90
    %1980 = vmatpush1.msra.mxu0 %v89
    %1981 = vmatprep.subr.mxu0 %v86
    %1982 = vmatpush1.msra.mxu0 %v85
    %1983 = vmatprep.subr.mxu0 0.0
    %1984 = vmatpush2.msra.mxu0 0.0
    %1985 = vmatprep.subr.mxu0 0.0
    %1986 = vmatpush2.msra.mxu0 0.0
    %1987 = vmatprep.subr.mxu0 0.0
    %1988 = vmatpush2.msra.mxu0 0.0
    %1989 = vmatprep.subr.mxu0 0.0
    %1990 = vmatpush2.msra.mxu0 0.0
    %1991 = vmatprep.subr.mxu0 0.0
    %1992 = vmatpush2.msra.mxu0 0.0
    %1993 = vmatprep.subr.mxu0 0.0
    %1994 = vmatpush2.msra.mxu0 0.0
    %1995 = vmatprep.subr.mxu0 0.0
    %1996 = vmatpush2.msra.mxu0 0.0
    %1997 = vmatprep.subr.mxu0 0.0
    %1998 = vmatpush2.msra.mxu0 0.0
    %1999 = vmatprep.subr.mxu0 0.0
    %2000 = vmatpush2.msra.mxu0 0.0
    %2001 = vmatprep.subr.mxu0 0.0
    %2002 = vmatpush2.msra.mxu0 0.0
    %2003 = vmatprep.subr.mxu0 0.0
    %2004 = vmatpush2.msra.mxu0 0.0
    %2005 = vmatprep.subr.mxu0 0.0
    %2006 = vmatpush2.msra.mxu0 0.0
    %2007 = vmatprep.subr.mxu0 0.0
    %2008 = vmatpush2.msra.mxu0 0.0
    %2009 = vmatprep.subr.mxu0 0.0
    %2010 = vmatpush2.msra.mxu0 0.0
    %2011 = vmatprep.subr.mxu0 0.0
    %2012 = vmatpush2.msra.mxu0 0.0
    %2013 = vmatprep.subr.mxu0 0.0
    %2014 = vmatpush2.msra.mxu0 0.0
    %2015 = vmatprep.mubr.f32.mxu0 0.0
    %2016 = vmatmul.mubr.f32.gmra.mxu0 %v1950
    %v2017 = vpop.f32.mrf.mxu0
    %v2018 = vadd.f32 0.0, %v2017
    %v2019 = vpop.f32.mrf.mxu0
    %v2020 = vadd.f32 0.0, %v2019
    %2021 = vdwg.mxu0
    %2022 = vmatprep.subr.mxu0 %v148
    %2023 = vmatpush1.msra.mxu0 %v147
    %2024 = vmatprep.subr.mxu0 %v144
    %2025 = vmatpush1.msra.mxu0 %v143
    %2026 = vmatprep.subr.mxu0 %v140
    %2027 = vmatpush1.msra.mxu0 %v139
    %2028 = vmatprep.subr.mxu0 %v136
    %2029 = vmatpush1.msra.mxu0 %v135
    %2030 = vmatprep.subr.mxu0 %v132
    %2031 = vmatpush1.msra.mxu0 %v131
    %2032 = vmatprep.subr.mxu0 %v128
    %2033 = vmatpush1.msra.mxu0 %v127
    %2034 = vmatprep.subr.mxu0 %v124
    %2035 = vmatpush1.msra.mxu0 %v123
    %2036 = vmatprep.subr.mxu0 %v120
    %2037 = vmatpush1.msra.mxu0 %v119
    %2038 = vmatprep.subr.mxu0 %v116
    %2039 = vmatpush1.msra.mxu0 %v115
    %2040 = vmatprep.subr.mxu0 %v112
    %2041 = vmatpush1.msra.mxu0 %v111
    %2042 = vmatprep.subr.mxu0 %v108
    %2043 = vmatpush1.msra.mxu0 %v107
    %2044 = vmatprep.subr.mxu0 %v104
    %2045 = vmatpush1.msra.mxu0 %v103
    %2046 = vmatprep.subr.mxu0 %v100
    %2047 = vmatpush1.msra.mxu0 %v99
    %2048 = vmatprep.subr.mxu0 %v96
    %2049 = vmatpush1.msra.mxu0 %v95
    %2050 = vmatprep.subr.mxu0 %v92
    %2051 = vmatpush1.msra.mxu0 %v91
    %2052 = vmatprep.subr.mxu0 %v88
    %2053 = vmatpush1.msra.mxu0 %v87
    %2054 = vmatprep.subr.mxu0 0.0
    %2055 = vmatpush2.msra.mxu0 0.0
    %2056 = vmatprep.subr.mxu0 0.0
    %2057 = vmatpush2.msra.mxu0 0.0
    %2058 = vmatprep.subr.mxu0 0.0
    %2059 = vmatpush2.msra.mxu0 0.0
    %2060 = vmatprep.subr.mxu0 0.0
    %2061 = vmatpush2.msra.mxu0 0.0
    %2062 = vmatprep.subr.mxu0 0.0
    %2063 = vmatpush2.msra.mxu0 0.0
    %2064 = vmatprep.subr.mxu0 0.0
    %2065 = vmatpush2.msra.mxu0 0.0
    %2066 = vmatprep.subr.mxu0 0.0
    %2067 = vmatpush2.msra.mxu0 0.0
    %2068 = vmatprep.subr.mxu0 0.0
    %2069 = vmatpush2.msra.mxu0 0.0
    %2070 = vmatprep.subr.mxu0 0.0
    %2071 = vmatpush2.msra.mxu0 0.0
    %2072 = vmatprep.subr.mxu0 0.0
    %2073 = vmatpush2.msra.mxu0 0.0
    %2074 = vmatprep.subr.mxu0 0.0
    %2075 = vmatpush2.msra.mxu0 0.0
    %2076 = vmatprep.subr.mxu0 0.0
    %2077 = vmatpush2.msra.mxu0 0.0
    %2078 = vmatprep.subr.mxu0 0.0
    %2079 = vmatpush2.msra.mxu0 0.0
    %2080 = vmatprep.subr.mxu0 0.0
    %2081 = vmatpush2.msra.mxu0 0.0
    %2082 = vmatprep.subr.mxu0 0.0
    %2083 = vmatpush2.msra.mxu0 0.0
    %2084 = vmatprep.subr.mxu0 0.0
    %2085 = vmatpush2.msra.mxu0 0.0
    %2086 = vmatprep.mubr.f32.mxu0 0.0
    %2087 = vmatmul.mubr.f32.gmra.mxu0 %v1950
    %v2088 = vpop.f32.mrf.mxu0
    %v2089 = vadd.f32 0.0, %v2088
    %v2090 = vpop.f32.mrf.mxu0
    %v2091 = vadd.f32 0.0, %v2090
    %2092 = vdwg.mxu0
    %v2093 = vadd.f32 %v2018, %v178
    %v2094 = vadd.f32 %v2020, %v182
    %v2095 = vxor.u32 %v2093, 2147483648
    %v2096 = vxor.u32 %v2094, 2147483648
    %v2097 = vmul.f32 %v2095, 1.442695
    %v2098 = vpow.pop %v2097
    %v2099 = vmul.f32 %v2096, 1.442695
    %v2100 = vpow.pop %v2099
    %v2101 = vadd.f32 %v2098, 1.0
    %v2102 = vadd.f32 %v2100, 1.0
    %v2103 = vrcp.pop %v2101
    %v2104 = vmul.f32 1.0, %v2103
    %v2105 = vrcp.pop %v2102
    %v2106 = vmul.f32 1.0, %v2105
    %v2107 = vtanh.pop %v2094
    %v2108 = vmul.f32 %v2104, %v1911
    %v2109 = vmul.f32 %v2104, %v2107
    %2111 = vrot.lane.b32.xlu0 %v2109, 64
    %v2112 = vpop.permute.xlu0 %2111
    %v2114 = vadd.f32 %v2108, %v2112
    %v2115 = vtanh.pop %v2114
    %v2116 = vmul.f32 %v2106, %v2115
    %2117 = vset.pattern.permute.xlu0 9
    %2118 = vperm.xlu0 %2117, %v276
    %v2119 = vpop.permute.xlu0 %2118
    %v2121 = vmul.f32 %v2119, %v154
    %v2122 = vmul.f32 %v2119, %v158
    %v2123 = vadd.f32 %v2121, %v2089
    %v2124 = vadd.f32 %v2122, %v2091
    %v2125 = vadd.f32 %v2123, %v166
    %v2126 = vadd.f32 %v2124, %v170
    %v2127 = vxor.u32 %v2125, 2147483648
    %v2128 = vxor.u32 %v2126, 2147483648
    %v2129 = vmul.f32 %v2127, 1.442695
    %v2130 = vpow.pop %v2129
    %v2131 = vmul.f32 %v2128, 1.442695
    %v2132 = vpow.pop %v2131
    %v2133 = vadd.f32 %v2130, 1.0
    %v2134 = vadd.f32 %v2132, 1.0
    %v2135 = vrcp.pop %v2133
    %v2136 = vmul.f32 1.0, %v2135
    %v2137 = vrcp.pop %v2134
    %v2138 = vmul.f32 1.0, %v2137
    %v2139 = vtanh.pop %v2126
    %v2140 = vmul.f32 %v2136, %v1943
    %v2141 = vmul.f32 %v2136, %v2139
    %2143 = vrot.lane.b32.xlu0 %v2141, 64
    %v2144 = vpop.permute.xlu0 %2143
    %v2146 = vadd.f32 %v2140, %v2144
    %v2147 = vtanh.pop %v2146
    %v2148 = vmul.f32 %v2138, %v2147
    %2150 = vrot.lane.b32.xlu0 %v2148, 64
    %v2151 = vpop.permute.xlu0 %2150
    %v2153 = vsel %vm201, %v2151, %v2116
    %2154 = vmatprep.subr.mxu0 %v146
    %2155 = vmatpush1.msra.mxu0 %v145
    %2156 = vmatprep.subr.mxu0 %v142
    %2157 = vmatpush1.msra.mxu0 %v141
    %2158 = vmatprep.subr.mxu0 %v138
    %2159 = vmatpush1.msra.mxu0 %v137
    %2160 = vmatprep.subr.mxu0 %v134
    %2161 = vmatpush1.msra.mxu0 %v133
    %2162 = vmatprep.subr.mxu0 %v130
    %2163 = vmatpush1.msra.mxu0 %v129
    %2164 = vmatprep.subr.mxu0 %v126
    %2165 = vmatpush1.msra.mxu0 %v125
    %2166 = vmatprep.subr.mxu0 %v122
    %2167 = vmatpush1.msra.mxu0 %v121
    %2168 = vmatprep.subr.mxu0 %v118
    %2169 = vmatpush1.msra.mxu0 %v117
    %2170 = vmatprep.subr.mxu0 %v114
    %2171 = vmatpush1.msra.mxu0 %v113
    %2172 = vmatprep.subr.mxu0 %v110
    %2173 = vmatpush1.msra.mxu0 %v109
    %2174 = vmatprep.subr.mxu0 %v106
    %2175 = vmatpush1.msra.mxu0 %v105
    %2176 = vmatprep.subr.mxu0 %v102
    %2177 = vmatpush1.msra.mxu0 %v101
    %2178 = vmatprep.subr.mxu0 %v98
    %2179 = vmatpush1.msra.mxu0 %v97
    %2180 = vmatprep.subr.mxu0 %v94
    %2181 = vmatpush1.msra.mxu0 %v93
    %2182 = vmatprep.subr.mxu0 %v90
    %2183 = vmatpush1.msra.mxu0 %v89
    %2184 = vmatprep.subr.mxu0 %v86
    %2185 = vmatpush1.msra.mxu0 %v85
    %2186 = vmatprep.subr.mxu0 0.0
    %2187 = vmatpush2.msra.mxu0 0.0
    %2188 = vmatprep.subr.mxu0 0.0
    %2189 = vmatpush2.msra.mxu0 0.0
    %2190 = vmatprep.subr.mxu0 0.0
    %2191 = vmatpush2.msra.mxu0 0.0
    %2192 = vmatprep.subr.mxu0 0.0
    %2193 = vmatpush2.msra.mxu0 0.0
    %2194 = vmatprep.subr.mxu0 0.0
    %2195 = vmatpush2.msra.mxu0 0.0
    %2196 = vmatprep.subr.mxu0 0.0
    %2197 = vmatpush2.msra.mxu0 0.0
    %2198 = vmatprep.subr.mxu0 0.0
    %2199 = vmatpush2.msra.mxu0 0.0
    %2200 = vmatprep.subr.mxu0 0.0
    %2201 = vmatpush2.msra.mxu0 0.0
    %2202 = vmatprep.subr.mxu0 0.0
    %2203 = vmatpush2.msra.mxu0 0.0
    %2204 = vmatprep.subr.mxu0 0.0
    %2205 = vmatpush2.msra.mxu0 0.0
    %2206 = vmatprep.subr.mxu0 0.0
    %2207 = vmatpush2.msra.mxu0 0.0
    %2208 = vmatprep.subr.mxu0 0.0
    %2209 = vmatpush2.msra.mxu0 0.0
    %2210 = vmatprep.subr.mxu0 0.0
    %2211 = vmatpush2.msra.mxu0 0.0
    %2212 = vmatprep.subr.mxu0 0.0
    %2213 = vmatpush2.msra.mxu0 0.0
    %2214 = vmatprep.subr.mxu0 0.0
    %2215 = vmatpush2.msra.mxu0 0.0
    %2216 = vmatprep.subr.mxu0 0.0
    %2217 = vmatpush2.msra.mxu0 0.0
    %2218 = vmatprep.mubr.f32.mxu0 0.0
    %2219 = vmatmul.mubr.f32.gmra.mxu0 %v2153
    %v2220 = vpop.f32.mrf.mxu0
    %v2221 = vadd.f32 0.0, %v2220
    %v2222 = vpop.f32.mrf.mxu0
    %v2223 = vadd.f32 0.0, %v2222
    %2224 = vdwg.mxu0
    %2225 = vmatprep.subr.mxu0 %v148
    %2226 = vmatpush1.msra.mxu0 %v147
    %2227 = vmatprep.subr.mxu0 %v144
    %2228 = vmatpush1.msra.mxu0 %v143
    %2229 = vmatprep.subr.mxu0 %v140
    %2230 = vmatpush1.msra.mxu0 %v139
    %2231 = vmatprep.subr.mxu0 %v136
    %2232 = vmatpush1.msra.mxu0 %v135
    %2233 = vmatprep.subr.mxu0 %v132
    %2234 = vmatpush1.msra.mxu0 %v131
    %2235 = vmatprep.subr.mxu0 %v128
    %2236 = vmatpush1.msra.mxu0 %v127
    %2237 = vmatprep.subr.mxu0 %v124
    %2238 = vmatpush1.msra.mxu0 %v123
    %2239 = vmatprep.subr.mxu0 %v120
    %2240 = vmatpush1.msra.mxu0 %v119
    %2241 = vmatprep.subr.mxu0 %v116
    %2242 = vmatpush1.msra.mxu0 %v115
    %2243 = vmatprep.subr.mxu0 %v112
    %2244 = vmatpush1.msra.mxu0 %v111
    %2245 = vmatprep.subr.mxu0 %v108
    %2246 = vmatpush1.msra.mxu0 %v107
    %2247 = vmatprep.subr.mxu0 %v104
    %2248 = vmatpush1.msra.mxu0 %v103
    %2249 = vmatprep.subr.mxu0 %v100
    %2250 = vmatpush1.msra.mxu0 %v99
    %2251 = vmatprep.subr.mxu0 %v96
    %2252 = vmatpush1.msra.mxu0 %v95
    %2253 = vmatprep.subr.mxu0 %v92
    %2254 = vmatpush1.msra.mxu0 %v91
    %2255 = vmatprep.subr.mxu0 %v88
    %2256 = vmatpush1.msra.mxu0 %v87
    %2257 = vmatprep.subr.mxu0 0.0
    %2258 = vmatpush2.msra.mxu0 0.0
    %2259 = vmatprep.subr.mxu0 0.0
    %2260 = vmatpush2.msra.mxu0 0.0
    %2261 = vmatprep.subr.mxu0 0.0
    %2262 = vmatpush2.msra.mxu0 0.0
    %2263 = vmatprep.subr.mxu0 0.0
    %2264 = vmatpush2.msra.mxu0 0.0
    %2265 = vmatprep.subr.mxu0 0.0
    %2266 = vmatpush2.msra.mxu0 0.0
    %2267 = vmatprep.subr.mxu0 0.0
    %2268 = vmatpush2.msra.mxu0 0.0
    %2269 = vmatprep.subr.mxu0 0.0
    %2270 = vmatpush2.msra.mxu0 0.0
    %2271 = vmatprep.subr.mxu0 0.0
    %2272 = vmatpush2.msra.mxu0 0.0
    %2273 = vmatprep.subr.mxu0 0.0
    %2274 = vmatpush2.msra.mxu0 0.0
    %2275 = vmatprep.subr.mxu0 0.0
    %2276 = vmatpush2.msra.mxu0 0.0
    %2277 = vmatprep.subr.mxu0 0.0
    %2278 = vmatpush2.msra.mxu0 0.0
    %2279 = vmatprep.subr.mxu0 0.0
    %2280 = vmatpush2.msra.mxu0 0.0
    %2281 = vmatprep.subr.mxu0 0.0
    %2282 = vmatpush2.msra.mxu0 0.0
    %2283 = vmatprep.subr.mxu0 0.0
    %2284 = vmatpush2.msra.mxu0 0.0
    %2285 = vmatprep.subr.mxu0 0.0
    %2286 = vmatpush2.msra.mxu0 0.0
    %2287 = vmatprep.subr.mxu0 0.0
    %2288 = vmatpush2.msra.mxu0 0.0
    %2289 = vmatprep.mubr.f32.mxu0 0.0
    %2290 = vmatmul.mubr.f32.gmra.mxu0 %v2153
    %v2291 = vpop.f32.mrf.mxu0
    %v2292 = vadd.f32 0.0, %v2291
    %v2293 = vpop.f32.mrf.mxu0
    %v2294 = vadd.f32 0.0, %v2293
    %2295 = vdwg.mxu0
    %v2296 = vadd.f32 %v2221, %v178
    %v2297 = vadd.f32 %v2223, %v182
    %v2298 = vxor.u32 %v2296, 2147483648
    %v2299 = vxor.u32 %v2297, 2147483648
    %v2300 = vmul.f32 %v2298, 1.442695
    %v2301 = vpow.pop %v2300
    %v2302 = vmul.f32 %v2299, 1.442695
    %v2303 = vpow.pop %v2302
    %v2304 = vadd.f32 %v2301, 1.0
    %v2305 = vadd.f32 %v2303, 1.0
    %v2306 = vrcp.pop %v2304
    %v2307 = vmul.f32 1.0, %v2306
    %v2308 = vrcp.pop %v2305
    %v2309 = vmul.f32 1.0, %v2308
    %v2310 = vtanh.pop %v2297
    %v2311 = vmul.f32 %v2307, %v2114
    %v2312 = vmul.f32 %v2307, %v2310
    %2314 = vrot.lane.b32.xlu0 %v2312, 64
    %v2315 = vpop.permute.xlu0 %2314
    %v2317 = vadd.f32 %v2311, %v2315
    %v2318 = vtanh.pop %v2317
    %v2319 = vmul.f32 %v2309, %v2318
    %2320 = vset.pattern.permute.xlu0 10
    %2321 = vperm.xlu0 %2320, %v276
    %v2322 = vpop.permute.xlu0 %2321
    %v2324 = vmul.f32 %v2322, %v154
    %v2325 = vmul.f32 %v2322, %v158
    %v2326 = vadd.f32 %v2324, %v2292
    %v2327 = vadd.f32 %v2325, %v2294
    %v2328 = vadd.f32 %v2326, %v166
    %v2329 = vadd.f32 %v2327, %v170
    %v2330 = vxor.u32 %v2328, 2147483648
    %v2331 = vxor.u32 %v2329, 2147483648
    %v2332 = vmul.f32 %v2330, 1.442695
    %v2333 = vpow.pop %v2332
    %v2334 = vmul.f32 %v2331, 1.442695
    %v2335 = vpow.pop %v2334
    %v2336 = vadd.f32 %v2333, 1.0
    %v2337 = vadd.f32 %v2335, 1.0
    %v2338 = vrcp.pop %v2336
    %v2339 = vmul.f32 1.0, %v2338
    %v2340 = vrcp.pop %v2337
    %v2341 = vmul.f32 1.0, %v2340
    %v2342 = vtanh.pop %v2329
    %v2343 = vmul.f32 %v2339, %v2146
    %v2344 = vmul.f32 %v2339, %v2342
    %2346 = vrot.lane.b32.xlu0 %v2344, 64
    %v2347 = vpop.permute.xlu0 %2346
    %v2349 = vadd.f32 %v2343, %v2347
    %v2350 = vtanh.pop %v2349
    %v2351 = vmul.f32 %v2341, %v2350
    %2353 = vrot.lane.b32.xlu0 %v2351, 64
    %v2354 = vpop.permute.xlu0 %2353
    %v2356 = vsel %vm201, %v2354, %v2319
    %2357 = vmatprep.subr.mxu0 %v146
    %2358 = vmatpush1.msra.mxu0 %v145
    %2359 = vmatprep.subr.mxu0 %v142
    %2360 = vmatpush1.msra.mxu0 %v141
    %2361 = vmatprep.subr.mxu0 %v138
    %2362 = vmatpush1.msra.mxu0 %v137
    %2363 = vmatprep.subr.mxu0 %v134
    %2364 = vmatpush1.msra.mxu0 %v133
    %2365 = vmatprep.subr.mxu0 %v130
    %2366 = vmatpush1.msra.mxu0 %v129
    %2367 = vmatprep.subr.mxu0 %v126
    %2368 = vmatpush1.msra.mxu0 %v125
    %2369 = vmatprep.subr.mxu0 %v122
    %2370 = vmatpush1.msra.mxu0 %v121
    %2371 = vmatprep.subr.mxu0 %v118
    %2372 = vmatpush1.msra.mxu0 %v117
    %2373 = vmatprep.subr.mxu0 %v114
    %2374 = vmatpush1.msra.mxu0 %v113
    %2375 = vmatprep.subr.mxu0 %v110
    %2376 = vmatpush1.msra.mxu0 %v109
    %2377 = vmatprep.subr.mxu0 %v106
    %2378 = vmatpush1.msra.mxu0 %v105
    %2379 = vmatprep.subr.mxu0 %v102
    %2380 = vmatpush1.msra.mxu0 %v101
    %2381 = vmatprep.subr.mxu0 %v98
    %2382 = vmatpush1.msra.mxu0 %v97
    %2383 = vmatprep.subr.mxu0 %v94
    %2384 = vmatpush1.msra.mxu0 %v93
    %2385 = vmatprep.subr.mxu0 %v90
    %2386 = vmatpush1.msra.mxu0 %v89
    %2387 = vmatprep.subr.mxu0 %v86
    %2388 = vmatpush1.msra.mxu0 %v85
    %2389 = vmatprep.subr.mxu0 0.0
    %2390 = vmatpush2.msra.mxu0 0.0
    %2391 = vmatprep.subr.mxu0 0.0
    %2392 = vmatpush2.msra.mxu0 0.0
    %2393 = vmatprep.subr.mxu0 0.0
    %2394 = vmatpush2.msra.mxu0 0.0
    %2395 = vmatprep.subr.mxu0 0.0
    %2396 = vmatpush2.msra.mxu0 0.0
    %2397 = vmatprep.subr.mxu0 0.0
    %2398 = vmatpush2.msra.mxu0 0.0
    %2399 = vmatprep.subr.mxu0 0.0
    %2400 = vmatpush2.msra.mxu0 0.0
    %2401 = vmatprep.subr.mxu0 0.0
    %2402 = vmatpush2.msra.mxu0 0.0
    %2403 = vmatprep.subr.mxu0 0.0
    %2404 = vmatpush2.msra.mxu0 0.0
    %2405 = vmatprep.subr.mxu0 0.0
    %2406 = vmatpush2.msra.mxu0 0.0
    %2407 = vmatprep.subr.mxu0 0.0
    %2408 = vmatpush2.msra.mxu0 0.0
    %2409 = vmatprep.subr.mxu0 0.0
    %2410 = vmatpush2.msra.mxu0 0.0
    %2411 = vmatprep.subr.mxu0 0.0
    %2412 = vmatpush2.msra.mxu0 0.0
    %2413 = vmatprep.subr.mxu0 0.0
    %2414 = vmatpush2.msra.mxu0 0.0
    %2415 = vmatprep.subr.mxu0 0.0
    %2416 = vmatpush2.msra.mxu0 0.0
    %2417 = vmatprep.subr.mxu0 0.0
    %2418 = vmatpush2.msra.mxu0 0.0
    %2419 = vmatprep.subr.mxu0 0.0
    %2420 = vmatpush2.msra.mxu0 0.0
    %2421 = vmatprep.mubr.f32.mxu0 0.0
    %2422 = vmatmul.mubr.f32.gmra.mxu0 %v2356
    %v2423 = vpop.f32.mrf.mxu0
    %v2424 = vadd.f32 0.0, %v2423
    %v2425 = vpop.f32.mrf.mxu0
    %v2426 = vadd.f32 0.0, %v2425
    %2427 = vdwg.mxu0
    %2428 = vmatprep.subr.mxu0 %v148
    %2429 = vmatpush1.msra.mxu0 %v147
    %2430 = vmatprep.subr.mxu0 %v144
    %2431 = vmatpush1.msra.mxu0 %v143
    %2432 = vmatprep.subr.mxu0 %v140
    %2433 = vmatpush1.msra.mxu0 %v139
    %2434 = vmatprep.subr.mxu0 %v136
    %2435 = vmatpush1.msra.mxu0 %v135
    %2436 = vmatprep.subr.mxu0 %v132
    %2437 = vmatpush1.msra.mxu0 %v131
    %2438 = vmatprep.subr.mxu0 %v128
    %2439 = vmatpush1.msra.mxu0 %v127
    %2440 = vmatprep.subr.mxu0 %v124
    %2441 = vmatpush1.msra.mxu0 %v123
    %2442 = vmatprep.subr.mxu0 %v120
    %2443 = vmatpush1.msra.mxu0 %v119
    %2444 = vmatprep.subr.mxu0 %v116
    %2445 = vmatpush1.msra.mxu0 %v115
    %2446 = vmatprep.subr.mxu0 %v112
    %2447 = vmatpush1.msra.mxu0 %v111
    %2448 = vmatprep.subr.mxu0 %v108
    %2449 = vmatpush1.msra.mxu0 %v107
    %2450 = vmatprep.subr.mxu0 %v104
    %2451 = vmatpush1.msra.mxu0 %v103
    %2452 = vmatprep.subr.mxu0 %v100
    %2453 = vmatpush1.msra.mxu0 %v99
    %2454 = vmatprep.subr.mxu0 %v96
    %2455 = vmatpush1.msra.mxu0 %v95
    %2456 = vmatprep.subr.mxu0 %v92
    %2457 = vmatpush1.msra.mxu0 %v91
    %2458 = vmatprep.subr.mxu0 %v88
    %2459 = vmatpush1.msra.mxu0 %v87
    %2460 = vmatprep.subr.mxu0 0.0
    %2461 = vmatpush2.msra.mxu0 0.0
    %2462 = vmatprep.subr.mxu0 0.0
    %2463 = vmatpush2.msra.mxu0 0.0
    %2464 = vmatprep.subr.mxu0 0.0
    %2465 = vmatpush2.msra.mxu0 0.0
    %2466 = vmatprep.subr.mxu0 0.0
    %2467 = vmatpush2.msra.mxu0 0.0
    %2468 = vmatprep.subr.mxu0 0.0
    %2469 = vmatpush2.msra.mxu0 0.0
    %2470 = vmatprep.subr.mxu0 0.0
    %2471 = vmatpush2.msra.mxu0 0.0
    %2472 = vmatprep.subr.mxu0 0.0
    %2473 = vmatpush2.msra.mxu0 0.0
    %2474 = vmatprep.subr.mxu0 0.0
    %2475 = vmatpush2.msra.mxu0 0.0
    %2476 = vmatprep.subr.mxu0 0.0
    %2477 = vmatpush2.msra.mxu0 0.0
    %2478 = vmatprep.subr.mxu0 0.0
    %2479 = vmatpush2.msra.mxu0 0.0
    %2480 = vmatprep.subr.mxu0 0.0
    %2481 = vmatpush2.msra.mxu0 0.0
    %2482 = vmatprep.subr.mxu0 0.0
    %2483 = vmatpush2.msra.mxu0 0.0
    %2484 = vmatprep.subr.mxu0 0.0
    %2485 = vmatpush2.msra.mxu0 0.0
    %2486 = vmatprep.subr.mxu0 0.0
    %2487 = vmatpush2.msra.mxu0 0.0
    %2488 = vmatprep.subr.mxu0 0.0
    %2489 = vmatpush2.msra.mxu0 0.0
    %2490 = vmatprep.subr.mxu0 0.0
    %2491 = vmatpush2.msra.mxu0 0.0
    %2492 = vmatprep.mubr.f32.mxu0 0.0
    %2493 = vmatmul.mubr.f32.gmra.mxu0 %v2356
    %v2494 = vpop.f32.mrf.mxu0
    %v2495 = vadd.f32 0.0, %v2494
    %v2496 = vpop.f32.mrf.mxu0
    %v2497 = vadd.f32 0.0, %v2496
    %2498 = vdwg.mxu0
    %v2499 = vadd.f32 %v2424, %v178
    %v2500 = vadd.f32 %v2426, %v182
    %v2501 = vxor.u32 %v2499, 2147483648
    %v2502 = vxor.u32 %v2500, 2147483648
    %v2503 = vmul.f32 %v2501, 1.442695
    %v2504 = vpow.pop %v2503
    %v2505 = vmul.f32 %v2502, 1.442695
    %v2506 = vpow.pop %v2505
    %v2507 = vadd.f32 %v2504, 1.0
    %v2508 = vadd.f32 %v2506, 1.0
    %v2509 = vrcp.pop %v2507
    %v2510 = vmul.f32 1.0, %v2509
    %v2511 = vrcp.pop %v2508
    %v2512 = vmul.f32 1.0, %v2511
    %v2513 = vtanh.pop %v2500
    %v2514 = vmul.f32 %v2510, %v2317
    %v2515 = vmul.f32 %v2510, %v2513
    %2517 = vrot.lane.b32.xlu0 %v2515, 64
    %v2518 = vpop.permute.xlu0 %2517
    %v2520 = vadd.f32 %v2514, %v2518
    %v2521 = vtanh.pop %v2520
    %v2522 = vmul.f32 %v2512, %v2521
    %2523 = vset.pattern.permute.xlu0 11
    %2524 = vperm.xlu0 %2523, %v276
    %v2525 = vpop.permute.xlu0 %2524
    %v2527 = vmul.f32 %v2525, %v154
    %v2528 = vmul.f32 %v2525, %v158
    %v2529 = vadd.f32 %v2527, %v2495
    %v2530 = vadd.f32 %v2528, %v2497
    %v2531 = vadd.f32 %v2529, %v166
    %v2532 = vadd.f32 %v2530, %v170
    %v2533 = vxor.u32 %v2531, 2147483648
    %v2534 = vxor.u32 %v2532, 2147483648
    %v2535 = vmul.f32 %v2533, 1.442695
    %v2536 = vpow.pop %v2535
    %v2537 = vmul.f32 %v2534, 1.442695
    %v2538 = vpow.pop %v2537
    %v2539 = vadd.f32 %v2536, 1.0
    %v2540 = vadd.f32 %v2538, 1.0
    %v2541 = vrcp.pop %v2539
    %v2542 = vmul.f32 1.0, %v2541
    %v2543 = vrcp.pop %v2540
    %v2544 = vmul.f32 1.0, %v2543
    %v2545 = vtanh.pop %v2532
    %v2546 = vmul.f32 %v2542, %v2349
    %v2547 = vmul.f32 %v2542, %v2545
    %2549 = vrot.lane.b32.xlu0 %v2547, 64
    %v2550 = vpop.permute.xlu0 %2549
    %v2552 = vadd.f32 %v2546, %v2550
    %v2553 = vtanh.pop %v2552
    %v2554 = vmul.f32 %v2544, %v2553
    %2556 = vrot.lane.b32.xlu0 %v2554, 64
    %v2557 = vpop.permute.xlu0 %2556
    %v2559 = vsel %vm201, %v2557, %v2522
    %2560 = vmatprep.subr.mxu0 %v146
    %2561 = vmatpush1.msra.mxu0 %v145
    %2562 = vmatprep.subr.mxu0 %v142
    %2563 = vmatpush1.msra.mxu0 %v141
    %2564 = vmatprep.subr.mxu0 %v138
    %2565 = vmatpush1.msra.mxu0 %v137
    %2566 = vmatprep.subr.mxu0 %v134
    %2567 = vmatpush1.msra.mxu0 %v133
    %2568 = vmatprep.subr.mxu0 %v130
    %2569 = vmatpush1.msra.mxu0 %v129
    %2570 = vmatprep.subr.mxu0 %v126
    %2571 = vmatpush1.msra.mxu0 %v125
    %2572 = vmatprep.subr.mxu0 %v122
    %2573 = vmatpush1.msra.mxu0 %v121
    %2574 = vmatprep.subr.mxu0 %v118
    %2575 = vmatpush1.msra.mxu0 %v117
    %2576 = vmatprep.subr.mxu0 %v114
    %2577 = vmatpush1.msra.mxu0 %v113
    %2578 = vmatprep.subr.mxu0 %v110
    %2579 = vmatpush1.msra.mxu0 %v109
    %2580 = vmatprep.subr.mxu0 %v106
    %2581 = vmatpush1.msra.mxu0 %v105
    %2582 = vmatprep.subr.mxu0 %v102
    %2583 = vmatpush1.msra.mxu0 %v101
    %2584 = vmatprep.subr.mxu0 %v98
    %2585 = vmatpush1.msra.mxu0 %v97
    %2586 = vmatprep.subr.mxu0 %v94
    %2587 = vmatpush1.msra.mxu0 %v93
    %2588 = vmatprep.subr.mxu0 %v90
    %2589 = vmatpush1.msra.mxu0 %v89
    %2590 = vmatprep.subr.mxu0 %v86
    %2591 = vmatpush1.msra.mxu0 %v85
    %2592 = vmatprep.subr.mxu0 0.0
    %2593 = vmatpush2.msra.mxu0 0.0
    %2594 = vmatprep.subr.mxu0 0.0
    %2595 = vmatpush2.msra.mxu0 0.0
    %2596 = vmatprep.subr.mxu0 0.0
    %2597 = vmatpush2.msra.mxu0 0.0
    %2598 = vmatprep.subr.mxu0 0.0
    %2599 = vmatpush2.msra.mxu0 0.0
    %2600 = vmatprep.subr.mxu0 0.0
    %2601 = vmatpush2.msra.mxu0 0.0
    %2602 = vmatprep.subr.mxu0 0.0
    %2603 = vmatpush2.msra.mxu0 0.0
    %2604 = vmatprep.subr.mxu0 0.0
    %2605 = vmatpush2.msra.mxu0 0.0
    %2606 = vmatprep.subr.mxu0 0.0
    %2607 = vmatpush2.msra.mxu0 0.0
    %2608 = vmatprep.subr.mxu0 0.0
    %2609 = vmatpush2.msra.mxu0 0.0
    %2610 = vmatprep.subr.mxu0 0.0
    %2611 = vmatpush2.msra.mxu0 0.0
    %2612 = vmatprep.subr.mxu0 0.0
    %2613 = vmatpush2.msra.mxu0 0.0
    %2614 = vmatprep.subr.mxu0 0.0
    %2615 = vmatpush2.msra.mxu0 0.0
    %2616 = vmatprep.subr.mxu0 0.0
    %2617 = vmatpush2.msra.mxu0 0.0
    %2618 = vmatprep.subr.mxu0 0.0
    %2619 = vmatpush2.msra.mxu0 0.0
    %2620 = vmatprep.subr.mxu0 0.0
    %2621 = vmatpush2.msra.mxu0 0.0
    %2622 = vmatprep.subr.mxu0 0.0
    %2623 = vmatpush2.msra.mxu0 0.0
    %2624 = vmatprep.mubr.f32.mxu0 0.0
    %2625 = vmatmul.mubr.f32.gmra.mxu0 %v2559
    %v2626 = vpop.f32.mrf.mxu0
    %v2627 = vadd.f32 0.0, %v2626
    %v2628 = vpop.f32.mrf.mxu0
    %v2629 = vadd.f32 0.0, %v2628
    %2630 = vdwg.mxu0
    %2631 = vmatprep.subr.mxu0 %v148
    %2632 = vmatpush1.msra.mxu0 %v147
    %2633 = vmatprep.subr.mxu0 %v144
    %2634 = vmatpush1.msra.mxu0 %v143
    %2635 = vmatprep.subr.mxu0 %v140
    %2636 = vmatpush1.msra.mxu0 %v139
    %2637 = vmatprep.subr.mxu0 %v136
    %2638 = vmatpush1.msra.mxu0 %v135
    %2639 = vmatprep.subr.mxu0 %v132
    %2640 = vmatpush1.msra.mxu0 %v131
    %2641 = vmatprep.subr.mxu0 %v128
    %2642 = vmatpush1.msra.mxu0 %v127
    %2643 = vmatprep.subr.mxu0 %v124
    %2644 = vmatpush1.msra.mxu0 %v123
    %2645 = vmatprep.subr.mxu0 %v120
    %2646 = vmatpush1.msra.mxu0 %v119
    %2647 = vmatprep.subr.mxu0 %v116
    %2648 = vmatpush1.msra.mxu0 %v115
    %2649 = vmatprep.subr.mxu0 %v112
    %2650 = vmatpush1.msra.mxu0 %v111
    %2651 = vmatprep.subr.mxu0 %v108
    %2652 = vmatpush1.msra.mxu0 %v107
    %2653 = vmatprep.subr.mxu0 %v104
    %2654 = vmatpush1.msra.mxu0 %v103
    %2655 = vmatprep.subr.mxu0 %v100
    %2656 = vmatpush1.msra.mxu0 %v99
    %2657 = vmatprep.subr.mxu0 %v96
    %2658 = vmatpush1.msra.mxu0 %v95
    %2659 = vmatprep.subr.mxu0 %v92
    %2660 = vmatpush1.msra.mxu0 %v91
    %2661 = vmatprep.subr.mxu0 %v88
    %2662 = vmatpush1.msra.mxu0 %v87
    %2663 = vmatprep.subr.mxu0 0.0
    %2664 = vmatpush2.msra.mxu0 0.0
    %2665 = vmatprep.subr.mxu0 0.0
    %2666 = vmatpush2.msra.mxu0 0.0
    %2667 = vmatprep.subr.mxu0 0.0
    %2668 = vmatpush2.msra.mxu0 0.0
    %2669 = vmatprep.subr.mxu0 0.0
    %2670 = vmatpush2.msra.mxu0 0.0
    %2671 = vmatprep.subr.mxu0 0.0
    %2672 = vmatpush2.msra.mxu0 0.0
    %2673 = vmatprep.subr.mxu0 0.0
    %2674 = vmatpush2.msra.mxu0 0.0
    %2675 = vmatprep.subr.mxu0 0.0
    %2676 = vmatpush2.msra.mxu0 0.0
    %2677 = vmatprep.subr.mxu0 0.0
    %2678 = vmatpush2.msra.mxu0 0.0
    %2679 = vmatprep.subr.mxu0 0.0
    %2680 = vmatpush2.msra.mxu0 0.0
    %2681 = vmatprep.subr.mxu0 0.0
    %2682 = vmatpush2.msra.mxu0 0.0
    %2683 = vmatprep.subr.mxu0 0.0
    %2684 = vmatpush2.msra.mxu0 0.0
    %2685 = vmatprep.subr.mxu0 0.0
    %2686 = vmatpush2.msra.mxu0 0.0
    %2687 = vmatprep.subr.mxu0 0.0
    %2688 = vmatpush2.msra.mxu0 0.0
    %2689 = vmatprep.subr.mxu0 0.0
    %2690 = vmatpush2.msra.mxu0 0.0
    %2691 = vmatprep.subr.mxu0 0.0
    %2692 = vmatpush2.msra.mxu0 0.0
    %2693 = vmatprep.subr.mxu0 0.0
    %2694 = vmatpush2.msra.mxu0 0.0
    %2695 = vmatprep.mubr.f32.mxu0 0.0
    %2696 = vmatmul.mubr.f32.gmra.mxu0 %v2559
    %v2697 = vpop.f32.mrf.mxu0
    %v2698 = vadd.f32 0.0, %v2697
    %v2699 = vpop.f32.mrf.mxu0
    %v2700 = vadd.f32 0.0, %v2699
    %2701 = vdwg.mxu0
    %v2702 = vadd.f32 %v2627, %v178
    %v2703 = vadd.f32 %v2629, %v182
    %v2704 = vxor.u32 %v2702, 2147483648
    %v2705 = vxor.u32 %v2703, 2147483648
    %v2706 = vmul.f32 %v2704, 1.442695
    %v2707 = vpow.pop %v2706
    %v2708 = vmul.f32 %v2705, 1.442695
    %v2709 = vpow.pop %v2708
    %v2710 = vadd.f32 %v2707, 1.0
    %v2711 = vadd.f32 %v2709, 1.0
    %v2712 = vrcp.pop %v2710
    %v2713 = vmul.f32 1.0, %v2712
    %v2714 = vrcp.pop %v2711
    %v2715 = vmul.f32 1.0, %v2714
    %v2716 = vtanh.pop %v2703
    %v2717 = vmul.f32 %v2713, %v2520
    %v2718 = vmul.f32 %v2713, %v2716
    %2720 = vrot.lane.b32.xlu0 %v2718, 64
    %v2721 = vpop.permute.xlu0 %2720
    %v2723 = vadd.f32 %v2717, %v2721
    %v2724 = vtanh.pop %v2723
    %v2725 = vmul.f32 %v2715, %v2724
    %2726 = vset.pattern.permute.xlu0 12
    %2727 = vperm.xlu0 %2726, %v276
    %v2728 = vpop.permute.xlu0 %2727
    %v2730 = vmul.f32 %v2728, %v154
    %v2731 = vmul.f32 %v2728, %v158
    %v2732 = vadd.f32 %v2730, %v2698
    %v2733 = vadd.f32 %v2731, %v2700
    %v2734 = vadd.f32 %v2732, %v166
    %v2735 = vadd.f32 %v2733, %v170
    %v2736 = vxor.u32 %v2734, 2147483648
    %v2737 = vxor.u32 %v2735, 2147483648
    %v2738 = vmul.f32 %v2736, 1.442695
    %v2739 = vpow.pop %v2738
    %v2740 = vmul.f32 %v2737, 1.442695
    %v2741 = vpow.pop %v2740
    %v2742 = vadd.f32 %v2739, 1.0
    %v2743 = vadd.f32 %v2741, 1.0
    %v2744 = vrcp.pop %v2742
    %v2745 = vmul.f32 1.0, %v2744
    %v2746 = vrcp.pop %v2743
    %v2747 = vmul.f32 1.0, %v2746
    %v2748 = vtanh.pop %v2735
    %v2749 = vmul.f32 %v2745, %v2552
    %v2750 = vmul.f32 %v2745, %v2748
    %2752 = vrot.lane.b32.xlu0 %v2750, 64
    %v2753 = vpop.permute.xlu0 %2752
    %v2755 = vadd.f32 %v2749, %v2753
    %v2756 = vtanh.pop %v2755
    %v2757 = vmul.f32 %v2747, %v2756
    %2759 = vrot.lane.b32.xlu0 %v2757, 64
    %v2760 = vpop.permute.xlu0 %2759
    %v2762 = vsel %vm201, %v2760, %v2725
    %2763 = vmatprep.subr.mxu0 %v146
    %2764 = vmatpush1.msra.mxu0 %v145
    %2765 = vmatprep.subr.mxu0 %v142
    %2766 = vmatpush1.msra.mxu0 %v141
    %2767 = vmatprep.subr.mxu0 %v138
    %2768 = vmatpush1.msra.mxu0 %v137
    %2769 = vmatprep.subr.mxu0 %v134
    %2770 = vmatpush1.msra.mxu0 %v133
    %2771 = vmatprep.subr.mxu0 %v130
    %2772 = vmatpush1.msra.mxu0 %v129
    %2773 = vmatprep.subr.mxu0 %v126
    %2774 = vmatpush1.msra.mxu0 %v125
    %2775 = vmatprep.subr.mxu0 %v122
    %2776 = vmatpush1.msra.mxu0 %v121
    %2777 = vmatprep.subr.mxu0 %v118
    %2778 = vmatpush1.msra.mxu0 %v117
    %2779 = vmatprep.subr.mxu0 %v114
    %2780 = vmatpush1.msra.mxu0 %v113
    %2781 = vmatprep.subr.mxu0 %v110
    %2782 = vmatpush1.msra.mxu0 %v109
    %2783 = vmatprep.subr.mxu0 %v106
    %2784 = vmatpush1.msra.mxu0 %v105
    %2785 = vmatprep.subr.mxu0 %v102
    %2786 = vmatpush1.msra.mxu0 %v101
    %2787 = vmatprep.subr.mxu0 %v98
    %2788 = vmatpush1.msra.mxu0 %v97
    %2789 = vmatprep.subr.mxu0 %v94
    %2790 = vmatpush1.msra.mxu0 %v93
    %2791 = vmatprep.subr.mxu0 %v90
    %2792 = vmatpush1.msra.mxu0 %v89
    %2793 = vmatprep.subr.mxu0 %v86
    %2794 = vmatpush1.msra.mxu0 %v85
    %2795 = vmatprep.subr.mxu0 0.0
    %2796 = vmatpush2.msra.mxu0 0.0
    %2797 = vmatprep.subr.mxu0 0.0
    %2798 = vmatpush2.msra.mxu0 0.0
    %2799 = vmatprep.subr.mxu0 0.0
    %2800 = vmatpush2.msra.mxu0 0.0
    %2801 = vmatprep.subr.mxu0 0.0
    %2802 = vmatpush2.msra.mxu0 0.0
    %2803 = vmatprep.subr.mxu0 0.0
    %2804 = vmatpush2.msra.mxu0 0.0
    %2805 = vmatprep.subr.mxu0 0.0
    %2806 = vmatpush2.msra.mxu0 0.0
    %2807 = vmatprep.subr.mxu0 0.0
    %2808 = vmatpush2.msra.mxu0 0.0
    %2809 = vmatprep.subr.mxu0 0.0
    %2810 = vmatpush2.msra.mxu0 0.0
    %2811 = vmatprep.subr.mxu0 0.0
    %2812 = vmatpush2.msra.mxu0 0.0
    %2813 = vmatprep.subr.mxu0 0.0
    %2814 = vmatpush2.msra.mxu0 0.0
    %2815 = vmatprep.subr.mxu0 0.0
    %2816 = vmatpush2.msra.mxu0 0.0
    %2817 = vmatprep.subr.mxu0 0.0
    %2818 = vmatpush2.msra.mxu0 0.0
    %2819 = vmatprep.subr.mxu0 0.0
    %2820 = vmatpush2.msra.mxu0 0.0
    %2821 = vmatprep.subr.mxu0 0.0
    %2822 = vmatpush2.msra.mxu0 0.0
    %2823 = vmatprep.subr.mxu0 0.0
    %2824 = vmatpush2.msra.mxu0 0.0
    %2825 = vmatprep.subr.mxu0 0.0
    %2826 = vmatpush2.msra.mxu0 0.0
    %2827 = vmatprep.mubr.f32.mxu0 0.0
    %2828 = vmatmul.mubr.f32.gmra.mxu0 %v2762
    %v2829 = vpop.f32.mrf.mxu0
    %v2830 = vadd.f32 0.0, %v2829
    %v2831 = vpop.f32.mrf.mxu0
    %v2832 = vadd.f32 0.0, %v2831
    %2833 = vdwg.mxu0
    %2834 = vmatprep.subr.mxu0 %v148
    %2835 = vmatpush1.msra.mxu0 %v147
    %2836 = vmatprep.subr.mxu0 %v144
    %2837 = vmatpush1.msra.mxu0 %v143
    %2838 = vmatprep.subr.mxu0 %v140
    %2839 = vmatpush1.msra.mxu0 %v139
    %2840 = vmatprep.subr.mxu0 %v136
    %2841 = vmatpush1.msra.mxu0 %v135
    %2842 = vmatprep.subr.mxu0 %v132
    %2843 = vmatpush1.msra.mxu0 %v131
    %2844 = vmatprep.subr.mxu0 %v128
    %2845 = vmatpush1.msra.mxu0 %v127
    %2846 = vmatprep.subr.mxu0 %v124
    %2847 = vmatpush1.msra.mxu0 %v123
    %2848 = vmatprep.subr.mxu0 %v120
    %2849 = vmatpush1.msra.mxu0 %v119
    %2850 = vmatprep.subr.mxu0 %v116
    %2851 = vmatpush1.msra.mxu0 %v115
    %2852 = vmatprep.subr.mxu0 %v112
    %2853 = vmatpush1.msra.mxu0 %v111
    %2854 = vmatprep.subr.mxu0 %v108
    %2855 = vmatpush1.msra.mxu0 %v107
    %2856 = vmatprep.subr.mxu0 %v104
    %2857 = vmatpush1.msra.mxu0 %v103
    %2858 = vmatprep.subr.mxu0 %v100
    %2859 = vmatpush1.msra.mxu0 %v99
    %2860 = vmatprep.subr.mxu0 %v96
    %2861 = vmatpush1.msra.mxu0 %v95
    %2862 = vmatprep.subr.mxu0 %v92
    %2863 = vmatpush1.msra.mxu0 %v91
    %2864 = vmatprep.subr.mxu0 %v88
    %2865 = vmatpush1.msra.mxu0 %v87
    %2866 = vmatprep.subr.mxu0 0.0
    %2867 = vmatpush2.msra.mxu0 0.0
    %2868 = vmatprep.subr.mxu0 0.0
    %2869 = vmatpush2.msra.mxu0 0.0
    %2870 = vmatprep.subr.mxu0 0.0
    %2871 = vmatpush2.msra.mxu0 0.0
    %2872 = vmatprep.subr.mxu0 0.0
    %2873 = vmatpush2.msra.mxu0 0.0
    %2874 = vmatprep.subr.mxu0 0.0
    %2875 = vmatpush2.msra.mxu0 0.0
    %2876 = vmatprep.subr.mxu0 0.0
    %2877 = vmatpush2.msra.mxu0 0.0
    %2878 = vmatprep.subr.mxu0 0.0
    %2879 = vmatpush2.msra.mxu0 0.0
    %2880 = vmatprep.subr.mxu0 0.0
    %2881 = vmatpush2.msra.mxu0 0.0
    %2882 = vmatprep.subr.mxu0 0.0
    %2883 = vmatpush2.msra.mxu0 0.0
    %2884 = vmatprep.subr.mxu0 0.0
    %2885 = vmatpush2.msra.mxu0 0.0
    %2886 = vmatprep.subr.mxu0 0.0
    %2887 = vmatpush2.msra.mxu0 0.0
    %2888 = vmatprep.subr.mxu0 0.0
    %2889 = vmatpush2.msra.mxu0 0.0
    %2890 = vmatprep.subr.mxu0 0.0
    %2891 = vmatpush2.msra.mxu0 0.0
    %2892 = vmatprep.subr.mxu0 0.0
    %2893 = vmatpush2.msra.mxu0 0.0
    %2894 = vmatprep.subr.mxu0 0.0
    %2895 = vmatpush2.msra.mxu0 0.0
    %2896 = vmatprep.subr.mxu0 0.0
    %2897 = vmatpush2.msra.mxu0 0.0
    %2898 = vmatprep.mubr.f32.mxu0 0.0
    %2899 = vmatmul.mubr.f32.gmra.mxu0 %v2762
    %v2900 = vpop.f32.mrf.mxu0
    %v2901 = vadd.f32 0.0, %v2900
    %v2902 = vpop.f32.mrf.mxu0
    %v2903 = vadd.f32 0.0, %v2902
    %2904 = vdwg.mxu0
    %v2905 = vadd.f32 %v2830, %v178
    %v2906 = vadd.f32 %v2832, %v182
    %v2907 = vxor.u32 %v2905, 2147483648
    %v2908 = vxor.u32 %v2906, 2147483648
    %v2909 = vmul.f32 %v2907, 1.442695
    %v2910 = vpow.pop %v2909
    %v2911 = vmul.f32 %v2908, 1.442695
    %v2912 = vpow.pop %v2911
    %v2913 = vadd.f32 %v2910, 1.0
    %v2914 = vadd.f32 %v2912, 1.0
    %v2915 = vrcp.pop %v2913
    %v2916 = vmul.f32 1.0, %v2915
    %v2917 = vrcp.pop %v2914
    %v2918 = vmul.f32 1.0, %v2917
    %v2919 = vtanh.pop %v2906
    %v2920 = vmul.f32 %v2916, %v2723
    %v2921 = vmul.f32 %v2916, %v2919
    %2923 = vrot.lane.b32.xlu0 %v2921, 64
    %v2924 = vpop.permute.xlu0 %2923
    %v2926 = vadd.f32 %v2920, %v2924
    %v2927 = vtanh.pop %v2926
    %v2928 = vmul.f32 %v2918, %v2927
    %2929 = vset.pattern.permute.xlu0 13
    %2930 = vperm.xlu0 %2929, %v276
    %v2931 = vpop.permute.xlu0 %2930
    %v2933 = vmul.f32 %v2931, %v154
    %v2934 = vmul.f32 %v2931, %v158
    %v2935 = vadd.f32 %v2933, %v2901
    %v2936 = vadd.f32 %v2934, %v2903
    %v2937 = vadd.f32 %v2935, %v166
    %v2938 = vadd.f32 %v2936, %v170
    %v2939 = vxor.u32 %v2937, 2147483648
    %v2940 = vxor.u32 %v2938, 2147483648
    %v2941 = vmul.f32 %v2939, 1.442695
    %v2942 = vpow.pop %v2941
    %v2943 = vmul.f32 %v2940, 1.442695
    %v2944 = vpow.pop %v2943
    %v2945 = vadd.f32 %v2942, 1.0
    %v2946 = vadd.f32 %v2944, 1.0
    %v2947 = vrcp.pop %v2945
    %v2948 = vmul.f32 1.0, %v2947
    %v2949 = vrcp.pop %v2946
    %v2950 = vmul.f32 1.0, %v2949
    %v2951 = vtanh.pop %v2938
    %v2952 = vmul.f32 %v2948, %v2755
    %v2953 = vmul.f32 %v2948, %v2951
    %2955 = vrot.lane.b32.xlu0 %v2953, 64
    %v2956 = vpop.permute.xlu0 %2955
    %v2958 = vadd.f32 %v2952, %v2956
    %v2959 = vtanh.pop %v2958
    %v2960 = vmul.f32 %v2950, %v2959
    %2962 = vrot.lane.b32.xlu0 %v2960, 64
    %v2963 = vpop.permute.xlu0 %2962
    %v2965 = vsel %vm201, %v2963, %v2928
    %2966 = vmatprep.subr.mxu0 %v146
    %2967 = vmatpush1.msra.mxu0 %v145
    %2968 = vmatprep.subr.mxu0 %v142
    %2969 = vmatpush1.msra.mxu0 %v141
    %2970 = vmatprep.subr.mxu0 %v138
    %2971 = vmatpush1.msra.mxu0 %v137
    %2972 = vmatprep.subr.mxu0 %v134
    %2973 = vmatpush1.msra.mxu0 %v133
    %2974 = vmatprep.subr.mxu0 %v130
    %2975 = vmatpush1.msra.mxu0 %v129
    %2976 = vmatprep.subr.mxu0 %v126
    %2977 = vmatpush1.msra.mxu0 %v125
    %2978 = vmatprep.subr.mxu0 %v122
    %2979 = vmatpush1.msra.mxu0 %v121
    %2980 = vmatprep.subr.mxu0 %v118
    %2981 = vmatpush1.msra.mxu0 %v117
    %2982 = vmatprep.subr.mxu0 %v114
    %2983 = vmatpush1.msra.mxu0 %v113
    %2984 = vmatprep.subr.mxu0 %v110
    %2985 = vmatpush1.msra.mxu0 %v109
    %2986 = vmatprep.subr.mxu0 %v106
    %2987 = vmatpush1.msra.mxu0 %v105
    %2988 = vmatprep.subr.mxu0 %v102
    %2989 = vmatpush1.msra.mxu0 %v101
    %2990 = vmatprep.subr.mxu0 %v98
    %2991 = vmatpush1.msra.mxu0 %v97
    %2992 = vmatprep.subr.mxu0 %v94
    %2993 = vmatpush1.msra.mxu0 %v93
    %2994 = vmatprep.subr.mxu0 %v90
    %2995 = vmatpush1.msra.mxu0 %v89
    %2996 = vmatprep.subr.mxu0 %v86
    %2997 = vmatpush1.msra.mxu0 %v85
    %2998 = vmatprep.subr.mxu0 0.0
    %2999 = vmatpush2.msra.mxu0 0.0
    %3000 = vmatprep.subr.mxu0 0.0
    %3001 = vmatpush2.msra.mxu0 0.0
    %3002 = vmatprep.subr.mxu0 0.0
    %3003 = vmatpush2.msra.mxu0 0.0
    %3004 = vmatprep.subr.mxu0 0.0
    %3005 = vmatpush2.msra.mxu0 0.0
    %3006 = vmatprep.subr.mxu0 0.0
    %3007 = vmatpush2.msra.mxu0 0.0
    %3008 = vmatprep.subr.mxu0 0.0
    %3009 = vmatpush2.msra.mxu0 0.0
    %3010 = vmatprep.subr.mxu0 0.0
    %3011 = vmatpush2.msra.mxu0 0.0
    %3012 = vmatprep.subr.mxu0 0.0
    %3013 = vmatpush2.msra.mxu0 0.0
    %3014 = vmatprep.subr.mxu0 0.0
    %3015 = vmatpush2.msra.mxu0 0.0
    %3016 = vmatprep.subr.mxu0 0.0
    %3017 = vmatpush2.msra.mxu0 0.0
    %3018 = vmatprep.subr.mxu0 0.0
    %3019 = vmatpush2.msra.mxu0 0.0
    %3020 = vmatprep.subr.mxu0 0.0
    %3021 = vmatpush2.msra.mxu0 0.0
    %3022 = vmatprep.subr.mxu0 0.0
    %3023 = vmatpush2.msra.mxu0 0.0
    %3024 = vmatprep.subr.mxu0 0.0
    %3025 = vmatpush2.msra.mxu0 0.0
    %3026 = vmatprep.subr.mxu0 0.0
    %3027 = vmatpush2.msra.mxu0 0.0
    %3028 = vmatprep.subr.mxu0 0.0
    %3029 = vmatpush2.msra.mxu0 0.0
    %3030 = vmatprep.mubr.f32.mxu0 0.0
    %3031 = vmatmul.mubr.f32.gmra.mxu0 %v2965
    %v3032 = vpop.f32.mrf.mxu0
    %v3033 = vadd.f32 0.0, %v3032
    %v3034 = vpop.f32.mrf.mxu0
    %v3035 = vadd.f32 0.0, %v3034
    %3036 = vdwg.mxu0
    %3037 = vmatprep.subr.mxu0 %v148
    %3038 = vmatpush1.msra.mxu0 %v147
    %3039 = vmatprep.subr.mxu0 %v144
    %3040 = vmatpush1.msra.mxu0 %v143
    %3041 = vmatprep.subr.mxu0 %v140
    %3042 = vmatpush1.msra.mxu0 %v139
    %3043 = vmatprep.subr.mxu0 %v136
    %3044 = vmatpush1.msra.mxu0 %v135
    %3045 = vmatprep.subr.mxu0 %v132
    %3046 = vmatpush1.msra.mxu0 %v131
    %3047 = vmatprep.subr.mxu0 %v128
    %3048 = vmatpush1.msra.mxu0 %v127
    %3049 = vmatprep.subr.mxu0 %v124
    %3050 = vmatpush1.msra.mxu0 %v123
    %3051 = vmatprep.subr.mxu0 %v120
    %3052 = vmatpush1.msra.mxu0 %v119
    %3053 = vmatprep.subr.mxu0 %v116
    %3054 = vmatpush1.msra.mxu0 %v115
    %3055 = vmatprep.subr.mxu0 %v112
    %3056 = vmatpush1.msra.mxu0 %v111
    %3057 = vmatprep.subr.mxu0 %v108
    %3058 = vmatpush1.msra.mxu0 %v107
    %3059 = vmatprep.subr.mxu0 %v104
    %3060 = vmatpush1.msra.mxu0 %v103
    %3061 = vmatprep.subr.mxu0 %v100
    %3062 = vmatpush1.msra.mxu0 %v99
    %3063 = vmatprep.subr.mxu0 %v96
    %3064 = vmatpush1.msra.mxu0 %v95
    %3065 = vmatprep.subr.mxu0 %v92
    %3066 = vmatpush1.msra.mxu0 %v91
    %3067 = vmatprep.subr.mxu0 %v88
    %3068 = vmatpush1.msra.mxu0 %v87
    %3069 = vmatprep.subr.mxu0 0.0
    %3070 = vmatpush2.msra.mxu0 0.0
    %3071 = vmatprep.subr.mxu0 0.0
    %3072 = vmatpush2.msra.mxu0 0.0
    %3073 = vmatprep.subr.mxu0 0.0
    %3074 = vmatpush2.msra.mxu0 0.0
    %3075 = vmatprep.subr.mxu0 0.0
    %3076 = vmatpush2.msra.mxu0 0.0
    %3077 = vmatprep.subr.mxu0 0.0
    %3078 = vmatpush2.msra.mxu0 0.0
    %3079 = vmatprep.subr.mxu0 0.0
    %3080 = vmatpush2.msra.mxu0 0.0
    %3081 = vmatprep.subr.mxu0 0.0
    %3082 = vmatpush2.msra.mxu0 0.0
    %3083 = vmatprep.subr.mxu0 0.0
    %3084 = vmatpush2.msra.mxu0 0.0
    %3085 = vmatprep.subr.mxu0 0.0
    %3086 = vmatpush2.msra.mxu0 0.0
    %3087 = vmatprep.subr.mxu0 0.0
    %3088 = vmatpush2.msra.mxu0 0.0
    %3089 = vmatprep.subr.mxu0 0.0
    %3090 = vmatpush2.msra.mxu0 0.0
    %3091 = vmatprep.subr.mxu0 0.0
    %3092 = vmatpush2.msra.mxu0 0.0
    %3093 = vmatprep.subr.mxu0 0.0
    %3094 = vmatpush2.msra.mxu0 0.0
    %3095 = vmatprep.subr.mxu0 0.0
    %3096 = vmatpush2.msra.mxu0 0.0
    %3097 = vmatprep.subr.mxu0 0.0
    %3098 = vmatpush2.msra.mxu0 0.0
    %3099 = vmatprep.subr.mxu0 0.0
    %3100 = vmatpush2.msra.mxu0 0.0
    %3101 = vmatprep.mubr.f32.mxu0 0.0
    %3102 = vmatmul.mubr.f32.gmra.mxu0 %v2965
    %v3103 = vpop.f32.mrf.mxu0
    %v3104 = vadd.f32 0.0, %v3103
    %v3105 = vpop.f32.mrf.mxu0
    %v3106 = vadd.f32 0.0, %v3105
    %3107 = vdwg.mxu0
    %v3108 = vadd.f32 %v3033, %v178
    %v3109 = vadd.f32 %v3035, %v182
    %v3110 = vxor.u32 %v3108, 2147483648
    %v3111 = vxor.u32 %v3109, 2147483648
    %v3112 = vmul.f32 %v3110, 1.442695
    %v3113 = vpow.pop %v3112
    %v3114 = vmul.f32 %v3111, 1.442695
    %v3115 = vpow.pop %v3114
    %v3116 = vadd.f32 %v3113, 1.0
    %v3117 = vadd.f32 %v3115, 1.0
    %v3118 = vrcp.pop %v3116
    %v3119 = vmul.f32 1.0, %v3118
    %v3120 = vrcp.pop %v3117
    %v3121 = vmul.f32 1.0, %v3120
    %v3122 = vtanh.pop %v3109
    %v3123 = vmul.f32 %v3119, %v2926
    %v3124 = vmul.f32 %v3119, %v3122
    %3126 = vrot.lane.b32.xlu0 %v3124, 64
    %v3127 = vpop.permute.xlu0 %3126
    %v3129 = vadd.f32 %v3123, %v3127
    %v3130 = vtanh.pop %v3129
    %v3131 = vmul.f32 %v3121, %v3130
    %3132 = vset.pattern.permute.xlu0 14
    %3133 = vperm.xlu0 %3132, %v276
    %v3134 = vpop.permute.xlu0 %3133
    %v3136 = vmul.f32 %v3134, %v154
    %v3137 = vmul.f32 %v3134, %v158
    %v3138 = vadd.f32 %v3136, %v3104
    %v3139 = vadd.f32 %v3137, %v3106
    %v3140 = vadd.f32 %v3138, %v166
    %v3141 = vadd.f32 %v3139, %v170
    %v3142 = vxor.u32 %v3140, 2147483648
    %v3143 = vxor.u32 %v3141, 2147483648
    %v3144 = vmul.f32 %v3142, 1.442695
    %v3145 = vpow.pop %v3144
    %v3146 = vmul.f32 %v3143, 1.442695
    %v3147 = vpow.pop %v3146
    %v3148 = vadd.f32 %v3145, 1.0
    %v3149 = vadd.f32 %v3147, 1.0
    %v3150 = vrcp.pop %v3148
    %v3151 = vmul.f32 1.0, %v3150
    %v3152 = vrcp.pop %v3149
    %v3153 = vmul.f32 1.0, %v3152
    %v3154 = vtanh.pop %v3141
    %v3155 = vmul.f32 %v3151, %v2958
    %v3156 = vmul.f32 %v3151, %v3154
    %3158 = vrot.lane.b32.xlu0 %v3156, 64
    %v3159 = vpop.permute.xlu0 %3158
    %v3161 = vadd.f32 %v3155, %v3159
    %v3162 = vtanh.pop %v3161
    %v3163 = vmul.f32 %v3153, %v3162
    %3165 = vrot.lane.b32.xlu0 %v3163, 64
    %v3166 = vpop.permute.xlu0 %3165
    %v3168 = vsel %vm201, %v3166, %v3131
    %3169 = vmatprep.subr.mxu0 %v146
    %3170 = vmatpush1.msra.mxu0 %v145
    %3171 = vmatprep.subr.mxu0 %v142
    %3172 = vmatpush1.msra.mxu0 %v141
    %3173 = vmatprep.subr.mxu0 %v138
    %3174 = vmatpush1.msra.mxu0 %v137
    %3175 = vmatprep.subr.mxu0 %v134
    %3176 = vmatpush1.msra.mxu0 %v133
    %3177 = vmatprep.subr.mxu0 %v130
    %3178 = vmatpush1.msra.mxu0 %v129
    %3179 = vmatprep.subr.mxu0 %v126
    %3180 = vmatpush1.msra.mxu0 %v125
    %3181 = vmatprep.subr.mxu0 %v122
    %3182 = vmatpush1.msra.mxu0 %v121
    %3183 = vmatprep.subr.mxu0 %v118
    %3184 = vmatpush1.msra.mxu0 %v117
    %3185 = vmatprep.subr.mxu0 %v114
    %3186 = vmatpush1.msra.mxu0 %v113
    %3187 = vmatprep.subr.mxu0 %v110
    %3188 = vmatpush1.msra.mxu0 %v109
    %3189 = vmatprep.subr.mxu0 %v106
    %3190 = vmatpush1.msra.mxu0 %v105
    %3191 = vmatprep.subr.mxu0 %v102
    %3192 = vmatpush1.msra.mxu0 %v101
    %3193 = vmatprep.subr.mxu0 %v98
    %3194 = vmatpush1.msra.mxu0 %v97
    %3195 = vmatprep.subr.mxu0 %v94
    %3196 = vmatpush1.msra.mxu0 %v93
    %3197 = vmatprep.subr.mxu0 %v90
    %3198 = vmatpush1.msra.mxu0 %v89
    %3199 = vmatprep.subr.mxu0 %v86
    %3200 = vmatpush1.msra.mxu0 %v85
    %3201 = vmatprep.subr.mxu0 0.0
    %3202 = vmatpush2.msra.mxu0 0.0
    %3203 = vmatprep.subr.mxu0 0.0
    %3204 = vmatpush2.msra.mxu0 0.0
    %3205 = vmatprep.subr.mxu0 0.0
    %3206 = vmatpush2.msra.mxu0 0.0
    %3207 = vmatprep.subr.mxu0 0.0
    %3208 = vmatpush2.msra.mxu0 0.0
    %3209 = vmatprep.subr.mxu0 0.0
    %3210 = vmatpush2.msra.mxu0 0.0
    %3211 = vmatprep.subr.mxu0 0.0
    %3212 = vmatpush2.msra.mxu0 0.0
    %3213 = vmatprep.subr.mxu0 0.0
    %3214 = vmatpush2.msra.mxu0 0.0
    %3215 = vmatprep.subr.mxu0 0.0
    %3216 = vmatpush2.msra.mxu0 0.0
    %3217 = vmatprep.subr.mxu0 0.0
    %3218 = vmatpush2.msra.mxu0 0.0
    %3219 = vmatprep.subr.mxu0 0.0
    %3220 = vmatpush2.msra.mxu0 0.0
    %3221 = vmatprep.subr.mxu0 0.0
    %3222 = vmatpush2.msra.mxu0 0.0
    %3223 = vmatprep.subr.mxu0 0.0
    %3224 = vmatpush2.msra.mxu0 0.0
    %3225 = vmatprep.subr.mxu0 0.0
    %3226 = vmatpush2.msra.mxu0 0.0
    %3227 = vmatprep.subr.mxu0 0.0
    %3228 = vmatpush2.msra.mxu0 0.0
    %3229 = vmatprep.subr.mxu0 0.0
    %3230 = vmatpush2.msra.mxu0 0.0
    %3231 = vmatprep.subr.mxu0 0.0
    %3232 = vmatpush2.msra.mxu0 0.0
    %3233 = vmatprep.mubr.f32.mxu0 0.0
    %3234 = vmatmul.mubr.f32.gmra.mxu0 %v3168
    %v3235 = vpop.f32.mrf.mxu0
    %v3236 = vadd.f32 0.0, %v3235
    %v3237 = vpop.f32.mrf.mxu0
    %v3238 = vadd.f32 0.0, %v3237
    %3239 = vdwg.mxu0
    %3240 = vmatprep.subr.mxu0 %v148
    %3241 = vmatpush1.msra.mxu0 %v147
    %3242 = vmatprep.subr.mxu0 %v144
    %3243 = vmatpush1.msra.mxu0 %v143
    %3244 = vmatprep.subr.mxu0 %v140
    %3245 = vmatpush1.msra.mxu0 %v139
    %3246 = vmatprep.subr.mxu0 %v136
    %3247 = vmatpush1.msra.mxu0 %v135
    %3248 = vmatprep.subr.mxu0 %v132
    %3249 = vmatpush1.msra.mxu0 %v131
    %3250 = vmatprep.subr.mxu0 %v128
    %3251 = vmatpush1.msra.mxu0 %v127
    %3252 = vmatprep.subr.mxu0 %v124
    %3253 = vmatpush1.msra.mxu0 %v123
    %3254 = vmatprep.subr.mxu0 %v120
    %3255 = vmatpush1.msra.mxu0 %v119
    %3256 = vmatprep.subr.mxu0 %v116
    %3257 = vmatpush1.msra.mxu0 %v115
    %3258 = vmatprep.subr.mxu0 %v112
    %3259 = vmatpush1.msra.mxu0 %v111
    %3260 = vmatprep.subr.mxu0 %v108
    %3261 = vmatpush1.msra.mxu0 %v107
    %3262 = vmatprep.subr.mxu0 %v104
    %3263 = vmatpush1.msra.mxu0 %v103
    %3264 = vmatprep.subr.mxu0 %v100
    %3265 = vmatpush1.msra.mxu0 %v99
    %3266 = vmatprep.subr.mxu0 %v96
    %3267 = vmatpush1.msra.mxu0 %v95
    %3268 = vmatprep.subr.mxu0 %v92
    %3269 = vmatpush1.msra.mxu0 %v91
    %3270 = vmatprep.subr.mxu0 %v88
    %3271 = vmatpush1.msra.mxu0 %v87
    %3272 = vmatprep.subr.mxu0 0.0
    %3273 = vmatpush2.msra.mxu0 0.0
    %3274 = vmatprep.subr.mxu0 0.0
    %3275 = vmatpush2.msra.mxu0 0.0
    %3276 = vmatprep.subr.mxu0 0.0
    %3277 = vmatpush2.msra.mxu0 0.0
    %3278 = vmatprep.subr.mxu0 0.0
    %3279 = vmatpush2.msra.mxu0 0.0
    %3280 = vmatprep.subr.mxu0 0.0
    %3281 = vmatpush2.msra.mxu0 0.0
    %3282 = vmatprep.subr.mxu0 0.0
    %3283 = vmatpush2.msra.mxu0 0.0
    %3284 = vmatprep.subr.mxu0 0.0
    %3285 = vmatpush2.msra.mxu0 0.0
    %3286 = vmatprep.subr.mxu0 0.0
    %3287 = vmatpush2.msra.mxu0 0.0
    %3288 = vmatprep.subr.mxu0 0.0
    %3289 = vmatpush2.msra.mxu0 0.0
    %3290 = vmatprep.subr.mxu0 0.0
    %3291 = vmatpush2.msra.mxu0 0.0
    %3292 = vmatprep.subr.mxu0 0.0
    %3293 = vmatpush2.msra.mxu0 0.0
    %3294 = vmatprep.subr.mxu0 0.0
    %3295 = vmatpush2.msra.mxu0 0.0
    %3296 = vmatprep.subr.mxu0 0.0
    %3297 = vmatpush2.msra.mxu0 0.0
    %3298 = vmatprep.subr.mxu0 0.0
    %3299 = vmatpush2.msra.mxu0 0.0
    %3300 = vmatprep.subr.mxu0 0.0
    %3301 = vmatpush2.msra.mxu0 0.0
    %3302 = vmatprep.subr.mxu0 0.0
    %3303 = vmatpush2.msra.mxu0 0.0
    %3304 = vmatprep.mubr.f32.mxu0 0.0
    %3305 = vmatmul.mubr.f32.gmra.mxu0 %v3168
    %v3306 = vpop.f32.mrf.mxu0
    %v3307 = vadd.f32 0.0, %v3306
    %v3308 = vpop.f32.mrf.mxu0
    %v3309 = vadd.f32 0.0, %v3308
    %3310 = vdwg.mxu0
    %v3311 = vadd.f32 %v3236, %v178
    %v3312 = vadd.f32 %v3238, %v182
    %v3313 = vxor.u32 %v3311, 2147483648
    %v3314 = vxor.u32 %v3312, 2147483648
    %v3315 = vmul.f32 %v3313, 1.442695
    %v3316 = vpow.pop %v3315
    %v3317 = vmul.f32 %v3314, 1.442695
    %v3318 = vpow.pop %v3317
    %v3319 = vadd.f32 %v3316, 1.0
    %v3320 = vadd.f32 %v3318, 1.0
    %v3321 = vrcp.pop %v3319
    %v3322 = vmul.f32 1.0, %v3321
    %v3323 = vrcp.pop %v3320
    %v3324 = vmul.f32 1.0, %v3323
    %v3325 = vtanh.pop %v3312
    %v3326 = vmul.f32 %v3322, %v3129
    %v3327 = vmul.f32 %v3322, %v3325
    %3329 = vrot.lane.b32.xlu0 %v3327, 64
    %v3330 = vpop.permute.xlu0 %3329
    %v3332 = vadd.f32 %v3326, %v3330
    %v3333 = vtanh.pop %v3332
    %v3334 = vmul.f32 %v3324, %v3333
    %3335 = vset.pattern.permute.xlu0 15
    %3336 = vperm.xlu0 %3335, %v276
    %v3337 = vpop.permute.xlu0 %3336
    %v3339 = vmul.f32 %v3337, %v154
    %v3340 = vmul.f32 %v3337, %v158
    %v3341 = vadd.f32 %v3339, %v3307
    %v3342 = vadd.f32 %v3340, %v3309
    %v3343 = vadd.f32 %v3341, %v166
    %v3344 = vadd.f32 %v3342, %v170
    %v3345 = vxor.u32 %v3343, 2147483648
    %v3346 = vxor.u32 %v3344, 2147483648
    %v3347 = vmul.f32 %v3345, 1.442695
    %v3348 = vpow.pop %v3347
    %v3349 = vmul.f32 %v3346, 1.442695
    %v3350 = vpow.pop %v3349
    %v3351 = vadd.f32 %v3348, 1.0
    %v3352 = vadd.f32 %v3350, 1.0
    %v3353 = vrcp.pop %v3351
    %v3354 = vmul.f32 1.0, %v3353
    %v3355 = vrcp.pop %v3352
    %v3356 = vmul.f32 1.0, %v3355
    %v3357 = vtanh.pop %v3344
    %v3358 = vmul.f32 %v3354, %v3161
    %v3359 = vmul.f32 %v3354, %v3357
    %3361 = vrot.lane.b32.xlu0 %v3359, 64
    %v3362 = vpop.permute.xlu0 %3361
    %v3364 = vadd.f32 %v3358, %v3362
    %v3365 = vtanh.pop %v3364
    %v3366 = vmul.f32 %v3356, %v3365
    %3368 = vrot.lane.b32.xlu0 %v3366, 64
    %v3369 = vpop.permute.xlu0 %3368
    %v3371 = vsel %vm201, %v3369, %v3334
    %3372 = vmatprep.subr.mxu0 %v146
    %3373 = vmatpush1.msra.mxu0 %v145
    %3374 = vmatprep.subr.mxu0 %v142
    %3375 = vmatpush1.msra.mxu0 %v141
    %3376 = vmatprep.subr.mxu0 %v138
    %3377 = vmatpush1.msra.mxu0 %v137
    %3378 = vmatprep.subr.mxu0 %v134
    %3379 = vmatpush1.msra.mxu0 %v133
    %3380 = vmatprep.subr.mxu0 %v130
    %3381 = vmatpush1.msra.mxu0 %v129
    %3382 = vmatprep.subr.mxu0 %v126
    %3383 = vmatpush1.msra.mxu0 %v125
    %3384 = vmatprep.subr.mxu0 %v122
    %3385 = vmatpush1.msra.mxu0 %v121
    %3386 = vmatprep.subr.mxu0 %v118
    %3387 = vmatpush1.msra.mxu0 %v117
    %3388 = vmatprep.subr.mxu0 %v114
    %3389 = vmatpush1.msra.mxu0 %v113
    %3390 = vmatprep.subr.mxu0 %v110
    %3391 = vmatpush1.msra.mxu0 %v109
    %3392 = vmatprep.subr.mxu0 %v106
    %3393 = vmatpush1.msra.mxu0 %v105
    %3394 = vmatprep.subr.mxu0 %v102
    %3395 = vmatpush1.msra.mxu0 %v101
    %3396 = vmatprep.subr.mxu0 %v98
    %3397 = vmatpush1.msra.mxu0 %v97
    %3398 = vmatprep.subr.mxu0 %v94
    %3399 = vmatpush1.msra.mxu0 %v93
    %3400 = vmatprep.subr.mxu0 %v90
    %3401 = vmatpush1.msra.mxu0 %v89
    %3402 = vmatprep.subr.mxu0 %v86
    %3403 = vmatpush1.msra.mxu0 %v85
    %3404 = vmatprep.subr.mxu0 0.0
    %3405 = vmatpush2.msra.mxu0 0.0
    %3406 = vmatprep.subr.mxu0 0.0
    %3407 = vmatpush2.msra.mxu0 0.0
    %3408 = vmatprep.subr.mxu0 0.0
    %3409 = vmatpush2.msra.mxu0 0.0
    %3410 = vmatprep.subr.mxu0 0.0
    %3411 = vmatpush2.msra.mxu0 0.0
    %3412 = vmatprep.subr.mxu0 0.0
    %3413 = vmatpush2.msra.mxu0 0.0
    %3414 = vmatprep.subr.mxu0 0.0
    %3415 = vmatpush2.msra.mxu0 0.0
    %3416 = vmatprep.subr.mxu0 0.0
    %3417 = vmatpush2.msra.mxu0 0.0
    %3418 = vmatprep.subr.mxu0 0.0
    %3419 = vmatpush2.msra.mxu0 0.0
    %3420 = vmatprep.subr.mxu0 0.0
    %3421 = vmatpush2.msra.mxu0 0.0
    %3422 = vmatprep.subr.mxu0 0.0
    %3423 = vmatpush2.msra.mxu0 0.0
    %3424 = vmatprep.subr.mxu0 0.0
    %3425 = vmatpush2.msra.mxu0 0.0
    %3426 = vmatprep.subr.mxu0 0.0
    %3427 = vmatpush2.msra.mxu0 0.0
    %3428 = vmatprep.subr.mxu0 0.0
    %3429 = vmatpush2.msra.mxu0 0.0
    %3430 = vmatprep.subr.mxu0 0.0
    %3431 = vmatpush2.msra.mxu0 0.0
    %3432 = vmatprep.subr.mxu0 0.0
    %3433 = vmatpush2.msra.mxu0 0.0
    %3434 = vmatprep.subr.mxu0 0.0
    %3435 = vmatpush2.msra.mxu0 0.0
    %3436 = vmatprep.mubr.f32.mxu0 0.0
    %3437 = vmatmul.mubr.f32.gmra.mxu0 %v3371
    %v3438 = vpop.f32.mrf.mxu0
    %v3439 = vadd.f32 0.0, %v3438
    %v3440 = vpop.f32.mrf.mxu0
    %v3441 = vadd.f32 0.0, %v3440
    %3442 = vdwg.mxu0
    %3443 = vmatprep.subr.mxu0 %v148
    %3444 = vmatpush1.msra.mxu0 %v147
    %3445 = vmatprep.subr.mxu0 %v144
    %3446 = vmatpush1.msra.mxu0 %v143
    %3447 = vmatprep.subr.mxu0 %v140
    %3448 = vmatpush1.msra.mxu0 %v139
    %3449 = vmatprep.subr.mxu0 %v136
    %3450 = vmatpush1.msra.mxu0 %v135
    %3451 = vmatprep.subr.mxu0 %v132
    %3452 = vmatpush1.msra.mxu0 %v131
    %3453 = vmatprep.subr.mxu0 %v128
    %3454 = vmatpush1.msra.mxu0 %v127
    %3455 = vmatprep.subr.mxu0 %v124
    %3456 = vmatpush1.msra.mxu0 %v123
    %3457 = vmatprep.subr.mxu0 %v120
    %3458 = vmatpush1.msra.mxu0 %v119
    %3459 = vmatprep.subr.mxu0 %v116
    %3460 = vmatpush1.msra.mxu0 %v115
    %3461 = vmatprep.subr.mxu0 %v112
    %3462 = vmatpush1.msra.mxu0 %v111
    %3463 = vmatprep.subr.mxu0 %v108
    %3464 = vmatpush1.msra.mxu0 %v107
    %3465 = vmatprep.subr.mxu0 %v104
    %3466 = vmatpush1.msra.mxu0 %v103
    %3467 = vmatprep.subr.mxu0 %v100
    %3468 = vmatpush1.msra.mxu0 %v99
    %3469 = vmatprep.subr.mxu0 %v96
    %3470 = vmatpush1.msra.mxu0 %v95
    %3471 = vmatprep.subr.mxu0 %v92
    %3472 = vmatpush1.msra.mxu0 %v91
    %3473 = vmatprep.subr.mxu0 %v88
    %3474 = vmatpush1.msra.mxu0 %v87
    %3475 = vmatprep.subr.mxu0 0.0
    %3476 = vmatpush2.msra.mxu0 0.0
    %3477 = vmatprep.subr.mxu0 0.0
    %3478 = vmatpush2.msra.mxu0 0.0
    %3479 = vmatprep.subr.mxu0 0.0
    %3480 = vmatpush2.msra.mxu0 0.0
    %3481 = vmatprep.subr.mxu0 0.0
    %3482 = vmatpush2.msra.mxu0 0.0
    %3483 = vmatprep.subr.mxu0 0.0
    %3484 = vmatpush2.msra.mxu0 0.0
    %3485 = vmatprep.subr.mxu0 0.0
    %3486 = vmatpush2.msra.mxu0 0.0
    %3487 = vmatprep.subr.mxu0 0.0
    %3488 = vmatpush2.msra.mxu0 0.0
    %3489 = vmatprep.subr.mxu0 0.0
    %3490 = vmatpush2.msra.mxu0 0.0
    %3491 = vmatprep.subr.mxu0 0.0
    %3492 = vmatpush2.msra.mxu0 0.0
    %3493 = vmatprep.subr.mxu0 0.0
    %3494 = vmatpush2.msra.mxu0 0.0
    %3495 = vmatprep.subr.mxu0 0.0
    %3496 = vmatpush2.msra.mxu0 0.0
    %3497 = vmatprep.subr.mxu0 0.0
    %3498 = vmatpush2.msra.mxu0 0.0
    %3499 = vmatprep.subr.mxu0 0.0
    %3500 = vmatpush2.msra.mxu0 0.0
    %3501 = vmatprep.subr.mxu0 0.0
    %3502 = vmatpush2.msra.mxu0 0.0
    %3503 = vmatprep.subr.mxu0 0.0
    %3504 = vmatpush2.msra.mxu0 0.0
    %3505 = vmatprep.subr.mxu0 0.0
    %3506 = vmatpush2.msra.mxu0 0.0
    %3507 = vmatprep.mubr.f32.mxu0 0.0
    %3508 = vmatmul.mubr.f32.gmra.mxu0 %v3371
    %v3509 = vpop.f32.mrf.mxu0
    %v3510 = vadd.f32 0.0, %v3509
    %v3511 = vpop.f32.mrf.mxu0
    %v3512 = vadd.f32 0.0, %v3511
    %3513 = vdwg.mxu0
    %v3514 = vadd.f32 %v3439, %v178
    %v3515 = vadd.f32 %v3441, %v182
    %v3516 = vxor.u32 %v3514, 2147483648
    %v3517 = vxor.u32 %v3515, 2147483648
    %v3518 = vmul.f32 %v3516, 1.442695
    %v3519 = vpow.pop %v3518
    %v3520 = vmul.f32 %v3517, 1.442695
    %v3521 = vpow.pop %v3520
    %v3522 = vadd.f32 %v3519, 1.0
    %v3523 = vadd.f32 %v3521, 1.0
    %v3524 = vrcp.pop %v3522
    %v3525 = vmul.f32 1.0, %v3524
    %v3526 = vrcp.pop %v3523
    %v3527 = vmul.f32 1.0, %v3526
    %v3528 = vtanh.pop %v3515
    %v3529 = vmul.f32 %v3525, %v3332
    %v3530 = vmul.f32 %v3525, %v3528
    %3532 = vrot.lane.b32.xlu0 %v3530, 64
    %v3533 = vpop.permute.xlu0 %3532
    %v3535 = vadd.f32 %v3529, %v3533
    %v3536 = vtanh.pop %v3535
    %v3537 = vmul.f32 %v3527, %v3536
    %3538 = vset.pattern.permute.xlu0 16
    %3539 = vperm.xlu0 %3538, %v276
    %v3540 = vpop.permute.xlu0 %3539
    %v3542 = vmul.f32 %v3540, %v154
    %v3543 = vmul.f32 %v3540, %v158
    %v3544 = vadd.f32 %v3542, %v3510
    %v3545 = vadd.f32 %v3543, %v3512
    %v3546 = vadd.f32 %v3544, %v166
    %v3547 = vadd.f32 %v3545, %v170
    %v3548 = vxor.u32 %v3546, 2147483648
    %v3549 = vxor.u32 %v3547, 2147483648
    %v3550 = vmul.f32 %v3548, 1.442695
    %v3551 = vpow.pop %v3550
    %v3552 = vmul.f32 %v3549, 1.442695
    %v3553 = vpow.pop %v3552
    %v3554 = vadd.f32 %v3551, 1.0
    %v3555 = vadd.f32 %v3553, 1.0
    %v3556 = vrcp.pop %v3554
    %v3557 = vmul.f32 1.0, %v3556
    %v3558 = vrcp.pop %v3555
    %v3559 = vmul.f32 1.0, %v3558
    %v3560 = vtanh.pop %v3547
    %v3561 = vmul.f32 %v3557, %v3364
    %v3562 = vmul.f32 %v3557, %v3560
    %3564 = vrot.lane.b32.xlu0 %v3562, 64
    %v3565 = vpop.permute.xlu0 %3564
    %v3567 = vadd.f32 %v3561, %v3565
    %v3568 = vtanh.pop %v3567
    %v3569 = vmul.f32 %v3559, %v3568
    %3571 = vrot.lane.b32.xlu0 %v3569, 64
    %v3572 = vpop.permute.xlu0 %3571
    %v3574 = vsel %vm201, %v3572, %v3537
    %3575 = vmatprep.subr.mxu0 %v146
    %3576 = vmatpush1.msra.mxu0 %v145
    %3577 = vmatprep.subr.mxu0 %v142
    %3578 = vmatpush1.msra.mxu0 %v141
    %3579 = vmatprep.subr.mxu0 %v138
    %3580 = vmatpush1.msra.mxu0 %v137
    %3581 = vmatprep.subr.mxu0 %v134
    %3582 = vmatpush1.msra.mxu0 %v133
    %3583 = vmatprep.subr.mxu0 %v130
    %3584 = vmatpush1.msra.mxu0 %v129
    %3585 = vmatprep.subr.mxu0 %v126
    %3586 = vmatpush1.msra.mxu0 %v125
    %3587 = vmatprep.subr.mxu0 %v122
    %3588 = vmatpush1.msra.mxu0 %v121
    %3589 = vmatprep.subr.mxu0 %v118
    %3590 = vmatpush1.msra.mxu0 %v117
    %3591 = vmatprep.subr.mxu0 %v114
    %3592 = vmatpush1.msra.mxu0 %v113
    %3593 = vmatprep.subr.mxu0 %v110
    %3594 = vmatpush1.msra.mxu0 %v109
    %3595 = vmatprep.subr.mxu0 %v106
    %3596 = vmatpush1.msra.mxu0 %v105
    %3597 = vmatprep.subr.mxu0 %v102
    %3598 = vmatpush1.msra.mxu0 %v101
    %3599 = vmatprep.subr.mxu0 %v98
    %3600 = vmatpush1.msra.mxu0 %v97
    %3601 = vmatprep.subr.mxu0 %v94
    %3602 = vmatpush1.msra.mxu0 %v93
    %3603 = vmatprep.subr.mxu0 %v90
    %3604 = vmatpush1.msra.mxu0 %v89
    %3605 = vmatprep.subr.mxu0 %v86
    %3606 = vmatpush1.msra.mxu0 %v85
    %3607 = vmatprep.subr.mxu0 0.0
    %3608 = vmatpush2.msra.mxu0 0.0
    %3609 = vmatprep.subr.mxu0 0.0
    %3610 = vmatpush2.msra.mxu0 0.0
    %3611 = vmatprep.subr.mxu0 0.0
    %3612 = vmatpush2.msra.mxu0 0.0
    %3613 = vmatprep.subr.mxu0 0.0
    %3614 = vmatpush2.msra.mxu0 0.0
    %3615 = vmatprep.subr.mxu0 0.0
    %3616 = vmatpush2.msra.mxu0 0.0
    %3617 = vmatprep.subr.mxu0 0.0
    %3618 = vmatpush2.msra.mxu0 0.0
    %3619 = vmatprep.subr.mxu0 0.0
    %3620 = vmatpush2.msra.mxu0 0.0
    %3621 = vmatprep.subr.mxu0 0.0
    %3622 = vmatpush2.msra.mxu0 0.0
    %3623 = vmatprep.subr.mxu0 0.0
    %3624 = vmatpush2.msra.mxu0 0.0
    %3625 = vmatprep.subr.mxu0 0.0
    %3626 = vmatpush2.msra.mxu0 0.0
    %3627 = vmatprep.subr.mxu0 0.0
    %3628 = vmatpush2.msra.mxu0 0.0
    %3629 = vmatprep.subr.mxu0 0.0
    %3630 = vmatpush2.msra.mxu0 0.0
    %3631 = vmatprep.subr.mxu0 0.0
    %3632 = vmatpush2.msra.mxu0 0.0
    %3633 = vmatprep.subr.mxu0 0.0
    %3634 = vmatpush2.msra.mxu0 0.0
    %3635 = vmatprep.subr.mxu0 0.0
    %3636 = vmatpush2.msra.mxu0 0.0
    %3637 = vmatprep.subr.mxu0 0.0
    %3638 = vmatpush2.msra.mxu0 0.0
    %3639 = vmatprep.mubr.f32.mxu0 0.0
    %3640 = vmatmul.mubr.f32.gmra.mxu0 %v3574
    %v3641 = vpop.f32.mrf.mxu0
    %v3642 = vadd.f32 0.0, %v3641
    %v3643 = vpop.f32.mrf.mxu0
    %v3644 = vadd.f32 0.0, %v3643
    %3645 = vdwg.mxu0
    %3646 = vmatprep.subr.mxu0 %v148
    %3647 = vmatpush1.msra.mxu0 %v147
    %3648 = vmatprep.subr.mxu0 %v144
    %3649 = vmatpush1.msra.mxu0 %v143
    %3650 = vmatprep.subr.mxu0 %v140
    %3651 = vmatpush1.msra.mxu0 %v139
    %3652 = vmatprep.subr.mxu0 %v136
    %3653 = vmatpush1.msra.mxu0 %v135
    %3654 = vmatprep.subr.mxu0 %v132
    %3655 = vmatpush1.msra.mxu0 %v131
    %3656 = vmatprep.subr.mxu0 %v128
    %3657 = vmatpush1.msra.mxu0 %v127
    %3658 = vmatprep.subr.mxu0 %v124
    %3659 = vmatpush1.msra.mxu0 %v123
    %3660 = vmatprep.subr.mxu0 %v120
    %3661 = vmatpush1.msra.mxu0 %v119
    %3662 = vmatprep.subr.mxu0 %v116
    %3663 = vmatpush1.msra.mxu0 %v115
    %3664 = vmatprep.subr.mxu0 %v112
    %3665 = vmatpush1.msra.mxu0 %v111
    %3666 = vmatprep.subr.mxu0 %v108
    %3667 = vmatpush1.msra.mxu0 %v107
    %3668 = vmatprep.subr.mxu0 %v104
    %3669 = vmatpush1.msra.mxu0 %v103
    %3670 = vmatprep.subr.mxu0 %v100
    %3671 = vmatpush1.msra.mxu0 %v99
    %3672 = vmatprep.subr.mxu0 %v96
    %3673 = vmatpush1.msra.mxu0 %v95
    %3674 = vmatprep.subr.mxu0 %v92
    %3675 = vmatpush1.msra.mxu0 %v91
    %3676 = vmatprep.subr.mxu0 %v88
    %3677 = vmatpush1.msra.mxu0 %v87
    %3678 = vmatprep.subr.mxu0 0.0
    %3679 = vmatpush2.msra.mxu0 0.0
    %3680 = vmatprep.subr.mxu0 0.0
    %3681 = vmatpush2.msra.mxu0 0.0
    %3682 = vmatprep.subr.mxu0 0.0
    %3683 = vmatpush2.msra.mxu0 0.0
    %3684 = vmatprep.subr.mxu0 0.0
    %3685 = vmatpush2.msra.mxu0 0.0
    %3686 = vmatprep.subr.mxu0 0.0
    %3687 = vmatpush2.msra.mxu0 0.0
    %3688 = vmatprep.subr.mxu0 0.0
    %3689 = vmatpush2.msra.mxu0 0.0
    %3690 = vmatprep.subr.mxu0 0.0
    %3691 = vmatpush2.msra.mxu0 0.0
    %3692 = vmatprep.subr.mxu0 0.0
    %3693 = vmatpush2.msra.mxu0 0.0
    %3694 = vmatprep.subr.mxu0 0.0
    %3695 = vmatpush2.msra.mxu0 0.0
    %3696 = vmatprep.subr.mxu0 0.0
    %3697 = vmatpush2.msra.mxu0 0.0
    %3698 = vmatprep.subr.mxu0 0.0
    %3699 = vmatpush2.msra.mxu0 0.0
    %3700 = vmatprep.subr.mxu0 0.0
    %3701 = vmatpush2.msra.mxu0 0.0
    %3702 = vmatprep.subr.mxu0 0.0
    %3703 = vmatpush2.msra.mxu0 0.0
    %3704 = vmatprep.subr.mxu0 0.0
    %3705 = vmatpush2.msra.mxu0 0.0
    %3706 = vmatprep.subr.mxu0 0.0
    %3707 = vmatpush2.msra.mxu0 0.0
    %3708 = vmatprep.subr.mxu0 0.0
    %3709 = vmatpush2.msra.mxu0 0.0
    %3710 = vmatprep.mubr.f32.mxu0 0.0
    %3711 = vmatmul.mubr.f32.gmra.mxu0 %v3574
    %v3712 = vpop.f32.mrf.mxu0
    %v3713 = vadd.f32 0.0, %v3712
    %v3714 = vpop.f32.mrf.mxu0
    %v3715 = vadd.f32 0.0, %v3714
    %3716 = vdwg.mxu0
    %v3717 = vadd.f32 %v3642, %v178
    %v3718 = vadd.f32 %v3644, %v182
    %v3719 = vxor.u32 %v3717, 2147483648
    %v3720 = vxor.u32 %v3718, 2147483648
    %v3721 = vmul.f32 %v3719, 1.442695
    %v3722 = vpow.pop %v3721
    %v3723 = vmul.f32 %v3720, 1.442695
    %v3724 = vpow.pop %v3723
    %v3725 = vadd.f32 %v3722, 1.0
    %v3726 = vadd.f32 %v3724, 1.0
    %v3727 = vrcp.pop %v3725
    %v3728 = vmul.f32 1.0, %v3727
    %v3729 = vrcp.pop %v3726
    %v3730 = vmul.f32 1.0, %v3729
    %v3731 = vtanh.pop %v3718
    %v3732 = vmul.f32 %v3728, %v3535
    %v3733 = vmul.f32 %v3728, %v3731
    %3735 = vrot.lane.b32.xlu0 %v3733, 64
    %v3736 = vpop.permute.xlu0 %3735
    %v3738 = vadd.f32 %v3732, %v3736
    %v3739 = vtanh.pop %v3738
    %v3740 = vmul.f32 %v3730, %v3739
    %3741 = vset.pattern.permute.xlu0 17
    %3742 = vperm.xlu0 %3741, %v276
    %v3743 = vpop.permute.xlu0 %3742
    %v3745 = vmul.f32 %v3743, %v154
    %v3746 = vmul.f32 %v3743, %v158
    %v3747 = vadd.f32 %v3745, %v3713
    %v3748 = vadd.f32 %v3746, %v3715
    %v3749 = vadd.f32 %v3747, %v166
    %v3750 = vadd.f32 %v3748, %v170
    %v3751 = vxor.u32 %v3749, 2147483648
    %v3752 = vxor.u32 %v3750, 2147483648
    %v3753 = vmul.f32 %v3751, 1.442695
    %v3754 = vpow.pop %v3753
    %v3755 = vmul.f32 %v3752, 1.442695
    %v3756 = vpow.pop %v3755
    %v3757 = vadd.f32 %v3754, 1.0
    %v3758 = vadd.f32 %v3756, 1.0
    %v3759 = vrcp.pop %v3757
    %v3760 = vmul.f32 1.0, %v3759
    %v3761 = vrcp.pop %v3758
    %v3762 = vmul.f32 1.0, %v3761
    %v3763 = vtanh.pop %v3750
    %v3764 = vmul.f32 %v3760, %v3567
    %v3765 = vmul.f32 %v3760, %v3763
    %3767 = vrot.lane.b32.xlu0 %v3765, 64
    %v3768 = vpop.permute.xlu0 %3767
    %v3770 = vadd.f32 %v3764, %v3768
    %v3771 = vtanh.pop %v3770
    %v3772 = vmul.f32 %v3762, %v3771
    %3774 = vrot.lane.b32.xlu0 %v3772, 64
    %v3775 = vpop.permute.xlu0 %3774
    %v3777 = vsel %vm201, %v3775, %v3740
    %3778 = vmatprep.subr.mxu0 %v146
    %3779 = vmatpush1.msra.mxu0 %v145
    %3780 = vmatprep.subr.mxu0 %v142
    %3781 = vmatpush1.msra.mxu0 %v141
    %3782 = vmatprep.subr.mxu0 %v138
    %3783 = vmatpush1.msra.mxu0 %v137
    %3784 = vmatprep.subr.mxu0 %v134
    %3785 = vmatpush1.msra.mxu0 %v133
    %3786 = vmatprep.subr.mxu0 %v130
    %3787 = vmatpush1.msra.mxu0 %v129
    %3788 = vmatprep.subr.mxu0 %v126
    %3789 = vmatpush1.msra.mxu0 %v125
    %3790 = vmatprep.subr.mxu0 %v122
    %3791 = vmatpush1.msra.mxu0 %v121
    %3792 = vmatprep.subr.mxu0 %v118
    %3793 = vmatpush1.msra.mxu0 %v117
    %3794 = vmatprep.subr.mxu0 %v114
    %3795 = vmatpush1.msra.mxu0 %v113
    %3796 = vmatprep.subr.mxu0 %v110
    %3797 = vmatpush1.msra.mxu0 %v109
    %3798 = vmatprep.subr.mxu0 %v106
    %3799 = vmatpush1.msra.mxu0 %v105
    %3800 = vmatprep.subr.mxu0 %v102
    %3801 = vmatpush1.msra.mxu0 %v101
    %3802 = vmatprep.subr.mxu0 %v98
    %3803 = vmatpush1.msra.mxu0 %v97
    %3804 = vmatprep.subr.mxu0 %v94
    %3805 = vmatpush1.msra.mxu0 %v93
    %3806 = vmatprep.subr.mxu0 %v90
    %3807 = vmatpush1.msra.mxu0 %v89
    %3808 = vmatprep.subr.mxu0 %v86
    %3809 = vmatpush1.msra.mxu0 %v85
    %3810 = vmatprep.subr.mxu0 0.0
    %3811 = vmatpush2.msra.mxu0 0.0
    %3812 = vmatprep.subr.mxu0 0.0
    %3813 = vmatpush2.msra.mxu0 0.0
    %3814 = vmatprep.subr.mxu0 0.0
    %3815 = vmatpush2.msra.mxu0 0.0
    %3816 = vmatprep.subr.mxu0 0.0
    %3817 = vmatpush2.msra.mxu0 0.0
    %3818 = vmatprep.subr.mxu0 0.0
    %3819 = vmatpush2.msra.mxu0 0.0
    %3820 = vmatprep.subr.mxu0 0.0
    %3821 = vmatpush2.msra.mxu0 0.0
    %3822 = vmatprep.subr.mxu0 0.0
    %3823 = vmatpush2.msra.mxu0 0.0
    %3824 = vmatprep.subr.mxu0 0.0
    %3825 = vmatpush2.msra.mxu0 0.0
    %3826 = vmatprep.subr.mxu0 0.0
    %3827 = vmatpush2.msra.mxu0 0.0
    %3828 = vmatprep.subr.mxu0 0.0
    %3829 = vmatpush2.msra.mxu0 0.0
    %3830 = vmatprep.subr.mxu0 0.0
    %3831 = vmatpush2.msra.mxu0 0.0
    %3832 = vmatprep.subr.mxu0 0.0
    %3833 = vmatpush2.msra.mxu0 0.0
    %3834 = vmatprep.subr.mxu0 0.0
    %3835 = vmatpush2.msra.mxu0 0.0
    %3836 = vmatprep.subr.mxu0 0.0
    %3837 = vmatpush2.msra.mxu0 0.0
    %3838 = vmatprep.subr.mxu0 0.0
    %3839 = vmatpush2.msra.mxu0 0.0
    %3840 = vmatprep.subr.mxu0 0.0
    %3841 = vmatpush2.msra.mxu0 0.0
    %3842 = vmatprep.mubr.f32.mxu0 0.0
    %3843 = vmatmul.mubr.f32.gmra.mxu0 %v3777
    %v3844 = vpop.f32.mrf.mxu0
    %v3845 = vadd.f32 0.0, %v3844
    %v3846 = vpop.f32.mrf.mxu0
    %v3847 = vadd.f32 0.0, %v3846
    %3848 = vdwg.mxu0
    %3849 = vmatprep.subr.mxu0 %v148
    %3850 = vmatpush1.msra.mxu0 %v147
    %3851 = vmatprep.subr.mxu0 %v144
    %3852 = vmatpush1.msra.mxu0 %v143
    %3853 = vmatprep.subr.mxu0 %v140
    %3854 = vmatpush1.msra.mxu0 %v139
    %3855 = vmatprep.subr.mxu0 %v136
    %3856 = vmatpush1.msra.mxu0 %v135
    %3857 = vmatprep.subr.mxu0 %v132
    %3858 = vmatpush1.msra.mxu0 %v131
    %3859 = vmatprep.subr.mxu0 %v128
    %3860 = vmatpush1.msra.mxu0 %v127
    %3861 = vmatprep.subr.mxu0 %v124
    %3862 = vmatpush1.msra.mxu0 %v123
    %3863 = vmatprep.subr.mxu0 %v120
    %3864 = vmatpush1.msra.mxu0 %v119
    %3865 = vmatprep.subr.mxu0 %v116
    %3866 = vmatpush1.msra.mxu0 %v115
    %3867 = vmatprep.subr.mxu0 %v112
    %3868 = vmatpush1.msra.mxu0 %v111
    %3869 = vmatprep.subr.mxu0 %v108
    %3870 = vmatpush1.msra.mxu0 %v107
    %3871 = vmatprep.subr.mxu0 %v104
    %3872 = vmatpush1.msra.mxu0 %v103
    %3873 = vmatprep.subr.mxu0 %v100
    %3874 = vmatpush1.msra.mxu0 %v99
    %3875 = vmatprep.subr.mxu0 %v96
    %3876 = vmatpush1.msra.mxu0 %v95
    %3877 = vmatprep.subr.mxu0 %v92
    %3878 = vmatpush1.msra.mxu0 %v91
    %3879 = vmatprep.subr.mxu0 %v88
    %3880 = vmatpush1.msra.mxu0 %v87
    %3881 = vmatprep.subr.mxu0 0.0
    %3882 = vmatpush2.msra.mxu0 0.0
    %3883 = vmatprep.subr.mxu0 0.0
    %3884 = vmatpush2.msra.mxu0 0.0
    %3885 = vmatprep.subr.mxu0 0.0
    %3886 = vmatpush2.msra.mxu0 0.0
    %3887 = vmatprep.subr.mxu0 0.0
    %3888 = vmatpush2.msra.mxu0 0.0
    %3889 = vmatprep.subr.mxu0 0.0
    %3890 = vmatpush2.msra.mxu0 0.0
    %3891 = vmatprep.subr.mxu0 0.0
    %3892 = vmatpush2.msra.mxu0 0.0
    %3893 = vmatprep.subr.mxu0 0.0
    %3894 = vmatpush2.msra.mxu0 0.0
    %3895 = vmatprep.subr.mxu0 0.0
    %3896 = vmatpush2.msra.mxu0 0.0
    %3897 = vmatprep.subr.mxu0 0.0
    %3898 = vmatpush2.msra.mxu0 0.0
    %3899 = vmatprep.subr.mxu0 0.0
    %3900 = vmatpush2.msra.mxu0 0.0
    %3901 = vmatprep.subr.mxu0 0.0
    %3902 = vmatpush2.msra.mxu0 0.0
    %3903 = vmatprep.subr.mxu0 0.0
    %3904 = vmatpush2.msra.mxu0 0.0
    %3905 = vmatprep.subr.mxu0 0.0
    %3906 = vmatpush2.msra.mxu0 0.0
    %3907 = vmatprep.subr.mxu0 0.0
    %3908 = vmatpush2.msra.mxu0 0.0
    %3909 = vmatprep.subr.mxu0 0.0
    %3910 = vmatpush2.msra.mxu0 0.0
    %3911 = vmatprep.subr.mxu0 0.0
    %3912 = vmatpush2.msra.mxu0 0.0
    %3913 = vmatprep.mubr.f32.mxu0 0.0
    %3914 = vmatmul.mubr.f32.gmra.mxu0 %v3777
    %v3915 = vpop.f32.mrf.mxu0
    %v3916 = vadd.f32 0.0, %v3915
    %v3917 = vpop.f32.mrf.mxu0
    %v3918 = vadd.f32 0.0, %v3917
    %3919 = vdwg.mxu0
    %v3920 = vadd.f32 %v3845, %v178
    %v3921 = vadd.f32 %v3847, %v182
    %v3922 = vxor.u32 %v3920, 2147483648
    %v3923 = vxor.u32 %v3921, 2147483648
    %v3924 = vmul.f32 %v3922, 1.442695
    %v3925 = vpow.pop %v3924
    %v3926 = vmul.f32 %v3923, 1.442695
    %v3927 = vpow.pop %v3926
    %v3928 = vadd.f32 %v3925, 1.0
    %v3929 = vadd.f32 %v3927, 1.0
    %v3930 = vrcp.pop %v3928
    %v3931 = vmul.f32 1.0, %v3930
    %v3932 = vrcp.pop %v3929
    %v3933 = vmul.f32 1.0, %v3932
    %v3934 = vtanh.pop %v3921
    %v3935 = vmul.f32 %v3931, %v3738
    %v3936 = vmul.f32 %v3931, %v3934
    %3938 = vrot.lane.b32.xlu0 %v3936, 64
    %v3939 = vpop.permute.xlu0 %3938
    %v3941 = vadd.f32 %v3935, %v3939
    %v3942 = vtanh.pop %v3941
    %v3943 = vmul.f32 %v3933, %v3942
    %3944 = vset.pattern.permute.xlu0 18
    %3945 = vperm.xlu0 %3944, %v276
    %v3946 = vpop.permute.xlu0 %3945
    %v3948 = vmul.f32 %v3946, %v154
    %v3949 = vmul.f32 %v3946, %v158
    %v3950 = vadd.f32 %v3948, %v3916
    %v3951 = vadd.f32 %v3949, %v3918
    %v3952 = vadd.f32 %v3950, %v166
    %v3953 = vadd.f32 %v3951, %v170
    %v3954 = vxor.u32 %v3952, 2147483648
    %v3955 = vxor.u32 %v3953, 2147483648
    %v3956 = vmul.f32 %v3954, 1.442695
    %v3957 = vpow.pop %v3956
    %v3958 = vmul.f32 %v3955, 1.442695
    %v3959 = vpow.pop %v3958
    %v3960 = vadd.f32 %v3957, 1.0
    %v3961 = vadd.f32 %v3959, 1.0
    %v3962 = vrcp.pop %v3960
    %v3963 = vmul.f32 1.0, %v3962
    %v3964 = vrcp.pop %v3961
    %v3965 = vmul.f32 1.0, %v3964
    %v3966 = vtanh.pop %v3953
    %v3967 = vmul.f32 %v3963, %v3770
    %v3968 = vmul.f32 %v3963, %v3966
    %3970 = vrot.lane.b32.xlu0 %v3968, 64
    %v3971 = vpop.permute.xlu0 %3970
    %v3973 = vadd.f32 %v3967, %v3971
    %v3974 = vtanh.pop %v3973
    %v3975 = vmul.f32 %v3965, %v3974
    %3977 = vrot.lane.b32.xlu0 %v3975, 64
    %v3978 = vpop.permute.xlu0 %3977
    %v3980 = vsel %vm201, %v3978, %v3943
    %3981 = vmatprep.subr.mxu0 %v146
    %3982 = vmatpush1.msra.mxu0 %v145
    %3983 = vmatprep.subr.mxu0 %v142
    %3984 = vmatpush1.msra.mxu0 %v141
    %3985 = vmatprep.subr.mxu0 %v138
    %3986 = vmatpush1.msra.mxu0 %v137
    %3987 = vmatprep.subr.mxu0 %v134
    %3988 = vmatpush1.msra.mxu0 %v133
    %3989 = vmatprep.subr.mxu0 %v130
    %3990 = vmatpush1.msra.mxu0 %v129
    %3991 = vmatprep.subr.mxu0 %v126
    %3992 = vmatpush1.msra.mxu0 %v125
    %3993 = vmatprep.subr.mxu0 %v122
    %3994 = vmatpush1.msra.mxu0 %v121
    %3995 = vmatprep.subr.mxu0 %v118
    %3996 = vmatpush1.msra.mxu0 %v117
    %3997 = vmatprep.subr.mxu0 %v114
    %3998 = vmatpush1.msra.mxu0 %v113
    %3999 = vmatprep.subr.mxu0 %v110
    %4000 = vmatpush1.msra.mxu0 %v109
    %4001 = vmatprep.subr.mxu0 %v106
    %4002 = vmatpush1.msra.mxu0 %v105
    %4003 = vmatprep.subr.mxu0 %v102
    %4004 = vmatpush1.msra.mxu0 %v101
    %4005 = vmatprep.subr.mxu0 %v98
    %4006 = vmatpush1.msra.mxu0 %v97
    %4007 = vmatprep.subr.mxu0 %v94
    %4008 = vmatpush1.msra.mxu0 %v93
    %4009 = vmatprep.subr.mxu0 %v90
    %4010 = vmatpush1.msra.mxu0 %v89
    %4011 = vmatprep.subr.mxu0 %v86
    %4012 = vmatpush1.msra.mxu0 %v85
    %4013 = vmatprep.subr.mxu0 0.0
    %4014 = vmatpush2.msra.mxu0 0.0
    %4015 = vmatprep.subr.mxu0 0.0
    %4016 = vmatpush2.msra.mxu0 0.0
    %4017 = vmatprep.subr.mxu0 0.0
    %4018 = vmatpush2.msra.mxu0 0.0
    %4019 = vmatprep.subr.mxu0 0.0
    %4020 = vmatpush2.msra.mxu0 0.0
    %4021 = vmatprep.subr.mxu0 0.0
    %4022 = vmatpush2.msra.mxu0 0.0
    %4023 = vmatprep.subr.mxu0 0.0
    %4024 = vmatpush2.msra.mxu0 0.0
    %4025 = vmatprep.subr.mxu0 0.0
    %4026 = vmatpush2.msra.mxu0 0.0
    %4027 = vmatprep.subr.mxu0 0.0
    %4028 = vmatpush2.msra.mxu0 0.0
    %4029 = vmatprep.subr.mxu0 0.0
    %4030 = vmatpush2.msra.mxu0 0.0
    %4031 = vmatprep.subr.mxu0 0.0
    %4032 = vmatpush2.msra.mxu0 0.0
    %4033 = vmatprep.subr.mxu0 0.0
    %4034 = vmatpush2.msra.mxu0 0.0
    %4035 = vmatprep.subr.mxu0 0.0
    %4036 = vmatpush2.msra.mxu0 0.0
    %4037 = vmatprep.subr.mxu0 0.0
    %4038 = vmatpush2.msra.mxu0 0.0
    %4039 = vmatprep.subr.mxu0 0.0
    %4040 = vmatpush2.msra.mxu0 0.0
    %4041 = vmatprep.subr.mxu0 0.0
    %4042 = vmatpush2.msra.mxu0 0.0
    %4043 = vmatprep.subr.mxu0 0.0
    %4044 = vmatpush2.msra.mxu0 0.0
    %4045 = vmatprep.mubr.f32.mxu0 0.0
    %4046 = vmatmul.mubr.f32.gmra.mxu0 %v3980
    %v4047 = vpop.f32.mrf.mxu0
    %v4048 = vadd.f32 0.0, %v4047
    %v4049 = vpop.f32.mrf.mxu0
    %v4050 = vadd.f32 0.0, %v4049
    %4051 = vdwg.mxu0
    %4052 = vmatprep.subr.mxu0 %v148
    %4053 = vmatpush1.msra.mxu0 %v147
    %4054 = vmatprep.subr.mxu0 %v144
    %4055 = vmatpush1.msra.mxu0 %v143
    %4056 = vmatprep.subr.mxu0 %v140
    %4057 = vmatpush1.msra.mxu0 %v139
    %4058 = vmatprep.subr.mxu0 %v136
    %4059 = vmatpush1.msra.mxu0 %v135
    %4060 = vmatprep.subr.mxu0 %v132
    %4061 = vmatpush1.msra.mxu0 %v131
    %4062 = vmatprep.subr.mxu0 %v128
    %4063 = vmatpush1.msra.mxu0 %v127
    %4064 = vmatprep.subr.mxu0 %v124
    %4065 = vmatpush1.msra.mxu0 %v123
    %4066 = vmatprep.subr.mxu0 %v120
    %4067 = vmatpush1.msra.mxu0 %v119
    %4068 = vmatprep.subr.mxu0 %v116
    %4069 = vmatpush1.msra.mxu0 %v115
    %4070 = vmatprep.subr.mxu0 %v112
    %4071 = vmatpush1.msra.mxu0 %v111
    %4072 = vmatprep.subr.mxu0 %v108
    %4073 = vmatpush1.msra.mxu0 %v107
    %4074 = vmatprep.subr.mxu0 %v104
    %4075 = vmatpush1.msra.mxu0 %v103
    %4076 = vmatprep.subr.mxu0 %v100
    %4077 = vmatpush1.msra.mxu0 %v99
    %4078 = vmatprep.subr.mxu0 %v96
    %4079 = vmatpush1.msra.mxu0 %v95
    %4080 = vmatprep.subr.mxu0 %v92
    %4081 = vmatpush1.msra.mxu0 %v91
    %4082 = vmatprep.subr.mxu0 %v88
    %4083 = vmatpush1.msra.mxu0 %v87
    %4084 = vmatprep.subr.mxu0 0.0
    %4085 = vmatpush2.msra.mxu0 0.0
    %4086 = vmatprep.subr.mxu0 0.0
    %4087 = vmatpush2.msra.mxu0 0.0
    %4088 = vmatprep.subr.mxu0 0.0
    %4089 = vmatpush2.msra.mxu0 0.0
    %4090 = vmatprep.subr.mxu0 0.0
    %4091 = vmatpush2.msra.mxu0 0.0
    %4092 = vmatprep.subr.mxu0 0.0
    %4093 = vmatpush2.msra.mxu0 0.0
    %4094 = vmatprep.subr.mxu0 0.0
    %4095 = vmatpush2.msra.mxu0 0.0
    %4096 = vmatprep.subr.mxu0 0.0
    %4097 = vmatpush2.msra.mxu0 0.0
    %4098 = vmatprep.subr.mxu0 0.0
    %4099 = vmatpush2.msra.mxu0 0.0
    %4100 = vmatprep.subr.mxu0 0.0
    %4101 = vmatpush2.msra.mxu0 0.0
    %4102 = vmatprep.subr.mxu0 0.0
    %4103 = vmatpush2.msra.mxu0 0.0
    %4104 = vmatprep.subr.mxu0 0.0
    %4105 = vmatpush2.msra.mxu0 0.0
    %4106 = vmatprep.subr.mxu0 0.0
    %4107 = vmatpush2.msra.mxu0 0.0
    %4108 = vmatprep.subr.mxu0 0.0
    %4109 = vmatpush2.msra.mxu0 0.0
    %4110 = vmatprep.subr.mxu0 0.0
    %4111 = vmatpush2.msra.mxu0 0.0
    %4112 = vmatprep.subr.mxu0 0.0
    %4113 = vmatpush2.msra.mxu0 0.0
    %4114 = vmatprep.subr.mxu0 0.0
    %4115 = vmatpush2.msra.mxu0 0.0
    %4116 = vmatprep.mubr.f32.mxu0 0.0
    %4117 = vmatmul.mubr.f32.gmra.mxu0 %v3980
    %v4118 = vpop.f32.mrf.mxu0
    %v4119 = vadd.f32 0.0, %v4118
    %v4120 = vpop.f32.mrf.mxu0
    %v4121 = vadd.f32 0.0, %v4120
    %4122 = vdwg.mxu0
    %v4123 = vadd.f32 %v4048, %v178
    %v4124 = vadd.f32 %v4050, %v182
    %v4125 = vxor.u32 %v4123, 2147483648
    %v4126 = vxor.u32 %v4124, 2147483648
    %v4127 = vmul.f32 %v4125, 1.442695
    %v4128 = vpow.pop %v4127
    %v4129 = vmul.f32 %v4126, 1.442695
    %v4130 = vpow.pop %v4129
    %v4131 = vadd.f32 %v4128, 1.0
    %v4132 = vadd.f32 %v4130, 1.0
    %v4133 = vrcp.pop %v4131
    %v4134 = vmul.f32 1.0, %v4133
    %v4135 = vrcp.pop %v4132
    %v4136 = vmul.f32 1.0, %v4135
    %v4137 = vtanh.pop %v4124
    %v4138 = vmul.f32 %v4134, %v3941
    %v4139 = vmul.f32 %v4134, %v4137
    %4141 = vrot.lane.b32.xlu0 %v4139, 64
    %v4142 = vpop.permute.xlu0 %4141
    %v4144 = vadd.f32 %v4138, %v4142
    %v4145 = vtanh.pop %v4144
    %v4146 = vmul.f32 %v4136, %v4145
    %4147 = vset.pattern.permute.xlu0 19
    %4148 = vperm.xlu0 %4147, %v276
    %v4149 = vpop.permute.xlu0 %4148
    %v4151 = vmul.f32 %v4149, %v154
    %v4152 = vmul.f32 %v4149, %v158
    %v4153 = vadd.f32 %v4151, %v4119
    %v4154 = vadd.f32 %v4152, %v4121
    %v4155 = vadd.f32 %v4153, %v166
    %v4156 = vadd.f32 %v4154, %v170
    %v4157 = vxor.u32 %v4155, 2147483648
    %v4158 = vxor.u32 %v4156, 2147483648
    %v4159 = vmul.f32 %v4157, 1.442695
    %v4160 = vpow.pop %v4159
    %v4161 = vmul.f32 %v4158, 1.442695
    %v4162 = vpow.pop %v4161
    %v4163 = vadd.f32 %v4160, 1.0
    %v4164 = vadd.f32 %v4162, 1.0
    %v4165 = vrcp.pop %v4163
    %v4166 = vmul.f32 1.0, %v4165
    %v4167 = vrcp.pop %v4164
    %v4168 = vmul.f32 1.0, %v4167
    %v4169 = vtanh.pop %v4156
    %v4170 = vmul.f32 %v4166, %v3973
    %v4171 = vmul.f32 %v4166, %v4169
    %4173 = vrot.lane.b32.xlu0 %v4171, 64
    %v4174 = vpop.permute.xlu0 %4173
    %v4176 = vadd.f32 %v4170, %v4174
    %v4177 = vtanh.pop %v4176
    %v4178 = vmul.f32 %v4168, %v4177
    %4180 = vrot.lane.b32.xlu0 %v4178, 64
    %v4181 = vpop.permute.xlu0 %4180
    %v4183 = vsel %vm201, %v4181, %v4146
    %4184 = vmatprep.subr.mxu0 %v146
    %4185 = vmatpush1.msra.mxu0 %v145
    %4186 = vmatprep.subr.mxu0 %v142
    %4187 = vmatpush1.msra.mxu0 %v141
    %4188 = vmatprep.subr.mxu0 %v138
    %4189 = vmatpush1.msra.mxu0 %v137
    %4190 = vmatprep.subr.mxu0 %v134
    %4191 = vmatpush1.msra.mxu0 %v133
    %4192 = vmatprep.subr.mxu0 %v130
    %4193 = vmatpush1.msra.mxu0 %v129
    %4194 = vmatprep.subr.mxu0 %v126
    %4195 = vmatpush1.msra.mxu0 %v125
    %4196 = vmatprep.subr.mxu0 %v122
    %4197 = vmatpush1.msra.mxu0 %v121
    %4198 = vmatprep.subr.mxu0 %v118
    %4199 = vmatpush1.msra.mxu0 %v117
    %4200 = vmatprep.subr.mxu0 %v114
    %4201 = vmatpush1.msra.mxu0 %v113
    %4202 = vmatprep.subr.mxu0 %v110
    %4203 = vmatpush1.msra.mxu0 %v109
    %4204 = vmatprep.subr.mxu0 %v106
    %4205 = vmatpush1.msra.mxu0 %v105
    %4206 = vmatprep.subr.mxu0 %v102
    %4207 = vmatpush1.msra.mxu0 %v101
    %4208 = vmatprep.subr.mxu0 %v98
    %4209 = vmatpush1.msra.mxu0 %v97
    %4210 = vmatprep.subr.mxu0 %v94
    %4211 = vmatpush1.msra.mxu0 %v93
    %4212 = vmatprep.subr.mxu0 %v90
    %4213 = vmatpush1.msra.mxu0 %v89
    %4214 = vmatprep.subr.mxu0 %v86
    %4215 = vmatpush1.msra.mxu0 %v85
    %4216 = vmatprep.subr.mxu0 0.0
    %4217 = vmatpush2.msra.mxu0 0.0
    %4218 = vmatprep.subr.mxu0 0.0
    %4219 = vmatpush2.msra.mxu0 0.0
    %4220 = vmatprep.subr.mxu0 0.0
    %4221 = vmatpush2.msra.mxu0 0.0
    %4222 = vmatprep.subr.mxu0 0.0
    %4223 = vmatpush2.msra.mxu0 0.0
    %4224 = vmatprep.subr.mxu0 0.0
    %4225 = vmatpush2.msra.mxu0 0.0
    %4226 = vmatprep.subr.mxu0 0.0
    %4227 = vmatpush2.msra.mxu0 0.0
    %4228 = vmatprep.subr.mxu0 0.0
    %4229 = vmatpush2.msra.mxu0 0.0
    %4230 = vmatprep.subr.mxu0 0.0
    %4231 = vmatpush2.msra.mxu0 0.0
    %4232 = vmatprep.subr.mxu0 0.0
    %4233 = vmatpush2.msra.mxu0 0.0
    %4234 = vmatprep.subr.mxu0 0.0
    %4235 = vmatpush2.msra.mxu0 0.0
    %4236 = vmatprep.subr.mxu0 0.0
    %4237 = vmatpush2.msra.mxu0 0.0
    %4238 = vmatprep.subr.mxu0 0.0
    %4239 = vmatpush2.msra.mxu0 0.0
    %4240 = vmatprep.subr.mxu0 0.0
    %4241 = vmatpush2.msra.mxu0 0.0
    %4242 = vmatprep.subr.mxu0 0.0
    %4243 = vmatpush2.msra.mxu0 0.0
    %4244 = vmatprep.subr.mxu0 0.0
    %4245 = vmatpush2.msra.mxu0 0.0
    %4246 = vmatprep.subr.mxu0 0.0
    %4247 = vmatpush2.msra.mxu0 0.0
    %4248 = vmatprep.mubr.f32.mxu0 0.0
    %4249 = vmatmul.mubr.f32.gmra.mxu0 %v4183
    %v4250 = vpop.f32.mrf.mxu0
    %v4251 = vadd.f32 0.0, %v4250
    %v4252 = vpop.f32.mrf.mxu0
    %v4253 = vadd.f32 0.0, %v4252
    %4254 = vdwg.mxu0
    %4255 = vmatprep.subr.mxu0 %v148
    %4256 = vmatpush1.msra.mxu0 %v147
    %4257 = vmatprep.subr.mxu0 %v144
    %4258 = vmatpush1.msra.mxu0 %v143
    %4259 = vmatprep.subr.mxu0 %v140
    %4260 = vmatpush1.msra.mxu0 %v139
    %4261 = vmatprep.subr.mxu0 %v136
    %4262 = vmatpush1.msra.mxu0 %v135
    %4263 = vmatprep.subr.mxu0 %v132
    %4264 = vmatpush1.msra.mxu0 %v131
    %4265 = vmatprep.subr.mxu0 %v128
    %4266 = vmatpush1.msra.mxu0 %v127
    %4267 = vmatprep.subr.mxu0 %v124
    %4268 = vmatpush1.msra.mxu0 %v123
    %4269 = vmatprep.subr.mxu0 %v120
    %4270 = vmatpush1.msra.mxu0 %v119
    %4271 = vmatprep.subr.mxu0 %v116
    %4272 = vmatpush1.msra.mxu0 %v115
    %4273 = vmatprep.subr.mxu0 %v112
    %4274 = vmatpush1.msra.mxu0 %v111
    %4275 = vmatprep.subr.mxu0 %v108
    %4276 = vmatpush1.msra.mxu0 %v107
    %4277 = vmatprep.subr.mxu0 %v104
    %4278 = vmatpush1.msra.mxu0 %v103
    %4279 = vmatprep.subr.mxu0 %v100
    %4280 = vmatpush1.msra.mxu0 %v99
    %4281 = vmatprep.subr.mxu0 %v96
    %4282 = vmatpush1.msra.mxu0 %v95
    %4283 = vmatprep.subr.mxu0 %v92
    %4284 = vmatpush1.msra.mxu0 %v91
    %4285 = vmatprep.subr.mxu0 %v88
    %4286 = vmatpush1.msra.mxu0 %v87
    %4287 = vmatprep.subr.mxu0 0.0
    %4288 = vmatpush2.msra.mxu0 0.0
    %4289 = vmatprep.subr.mxu0 0.0
    %4290 = vmatpush2.msra.mxu0 0.0
    %4291 = vmatprep.subr.mxu0 0.0
    %4292 = vmatpush2.msra.mxu0 0.0
    %4293 = vmatprep.subr.mxu0 0.0
    %4294 = vmatpush2.msra.mxu0 0.0
    %4295 = vmatprep.subr.mxu0 0.0
    %4296 = vmatpush2.msra.mxu0 0.0
    %4297 = vmatprep.subr.mxu0 0.0
    %4298 = vmatpush2.msra.mxu0 0.0
    %4299 = vmatprep.subr.mxu0 0.0
    %4300 = vmatpush2.msra.mxu0 0.0
    %4301 = vmatprep.subr.mxu0 0.0
    %4302 = vmatpush2.msra.mxu0 0.0
    %4303 = vmatprep.subr.mxu0 0.0
    %4304 = vmatpush2.msra.mxu0 0.0
    %4305 = vmatprep.subr.mxu0 0.0
    %4306 = vmatpush2.msra.mxu0 0.0
    %4307 = vmatprep.subr.mxu0 0.0
    %4308 = vmatpush2.msra.mxu0 0.0
    %4309 = vmatprep.subr.mxu0 0.0
    %4310 = vmatpush2.msra.mxu0 0.0
    %4311 = vmatprep.subr.mxu0 0.0
    %4312 = vmatpush2.msra.mxu0 0.0
    %4313 = vmatprep.subr.mxu0 0.0
    %4314 = vmatpush2.msra.mxu0 0.0
    %4315 = vmatprep.subr.mxu0 0.0
    %4316 = vmatpush2.msra.mxu0 0.0
    %4317 = vmatprep.subr.mxu0 0.0
    %4318 = vmatpush2.msra.mxu0 0.0
    %4319 = vmatprep.mubr.f32.mxu0 0.0
    %4320 = vmatmul.mubr.f32.gmra.mxu0 %v4183
    %v4321 = vpop.f32.mrf.mxu0
    %v4322 = vadd.f32 0.0, %v4321
    %v4323 = vpop.f32.mrf.mxu0
    %v4324 = vadd.f32 0.0, %v4323
    %4325 = vdwg.mxu0
    %v4326 = vadd.f32 %v4251, %v178
    %v4327 = vadd.f32 %v4253, %v182
    %v4328 = vxor.u32 %v4326, 2147483648
    %v4329 = vxor.u32 %v4327, 2147483648
    %v4330 = vmul.f32 %v4328, 1.442695
    %v4331 = vpow.pop %v4330
    %v4332 = vmul.f32 %v4329, 1.442695
    %v4333 = vpow.pop %v4332
    %v4334 = vadd.f32 %v4331, 1.0
    %v4335 = vadd.f32 %v4333, 1.0
    %v4336 = vrcp.pop %v4334
    %v4337 = vmul.f32 1.0, %v4336
    %v4338 = vrcp.pop %v4335
    %v4339 = vmul.f32 1.0, %v4338
    %v4340 = vtanh.pop %v4327
    %v4341 = vmul.f32 %v4337, %v4144
    %v4342 = vmul.f32 %v4337, %v4340
    %4344 = vrot.lane.b32.xlu0 %v4342, 64
    %v4345 = vpop.permute.xlu0 %4344
    %v4347 = vadd.f32 %v4341, %v4345
    %v4348 = vtanh.pop %v4347
    %v4349 = vmul.f32 %v4339, %v4348
    %4350 = vset.pattern.permute.xlu0 20
    %4351 = vperm.xlu0 %4350, %v276
    %v4352 = vpop.permute.xlu0 %4351
    %v4354 = vmul.f32 %v4352, %v154
    %v4355 = vmul.f32 %v4352, %v158
    %v4356 = vadd.f32 %v4354, %v4322
    %v4357 = vadd.f32 %v4355, %v4324
    %v4358 = vadd.f32 %v4356, %v166
    %v4359 = vadd.f32 %v4357, %v170
    %v4360 = vxor.u32 %v4358, 2147483648
    %v4361 = vxor.u32 %v4359, 2147483648
    %v4362 = vmul.f32 %v4360, 1.442695
    %v4363 = vpow.pop %v4362
    %v4364 = vmul.f32 %v4361, 1.442695
    %v4365 = vpow.pop %v4364
    %v4366 = vadd.f32 %v4363, 1.0
    %v4367 = vadd.f32 %v4365, 1.0
    %v4368 = vrcp.pop %v4366
    %v4369 = vmul.f32 1.0, %v4368
    %v4370 = vrcp.pop %v4367
    %v4371 = vmul.f32 1.0, %v4370
    %v4372 = vtanh.pop %v4359
    %v4373 = vmul.f32 %v4369, %v4176
    %v4374 = vmul.f32 %v4369, %v4372
    %4376 = vrot.lane.b32.xlu0 %v4374, 64
    %v4377 = vpop.permute.xlu0 %4376
    %v4379 = vadd.f32 %v4373, %v4377
    %v4380 = vtanh.pop %v4379
    %v4381 = vmul.f32 %v4371, %v4380
    %4383 = vrot.lane.b32.xlu0 %v4381, 64
    %v4384 = vpop.permute.xlu0 %4383
    %v4386 = vsel %vm201, %v4384, %v4349
    %4387 = vmatprep.subr.mxu0 %v146
    %4388 = vmatpush1.msra.mxu0 %v145
    %4389 = vmatprep.subr.mxu0 %v142
    %4390 = vmatpush1.msra.mxu0 %v141
    %4391 = vmatprep.subr.mxu0 %v138
    %4392 = vmatpush1.msra.mxu0 %v137
    %4393 = vmatprep.subr.mxu0 %v134
    %4394 = vmatpush1.msra.mxu0 %v133
    %4395 = vmatprep.subr.mxu0 %v130
    %4396 = vmatpush1.msra.mxu0 %v129
    %4397 = vmatprep.subr.mxu0 %v126
    %4398 = vmatpush1.msra.mxu0 %v125
    %4399 = vmatprep.subr.mxu0 %v122
    %4400 = vmatpush1.msra.mxu0 %v121
    %4401 = vmatprep.subr.mxu0 %v118
    %4402 = vmatpush1.msra.mxu0 %v117
    %4403 = vmatprep.subr.mxu0 %v114
    %4404 = vmatpush1.msra.mxu0 %v113
    %4405 = vmatprep.subr.mxu0 %v110
    %4406 = vmatpush1.msra.mxu0 %v109
    %4407 = vmatprep.subr.mxu0 %v106
    %4408 = vmatpush1.msra.mxu0 %v105
    %4409 = vmatprep.subr.mxu0 %v102
    %4410 = vmatpush1.msra.mxu0 %v101
    %4411 = vmatprep.subr.mxu0 %v98
    %4412 = vmatpush1.msra.mxu0 %v97
    %4413 = vmatprep.subr.mxu0 %v94
    %4414 = vmatpush1.msra.mxu0 %v93
    %4415 = vmatprep.subr.mxu0 %v90
    %4416 = vmatpush1.msra.mxu0 %v89
    %4417 = vmatprep.subr.mxu0 %v86
    %4418 = vmatpush1.msra.mxu0 %v85
    %4419 = vmatprep.subr.mxu0 0.0
    %4420 = vmatpush2.msra.mxu0 0.0
    %4421 = vmatprep.subr.mxu0 0.0
    %4422 = vmatpush2.msra.mxu0 0.0
    %4423 = vmatprep.subr.mxu0 0.0
    %4424 = vmatpush2.msra.mxu0 0.0
    %4425 = vmatprep.subr.mxu0 0.0
    %4426 = vmatpush2.msra.mxu0 0.0
    %4427 = vmatprep.subr.mxu0 0.0
    %4428 = vmatpush2.msra.mxu0 0.0
    %4429 = vmatprep.subr.mxu0 0.0
    %4430 = vmatpush2.msra.mxu0 0.0
    %4431 = vmatprep.subr.mxu0 0.0
    %4432 = vmatpush2.msra.mxu0 0.0
    %4433 = vmatprep.subr.mxu0 0.0
    %4434 = vmatpush2.msra.mxu0 0.0
    %4435 = vmatprep.subr.mxu0 0.0
    %4436 = vmatpush2.msra.mxu0 0.0
    %4437 = vmatprep.subr.mxu0 0.0
    %4438 = vmatpush2.msra.mxu0 0.0
    %4439 = vmatprep.subr.mxu0 0.0
    %4440 = vmatpush2.msra.mxu0 0.0
    %4441 = vmatprep.subr.mxu0 0.0
    %4442 = vmatpush2.msra.mxu0 0.0
    %4443 = vmatprep.subr.mxu0 0.0
    %4444 = vmatpush2.msra.mxu0 0.0
    %4445 = vmatprep.subr.mxu0 0.0
    %4446 = vmatpush2.msra.mxu0 0.0
    %4447 = vmatprep.subr.mxu0 0.0
    %4448 = vmatpush2.msra.mxu0 0.0
    %4449 = vmatprep.subr.mxu0 0.0
    %4450 = vmatpush2.msra.mxu0 0.0
    %4451 = vmatprep.mubr.f32.mxu0 0.0
    %4452 = vmatmul.mubr.f32.gmra.mxu0 %v4386
    %v4453 = vpop.f32.mrf.mxu0
    %v4454 = vadd.f32 0.0, %v4453
    %v4455 = vpop.f32.mrf.mxu0
    %v4456 = vadd.f32 0.0, %v4455
    %4457 = vdwg.mxu0
    %4458 = vmatprep.subr.mxu0 %v148
    %4459 = vmatpush1.msra.mxu0 %v147
    %4460 = vmatprep.subr.mxu0 %v144
    %4461 = vmatpush1.msra.mxu0 %v143
    %4462 = vmatprep.subr.mxu0 %v140
    %4463 = vmatpush1.msra.mxu0 %v139
    %4464 = vmatprep.subr.mxu0 %v136
    %4465 = vmatpush1.msra.mxu0 %v135
    %4466 = vmatprep.subr.mxu0 %v132
    %4467 = vmatpush1.msra.mxu0 %v131
    %4468 = vmatprep.subr.mxu0 %v128
    %4469 = vmatpush1.msra.mxu0 %v127
    %4470 = vmatprep.subr.mxu0 %v124
    %4471 = vmatpush1.msra.mxu0 %v123
    %4472 = vmatprep.subr.mxu0 %v120
    %4473 = vmatpush1.msra.mxu0 %v119
    %4474 = vmatprep.subr.mxu0 %v116
    %4475 = vmatpush1.msra.mxu0 %v115
    %4476 = vmatprep.subr.mxu0 %v112
    %4477 = vmatpush1.msra.mxu0 %v111
    %4478 = vmatprep.subr.mxu0 %v108
    %4479 = vmatpush1.msra.mxu0 %v107
    %4480 = vmatprep.subr.mxu0 %v104
    %4481 = vmatpush1.msra.mxu0 %v103
    %4482 = vmatprep.subr.mxu0 %v100
    %4483 = vmatpush1.msra.mxu0 %v99
    %4484 = vmatprep.subr.mxu0 %v96
    %4485 = vmatpush1.msra.mxu0 %v95
    %4486 = vmatprep.subr.mxu0 %v92
    %4487 = vmatpush1.msra.mxu0 %v91
    %4488 = vmatprep.subr.mxu0 %v88
    %4489 = vmatpush1.msra.mxu0 %v87
    %4490 = vmatprep.subr.mxu0 0.0
    %4491 = vmatpush2.msra.mxu0 0.0
    %4492 = vmatprep.subr.mxu0 0.0
    %4493 = vmatpush2.msra.mxu0 0.0
    %4494 = vmatprep.subr.mxu0 0.0
    %4495 = vmatpush2.msra.mxu0 0.0
    %4496 = vmatprep.subr.mxu0 0.0
    %4497 = vmatpush2.msra.mxu0 0.0
    %4498 = vmatprep.subr.mxu0 0.0
    %4499 = vmatpush2.msra.mxu0 0.0
    %4500 = vmatprep.subr.mxu0 0.0
    %4501 = vmatpush2.msra.mxu0 0.0
    %4502 = vmatprep.subr.mxu0 0.0
    %4503 = vmatpush2.msra.mxu0 0.0
    %4504 = vmatprep.subr.mxu0 0.0
    %4505 = vmatpush2.msra.mxu0 0.0
    %4506 = vmatprep.subr.mxu0 0.0
    %4507 = vmatpush2.msra.mxu0 0.0
    %4508 = vmatprep.subr.mxu0 0.0
    %4509 = vmatpush2.msra.mxu0 0.0
    %4510 = vmatprep.subr.mxu0 0.0
    %4511 = vmatpush2.msra.mxu0 0.0
    %4512 = vmatprep.subr.mxu0 0.0
    %4513 = vmatpush2.msra.mxu0 0.0
    %4514 = vmatprep.subr.mxu0 0.0
    %4515 = vmatpush2.msra.mxu0 0.0
    %4516 = vmatprep.subr.mxu0 0.0
    %4517 = vmatpush2.msra.mxu0 0.0
    %4518 = vmatprep.subr.mxu0 0.0
    %4519 = vmatpush2.msra.mxu0 0.0
    %4520 = vmatprep.subr.mxu0 0.0
    %4521 = vmatpush2.msra.mxu0 0.0
    %4522 = vmatprep.mubr.f32.mxu0 0.0
    %4523 = vmatmul.mubr.f32.gmra.mxu0 %v4386
    %v4524 = vpop.f32.mrf.mxu0
    %v4525 = vadd.f32 0.0, %v4524
    %v4526 = vpop.f32.mrf.mxu0
    %v4527 = vadd.f32 0.0, %v4526
    %4528 = vdwg.mxu0
    %v4529 = vadd.f32 %v4454, %v178
    %v4530 = vadd.f32 %v4456, %v182
    %v4531 = vxor.u32 %v4529, 2147483648
    %v4532 = vxor.u32 %v4530, 2147483648
    %v4533 = vmul.f32 %v4531, 1.442695
    %v4534 = vpow.pop %v4533
    %v4535 = vmul.f32 %v4532, 1.442695
    %v4536 = vpow.pop %v4535
    %v4537 = vadd.f32 %v4534, 1.0
    %v4538 = vadd.f32 %v4536, 1.0
    %v4539 = vrcp.pop %v4537
    %v4540 = vmul.f32 1.0, %v4539
    %v4541 = vrcp.pop %v4538
    %v4542 = vmul.f32 1.0, %v4541
    %v4543 = vtanh.pop %v4530
    %v4544 = vmul.f32 %v4540, %v4347
    %v4545 = vmul.f32 %v4540, %v4543
    %4547 = vrot.lane.b32.xlu0 %v4545, 64
    %v4548 = vpop.permute.xlu0 %4547
    %v4550 = vadd.f32 %v4544, %v4548
    %v4551 = vtanh.pop %v4550
    %v4552 = vmul.f32 %v4542, %v4551
    %4553 = vset.pattern.permute.xlu0 21
    %4554 = vperm.xlu0 %4553, %v276
    %v4555 = vpop.permute.xlu0 %4554
    %v4557 = vmul.f32 %v4555, %v154
    %v4558 = vmul.f32 %v4555, %v158
    %v4559 = vadd.f32 %v4557, %v4525
    %v4560 = vadd.f32 %v4558, %v4527
    %v4561 = vadd.f32 %v4559, %v166
    %v4562 = vadd.f32 %v4560, %v170
    %v4563 = vxor.u32 %v4561, 2147483648
    %v4564 = vxor.u32 %v4562, 2147483648
    %v4565 = vmul.f32 %v4563, 1.442695
    %v4566 = vpow.pop %v4565
    %v4567 = vmul.f32 %v4564, 1.442695
    %v4568 = vpow.pop %v4567
    %v4569 = vadd.f32 %v4566, 1.0
    %v4570 = vadd.f32 %v4568, 1.0
    %v4571 = vrcp.pop %v4569
    %v4572 = vmul.f32 1.0, %v4571
    %v4573 = vrcp.pop %v4570
    %v4574 = vmul.f32 1.0, %v4573
    %v4575 = vtanh.pop %v4562
    %v4576 = vmul.f32 %v4572, %v4379
    %v4577 = vmul.f32 %v4572, %v4575
    %4579 = vrot.lane.b32.xlu0 %v4577, 64
    %v4580 = vpop.permute.xlu0 %4579
    %v4582 = vadd.f32 %v4576, %v4580
    %v4583 = vtanh.pop %v4582
    %v4584 = vmul.f32 %v4574, %v4583
    %4586 = vrot.lane.b32.xlu0 %v4584, 64
    %v4587 = vpop.permute.xlu0 %4586
    %v4589 = vsel %vm201, %v4587, %v4552
    %4590 = vmatprep.subr.mxu0 %v146
    %4591 = vmatpush1.msra.mxu0 %v145
    %4592 = vmatprep.subr.mxu0 %v142
    %4593 = vmatpush1.msra.mxu0 %v141
    %4594 = vmatprep.subr.mxu0 %v138
    %4595 = vmatpush1.msra.mxu0 %v137
    %4596 = vmatprep.subr.mxu0 %v134
    %4597 = vmatpush1.msra.mxu0 %v133
    %4598 = vmatprep.subr.mxu0 %v130
    %4599 = vmatpush1.msra.mxu0 %v129
    %4600 = vmatprep.subr.mxu0 %v126
    %4601 = vmatpush1.msra.mxu0 %v125
    %4602 = vmatprep.subr.mxu0 %v122
    %4603 = vmatpush1.msra.mxu0 %v121
    %4604 = vmatprep.subr.mxu0 %v118
    %4605 = vmatpush1.msra.mxu0 %v117
    %4606 = vmatprep.subr.mxu0 %v114
    %4607 = vmatpush1.msra.mxu0 %v113
    %4608 = vmatprep.subr.mxu0 %v110
    %4609 = vmatpush1.msra.mxu0 %v109
    %4610 = vmatprep.subr.mxu0 %v106
    %4611 = vmatpush1.msra.mxu0 %v105
    %4612 = vmatprep.subr.mxu0 %v102
    %4613 = vmatpush1.msra.mxu0 %v101
    %4614 = vmatprep.subr.mxu0 %v98
    %4615 = vmatpush1.msra.mxu0 %v97
    %4616 = vmatprep.subr.mxu0 %v94
    %4617 = vmatpush1.msra.mxu0 %v93
    %4618 = vmatprep.subr.mxu0 %v90
    %4619 = vmatpush1.msra.mxu0 %v89
    %4620 = vmatprep.subr.mxu0 %v86
    %4621 = vmatpush1.msra.mxu0 %v85
    %4622 = vmatprep.subr.mxu0 0.0
    %4623 = vmatpush2.msra.mxu0 0.0
    %4624 = vmatprep.subr.mxu0 0.0
    %4625 = vmatpush2.msra.mxu0 0.0
    %4626 = vmatprep.subr.mxu0 0.0
    %4627 = vmatpush2.msra.mxu0 0.0
    %4628 = vmatprep.subr.mxu0 0.0
    %4629 = vmatpush2.msra.mxu0 0.0
    %4630 = vmatprep.subr.mxu0 0.0
    %4631 = vmatpush2.msra.mxu0 0.0
    %4632 = vmatprep.subr.mxu0 0.0
    %4633 = vmatpush2.msra.mxu0 0.0
    %4634 = vmatprep.subr.mxu0 0.0
    %4635 = vmatpush2.msra.mxu0 0.0
    %4636 = vmatprep.subr.mxu0 0.0
    %4637 = vmatpush2.msra.mxu0 0.0
    %4638 = vmatprep.subr.mxu0 0.0
    %4639 = vmatpush2.msra.mxu0 0.0
    %4640 = vmatprep.subr.mxu0 0.0
    %4641 = vmatpush2.msra.mxu0 0.0
    %4642 = vmatprep.subr.mxu0 0.0
    %4643 = vmatpush2.msra.mxu0 0.0
    %4644 = vmatprep.subr.mxu0 0.0
    %4645 = vmatpush2.msra.mxu0 0.0
    %4646 = vmatprep.subr.mxu0 0.0
    %4647 = vmatpush2.msra.mxu0 0.0
    %4648 = vmatprep.subr.mxu0 0.0
    %4649 = vmatpush2.msra.mxu0 0.0
    %4650 = vmatprep.subr.mxu0 0.0
    %4651 = vmatpush2.msra.mxu0 0.0
    %4652 = vmatprep.subr.mxu0 0.0
    %4653 = vmatpush2.msra.mxu0 0.0
    %4654 = vmatprep.mubr.f32.mxu0 0.0
    %4655 = vmatmul.mubr.f32.gmra.mxu0 %v4589
    %v4656 = vpop.f32.mrf.mxu0
    %v4657 = vadd.f32 0.0, %v4656
    %v4658 = vpop.f32.mrf.mxu0
    %v4659 = vadd.f32 0.0, %v4658
    %4660 = vdwg.mxu0
    %4661 = vmatprep.subr.mxu0 %v148
    %4662 = vmatpush1.msra.mxu0 %v147
    %4663 = vmatprep.subr.mxu0 %v144
    %4664 = vmatpush1.msra.mxu0 %v143
    %4665 = vmatprep.subr.mxu0 %v140
    %4666 = vmatpush1.msra.mxu0 %v139
    %4667 = vmatprep.subr.mxu0 %v136
    %4668 = vmatpush1.msra.mxu0 %v135
    %4669 = vmatprep.subr.mxu0 %v132
    %4670 = vmatpush1.msra.mxu0 %v131
    %4671 = vmatprep.subr.mxu0 %v128
    %4672 = vmatpush1.msra.mxu0 %v127
    %4673 = vmatprep.subr.mxu0 %v124
    %4674 = vmatpush1.msra.mxu0 %v123
    %4675 = vmatprep.subr.mxu0 %v120
    %4676 = vmatpush1.msra.mxu0 %v119
    %4677 = vmatprep.subr.mxu0 %v116
    %4678 = vmatpush1.msra.mxu0 %v115
    %4679 = vmatprep.subr.mxu0 %v112
    %4680 = vmatpush1.msra.mxu0 %v111
    %4681 = vmatprep.subr.mxu0 %v108
    %4682 = vmatpush1.msra.mxu0 %v107
    %4683 = vmatprep.subr.mxu0 %v104
    %4684 = vmatpush1.msra.mxu0 %v103
    %4685 = vmatprep.subr.mxu0 %v100
    %4686 = vmatpush1.msra.mxu0 %v99
    %4687 = vmatprep.subr.mxu0 %v96
    %4688 = vmatpush1.msra.mxu0 %v95
    %4689 = vmatprep.subr.mxu0 %v92
    %4690 = vmatpush1.msra.mxu0 %v91
    %4691 = vmatprep.subr.mxu0 %v88
    %4692 = vmatpush1.msra.mxu0 %v87
    %4693 = vmatprep.subr.mxu0 0.0
    %4694 = vmatpush2.msra.mxu0 0.0
    %4695 = vmatprep.subr.mxu0 0.0
    %4696 = vmatpush2.msra.mxu0 0.0
    %4697 = vmatprep.subr.mxu0 0.0
    %4698 = vmatpush2.msra.mxu0 0.0
    %4699 = vmatprep.subr.mxu0 0.0
    %4700 = vmatpush2.msra.mxu0 0.0
    %4701 = vmatprep.subr.mxu0 0.0
    %4702 = vmatpush2.msra.mxu0 0.0
    %4703 = vmatprep.subr.mxu0 0.0
    %4704 = vmatpush2.msra.mxu0 0.0
    %4705 = vmatprep.subr.mxu0 0.0
    %4706 = vmatpush2.msra.mxu0 0.0
    %4707 = vmatprep.subr.mxu0 0.0
    %4708 = vmatpush2.msra.mxu0 0.0
    %4709 = vmatprep.subr.mxu0 0.0
    %4710 = vmatpush2.msra.mxu0 0.0
    %4711 = vmatprep.subr.mxu0 0.0
    %4712 = vmatpush2.msra.mxu0 0.0
    %4713 = vmatprep.subr.mxu0 0.0
    %4714 = vmatpush2.msra.mxu0 0.0
    %4715 = vmatprep.subr.mxu0 0.0
    %4716 = vmatpush2.msra.mxu0 0.0
    %4717 = vmatprep.subr.mxu0 0.0
    %4718 = vmatpush2.msra.mxu0 0.0
    %4719 = vmatprep.subr.mxu0 0.0
    %4720 = vmatpush2.msra.mxu0 0.0
    %4721 = vmatprep.subr.mxu0 0.0
    %4722 = vmatpush2.msra.mxu0 0.0
    %4723 = vmatprep.subr.mxu0 0.0
    %4724 = vmatpush2.msra.mxu0 0.0
    %4725 = vmatprep.mubr.f32.mxu0 0.0
    %4726 = vmatmul.mubr.f32.gmra.mxu0 %v4589
    %v4727 = vpop.f32.mrf.mxu0
    %v4728 = vadd.f32 0.0, %v4727
    %v4729 = vpop.f32.mrf.mxu0
    %v4730 = vadd.f32 0.0, %v4729
    %4731 = vdwg.mxu0
    %v4732 = vadd.f32 %v4657, %v178
    %v4733 = vadd.f32 %v4659, %v182
    %v4734 = vxor.u32 %v4732, 2147483648
    %v4735 = vxor.u32 %v4733, 2147483648
    %v4736 = vmul.f32 %v4734, 1.442695
    %v4737 = vpow.pop %v4736
    %v4738 = vmul.f32 %v4735, 1.442695
    %v4739 = vpow.pop %v4738
    %v4740 = vadd.f32 %v4737, 1.0
    %v4741 = vadd.f32 %v4739, 1.0
    %v4742 = vrcp.pop %v4740
    %v4743 = vmul.f32 1.0, %v4742
    %v4744 = vrcp.pop %v4741
    %v4745 = vmul.f32 1.0, %v4744
    %v4746 = vtanh.pop %v4733
    %v4747 = vmul.f32 %v4743, %v4550
    %v4748 = vmul.f32 %v4743, %v4746
    %4750 = vrot.lane.b32.xlu0 %v4748, 64
    %v4751 = vpop.permute.xlu0 %4750
    %v4753 = vadd.f32 %v4747, %v4751
    %v4754 = vtanh.pop %v4753
    %v4755 = vmul.f32 %v4745, %v4754
    %4756 = vset.pattern.permute.xlu0 22
    %4757 = vperm.xlu0 %4756, %v276
    %v4758 = vpop.permute.xlu0 %4757
    %v4760 = vmul.f32 %v4758, %v154
    %v4761 = vmul.f32 %v4758, %v158
    %v4762 = vadd.f32 %v4760, %v4728
    %v4763 = vadd.f32 %v4761, %v4730
    %v4764 = vadd.f32 %v4762, %v166
    %v4765 = vadd.f32 %v4763, %v170
    %v4766 = vxor.u32 %v4764, 2147483648
    %v4767 = vxor.u32 %v4765, 2147483648
    %v4768 = vmul.f32 %v4766, 1.442695
    %v4769 = vpow.pop %v4768
    %v4770 = vmul.f32 %v4767, 1.442695
    %v4771 = vpow.pop %v4770
    %v4772 = vadd.f32 %v4769, 1.0
    %v4773 = vadd.f32 %v4771, 1.0
    %v4774 = vrcp.pop %v4772
    %v4775 = vmul.f32 1.0, %v4774
    %v4776 = vrcp.pop %v4773
    %v4777 = vmul.f32 1.0, %v4776
    %v4778 = vtanh.pop %v4765
    %v4779 = vmul.f32 %v4775, %v4582
    %v4780 = vmul.f32 %v4775, %v4778
    %4782 = vrot.lane.b32.xlu0 %v4780, 64
    %v4783 = vpop.permute.xlu0 %4782
    %v4785 = vadd.f32 %v4779, %v4783
    %v4786 = vtanh.pop %v4785
    %v4787 = vmul.f32 %v4777, %v4786
    %4789 = vrot.lane.b32.xlu0 %v4787, 64
    %v4790 = vpop.permute.xlu0 %4789
    %v4792 = vsel %vm201, %v4790, %v4755
    %4793 = vmatprep.subr.mxu0 %v146
    %4794 = vmatpush1.msra.mxu0 %v145
    %4795 = vmatprep.subr.mxu0 %v142
    %4796 = vmatpush1.msra.mxu0 %v141
    %4797 = vmatprep.subr.mxu0 %v138
    %4798 = vmatpush1.msra.mxu0 %v137
    %4799 = vmatprep.subr.mxu0 %v134
    %4800 = vmatpush1.msra.mxu0 %v133
    %4801 = vmatprep.subr.mxu0 %v130
    %4802 = vmatpush1.msra.mxu0 %v129
    %4803 = vmatprep.subr.mxu0 %v126
    %4804 = vmatpush1.msra.mxu0 %v125
    %4805 = vmatprep.subr.mxu0 %v122
    %4806 = vmatpush1.msra.mxu0 %v121
    %4807 = vmatprep.subr.mxu0 %v118
    %4808 = vmatpush1.msra.mxu0 %v117
    %4809 = vmatprep.subr.mxu0 %v114
    %4810 = vmatpush1.msra.mxu0 %v113
    %4811 = vmatprep.subr.mxu0 %v110
    %4812 = vmatpush1.msra.mxu0 %v109
    %4813 = vmatprep.subr.mxu0 %v106
    %4814 = vmatpush1.msra.mxu0 %v105
    %4815 = vmatprep.subr.mxu0 %v102
    %4816 = vmatpush1.msra.mxu0 %v101
    %4817 = vmatprep.subr.mxu0 %v98
    %4818 = vmatpush1.msra.mxu0 %v97
    %4819 = vmatprep.subr.mxu0 %v94
    %4820 = vmatpush1.msra.mxu0 %v93
    %4821 = vmatprep.subr.mxu0 %v90
    %4822 = vmatpush1.msra.mxu0 %v89
    %4823 = vmatprep.subr.mxu0 %v86
    %4824 = vmatpush1.msra.mxu0 %v85
    %4825 = vmatprep.subr.mxu0 0.0
    %4826 = vmatpush2.msra.mxu0 0.0
    %4827 = vmatprep.subr.mxu0 0.0
    %4828 = vmatpush2.msra.mxu0 0.0
    %4829 = vmatprep.subr.mxu0 0.0
    %4830 = vmatpush2.msra.mxu0 0.0
    %4831 = vmatprep.subr.mxu0 0.0
    %4832 = vmatpush2.msra.mxu0 0.0
    %4833 = vmatprep.subr.mxu0 0.0
    %4834 = vmatpush2.msra.mxu0 0.0
    %4835 = vmatprep.subr.mxu0 0.0
    %4836 = vmatpush2.msra.mxu0 0.0
    %4837 = vmatprep.subr.mxu0 0.0
    %4838 = vmatpush2.msra.mxu0 0.0
    %4839 = vmatprep.subr.mxu0 0.0
    %4840 = vmatpush2.msra.mxu0 0.0
    %4841 = vmatprep.subr.mxu0 0.0
    %4842 = vmatpush2.msra.mxu0 0.0
    %4843 = vmatprep.subr.mxu0 0.0
    %4844 = vmatpush2.msra.mxu0 0.0
    %4845 = vmatprep.subr.mxu0 0.0
    %4846 = vmatpush2.msra.mxu0 0.0
    %4847 = vmatprep.subr.mxu0 0.0
    %4848 = vmatpush2.msra.mxu0 0.0
    %4849 = vmatprep.subr.mxu0 0.0
    %4850 = vmatpush2.msra.mxu0 0.0
    %4851 = vmatprep.subr.mxu0 0.0
    %4852 = vmatpush2.msra.mxu0 0.0
    %4853 = vmatprep.subr.mxu0 0.0
    %4854 = vmatpush2.msra.mxu0 0.0
    %4855 = vmatprep.subr.mxu0 0.0
    %4856 = vmatpush2.msra.mxu0 0.0
    %4857 = vmatprep.mubr.f32.mxu0 0.0
    %4858 = vmatmul.mubr.f32.gmra.mxu0 %v4792
    %v4859 = vpop.f32.mrf.mxu0
    %v4860 = vadd.f32 0.0, %v4859
    %v4861 = vpop.f32.mrf.mxu0
    %v4862 = vadd.f32 0.0, %v4861
    %4863 = vdwg.mxu0
    %4864 = vmatprep.subr.mxu0 %v148
    %4865 = vmatpush1.msra.mxu0 %v147
    %4866 = vmatprep.subr.mxu0 %v144
    %4867 = vmatpush1.msra.mxu0 %v143
    %4868 = vmatprep.subr.mxu0 %v140
    %4869 = vmatpush1.msra.mxu0 %v139
    %4870 = vmatprep.subr.mxu0 %v136
    %4871 = vmatpush1.msra.mxu0 %v135
    %4872 = vmatprep.subr.mxu0 %v132
    %4873 = vmatpush1.msra.mxu0 %v131
    %4874 = vmatprep.subr.mxu0 %v128
    %4875 = vmatpush1.msra.mxu0 %v127
    %4876 = vmatprep.subr.mxu0 %v124
    %4877 = vmatpush1.msra.mxu0 %v123
    %4878 = vmatprep.subr.mxu0 %v120
    %4879 = vmatpush1.msra.mxu0 %v119
    %4880 = vmatprep.subr.mxu0 %v116
    %4881 = vmatpush1.msra.mxu0 %v115
    %4882 = vmatprep.subr.mxu0 %v112
    %4883 = vmatpush1.msra.mxu0 %v111
    %4884 = vmatprep.subr.mxu0 %v108
    %4885 = vmatpush1.msra.mxu0 %v107
    %4886 = vmatprep.subr.mxu0 %v104
    %4887 = vmatpush1.msra.mxu0 %v103
    %4888 = vmatprep.subr.mxu0 %v100
    %4889 = vmatpush1.msra.mxu0 %v99
    %4890 = vmatprep.subr.mxu0 %v96
    %4891 = vmatpush1.msra.mxu0 %v95
    %4892 = vmatprep.subr.mxu0 %v92
    %4893 = vmatpush1.msra.mxu0 %v91
    %4894 = vmatprep.subr.mxu0 %v88
    %4895 = vmatpush1.msra.mxu0 %v87
    %4896 = vmatprep.subr.mxu0 0.0
    %4897 = vmatpush2.msra.mxu0 0.0
    %4898 = vmatprep.subr.mxu0 0.0
    %4899 = vmatpush2.msra.mxu0 0.0
    %4900 = vmatprep.subr.mxu0 0.0
    %4901 = vmatpush2.msra.mxu0 0.0
    %4902 = vmatprep.subr.mxu0 0.0
    %4903 = vmatpush2.msra.mxu0 0.0
    %4904 = vmatprep.subr.mxu0 0.0
    %4905 = vmatpush2.msra.mxu0 0.0
    %4906 = vmatprep.subr.mxu0 0.0
    %4907 = vmatpush2.msra.mxu0 0.0
    %4908 = vmatprep.subr.mxu0 0.0
    %4909 = vmatpush2.msra.mxu0 0.0
    %4910 = vmatprep.subr.mxu0 0.0
    %4911 = vmatpush2.msra.mxu0 0.0
    %4912 = vmatprep.subr.mxu0 0.0
    %4913 = vmatpush2.msra.mxu0 0.0
    %4914 = vmatprep.subr.mxu0 0.0
    %4915 = vmatpush2.msra.mxu0 0.0
    %4916 = vmatprep.subr.mxu0 0.0
    %4917 = vmatpush2.msra.mxu0 0.0
    %4918 = vmatprep.subr.mxu0 0.0
    %4919 = vmatpush2.msra.mxu0 0.0
    %4920 = vmatprep.subr.mxu0 0.0
    %4921 = vmatpush2.msra.mxu0 0.0
    %4922 = vmatprep.subr.mxu0 0.0
    %4923 = vmatpush2.msra.mxu0 0.0
    %4924 = vmatprep.subr.mxu0 0.0
    %4925 = vmatpush2.msra.mxu0 0.0
    %4926 = vmatprep.subr.mxu0 0.0
    %4927 = vmatpush2.msra.mxu0 0.0
    %4928 = vmatprep.mubr.f32.mxu0 0.0
    %4929 = vmatmul.mubr.f32.gmra.mxu0 %v4792
    %v4930 = vpop.f32.mrf.mxu0
    %v4931 = vadd.f32 0.0, %v4930
    %v4932 = vpop.f32.mrf.mxu0
    %v4933 = vadd.f32 0.0, %v4932
    %4934 = vdwg.mxu0
    %v4935 = vadd.f32 %v4860, %v178
    %v4936 = vadd.f32 %v4862, %v182
    %v4937 = vxor.u32 %v4935, 2147483648
    %v4938 = vxor.u32 %v4936, 2147483648
    %v4939 = vmul.f32 %v4937, 1.442695
    %v4940 = vpow.pop %v4939
    %v4941 = vmul.f32 %v4938, 1.442695
    %v4942 = vpow.pop %v4941
    %v4943 = vadd.f32 %v4940, 1.0
    %v4944 = vadd.f32 %v4942, 1.0
    %v4945 = vrcp.pop %v4943
    %v4946 = vmul.f32 1.0, %v4945
    %v4947 = vrcp.pop %v4944
    %v4948 = vmul.f32 1.0, %v4947
    %v4949 = vtanh.pop %v4936
    %v4950 = vmul.f32 %v4946, %v4753
    %v4951 = vmul.f32 %v4946, %v4949
    %4953 = vrot.lane.b32.xlu0 %v4951, 64
    %v4954 = vpop.permute.xlu0 %4953
    %v4956 = vadd.f32 %v4950, %v4954
    %v4957 = vtanh.pop %v4956
    %v4958 = vmul.f32 %v4948, %v4957
    %4959 = vset.pattern.permute.xlu0 23
    %4960 = vperm.xlu0 %4959, %v276
    %v4961 = vpop.permute.xlu0 %4960
    %v4963 = vmul.f32 %v4961, %v154
    %v4964 = vmul.f32 %v4961, %v158
    %v4965 = vadd.f32 %v4963, %v4931
    %v4966 = vadd.f32 %v4964, %v4933
    %v4967 = vadd.f32 %v4965, %v166
    %v4968 = vadd.f32 %v4966, %v170
    %v4969 = vxor.u32 %v4967, 2147483648
    %v4970 = vxor.u32 %v4968, 2147483648
    %v4971 = vmul.f32 %v4969, 1.442695
    %v4972 = vpow.pop %v4971
    %v4973 = vmul.f32 %v4970, 1.442695
    %v4974 = vpow.pop %v4973
    %v4975 = vadd.f32 %v4972, 1.0
    %v4976 = vadd.f32 %v4974, 1.0
    %v4977 = vrcp.pop %v4975
    %v4978 = vmul.f32 1.0, %v4977
    %v4979 = vrcp.pop %v4976
    %v4980 = vmul.f32 1.0, %v4979
    %v4981 = vtanh.pop %v4968
    %v4982 = vmul.f32 %v4978, %v4785
    %v4983 = vmul.f32 %v4978, %v4981
    %4985 = vrot.lane.b32.xlu0 %v4983, 64
    %v4986 = vpop.permute.xlu0 %4985
    %v4988 = vadd.f32 %v4982, %v4986
    %v4989 = vtanh.pop %v4988
    %v4990 = vmul.f32 %v4980, %v4989
    %4992 = vrot.lane.b32.xlu0 %v4990, 64
    %v4993 = vpop.permute.xlu0 %4992
    %v4995 = vsel %vm201, %v4993, %v4958
    %4996 = vmatprep.subr.mxu0 %v146
    %4997 = vmatpush1.msra.mxu0 %v145
    %4998 = vmatprep.subr.mxu0 %v142
    %4999 = vmatpush1.msra.mxu0 %v141
    %5000 = vmatprep.subr.mxu0 %v138
    %5001 = vmatpush1.msra.mxu0 %v137
    %5002 = vmatprep.subr.mxu0 %v134
    %5003 = vmatpush1.msra.mxu0 %v133
    %5004 = vmatprep.subr.mxu0 %v130
    %5005 = vmatpush1.msra.mxu0 %v129
    %5006 = vmatprep.subr.mxu0 %v126
    %5007 = vmatpush1.msra.mxu0 %v125
    %5008 = vmatprep.subr.mxu0 %v122
    %5009 = vmatpush1.msra.mxu0 %v121
    %5010 = vmatprep.subr.mxu0 %v118
    %5011 = vmatpush1.msra.mxu0 %v117
    %5012 = vmatprep.subr.mxu0 %v114
    %5013 = vmatpush1.msra.mxu0 %v113
    %5014 = vmatprep.subr.mxu0 %v110
    %5015 = vmatpush1.msra.mxu0 %v109
    %5016 = vmatprep.subr.mxu0 %v106
    %5017 = vmatpush1.msra.mxu0 %v105
    %5018 = vmatprep.subr.mxu0 %v102
    %5019 = vmatpush1.msra.mxu0 %v101
    %5020 = vmatprep.subr.mxu0 %v98
    %5021 = vmatpush1.msra.mxu0 %v97
    %5022 = vmatprep.subr.mxu0 %v94
    %5023 = vmatpush1.msra.mxu0 %v93
    %5024 = vmatprep.subr.mxu0 %v90
    %5025 = vmatpush1.msra.mxu0 %v89
    %5026 = vmatprep.subr.mxu0 %v86
    %5027 = vmatpush1.msra.mxu0 %v85
    %5028 = vmatprep.subr.mxu0 0.0
    %5029 = vmatpush2.msra.mxu0 0.0
    %5030 = vmatprep.subr.mxu0 0.0
    %5031 = vmatpush2.msra.mxu0 0.0
    %5032 = vmatprep.subr.mxu0 0.0
    %5033 = vmatpush2.msra.mxu0 0.0
    %5034 = vmatprep.subr.mxu0 0.0
    %5035 = vmatpush2.msra.mxu0 0.0
    %5036 = vmatprep.subr.mxu0 0.0
    %5037 = vmatpush2.msra.mxu0 0.0
    %5038 = vmatprep.subr.mxu0 0.0
    %5039 = vmatpush2.msra.mxu0 0.0
    %5040 = vmatprep.subr.mxu0 0.0
    %5041 = vmatpush2.msra.mxu0 0.0
    %5042 = vmatprep.subr.mxu0 0.0
    %5043 = vmatpush2.msra.mxu0 0.0
    %5044 = vmatprep.subr.mxu0 0.0
    %5045 = vmatpush2.msra.mxu0 0.0
    %5046 = vmatprep.subr.mxu0 0.0
    %5047 = vmatpush2.msra.mxu0 0.0
    %5048 = vmatprep.subr.mxu0 0.0
    %5049 = vmatpush2.msra.mxu0 0.0
    %5050 = vmatprep.subr.mxu0 0.0
    %5051 = vmatpush2.msra.mxu0 0.0
    %5052 = vmatprep.subr.mxu0 0.0
    %5053 = vmatpush2.msra.mxu0 0.0
    %5054 = vmatprep.subr.mxu0 0.0
    %5055 = vmatpush2.msra.mxu0 0.0
    %5056 = vmatprep.subr.mxu0 0.0
    %5057 = vmatpush2.msra.mxu0 0.0
    %5058 = vmatprep.subr.mxu0 0.0
    %5059 = vmatpush2.msra.mxu0 0.0
    %5060 = vmatprep.mubr.f32.mxu0 0.0
    %5061 = vmatmul.mubr.f32.gmra.mxu0 %v4995
    %v5062 = vpop.f32.mrf.mxu0
    %v5063 = vadd.f32 0.0, %v5062
    %v5064 = vpop.f32.mrf.mxu0
    %v5065 = vadd.f32 0.0, %v5064
    %5066 = vdwg.mxu0
    %v5067 = vadd.f32 %v5063, %v178
    %v5068 = vadd.f32 %v5065, %v182
    %v5069 = vxor.u32 %v5067, 2147483648
    %v5070 = vxor.u32 %v5068, 2147483648
    %v5071 = vmul.f32 %v5069, 1.442695
    %v5072 = vpow.pop %v5071
    %v5073 = vmul.f32 %v5070, 1.442695
    %v5074 = vpow.pop %v5073
    %v5075 = vadd.f32 %v5072, 1.0
    %v5076 = vadd.f32 %v5074, 1.0
    %v5077 = vrcp.pop %v5075
    %v5078 = vmul.f32 1.0, %v5077
    %v5079 = vrcp.pop %v5076
    %v5080 = vmul.f32 1.0, %v5079
    %v5081 = vtanh.pop %v5068
    %v5082 = vmul.f32 %v5078, %v4956
    %v5083 = vmul.f32 %v5078, %v5081
    %5085 = vrot.lane.b32.xlu0 %v5083, 64
    %v5086 = vpop.permute.xlu0 %5085
    %v5088 = vadd.f32 %v5082, %v5086
    %v5089 = vtanh.pop %v5088
    %v5090 = vmul.f32 %v5080, %v5089
    %v5091 = vld [vmem:[#allocation8] sm:$0xff]
    %v5092 = vld [vmem:[#allocation8 + $0x8] sm:$0xff]
    %v5093 = vld [vmem:[#allocation8 + $0x10] sm:$0xff]
    %v5094 = vld [vmem:[#allocation8 + $0x18] sm:$0xff]
    %v5095 = vld [vmem:[#allocation8 + $0x20] sm:$0xff]
    %v5096 = vld [vmem:[#allocation8 + $0x28] sm:$0xff]
    %v5097 = vld [vmem:[#allocation8 + $0x30] sm:$0xff]
    %v5098 = vld [vmem:[#allocation8 + $0x38] sm:$0xff]
    %v5099 = vld [vmem:[%s6] sm:$0x1]
    %v5101 = vlaneseq
    %v5102 = vshrl.u32 %v5101, 7
    %v5103 = vsub.s32 0, %v5102
    %v5104 = vrot.slane %v5099, %v5103
    %5107 = vrot.lane.b32.xlu0 %v5090, 64
    %v5108 = vpop.permute.xlu0 %5107
    %v5109 = vsel %vm201, %v5108, 0
    %5111 = vmatprep.subr.mxu0 0.0
    %5112 = vmatpush1.msra.mxu0 0.0
    %5113 = vmatprep.subr.mxu0 0.0
    %5114 = vmatpush1.msra.mxu0 0.0
    %5115 = vmatprep.subr.mxu0 0.0
    %5116 = vmatpush1.msra.mxu0 0.0
    %5117 = vmatprep.subr.mxu0 0.0
    %5118 = vmatpush1.msra.mxu0 0.0
    %5119 = vmatprep.subr.mxu0 0.0
    %5120 = vmatpush1.msra.mxu0 0.0
    %5121 = vmatprep.subr.mxu0 0.0
    %5122 = vmatpush1.msra.mxu0 0.0
    %5123 = vmatprep.subr.mxu0 0.0
    %5124 = vmatpush1.msra.mxu0 0.0
    %5125 = vmatprep.subr.mxu0 0.0
    %5126 = vmatpush1.msra.mxu0 0.0
    %5127 = vmatprep.subr.mxu0 0.0
    %5128 = vmatpush1.msra.mxu0 %v5098
    %5129 = vmatprep.subr.mxu0 0.0
    %5130 = vmatpush1.msra.mxu0 %v5097
    %5131 = vmatprep.subr.mxu0 0.0
    %5132 = vmatpush1.msra.mxu0 %v5096
    %5133 = vmatprep.subr.mxu0 0.0
    %5134 = vmatpush1.msra.mxu0 %v5095
    %5135 = vmatprep.subr.mxu0 0.0
    %5136 = vmatpush1.msra.mxu0 %v5094
    %5137 = vmatprep.subr.mxu0 0.0
    %5138 = vmatpush1.msra.mxu0 %v5093
    %5139 = vmatprep.subr.mxu0 0.0
    %5140 = vmatpush1.msra.mxu0 %v5092
    %5141 = vmatprep.subr.mxu0 0.0
    %5142 = vmatpush1.msra.mxu0 %v5091
    %5143 = vmatprep.subr.mxu0 0.0
    %5144 = vmatpush2.msra.mxu0 0.0
    %5145 = vmatprep.subr.mxu0 0.0
    %5146 = vmatpush2.msra.mxu0 0.0
    %5147 = vmatprep.subr.mxu0 0.0
    %5148 = vmatpush2.msra.mxu0 0.0
    %5149 = vmatprep.subr.mxu0 0.0
    %5150 = vmatpush2.msra.mxu0 0.0
    %5151 = vmatprep.subr.mxu0 0.0
    %5152 = vmatpush2.msra.mxu0 0.0
    %5153 = vmatprep.subr.mxu0 0.0
    %5154 = vmatpush2.msra.mxu0 0.0
    %5155 = vmatprep.subr.mxu0 0.0
    %5156 = vmatpush2.msra.mxu0 0.0
    %5157 = vmatprep.subr.mxu0 0.0
    %5158 = vmatpush2.msra.mxu0 0.0
    %5159 = vmatprep.subr.mxu0 0.0
    %5160 = vmatpush2.msra.mxu0 0.0
    %5161 = vmatprep.subr.mxu0 0.0
    %5162 = vmatpush2.msra.mxu0 0.0
    %5163 = vmatprep.subr.mxu0 0.0
    %5164 = vmatpush2.msra.mxu0 0.0
    %5165 = vmatprep.subr.mxu0 0.0
    %5166 = vmatpush2.msra.mxu0 0.0
    %5167 = vmatprep.subr.mxu0 0.0
    %5168 = vmatpush2.msra.mxu0 0.0
    %5169 = vmatprep.subr.mxu0 0.0
    %5170 = vmatpush2.msra.mxu0 0.0
    %5171 = vmatprep.subr.mxu0 0.0
    %5172 = vmatpush2.msra.mxu0 0.0
    %5173 = vmatprep.subr.mxu0 0.0
    %5174 = vmatpush2.msra.mxu0 0.0
    %5175 = vmatprep.mubr.f32.mxu0 0.0
    %5176 = vmatmul.mubr.f32.gmra.mxu0 %v5109
    %v5177 = vpop.f32.mrf.mxu0
    %v5178 = vadd.f32 %v5104, %v5177
    %v5179 = vpop.f32.mrf.mxu0
    %5180 = vdwg.mxu0
    %vm5181 = vcmask 9216
    %5182 = vst.msk [vmem:[#allocation10] sm:$0x3] %vm5181, %v5178
    // Predicated region
    $region50: #{_lambda_.1} parent=1 // pred_check
      _
    $region51: #{_lambda_.1} parent=1 // pred_check_branch
      %5184 = sbr.rel (0) target = $region53
    $region52: #{_lambda_.1} parent=1 // pred_region
      %s5186 = ssub.s32 32, 32
      %5187 = vsyncadd [#allocation4], %s5186
      %s5189 = sshll.u32 [#allocation10], 4
      %s5190 = int_to_ptr.vmem [resolvable:$true] %s5189
      %5192 = dma.vmem_to_hbm [thread:$0]  %s5190, 32, %s8, [#allocation4]
    $region53: #{_lambda_.1} parent=1 // pred_fallthru
      _
    // Predicated region
    $region54: #{_lambda_.1} parent=1 // pred_check
      _
    $region55: #{_lambda_.1} parent=1 // pred_check_branch
      %5194 = sbr.rel (0) target = $region57
    $region56: #{_lambda_.1} parent=1 // pred_region
      %5195 = dma.done [#allocation4], 32
    $region57: #{_lambda_.1} parent=1 // pred_fallthru
      _
    %5196 = vsyncpa [#allocation3], 1
    %5197 = vsyncpa [#allocation6], 1
    %5198 = vsyncpa [#allocation9], 1
    %5199 = vsyncpa [#allocation4], 1

</llo_original>
